<compile_context>
chip_gen: v5e
topology: v5e:2x2
jax: 0.10.0
libtpu: 0.0.40
codegen_flags: <defaults>
</compile_context>

<pallas_src>
import functools

import jax
import jax.numpy as jnp
import numpy as np
from jax import lax
from jax.experimental import pallas as pl
from jax.experimental.pallas import tpu as pltpu

NEG_SLOPE = 0.2
BN_EPS = 1e-5
MAX_TILE_M = 2048          # rows of the patch matrix per grid step


def _vmem_limit_bytes():
    """~75% of the chip's physical per-core VMEM (headroom for compiler scratch)."""
    try:
        cap = pltpu.get_tpu_info().vmem_capacity_bytes
    except Exception:
        cap = 64 * 1024 * 1024
    return int(cap) * 3 // 4


def _pick_tile(dim, max_tile):
    """Largest power-of-two tile <= max_tile that divides dim, else dim itself."""
    t = max_tile
    while t >= 8:
        if dim % t == 0:
            return t
        t //= 2
    return dim


# ----------------------------------------------------------------------------
# Kernel 1: conv-as-matmul + bias + LeakyReLU (no BN).  Weight is resident.
# ----------------------------------------------------------------------------
def _conv_lrelu_kernel(x_ref, w_ref, b_ref, o_ref):
    y = jnp.dot(x_ref[...], w_ref[...], preferred_element_type=jnp.float32)
    y = y + b_ref[...]                                  # f32 epilogue
    y = jnp.where(y > 0, y, NEG_SLOPE * y)
    o_ref[...] = y.astype(o_ref.dtype)


# ----------------------------------------------------------------------------
# Kernel 2: conv-as-matmul + bias + train-mode BatchNorm + LeakyReLU, fully
# fused.  The whole (M, N) output stays resident in VMEM (constant block
# index); per-channel sum / sum-of-squares accumulate in VMEM scratch; the
# final grid step normalizes in place (no HBM round trip of the raw y).
# ----------------------------------------------------------------------------
def _conv_bn_lrelu_kernel(x_ref, w_ref, b_ref, g_ref, be_ref, o_ref,
                          sum_ref, sq_ref, *, nm, tm, inv_m):
    i = pl.program_id(0)

    @pl.when(i == 0)
    def _():
        sum_ref[...] = jnp.zeros_like(sum_ref)
        sq_ref[...] = jnp.zeros_like(sq_ref)

    y = jnp.dot(x_ref[...], w_ref[...], preferred_element_type=jnp.float32)
    y = y + b_ref[...]                                   # f32 epilogue
    sum_ref[...] += jnp.sum(y, axis=0, keepdims=True)
    sq_ref[...] += jnp.sum(y * y, axis=0, keepdims=True)
    row = pl.multiple_of(i * tm, tm)
    o_ref[pl.ds(row, tm), :] = y.astype(o_ref.dtype)     # stash raw y (bf16)

    @pl.when(i == nm - 1)
    def _():
        # NOTE: E[x^2]-E[x]^2 in f32; fine at these M, matches the reference.
        mean = sum_ref[...] * inv_m
        var = jnp.maximum(sq_ref[...] * inv_m - mean * mean, 0.0)
        scale = lax.rsqrt(var + BN_EPS) * g_ref[...]
        for j in range(nm):                              # static unroll, tile-wise
            r = j * tm
            yt = o_ref[pl.ds(r, tm), :].astype(jnp.float32)
            yn = (yt - mean) * scale + be_ref[...]
            yn = jnp.where(yn > 0, yn, NEG_SLOPE * yn)
            o_ref[pl.ds(r, tm), :] = yn.astype(o_ref.dtype)


def conv_matmul_pallas(patches, w, b, gamma=None, beta=None, *, use_bn):
    """patches: (M, K) bf16; w: (K, N) bf16; b/gamma/beta: (N,) f32."""
    M, K = patches.shape
    K2, N = w.shape
    assert K == K2
    tm = _pick_tile(M, MAX_TILE_M)
    nm = M // tm
    b2 = b.reshape(1, N).astype(jnp.float32)
    flops = int(2 * M * K * N)
    bytes_acc = int(M * K * 2 + K * N * 2 + M * N * 2 + 4 * N * 4)
    vmem = _vmem_limit_bytes()

    if not use_bn:
        return pl.pallas_call(
            _conv_lrelu_kernel,
            out_shape=jax.ShapeDtypeStruct((M, N), jnp.bfloat16),
            grid_spec=pltpu.PrefetchScalarGridSpec(
                num_scalar_prefetch=0,
                grid=(nm,),
                in_specs=[
                    pl.BlockSpec((tm, K), lambda i: (i, 0)),   # patches: tiled over M
                    pl.BlockSpec((K, N), lambda i: (0, 0)),    # weight: VMEM-resident
                    pl.BlockSpec((1, N), lambda i: (0, 0)),    # bias
                ],
                # N may be 64 (layer 1): lane-sparse store accepted -- cheaper
                # than doubling layer-2's K with zero padding.
                out_specs=pl.BlockSpec((tm, N), lambda i: (i, 0)),
            ),
            compiler_params=pltpu.CompilerParams(
                dimension_semantics=("parallel",),
                vmem_limit_bytes=vmem,
            ),
            cost_estimate=pl.CostEstimate(flops=flops, transcendentals=0,
                                          bytes_accessed=bytes_acc),
        )(patches, w, b2)

    g2 = gamma.reshape(1, N).astype(jnp.float32)
    be2 = beta.reshape(1, N).astype(jnp.float32)
    kernel = functools.partial(_conv_bn_lrelu_kernel, nm=nm, tm=tm,
                               inv_m=1.0 / float(M))
    return pl.pallas_call(
        kernel,
        out_shape=jax.ShapeDtypeStruct((M, N), jnp.bfloat16),
        grid_spec=pltpu.PrefetchScalarGridSpec(
            num_scalar_prefetch=0,
            grid=(nm,),
            in_specs=[
                pl.BlockSpec((tm, K), lambda i: (i, 0)),       # patches: tiled over M
                pl.BlockSpec((K, N), lambda i: (0, 0)),        # weight: VMEM-resident
                pl.BlockSpec((1, N), lambda i: (0, 0)),        # bias
                pl.BlockSpec((1, N), lambda i: (0, 0)),        # gamma
                pl.BlockSpec((1, N), lambda i: (0, 0)),        # beta
            ],
            # Whole output resident across the grid -> BN normalize happens in
            # the final step without writing the raw y to HBM.
            out_specs=pl.BlockSpec((M, N), lambda i: (0, 0)),
            scratch_shapes=[pltpu.VMEM((1, N), jnp.float32),   # channel sums
                            pltpu.VMEM((1, N), jnp.float32)],  # channel sum-sq
        ),
        compiler_params=pltpu.CompilerParams(
            # Resident output + running stats -> sequential M axis.
            dimension_semantics=("arbitrary",),
            vmem_limit_bytes=vmem,
        ),
        cost_estimate=pl.CostEstimate(flops=flops, transcendentals=0,
                                      bytes_accessed=bytes_acc),
    )(patches, w, b2, g2, be2)


# ----------------------------------------------------------------------------
# Kernel 3: final Linear (N = 1), unpadded.  Per-row VPU multiply + lane
# reduce; all operands fit in a single full-dim block.
# ----------------------------------------------------------------------------
def _fc_kernel(x_ref, w_ref, b_ref, o_ref):
    x = x_ref[...].astype(jnp.float32)
    w = w_ref[...].astype(jnp.float32)                  # (1, K) broadcast over rows
    o_ref[...] = jnp.sum(x * w, axis=1, keepdims=True) + b_ref[...]


def fc_pallas(flat, wfc_row, bfc):
    """flat: (B, K) bf16; wfc_row: (1, K) bf16; bfc: scalar."""
    B, K = flat.shape
    b2 = jnp.asarray(bfc, jnp.float32).reshape(1, 1)
    return pl.pallas_call(
        _fc_kernel,
        out_shape=jax.ShapeDtypeStruct((B, 1), jnp.float32),
        grid_spec=pltpu.PrefetchScalarGridSpec(
            num_scalar_prefetch=0,
            grid=(1,),
            in_specs=[
                pl.BlockSpec((B, K), lambda i: (0, 0)),
                pl.BlockSpec((1, K), lambda i: (0, 0)),
                pl.BlockSpec((1, 1), lambda i: (0, 0)),
            ],
            out_specs=pl.BlockSpec((B, 1), lambda i: (0, 0)),
        ),
        compiler_params=pltpu.CompilerParams(
            dimension_semantics=("arbitrary",),
            vmem_limit_bytes=_vmem_limit_bytes(),
        ),
    )(flat, wfc_row, b2)


# ----------------------------------------------------------------------------
# Glue: NHWC im2col for Conv2d(kernel=4, stride=2, padding=1)
# column order = (kh, kw, cin); rows ordered (b, ho, wo)
# ----------------------------------------------------------------------------
def im2col_nhwc(x, k=4, s=2, p=1):
    B, H, W, C = x.shape
    xp = jnp.pad(x, ((0, 0), (p, p), (p, p), (0, 0)))
    Ho = (H + 2 * p - k) // s + 1
    Wo = (W + 2 * p - k) // s + 1
    cols = []
    for kh in range(k):
        for kw in range(k):
            cols.append(xp[:, kh:kh + s * Ho:s, kw:kw + s * Wo:s, :])
    patches = jnp.concatenate(cols, axis=-1)            # (B, Ho, Wo, k*k*C)
    return patches.reshape(B * Ho * Wo, k * k * C), Ho, Wo


def _weight_to_patch_layout(w):
    """(Cout, Cin, Kh, Kw) torch weight -> (Kh*Kw*Cin, Cout), bf16."""
    Cout, Cin, Kh, Kw = w.shape
    return jnp.transpose(w, (2, 3, 1, 0)).reshape(Kh * Kw * Cin, Cout).astype(jnp.bfloat16)


def conv_block_pallas(x_nhwc, w, b, gamma=None, beta=None, *, use_bn):
    B = x_nhwc.shape[0]
    Cout, Cin, k, _ = w.shape
    assert x_nhwc.shape[-1] == Cin
    # TODO(synk): fuse this patch gather into the matmul kernel (pl.ANY input +
    # manual make_async_copy of kh/kw row stripes) to remove the im2col HBM
    # round trip -- the largest remaining HBM term at real input sizes.
    patches, Ho, Wo = im2col_nhwc(x_nhwc, k=k, s=2, p=1)
    w2 = _weight_to_patch_layout(w)
    y = conv_matmul_pallas(patches, w2, b, gamma, beta, use_bn=use_bn)
    return y.reshape(B, Ho, Wo, Cout)


# ----------------------------------------------------------------------------
# Discriminator forward (Pallas path)
# ----------------------------------------------------------------------------
def discriminator_pallas(params, x, labels):
    B, _, H, W = x.shape
    nc = labels.shape[1]
    xh = jnp.transpose(x, (0, 2, 3, 1))                          # NCHW -> NHWC once
    lab = jnp.broadcast_to(labels.reshape(B, 1, 1, nc), (B, H, W, nc))
    h = jnp.concatenate([xh, lab], axis=-1)                      # (B, H, W, 3+nc)
    cin = 3 + nc
    cpad = (-cin) % 8                                            # layer-1 K -> 16*8 = 128
    if cpad:
        h = jnp.pad(h, ((0, 0), (0, 0), (0, 0), (0, cpad)))
    h = h.astype(jnp.bfloat16)

    # Layer 1 (no BN): Cin zero-padded to 8 (aligned K); Cout stays 64.
    w1 = jnp.pad(params["w1"], ((0, 0), (0, cpad), (0, 0), (0, 0)))
    h = conv_block_pallas(h, w1, params["b1"], use_bn=False)

    # Layers 2-4: conv + train-mode BatchNorm + LeakyReLU fused in one kernel.
    h = conv_block_pallas(h, params["w2"], params["b2"], params["g2"], params["be2"], use_bn=True)
    h = conv_block_pallas(h, params["w3"], params["b3"], params["g3"], params["be3"], use_bn=True)
    h = conv_block_pallas(h, params["w4"], params["b4"], params["g4"], params["be4"], use_bn=True)

    # Final Linear (unpadded, N = 1).  wfc is stored in torch (C,H,W)-flatten
    # order; permute to our NHWC flatten order.
    Bq, Hq, Wq, Cq = h.shape
    flat = h.reshape(B, Hq * Wq * Cq)
    wfc = params["wfc"].reshape(1, Cq, Hq, Wq).transpose(0, 2, 3, 1).reshape(1, -1)
    out = fc_pallas(flat, wfc.astype(jnp.bfloat16), params["bfc"][0])
    # TODO(synk): fold this per-row dot-reduce into layer 4's final BN step to
    # drop the extra (tiny) pallas_call.
    return out                                                   # (B, 1)


# ----------------------------------------------------------------------------
# Plain-JAX reference mirroring the same numerical recipe (bf16 matmul inputs,
# f32 accumulation / BN / LeakyReLU, bf16 inter-layer activations).
# ----------------------------------------------------------------------------
def _conv_ref(x_nhwc, w, b, gamma=None, beta=None, *, use_bn):
    B = x_nhwc.shape[0]
    Cout, Cin, k, _ = w.shape
    patches, Ho, Wo = im2col_nhwc(x_nhwc, k=k, s=2, p=1)
    w2 = _weight_to_patch_layout(w)
    y = jnp.dot(patches, w2, preferred_element_type=jnp.float32) + b.reshape(1, -1)
    M = y.shape[0]
    if use_bn:
        mean = jnp.sum(y, axis=0, keepdims=True) / M
        var = jnp.maximum(jnp.sum(y * y, axis=0, keepdims=True) / M - mean * mean, 0.0)
        yb = y.astype(jnp.bfloat16).astype(jnp.float32)
        yn = (yb - mean) * lax.rsqrt(var + BN_EPS) * gamma.reshape(1, -1) + beta.reshape(1, -1)
        y = jnp.where(yn > 0, yn, NEG_SLOPE * yn)
    else:
        y = jnp.where(y > 0, y, NEG_SLOPE * y)
    return y.astype(jnp.bfloat16).reshape(B, Ho, Wo, Cout)


def discriminator_ref(params, x, labels):
    B, _, H, W = x.shape
    nc = labels.shape[1]
    xh = jnp.transpose(x, (0, 2, 3, 1))
    lab = jnp.broadcast_to(labels.reshape(B, 1, 1, nc), (B, H, W, nc))
    h = jnp.concatenate([xh, lab], axis=-1).astype(jnp.bfloat16)
    h = _conv_ref(h, params["w1"], params["b1"], use_bn=False)
    h = _conv_ref(h, params["w2"], params["b2"], params["g2"], params["be2"], use_bn=True)
    h = _conv_ref(h, params["w3"], params["b3"], params["g3"], params["be3"], use_bn=True)
    h = _conv_ref(h, params["w4"], params["b4"], params["g4"], params["be4"], use_bn=True)
    Bq, Hq, Wq, Cq = h.shape
    flat = h.reshape(B, -1)
    wfc = params["wfc"].reshape(1, Cq, Hq, Wq).transpose(0, 2, 3, 1).reshape(1, -1)
    out = (jnp.sum(flat.astype(jnp.float32)
                   * wfc.astype(jnp.bfloat16).astype(jnp.float32),
                   axis=1, keepdims=True)
           + params["bfc"].reshape(1, 1))
    return out


# ----------------------------------------------------------------------------
# Deterministic parameter init (synthetic; shapes from the PyTorch __init__)
# ----------------------------------------------------------------------------
def init_params(num_classes, fc_in):
    ks = jax.random.split(jax.random.PRNGKey(1), 20)
    nrm = lambda k, shape, s: s * jax.random.normal(k, shape, jnp.float32)
    cin = 3 + num_classes
    p = {}
    p["w1"] = nrm(ks[0], (64, cin, 4, 4), 0.05);   p["b1"] = nrm(ks[1], (64,), 0.01)
    p["w2"] = nrm(ks[2], (128, 64, 4, 4), 0.05);   p["b2"] = nrm(ks[3], (128,), 0.01)
    p["w3"] = nrm(ks[4], (256, 128, 4, 4), 0.05);  p["b3"] = nrm(ks[5], (256,), 0.01)
    p["w4"] = nrm(ks[6], (512, 256, 4, 4), 0.05);  p["b4"] = nrm(ks[7], (512,), 0.01)
    p["g2"] = 1.0 + nrm(ks[8], (128,), 0.1);       p["be2"] = nrm(ks[9], (128,), 0.1)
    p["g3"] = 1.0 + nrm(ks[10], (256,), 0.1);      p["be3"] = nrm(ks[11], (256,), 0.1)
    p["g4"] = 1.0 + nrm(ks[12], (512,), 0.1);      p["be4"] = nrm(ks[13], (512,), 0.1)
    p["wfc"] = nrm(ks[14], (1, fc_in), 0.02);      p["bfc"] = nrm(ks[15], (1,), 0.01)
    return p


# ----------------------------------------------------------------------------
if __name__ == "__main__":
    B, NC, H, W = 2, 4, 32, 32
    key = jax.random.PRNGKey(0)
    kx, kl = jax.random.split(key)
    x = jax.random.normal(kx, (B, 3, H, W), jnp.float32)
    labels = jax.nn.one_hot(
        jax.random.randint(kl, (B,), 0, NC), NC).astype(jnp.float32)

    fc_in = 512 * (H // 16) * (W // 16)        # == 512*16*16 for 256x256 inputs
    params = init_params(NC, fc_in)

    fwd = jax.jit(discriminator_pallas)
    out = jax.block_until_ready(fwd(params, x, labels))
    assert out.shape == (B, 1)

    ref = jax.block_until_ready(discriminator_ref(params, x, labels))
    np.testing.assert_allclose(np.asarray(out, dtype=np.float32),
                               np.asarray(ref, dtype=np.float32),
                               rtol=2e-2, atol=2e-2)
    print("KERNEL_OK")
</pallas_src>

<mosaic_0001>
module attributes {stable_mosaic.version = 11 : i64} {
  func.func @_conv_lrelu_kernel(%arg0: i32, %arg1: memref<512x128xbf16, #tpu.memory_space<vmem>>, %arg2: memref<128x64xbf16, #tpu.memory_space<vmem>>, %arg3: memref<1x64xf32, #tpu.memory_space<vmem>>, %arg4: memref<512x64xbf16, #tpu.memory_space<vmem>>) attributes {dimension_semantics = [#tpu.dimension_semantics<parallel>], iteration_bounds = array<i64: 1>, scalar_prefetch = 0 : i64, scratch_operands = 0 : i64, tpu.core_type = #tpu.core_type<tc>, window_params = [{transform_indices = @transform_0, window_bounds = array<i64: 512, 128>}, {pipeline_mode = #tpu.pipeline_mode<synchronous>, transform_indices = @transform_1, window_bounds = array<i64: 128, 64>}, {pipeline_mode = #tpu.pipeline_mode<synchronous>, transform_indices = @transform_2, window_bounds = array<i64: 1, 64>}, {transform_indices = @transform_3, window_bounds = array<i64: 512, 64>}]} {
    %c0 = arith.constant 0 : index
    %c0_0 = arith.constant 0 : index
    %0 = vector.load %arg1[%c0, %c0_0] : memref<512x128xbf16, #tpu.memory_space<vmem>>, vector<512x128xbf16>
    %c0_1 = arith.constant 0 : index
    %c0_2 = arith.constant 0 : index
    %1 = vector.load %arg2[%c0_1, %c0_2] : memref<128x64xbf16, #tpu.memory_space<vmem>>, vector<128x64xbf16>
    %cst = arith.constant dense<0.000000e+00> : vector<512x64xf32>
    %2 = tpu.matmul %0, %1, %cst {dimension_numbers = #tpu.dot_dimension_numbers<[1], [0], [0], [1], [0, 0, 1, 1], [], []>} : vector<512x128xbf16>, vector<128x64xbf16>, vector<512x64xf32> -> vector<512x64xf32>
    %c0_3 = arith.constant 0 : index
    %c0_4 = arith.constant 0 : index
    %3 = vector.load %arg3[%c0_3, %c0_4] : memref<1x64xf32, #tpu.memory_space<vmem>>, vector<1x64xf32>
    %4 = vector.broadcast %3 : vector<1x64xf32> to vector<512x64xf32>
    %5 = arith.addf %2, %4 : vector<512x64xf32>
    %cst_5 = arith.constant 0.000000e+00 : f32
    %6 = vector.broadcast %cst_5 : f32 to vector<512x64xf32>
    %7 = arith.cmpf ogt, %5, %6 : vector<512x64xf32>
    %cst_6 = arith.constant 2.000000e-01 : f32
    %8 = vector.broadcast %cst_6 : f32 to vector<512x64xf32>
    %9 = arith.mulf %8, %5 : vector<512x64xf32>
    %10 = arith.select %7, %5, %9 : vector<512x64xi1>, vector<512x64xf32>
    %11 = arith.truncf %10 : vector<512x64xf32> to vector<512x64xbf16>
    %c0_7 = arith.constant 0 : index
    %c0_8 = arith.constant 0 : index
    %12 = vector.load %arg4[%c0_7, %c0_8] : memref<512x64xbf16, #tpu.memory_space<vmem>>, vector<512x64xbf16>
    tpu.vector_store %arg4[%c0_7, %c0_8], %11 {strides = array<i32>} : memref<512x64xbf16, #tpu.memory_space<vmem>>, vector<512x64xbf16>,
    return
  }
  func.func @transform_0(%arg0: i32) -> (i32, i32) {
    %c0_i32 = arith.constant 0 : i32
    %c0_i32_0 = arith.constant 0 : i32
    return %arg0, %c0_i32 : i32, i32
  }
  func.func @transform_1(%arg0: i32) -> (i32, i32) {
    %c0_i32 = arith.constant 0 : i32
    %c0_i32_0 = arith.constant 0 : i32
    %c0_i32_1 = arith.constant 0 : i32
    return %c0_i32, %c0_i32_0 : i32, i32
  }
  func.func @transform_2(%arg0: i32) -> (i32, i32) {
    %c0_i32 = arith.constant 0 : i32
    %c0_i32_0 = arith.constant 0 : i32
    %c0_i32_1 = arith.constant 0 : i32
    return %c0_i32, %c0_i32_0 : i32, i32
  }
  func.func @transform_3(%arg0: i32) -> (i32, i32) {
    %c0_i32 = arith.constant 0 : i32
    %c0_i32_0 = arith.constant 0 : i32
    return %arg0, %c0_i32 : i32, i32
  }
}

module attributes {stable_mosaic.version = 11 : i64} {
  func.func @_conv_bn_lrelu_kernel(%arg0: i32, %arg1: memref<128x1024xbf16, #tpu.memory_space<vmem>>, %arg2: memref<1024x128xbf16, #tpu.memory_space<vmem>>, %arg3: memref<1x128xf32, #tpu.memory_space<vmem>>, %arg4: memref<1x128xf32, #tpu.memory_space<vmem>>, %arg5: memref<1x128xf32, #tpu.memory_space<vmem>>, %arg6: memref<128x128xbf16, #tpu.memory_space<vmem>>, %arg7: memref<1x128xf32, #tpu.memory_space<vmem>>, %arg8: memref<1x128xf32, #tpu.memory_space<vmem>>) attributes {dimension_semantics = [#tpu.dimension_semantics<arbitrary>], iteration_bounds = array<i64: 1>, scalar_prefetch = 0 : i64, scratch_operands = 2 : i64, tpu.core_type = #tpu.core_type<tc>, window_params = [{transform_indices = @transform_0, window_bounds = array<i64: 128, 1024>}, {pipeline_mode = #tpu.pipeline_mode<synchronous>, transform_indices = @transform_1, window_bounds = array<i64: 1024, 128>}, {pipeline_mode = #tpu.pipeline_mode<synchronous>, transform_indices = @transform_2, window_bounds = array<i64: 1, 128>}, {pipeline_mode = #tpu.pipeline_mode<synchronous>, transform_indices = @transform_3, window_bounds = array<i64: 1, 128>}, {pipeline_mode = #tpu.pipeline_mode<synchronous>, transform_indices = @transform_4, window_bounds = array<i64: 1, 128>}, {pipeline_mode = #tpu.pipeline_mode<synchronous>, transform_indices = @transform_5, window_bounds = array<i64: 128, 128>}]} {
    %c0_i32 = arith.constant 0 : i32
    %0 = arith.cmpi eq, %arg0, %c0_i32 : i32
    %1 = arith.extui %0 : i1 to i32
    %c0_i32_0 = arith.constant 0 : i32
    %2 = arith.cmpi ne, %1, %c0_i32_0 : i32
    scf.if %2 {
      %cst_19 = arith.constant 0.000000e+00 : f32
      %28 = vector.broadcast %cst_19 : f32 to vector<1x128xf32>
      %c0_20 = arith.constant 0 : index
      %c0_21 = arith.constant 0 : index
      %29 = vector.load %arg7[%c0_20, %c0_21] : memref<1x128xf32, #tpu.memory_space<vmem>>, vector<1x128xf32>
      tpu.vector_store %arg7[%c0_20, %c0_21], %28 {strides = array<i32>} : memref<1x128xf32, #tpu.memory_space<vmem>>, vector<1x128xf32>,
      %cst_22 = arith.constant 0.000000e+00 : f32
      %30 = vector.broadcast %cst_22 : f32 to vector<1x128xf32>
      %c0_23 = arith.constant 0 : index
      %c0_24 = arith.constant 0 : index
      %31 = vector.load %arg8[%c0_23, %c0_24] : memref<1x128xf32, #tpu.memory_space<vmem>>, vector<1x128xf32>
      tpu.vector_store %arg8[%c0_23, %c0_24], %30 {strides = array<i32>} : memref<1x128xf32, #tpu.memory_space<vmem>>, vector<1x128xf32>,
    } else {
    }
    %c0 = arith.constant 0 : index
    %c0_1 = arith.constant 0 : index
    %3 = vector.load %arg1[%c0, %c0_1] : memref<128x1024xbf16, #tpu.memory_space<vmem>>, vector<128x1024xbf16>
    %c0_2 = arith.constant 0 : index
    %c0_3 = arith.constant 0 : index
    %4 = vector.load %arg2[%c0_2, %c0_3] : memref<1024x128xbf16, #tpu.memory_space<vmem>>, vector<1024x128xbf16>
    %cst = arith.constant dense<0.000000e+00> : vector<128x128xf32>
    %5 = tpu.matmul %3, %4, %cst {dimension_numbers = #tpu.dot_dimension_numbers<[1], [0], [0], [1], [0, 0, 1, 1], [], []>} : vector<128x1024xbf16>, vector<1024x128xbf16>, vector<128x128xf32> -> vector<128x128xf32>
    %c0_4 = arith.constant 0 : index
    %c0_5 = arith.constant 0 : index
    %6 = vector.load %arg3[%c0_4, %c0_5] : memref<1x128xf32, #tpu.memory_space<vmem>>, vector<1x128xf32>
    %7 = vector.broadcast %6 : vector<1x128xf32> to vector<128x128xf32>
    %8 = arith.addf %5, %7 : vector<128x128xf32>
    %c0_6 = arith.constant 0 : index
    %c0_7 = arith.constant 0 : index
    %9 = vector.load %arg7[%c0_6, %c0_7] : memref<1x128xf32, #tpu.memory_space<vmem>>, vector<1x128xf32>
    %cst_8 = arith.constant dense<0.000000e+00> : vector<128xf32>
    %10 = vector.multi_reduction <add>, %8, %cst_8 [0] : vector<128x128xf32> to vector<128xf32>
    %11 = vector.shape_cast %10 : vector<128xf32> to vector<1x128xf32>
    %12 = arith.addf %9, %11 : vector<1x128xf32>
    %c0_9 = arith.constant 0 : index
    %c0_10 = arith.constant 0 : index
    %13 = vector.load %arg7[%c0_9, %c0_10] : memref<1x128xf32, #tpu.memory_space<vmem>>, vector<1x128xf32>
    tpu.vector_store %arg7[%c0_9, %c0_10], %12 {strides = array<i32>} : memref<1x128xf32, #tpu.memory_space<vmem>>, vector<1x128xf32>,
    %c0_11 = arith.constant 0 : index
    %c0_12 = arith.constant 0 : index
    %14 = vector.load %arg8[%c0_11, %c0_12] : memref<1x128xf32, #tpu.memory_space<vmem>>, vector<1x128xf32>
    %15 = arith.mulf %8, %8 : vector<128x128xf32>
    %cst_13 = arith.constant dense<0.000000e+00> : vector<128xf32>
    %16 = vector.multi_reduction <add>, %15, %cst_13 [0] : vector<128x128xf32> to vector<128xf32>
    %17 = vector.shape_cast %16 : vector<128xf32> to vector<1x128xf32>
    %18 = arith.addf %14, %17 : vector<1x128xf32>
    %c0_14 = arith.constant 0 : index
    %c0_15 = arith.constant 0 : index
    %19 = vector.load %arg8[%c0_14, %c0_15] : memref<1x128xf32, #tpu.memory_space<vmem>>, vector<1x128xf32>
    tpu.vector_store %arg8[%c0_14, %c0_15], %18 {strides = array<i32>} : memref<1x128xf32, #tpu.memory_space<vmem>>, vector<1x128xf32>,
    %c128_i32 = arith.constant 128 : i32
    %20 = arith.muli %arg0, %c128_i32 : i32
    %21 = tpu.assume_multiple %20, 128 : i32
    %22 = arith.truncf %8 : vector<128x128xf32> to vector<128x128xbf16>
    %23 = arith.index_cast %21 : i32 to index
    %c0_16 = arith.constant 0 : index
    %24 = vector.load %arg6[%23, %c0_16] : memref<128x128xbf16, #tpu.memory_space<vmem>>, vector<128x128xbf16>
    tpu.vector_store %arg6[%23, %c0_16], %22 {strides = array<i32>} : memref<128x128xbf16, #tpu.memory_space<vmem>>, vector<128x128xbf16>,
    %c0_i32_17 = arith.constant 0 : i32
    %25 = arith.cmpi eq, %arg0, %c0_i32_17 : i32
    %26 = arith.extui %25 : i1 to i32
    %c0_i32_18 = arith.constant 0 : i32
    %27 = arith.cmpi ne, %26, %c0_i32_18 : i32
    scf.if %27 {
      %c0_19 = arith.constant 0 : index
      %c0_20 = arith.constant 0 : index
      %28 = vector.load %arg7[%c0_19, %c0_20] : memref<1x128xf32, #tpu.memory_space<vmem>>, vector<1x128xf32>
      %cst_21 = arith.constant 7.812500e-03 : f32
      %29 = vector.broadcast %cst_21 : f32 to vector<1x128xf32>
      %30 = arith.mulf %28, %29 : vector<1x128xf32>
      %c0_22 = arith.constant 0 : index
      %c0_23 = arith.constant 0 : index
      %31 = vector.load %arg8[%c0_22, %c0_23] : memref<1x128xf32, #tpu.memory_space<vmem>>, vector<1x128xf32>
      %cst_24 = arith.constant 7.812500e-03 : f32
      %32 = vector.broadcast %cst_24 : f32 to vector<1x128xf32>
      %33 = arith.mulf %31, %32 : vector<1x128xf32>
      %34 = arith.mulf %30, %30 : vector<1x128xf32>
      %35 = arith.subf %33, %34 : vector<1x128xf32>
      %cst_25 = arith.constant 0.000000e+00 : f32
      %36 = vector.broadcast %cst_25 : f32 to vector<1x128xf32>
      %37 = arith.maximumf %35, %36 : vector<1x128xf32>
      %cst_26 = arith.constant 9.99999974E-6 : f32
      %38 = vector.broadcast %cst_26 : f32 to vector<1x128xf32>
      %39 = arith.addf %37, %38 : vector<1x128xf32>
      %40 = math.rsqrt %39 : vector<1x128xf32>
      %c0_27 = arith.constant 0 : index
      %c0_28 = arith.constant 0 : index
      %41 = vector.load %arg4[%c0_27, %c0_28] : memref<1x128xf32, #tpu.memory_space<vmem>>, vector<1x128xf32>
      %42 = arith.mulf %40, %41 : vector<1x128xf32>
      %c0_29 = arith.constant 0 : index
      %c0_30 = arith.constant 0 : index
      %43 = vector.load %arg6[%c0_29, %c0_30] : memref<128x128xbf16, #tpu.memory_space<vmem>>, vector<128x128xbf16>
      %44 = arith.extf %43 : vector<128x128xbf16> to vector<128x128xf32>
      %45 = vector.broadcast %30 : vector<1x128xf32> to vector<128x128xf32>
      %46 = arith.subf %44, %45 : vector<128x128xf32>
      %47 = vector.broadcast %42 : vector<1x128xf32> to vector<128x128xf32>
      %48 = arith.mulf %46, %47 : vector<128x128xf32>
      %c0_31 = arith.constant 0 : index
      %c0_32 = arith.constant 0 : index
      %49 = vector.load %arg5[%c0_31, %c0_32] : memref<1x128xf32, #tpu.memory_space<vmem>>, vector<1x128xf32>
      %50 = vector.broadcast %49 : vector<1x128xf32> to vector<128x128xf32>
      %51 = arith.addf %48, %50 : vector<128x128xf32>
      %cst_33 = arith.constant 0.000000e+00 : f32
      %52 = vector.broadcast %cst_33 : f32 to vector<128x128xf32>
      %53 = arith.cmpf ogt, %51, %52 : vector<128x128xf32>
      %cst_34 = arith.constant 2.000000e-01 : f32
      %54 = vector.broadcast %cst_34 : f32 to vector<128x128xf32>
      %55 = arith.mulf %54, %51 : vector<128x128xf32>
      %56 = arith.select %53, %51, %55 : vector<128x128xi1>, vector<128x128xf32>
      %57 = arith.truncf %56 : vector<128x128xf32> to vector<128x128xbf16>
      %c0_35 = arith.constant 0 : index
      %c0_36 = arith.constant 0 : index
      %58 = vector.load %arg6[%c0_35, %c0_36] : memref<128x128xbf16, #tpu.memory_space<vmem>>, vector<128x128xbf16>
      tpu.vector_store %arg6[%c0_35, %c0_36], %57 {strides = array<i32>} : memref<128x128xbf16, #tpu.memory_space<vmem>>, vector<128x128xbf16>,
    } else {
    }
    return
  }
  func.func @transform_0(%arg0: i32) -> (i32, i32) {
    %c0_i32 = arith.constant 0 : i32
    %c0_i32_0 = arith.constant 0 : i32
    return %arg0, %c0_i32 : i32, i32
  }
  func.func @transform_1(%arg0: i32) -> (i32, i32) {
    %c0_i32 = arith.constant 0 : i32
    %c0_i32_0 = arith.constant 0 : i32
    %c0_i32_1 = arith.constant 0 : i32
    return %c0_i32, %c0_i32_0 : i32, i32
  }
  func.func @transform_2(%arg0: i32) -> (i32, i32) {
    %c0_i32 = arith.constant 0 : i32
    %c0_i32_0 = arith.constant 0 : i32
    %c0_i32_1 = arith.constant 0 : i32
    return %c0_i32, %c0_i32_0 : i32, i32
  }
  func.func @transform_3(%arg0: i32) -> (i32, i32) {
    %c0_i32 = arith.constant 0 : i32
    %c0_i32_0 = arith.constant 0 : i32
    %c0_i32_1 = arith.constant 0 : i32
    return %c0_i32, %c0_i32_0 : i32, i32
  }
  func.func @transform_4(%arg0: i32) -> (i32, i32) {
    %c0_i32 = arith.constant 0 : i32
    %c0_i32_0 = arith.constant 0 : i32
    %c0_i32_1 = arith.constant 0 : i32
    return %c0_i32, %c0_i32_0 : i32, i32
  }
  func.func @transform_5(%arg0: i32) -> (i32, i32) {
    %c0_i32 = arith.constant 0 : i32
    %c0_i32_0 = arith.constant 0 : i32
    %c0_i32_1 = arith.constant 0 : i32
    return %c0_i32, %c0_i32_0 : i32, i32
  }
}

module attributes {stable_mosaic.version = 11 : i64} {
  func.func @_conv_bn_lrelu_kernel(%arg0: i32, %arg1: memref<32x2048xbf16, #tpu.memory_space<vmem>>, %arg2: memref<2048x256xbf16, #tpu.memory_space<vmem>>, %arg3: memref<1x256xf32, #tpu.memory_space<vmem>>, %arg4: memref<1x256xf32, #tpu.memory_space<vmem>>, %arg5: memref<1x256xf32, #tpu.memory_space<vmem>>, %arg6: memref<32x256xbf16, #tpu.memory_space<vmem>>, %arg7: memref<1x256xf32, #tpu.memory_space<vmem>>, %arg8: memref<1x256xf32, #tpu.memory_space<vmem>>) attributes {dimension_semantics = [#tpu.dimension_semantics<arbitrary>], iteration_bounds = array<i64: 1>, scalar_prefetch = 0 : i64, scratch_operands = 2 : i64, tpu.core_type = #tpu.core_type<tc>, window_params = [{transform_indices = @transform_0, window_bounds = array<i64: 32, 2048>}, {pipeline_mode = #tpu.pipeline_mode<synchronous>, transform_indices = @transform_1, window_bounds = array<i64: 2048, 256>}, {pipeline_mode = #tpu.pipeline_mode<synchronous>, transform_indices = @transform_2, window_bounds = array<i64: 1, 256>}, {pipeline_mode = #tpu.pipeline_mode<synchronous>, transform_indices = @transform_3, window_bounds = array<i64: 1, 256>}, {pipeline_mode = #tpu.pipeline_mode<synchronous>, transform_indices = @transform_4, window_bounds = array<i64: 1, 256>}, {pipeline_mode = #tpu.pipeline_mode<synchronous>, transform_indices = @transform_5, window_bounds = array<i64: 32, 256>}]} {
    %c0_i32 = arith.constant 0 : i32
    %0 = arith.cmpi eq, %arg0, %c0_i32 : i32
    %1 = arith.extui %0 : i1 to i32
    %c0_i32_0 = arith.constant 0 : i32
    %2 = arith.cmpi ne, %1, %c0_i32_0 : i32
    scf.if %2 {
      %cst_19 = arith.constant 0.000000e+00 : f32
      %28 = vector.broadcast %cst_19 : f32 to vector<1x256xf32>
      %c0_20 = arith.constant 0 : index
      %c0_21 = arith.constant 0 : index
      %29 = vector.load %arg7[%c0_20, %c0_21] : memref<1x256xf32, #tpu.memory_space<vmem>>, vector<1x256xf32>
      tpu.vector_store %arg7[%c0_20, %c0_21], %28 {strides = array<i32>} : memref<1x256xf32, #tpu.memory_space<vmem>>, vector<1x256xf32>,
      %cst_22 = arith.constant 0.000000e+00 : f32
      %30 = vector.broadcast %cst_22 : f32 to vector<1x256xf32>
      %c0_23 = arith.constant 0 : index
      %c0_24 = arith.constant 0 : index
      %31 = vector.load %arg8[%c0_23, %c0_24] : memref<1x256xf32, #tpu.memory_space<vmem>>, vector<1x256xf32>
      tpu.vector_store %arg8[%c0_23, %c0_24], %30 {strides = array<i32>} : memref<1x256xf32, #tpu.memory_space<vmem>>, vector<1x256xf32>,
    } else {
    }
    %c0 = arith.constant 0 : index
    %c0_1 = arith.constant 0 : index
    %3 = vector.load %arg1[%c0, %c0_1] : memref<32x2048xbf16, #tpu.memory_space<vmem>>, vector<32x2048xbf16>
    %c0_2 = arith.constant 0 : index
    %c0_3 = arith.constant 0 : index
    %4 = vector.load %arg2[%c0_2, %c0_3] : memref<2048x256xbf16, #tpu.memory_space<vmem>>, vector<2048x256xbf16>
    %cst = arith.constant dense<0.000000e+00> : vector<32x256xf32>
    %5 = tpu.matmul %3, %4, %cst {dimension_numbers = #tpu.dot_dimension_numbers<[1], [0], [0], [1], [0, 0, 1, 1], [], []>} : vector<32x2048xbf16>, vector<2048x256xbf16>, vector<32x256xf32> -> vector<32x256xf32>
    %c0_4 = arith.constant 0 : index
    %c0_5 = arith.constant 0 : index
    %6 = vector.load %arg3[%c0_4, %c0_5] : memref<1x256xf32, #tpu.memory_space<vmem>>, vector<1x256xf32>
    %7 = vector.broadcast %6 : vector<1x256xf32> to vector<32x256xf32>
    %8 = arith.addf %5, %7 : vector<32x256xf32>
    %c0_6 = arith.constant 0 : index
    %c0_7 = arith.constant 0 : index
    %9 = vector.load %arg7[%c0_6, %c0_7] : memref<1x256xf32, #tpu.memory_space<vmem>>, vector<1x256xf32>
    %cst_8 = arith.constant dense<0.000000e+00> : vector<256xf32>
    %10 = vector.multi_reduction <add>, %8, %cst_8 [0] : vector<32x256xf32> to vector<256xf32>
    %11 = vector.shape_cast %10 : vector<256xf32> to vector<1x256xf32>
    %12 = arith.addf %9, %11 : vector<1x256xf32>
    %c0_9 = arith.constant 0 : index
    %c0_10 = arith.constant 0 : index
    %13 = vector.load %arg7[%c0_9, %c0_10] : memref<1x256xf32, #tpu.memory_space<vmem>>, vector<1x256xf32>
    tpu.vector_store %arg7[%c0_9, %c0_10], %12 {strides = array<i32>} : memref<1x256xf32, #tpu.memory_space<vmem>>, vector<1x256xf32>,
    %c0_11 = arith.constant 0 : index
    %c0_12 = arith.constant 0 : index
    %14 = vector.load %arg8[%c0_11, %c0_12] : memref<1x256xf32, #tpu.memory_space<vmem>>, vector<1x256xf32>
    %15 = arith.mulf %8, %8 : vector<32x256xf32>
    %cst_13 = arith.constant dense<0.000000e+00> : vector<256xf32>
    %16 = vector.multi_reduction <add>, %15, %cst_13 [0] : vector<32x256xf32> to vector<256xf32>
    %17 = vector.shape_cast %16 : vector<256xf32> to vector<1x256xf32>
    %18 = arith.addf %14, %17 : vector<1x256xf32>
    %c0_14 = arith.constant 0 : index
    %c0_15 = arith.constant 0 : index
    %19 = vector.load %arg8[%c0_14, %c0_15] : memref<1x256xf32, #tpu.memory_space<vmem>>, vector<1x256xf32>
    tpu.vector_store %arg8[%c0_14, %c0_15], %18 {strides = array<i32>} : memref<1x256xf32, #tpu.memory_space<vmem>>, vector<1x256xf32>,
    %c32_i32 = arith.constant 32 : i32
    %20 = arith.muli %arg0, %c32_i32 : i32
    %21 = tpu.assume_multiple %20, 32 : i32
    %22 = arith.truncf %8 : vector<32x256xf32> to vector<32x256xbf16>
    %23 = arith.index_cast %21 : i32 to index
    %c0_16 = arith.constant 0 : index
    %24 = vector.load %arg6[%23, %c0_16] : memref<32x256xbf16, #tpu.memory_space<vmem>>, vector<32x256xbf16>
    tpu.vector_store %arg6[%23, %c0_16], %22 {strides = array<i32>} : memref<32x256xbf16, #tpu.memory_space<vmem>>, vector<32x256xbf16>,
    %c0_i32_17 = arith.constant 0 : i32
    %25 = arith.cmpi eq, %arg0, %c0_i32_17 : i32
    %26 = arith.extui %25 : i1 to i32
    %c0_i32_18 = arith.constant 0 : i32
    %27 = arith.cmpi ne, %26, %c0_i32_18 : i32
    scf.if %27 {
      %c0_19 = arith.constant 0 : index
      %c0_20 = arith.constant 0 : index
      %28 = vector.load %arg7[%c0_19, %c0_20] : memref<1x256xf32, #tpu.memory_space<vmem>>, vector<1x256xf32>
      %cst_21 = arith.constant 3.125000e-02 : f32
      %29 = vector.broadcast %cst_21 : f32 to vector<1x256xf32>
      %30 = arith.mulf %28, %29 : vector<1x256xf32>
      %c0_22 = arith.constant 0 : index
      %c0_23 = arith.constant 0 : index
      %31 = vector.load %arg8[%c0_22, %c0_23] : memref<1x256xf32, #tpu.memory_space<vmem>>, vector<1x256xf32>
      %cst_24 = arith.constant 3.125000e-02 : f32
      %32 = vector.broadcast %cst_24 : f32 to vector<1x256xf32>
      %33 = arith.mulf %31, %32 : vector<1x256xf32>
      %34 = arith.mulf %30, %30 : vector<1x256xf32>
      %35 = arith.subf %33, %34 : vector<1x256xf32>
      %cst_25 = arith.constant 0.000000e+00 : f32
      %36 = vector.broadcast %cst_25 : f32 to vector<1x256xf32>
      %37 = arith.maximumf %35, %36 : vector<1x256xf32>
      %cst_26 = arith.constant 9.99999974E-6 : f32
      %38 = vector.broadcast %cst_26 : f32 to vector<1x256xf32>
      %39 = arith.addf %37, %38 : vector<1x256xf32>
      %40 = math.rsqrt %39 : vector<1x256xf32>
      %c0_27 = arith.constant 0 : index
      %c0_28 = arith.constant 0 : index
      %41 = vector.load %arg4[%c0_27, %c0_28] : memref<1x256xf32, #tpu.memory_space<vmem>>, vector<1x256xf32>
      %42 = arith.mulf %40, %41 : vector<1x256xf32>
      %c0_29 = arith.constant 0 : index
      %c0_30 = arith.constant 0 : index
      %43 = vector.load %arg6[%c0_29, %c0_30] : memref<32x256xbf16, #tpu.memory_space<vmem>>, vector<32x256xbf16>
      %44 = arith.extf %43 : vector<32x256xbf16> to vector<32x256xf32>
      %45 = vector.broadcast %30 : vector<1x256xf32> to vector<32x256xf32>
      %46 = arith.subf %44, %45 : vector<32x256xf32>
      %47 = vector.broadcast %42 : vector<1x256xf32> to vector<32x256xf32>
      %48 = arith.mulf %46, %47 : vector<32x256xf32>
      %c0_31 = arith.constant 0 : index
      %c0_32 = arith.constant 0 : index
      %49 = vector.load %arg5[%c0_31, %c0_32] : memref<1x256xf32, #tpu.memory_space<vmem>>, vector<1x256xf32>
      %50 = vector.broadcast %49 : vector<1x256xf32> to vector<32x256xf32>
      %51 = arith.addf %48, %50 : vector<32x256xf32>
      %cst_33 = arith.constant 0.000000e+00 : f32
      %52 = vector.broadcast %cst_33 : f32 to vector<32x256xf32>
      %53 = arith.cmpf ogt, %51, %52 : vector<32x256xf32>
      %cst_34 = arith.constant 2.000000e-01 : f32
      %54 = vector.broadcast %cst_34 : f32 to vector<32x256xf32>
      %55 = arith.mulf %54, %51 : vector<32x256xf32>
      %56 = arith.select %53, %51, %55 : vector<32x256xi1>, vector<32x256xf32>
      %57 = arith.truncf %56 : vector<32x256xf32> to vector<32x256xbf16>
      %c0_35 = arith.constant 0 : index
      %c0_36 = arith.constant 0 : index
      %58 = vector.load %arg6[%c0_35, %c0_36] : memref<32x256xbf16, #tpu.memory_space<vmem>>, vector<32x256xbf16>
      tpu.vector_store %arg6[%c0_35, %c0_36], %57 {strides = array<i32>} : memref<32x256xbf16, #tpu.memory_space<vmem>>, vector<32x256xbf16>,
    } else {
    }
    return
  }
  func.func @transform_0(%arg0: i32) -> (i32, i32) {
    %c0_i32 = arith.constant 0 : i32
    %c0_i32_0 = arith.constant 0 : i32
    return %arg0, %c0_i32 : i32, i32
  }
  func.func @transform_1(%arg0: i32) -> (i32, i32) {
    %c0_i32 = arith.constant 0 : i32
    %c0_i32_0 = arith.constant 0 : i32
    %c0_i32_1 = arith.constant 0 : i32
    return %c0_i32, %c0_i32_0 : i32, i32
  }
  func.func @transform_2(%arg0: i32) -> (i32, i32) {
    %c0_i32 = arith.constant 0 : i32
    %c0_i32_0 = arith.constant 0 : i32
    %c0_i32_1 = arith.constant 0 : i32
    return %c0_i32, %c0_i32_0 : i32, i32
  }
  func.func @transform_3(%arg0: i32) -> (i32, i32) {
    %c0_i32 = arith.constant 0 : i32
    %c0_i32_0 = arith.constant 0 : i32
    %c0_i32_1 = arith.constant 0 : i32
    return %c0_i32, %c0_i32_0 : i32, i32
  }
  func.func @transform_4(%arg0: i32) -> (i32, i32) {
    %c0_i32 = arith.constant 0 : i32
    %c0_i32_0 = arith.constant 0 : i32
    %c0_i32_1 = arith.constant 0 : i32
    return %c0_i32, %c0_i32_0 : i32, i32
  }
  func.func @transform_5(%arg0: i32) -> (i32, i32) {
    %c0_i32 = arith.constant 0 : i32
    %c0_i32_0 = arith.constant 0 : i32
    %c0_i32_1 = arith.constant 0 : i32
    return %c0_i32, %c0_i32_0 : i32, i32
  }
}

module attributes {stable_mosaic.version = 11 : i64} {
  func.func @_conv_bn_lrelu_kernel(%arg0: i32, %arg1: memref<8x4096xbf16, #tpu.memory_space<vmem>>, %arg2: memref<4096x512xbf16, #tpu.memory_space<vmem>>, %arg3: memref<1x512xf32, #tpu.memory_space<vmem>>, %arg4: memref<1x512xf32, #tpu.memory_space<vmem>>, %arg5: memref<1x512xf32, #tpu.memory_space<vmem>>, %arg6: memref<8x512xbf16, #tpu.memory_space<vmem>>, %arg7: memref<1x512xf32, #tpu.memory_space<vmem>>, %arg8: memref<1x512xf32, #tpu.memory_space<vmem>>) attributes {dimension_semantics = [#tpu.dimension_semantics<arbitrary>], iteration_bounds = array<i64: 1>, scalar_prefetch = 0 : i64, scratch_operands = 2 : i64, tpu.core_type = #tpu.core_type<tc>, window_params = [{transform_indices = @transform_0, window_bounds = array<i64: 8, 4096>}, {pipeline_mode = #tpu.pipeline_mode<synchronous>, transform_indices = @transform_1, window_bounds = array<i64: 4096, 512>}, {pipeline_mode = #tpu.pipeline_mode<synchronous>, transform_indices = @transform_2, window_bounds = array<i64: 1, 512>}, {pipeline_mode = #tpu.pipeline_mode<synchronous>, transform_indices = @transform_3, window_bounds = array<i64: 1, 512>}, {pipeline_mode = #tpu.pipeline_mode<synchronous>, transform_indices = @transform_4, window_bounds = array<i64: 1, 512>}, {pipeline_mode = #tpu.pipeline_mode<synchronous>, transform_indices = @transform_5, window_bounds = array<i64: 8, 512>}]} {
    %c0_i32 = arith.constant 0 : i32
    %0 = arith.cmpi eq, %arg0, %c0_i32 : i32
    %1 = arith.extui %0 : i1 to i32
    %c0_i32_0 = arith.constant 0 : i32
    %2 = arith.cmpi ne, %1, %c0_i32_0 : i32
    scf.if %2 {
      %cst_19 = arith.constant 0.000000e+00 : f32
      %28 = vector.broadcast %cst_19 : f32 to vector<1x512xf32>
      %c0_20 = arith.constant 0 : index
      %c0_21 = arith.constant 0 : index
      %29 = vector.load %arg7[%c0_20, %c0_21] : memref<1x512xf32, #tpu.memory_space<vmem>>, vector<1x512xf32>
      tpu.vector_store %arg7[%c0_20, %c0_21], %28 {strides = array<i32>} : memref<1x512xf32, #tpu.memory_space<vmem>>, vector<1x512xf32>,
      %cst_22 = arith.constant 0.000000e+00 : f32
      %30 = vector.broadcast %cst_22 : f32 to vector<1x512xf32>
      %c0_23 = arith.constant 0 : index
      %c0_24 = arith.constant 0 : index
      %31 = vector.load %arg8[%c0_23, %c0_24] : memref<1x512xf32, #tpu.memory_space<vmem>>, vector<1x512xf32>
      tpu.vector_store %arg8[%c0_23, %c0_24], %30 {strides = array<i32>} : memref<1x512xf32, #tpu.memory_space<vmem>>, vector<1x512xf32>,
    } else {
    }
    %c0 = arith.constant 0 : index
    %c0_1 = arith.constant 0 : index
    %3 = vector.load %arg1[%c0, %c0_1] : memref<8x4096xbf16, #tpu.memory_space<vmem>>, vector<8x4096xbf16>
    %c0_2 = arith.constant 0 : index
    %c0_3 = arith.constant 0 : index
    %4 = vector.load %arg2[%c0_2, %c0_3] : memref<4096x512xbf16, #tpu.memory_space<vmem>>, vector<4096x512xbf16>
    %cst = arith.constant dense<0.000000e+00> : vector<8x512xf32>
    %5 = tpu.matmul %3, %4, %cst {dimension_numbers = #tpu.dot_dimension_numbers<[1], [0], [0], [1], [0, 0, 1, 1], [], []>} : vector<8x4096xbf16>, vector<4096x512xbf16>, vector<8x512xf32> -> vector<8x512xf32>
    %c0_4 = arith.constant 0 : index
    %c0_5 = arith.constant 0 : index
    %6 = vector.load %arg3[%c0_4, %c0_5] : memref<1x512xf32, #tpu.memory_space<vmem>>, vector<1x512xf32>
    %7 = vector.broadcast %6 : vector<1x512xf32> to vector<8x512xf32>
    %8 = arith.addf %5, %7 : vector<8x512xf32>
    %c0_6 = arith.constant 0 : index
    %c0_7 = arith.constant 0 : index
    %9 = vector.load %arg7[%c0_6, %c0_7] : memref<1x512xf32, #tpu.memory_space<vmem>>, vector<1x512xf32>
    %cst_8 = arith.constant dense<0.000000e+00> : vector<512xf32>
    %10 = vector.multi_reduction <add>, %8, %cst_8 [0] : vector<8x512xf32> to vector<512xf32>
    %11 = vector.shape_cast %10 : vector<512xf32> to vector<1x512xf32>
    %12 = arith.addf %9, %11 : vector<1x512xf32>
    %c0_9 = arith.constant 0 : index
    %c0_10 = arith.constant 0 : index
    %13 = vector.load %arg7[%c0_9, %c0_10] : memref<1x512xf32, #tpu.memory_space<vmem>>, vector<1x512xf32>
    tpu.vector_store %arg7[%c0_9, %c0_10], %12 {strides = array<i32>} : memref<1x512xf32, #tpu.memory_space<vmem>>, vector<1x512xf32>,
    %c0_11 = arith.constant 0 : index
    %c0_12 = arith.constant 0 : index
    %14 = vector.load %arg8[%c0_11, %c0_12] : memref<1x512xf32, #tpu.memory_space<vmem>>, vector<1x512xf32>
    %15 = arith.mulf %8, %8 : vector<8x512xf32>
    %cst_13 = arith.constant dense<0.000000e+00> : vector<512xf32>
    %16 = vector.multi_reduction <add>, %15, %cst_13 [0] : vector<8x512xf32> to vector<512xf32>
    %17 = vector.shape_cast %16 : vector<512xf32> to vector<1x512xf32>
    %18 = arith.addf %14, %17 : vector<1x512xf32>
    %c0_14 = arith.constant 0 : index
    %c0_15 = arith.constant 0 : index
    %19 = vector.load %arg8[%c0_14, %c0_15] : memref<1x512xf32, #tpu.memory_space<vmem>>, vector<1x512xf32>
    tpu.vector_store %arg8[%c0_14, %c0_15], %18 {strides = array<i32>} : memref<1x512xf32, #tpu.memory_space<vmem>>, vector<1x512xf32>,
    %c8_i32 = arith.constant 8 : i32
    %20 = arith.muli %arg0, %c8_i32 : i32
    %21 = tpu.assume_multiple %20, 8 : i32
    %22 = arith.truncf %8 : vector<8x512xf32> to vector<8x512xbf16>
    %23 = arith.index_cast %21 : i32 to index
    %c0_16 = arith.constant 0 : index
    %24 = vector.load %arg6[%23, %c0_16] : memref<8x512xbf16, #tpu.memory_space<vmem>>, vector<8x512xbf16>
    tpu.vector_store %arg6[%23, %c0_16], %22 {strides = array<i32>} : memref<8x512xbf16, #tpu.memory_space<vmem>>, vector<8x512xbf16>,
    %c0_i32_17 = arith.constant 0 : i32
    %25 = arith.cmpi eq, %arg0, %c0_i32_17 : i32
    %26 = arith.extui %25 : i1 to i32
    %c0_i32_18 = arith.constant 0 : i32
    %27 = arith.cmpi ne, %26, %c0_i32_18 : i32
    scf.if %27 {
      %c0_19 = arith.constant 0 : index
      %c0_20 = arith.constant 0 : index
      %28 = vector.load %arg7[%c0_19, %c0_20] : memref<1x512xf32, #tpu.memory_space<vmem>>, vector<1x512xf32>
      %cst_21 = arith.constant 1.250000e-01 : f32
      %29 = vector.broadcast %cst_21 : f32 to vector<1x512xf32>
      %30 = arith.mulf %28, %29 : vector<1x512xf32>
      %c0_22 = arith.constant 0 : index
      %c0_23 = arith.constant 0 : index
      %31 = vector.load %arg8[%c0_22, %c0_23] : memref<1x512xf32, #tpu.memory_space<vmem>>, vector<1x512xf32>
      %cst_24 = arith.constant 1.250000e-01 : f32
      %32 = vector.broadcast %cst_24 : f32 to vector<1x512xf32>
      %33 = arith.mulf %31, %32 : vector<1x512xf32>
      %34 = arith.mulf %30, %30 : vector<1x512xf32>
      %35 = arith.subf %33, %34 : vector<1x512xf32>
      %cst_25 = arith.constant 0.000000e+00 : f32
      %36 = vector.broadcast %cst_25 : f32 to vector<1x512xf32>
      %37 = arith.maximumf %35, %36 : vector<1x512xf32>
      %cst_26 = arith.constant 9.99999974E-6 : f32
      %38 = vector.broadcast %cst_26 : f32 to vector<1x512xf32>
      %39 = arith.addf %37, %38 : vector<1x512xf32>
      %40 = math.rsqrt %39 : vector<1x512xf32>
      %c0_27 = arith.constant 0 : index
      %c0_28 = arith.constant 0 : index
      %41 = vector.load %arg4[%c0_27, %c0_28] : memref<1x512xf32, #tpu.memory_space<vmem>>, vector<1x512xf32>
      %42 = arith.mulf %40, %41 : vector<1x512xf32>
      %c0_29 = arith.constant 0 : index
      %c0_30 = arith.constant 0 : index
      %43 = vector.load %arg6[%c0_29, %c0_30] : memref<8x512xbf16, #tpu.memory_space<vmem>>, vector<8x512xbf16>
      %44 = arith.extf %43 : vector<8x512xbf16> to vector<8x512xf32>
      %45 = vector.broadcast %30 : vector<1x512xf32> to vector<8x512xf32>
      %46 = arith.subf %44, %45 : vector<8x512xf32>
      %47 = vector.broadcast %42 : vector<1x512xf32> to vector<8x512xf32>
      %48 = arith.mulf %46, %47 : vector<8x512xf32>
      %c0_31 = arith.constant 0 : index
      %c0_32 = arith.constant 0 : index
      %49 = vector.load %arg5[%c0_31, %c0_32] : memref<1x512xf32, #tpu.memory_space<vmem>>, vector<1x512xf32>
      %50 = vector.broadcast %49 : vector<1x512xf32> to vector<8x512xf32>
      %51 = arith.addf %48, %50 : vector<8x512xf32>
      %cst_33 = arith.constant 0.000000e+00 : f32
      %52 = vector.broadcast %cst_33 : f32 to vector<8x512xf32>
      %53 = arith.cmpf ogt, %51, %52 : vector<8x512xf32>
      %cst_34 = arith.constant 2.000000e-01 : f32
      %54 = vector.broadcast %cst_34 : f32 to vector<8x512xf32>
      %55 = arith.mulf %54, %51 : vector<8x512xf32>
      %56 = arith.select %53, %51, %55 : vector<8x512xi1>, vector<8x512xf32>
      %57 = arith.truncf %56 : vector<8x512xf32> to vector<8x512xbf16>
      %c0_35 = arith.constant 0 : index
      %c0_36 = arith.constant 0 : index
      %58 = vector.load %arg6[%c0_35, %c0_36] : memref<8x512xbf16, #tpu.memory_space<vmem>>, vector<8x512xbf16>
      tpu.vector_store %arg6[%c0_35, %c0_36], %57 {strides = array<i32>} : memref<8x512xbf16, #tpu.memory_space<vmem>>, vector<8x512xbf16>,
    } else {
    }
    return
  }
  func.func @transform_0(%arg0: i32) -> (i32, i32) {
    %c0_i32 = arith.constant 0 : i32
    %c0_i32_0 = arith.constant 0 : i32
    return %arg0, %c0_i32 : i32, i32
  }
  func.func @transform_1(%arg0: i32) -> (i32, i32) {
    %c0_i32 = arith.constant 0 : i32
    %c0_i32_0 = arith.constant 0 : i32
    %c0_i32_1 = arith.constant 0 : i32
    return %c0_i32, %c0_i32_0 : i32, i32
  }
  func.func @transform_2(%arg0: i32) -> (i32, i32) {
    %c0_i32 = arith.constant 0 : i32
    %c0_i32_0 = arith.constant 0 : i32
    %c0_i32_1 = arith.constant 0 : i32
    return %c0_i32, %c0_i32_0 : i32, i32
  }
  func.func @transform_3(%arg0: i32) -> (i32, i32) {
    %c0_i32 = arith.constant 0 : i32
    %c0_i32_0 = arith.constant 0 : i32
    %c0_i32_1 = arith.constant 0 : i32
    return %c0_i32, %c0_i32_0 : i32, i32
  }
  func.func @transform_4(%arg0: i32) -> (i32, i32) {
    %c0_i32 = arith.constant 0 : i32
    %c0_i32_0 = arith.constant 0 : i32
    %c0_i32_1 = arith.constant 0 : i32
    return %c0_i32, %c0_i32_0 : i32, i32
  }
  func.func @transform_5(%arg0: i32) -> (i32, i32) {
    %c0_i32 = arith.constant 0 : i32
    %c0_i32_0 = arith.constant 0 : i32
    %c0_i32_1 = arith.constant 0 : i32
    return %c0_i32, %c0_i32_0 : i32, i32
  }
}

module attributes {stable_mosaic.version = 11 : i64} {
  func.func @_fc_kernel(%arg0: i32, %arg1: memref<2x2048xbf16, #tpu.memory_space<vmem>>, %arg2: memref<1x2048xbf16, #tpu.memory_space<vmem>>, %arg3: memref<1x1xf32, #tpu.memory_space<vmem>>, %arg4: memref<2x1xf32, #tpu.memory_space<vmem>>) attributes {dimension_semantics = [#tpu.dimension_semantics<arbitrary>], iteration_bounds = array<i64: 1>, scalar_prefetch = 0 : i64, scratch_operands = 0 : i64, tpu.core_type = #tpu.core_type<tc>, window_params = [{pipeline_mode = #tpu.pipeline_mode<synchronous>, transform_indices = @transform_0, window_bounds = array<i64: 2, 2048>}, {pipeline_mode = #tpu.pipeline_mode<synchronous>, transform_indices = @transform_1, window_bounds = array<i64: 1, 2048>}, {pipeline_mode = #tpu.pipeline_mode<synchronous>, transform_indices = @transform_2, window_bounds = array<i64: 1, 1>}, {pipeline_mode = #tpu.pipeline_mode<synchronous>, transform_indices = @transform_3, window_bounds = array<i64: 2, 1>}]} {
    %c0 = arith.constant 0 : index
    %c0_0 = arith.constant 0 : index
    %0 = vector.load %arg1[%c0, %c0_0] : memref<2x2048xbf16, #tpu.memory_space<vmem>>, vector<2x2048xbf16>
    %1 = arith.extf %0 : vector<2x2048xbf16> to vector<2x2048xf32>
    %c0_1 = arith.constant 0 : index
    %c0_2 = arith.constant 0 : index
    %2 = vector.load %arg2[%c0_1, %c0_2] : memref<1x2048xbf16, #tpu.memory_space<vmem>>, vector<1x2048xbf16>
    %3 = arith.extf %2 : vector<1x2048xbf16> to vector<1x2048xf32>
    %4 = vector.broadcast %3 : vector<1x2048xf32> to vector<2x2048xf32>
    %5 = arith.mulf %1, %4 : vector<2x2048xf32>
    %cst = arith.constant dense<0.000000e+00> : vector<2xf32>
    %6 = vector.multi_reduction <add>, %5, %cst [1] : vector<2x2048xf32> to vector<2xf32>
    %7 = vector.shape_cast %6 : vector<2xf32> to vector<2x1xf32>
    %c0_3 = arith.constant 0 : index
    %c0_4 = arith.constant 0 : index
    %8 = vector.load %arg3[%c0_3, %c0_4] : memref<1x1xf32, #tpu.memory_space<vmem>>, vector<1x1xf32>
    %9 = vector.broadcast %8 : vector<1x1xf32> to vector<2x1xf32>
    %10 = arith.addf %7, %9 : vector<2x1xf32>
    %c0_5 = arith.constant 0 : index
    %c0_6 = arith.constant 0 : index
    %11 = vector.load %arg4[%c0_5, %c0_6] : memref<2x1xf32, #tpu.memory_space<vmem>>, vector<2x1xf32>
    tpu.vector_store %arg4[%c0_5, %c0_6], %10 {strides = array<i32>} : memref<2x1xf32, #tpu.memory_space<vmem>>, vector<2x1xf32>,
    return
  }
  func.func @transform_0(%arg0: i32) -> (i32, i32) {
    %c0_i32 = arith.constant 0 : i32
    %c0_i32_0 = arith.constant 0 : i32
    %c0_i32_1 = arith.constant 0 : i32
    return %c0_i32, %c0_i32_0 : i32, i32
  }
  func.func @transform_1(%arg0: i32) -> (i32, i32) {
    %c0_i32 = arith.constant 0 : i32
    %c0_i32_0 = arith.constant 0 : i32
    %c0_i32_1 = arith.constant 0 : i32
    return %c0_i32, %c0_i32_0 : i32, i32
  }
  func.func @transform_2(%arg0: i32) -> (i32, i32) {
    %c0_i32 = arith.constant 0 : i32
    %c0_i32_0 = arith.constant 0 : i32
    %c0_i32_1 = arith.constant 0 : i32
    return %c0_i32, %c0_i32_0 : i32, i32
  }
  func.func @transform_3(%arg0: i32) -> (i32, i32) {
    %c0_i32 = arith.constant 0 : i32
    %c0_i32_0 = arith.constant 0 : i32
    %c0_i32_1 = arith.constant 0 : i32
    return %c0_i32, %c0_i32_0 : i32, i32
  }
}

</mosaic_0001>

<llo_original>
// kernel: discriminator_pallas.5
$region0: #{discriminator_pallas.5}
  #allocation0 [shape = 'u32[]', space=smem, size = 0x4, offset = 0x4, fixed_abs, tag = 'smem constant byte address 0x4 - core index']
  #allocation1 [shape = 'u32[72,128]{1,0:T(1,128)}', space=vmem, size = 0x9000, scoped, tag = 'internal scratch']
  %s0 = inlined_call_operand.vmem [shape: bf16[512,128], index: 0, kind: input, shape index: {}]
  %s1 = inlined_call_operand.vmem [shape: bf16[128,64], index: 1, kind: input, shape index: {}]
  %s2 = inlined_call_operand.vmem [shape: f32[1,64], index: 2, kind: input, shape index: {}]
  %s3 = inlined_call_operand.vmem [shape: bf16[512,64], index: 3, kind: output, shape index: {}]
  %s4 = sld [smem:[#allocation0]]
  $region22: #{discriminator_pallas.5} parent=0
    _
  %s6 = ssub.s32 1, %s4
  %s7 = scalar_select 0, %s6, %s4
  // Predicated region
  $region2: #{discriminator_pallas.5} parent=0 // pred_check
    _
  $region3: #{discriminator_pallas.5} parent=0 // pred_check_branch
    %9 = sbr.rel (0) target = $region5
  $region4: #{discriminator_pallas.5} parent=0 // pred_region
    _
  $region5: #{discriminator_pallas.5} parent=0 // pred_fallthru
    _
  // Predicated region
  $region6: #{discriminator_pallas.5} parent=0 // pred_check
    _
  $region7: #{discriminator_pallas.5} parent=0 // pred_check_branch
    %11 = sbr.rel (0) target = $region9
  $region8: #{discriminator_pallas.5} parent=0 // pred_region
    _
  $region9: #{discriminator_pallas.5} parent=0 // pred_fallthru
    _
  // Predicated region
  $region10: #{discriminator_pallas.5} parent=0 // pred_check
    _
  $region11: #{discriminator_pallas.5} parent=0 // pred_check_branch
    %13 = sbr.rel (0) target = $region13
  $region12: #{discriminator_pallas.5} parent=0 // pred_region
    _
  $region13: #{discriminator_pallas.5} parent=0 // pred_fallthru
    _
  %v14 = vld [vmem:[%s0] sm:$0xf]
  %v15 = vld [vmem:[%s0 + $0x4] sm:$0xf]
  %v16 = vld [vmem:[%s0 + $0x8] sm:$0xf]
  %v17 = vld [vmem:[%s0 + $0xc] sm:$0xf]
  %v18 = vld [vmem:[%s0 + $0x10] sm:$0xf]
  %v19 = vld [vmem:[%s0 + $0x14] sm:$0xf]
  %v20 = vld [vmem:[%s0 + $0x18] sm:$0xf]
  %v21 = vld [vmem:[%s0 + $0x1c] sm:$0xf]
  %v22 = vld [vmem:[%s0 + $0x20] sm:$0xf]
  %v23 = vld [vmem:[%s0 + $0x24] sm:$0xf]
  %v24 = vld [vmem:[%s0 + $0x28] sm:$0xf]
  %v25 = vld [vmem:[%s0 + $0x2c] sm:$0xf]
  %v26 = vld [vmem:[%s0 + $0x30] sm:$0xf]
  %v27 = vld [vmem:[%s0 + $0x34] sm:$0xf]
  %v28 = vld [vmem:[%s0 + $0x38] sm:$0xf]
  %v29 = vld [vmem:[%s0 + $0x3c] sm:$0xf]
  %v30 = vld [vmem:[%s0 + $0x40] sm:$0xf]
  %v31 = vld [vmem:[%s0 + $0x44] sm:$0xf]
  %v32 = vld [vmem:[%s0 + $0x48] sm:$0xf]
  %v33 = vld [vmem:[%s0 + $0x4c] sm:$0xf]
  %v34 = vld [vmem:[%s0 + $0x50] sm:$0xf]
  %v35 = vld [vmem:[%s0 + $0x54] sm:$0xf]
  %v36 = vld [vmem:[%s0 + $0x58] sm:$0xf]
  %v37 = vld [vmem:[%s0 + $0x5c] sm:$0xf]
  %v38 = vld [vmem:[%s0 + $0x60] sm:$0xf]
  %v39 = vld [vmem:[%s0 + $0x64] sm:$0xf]
  %v40 = vld [vmem:[%s0 + $0x68] sm:$0xf]
  %v41 = vld [vmem:[%s0 + $0x6c] sm:$0xf]
  %v42 = vld [vmem:[%s0 + $0x70] sm:$0xf]
  %v43 = vld [vmem:[%s0 + $0x74] sm:$0xf]
  %v44 = vld [vmem:[%s0 + $0x78] sm:$0xf]
  %v45 = vld [vmem:[%s0 + $0x7c] sm:$0xf]
  %v46 = vld [vmem:[%s0 + $0x80] sm:$0xf]
  %v47 = vld [vmem:[%s0 + $0x84] sm:$0xf]
  %v48 = vld [vmem:[%s0 + $0x88] sm:$0xf]
  %v49 = vld [vmem:[%s0 + $0x8c] sm:$0xf]
  %v50 = vld [vmem:[%s0 + $0x90] sm:$0xf]
  %v51 = vld [vmem:[%s0 + $0x94] sm:$0xf]
  %v52 = vld [vmem:[%s0 + $0x98] sm:$0xf]
  %v53 = vld [vmem:[%s0 + $0x9c] sm:$0xf]
  %v54 = vld [vmem:[%s0 + $0xa0] sm:$0xf]
  %v55 = vld [vmem:[%s0 + $0xa4] sm:$0xf]
  %v56 = vld [vmem:[%s0 + $0xa8] sm:$0xf]
  %v57 = vld [vmem:[%s0 + $0xac] sm:$0xf]
  %v58 = vld [vmem:[%s0 + $0xb0] sm:$0xf]
  %v59 = vld [vmem:[%s0 + $0xb4] sm:$0xf]
  %v60 = vld [vmem:[%s0 + $0xb8] sm:$0xf]
  %v61 = vld [vmem:[%s0 + $0xbc] sm:$0xf]
  %v62 = vld [vmem:[%s0 + $0xc0] sm:$0xf]
  %v63 = vld [vmem:[%s0 + $0xc4] sm:$0xf]
  %v64 = vld [vmem:[%s0 + $0xc8] sm:$0xf]
  %v65 = vld [vmem:[%s0 + $0xcc] sm:$0xf]
  %v66 = vld [vmem:[%s0 + $0xd0] sm:$0xf]
  %v67 = vld [vmem:[%s0 + $0xd4] sm:$0xf]
  %v68 = vld [vmem:[%s0 + $0xd8] sm:$0xf]
  %v69 = vld [vmem:[%s0 + $0xdc] sm:$0xf]
  %v70 = vld [vmem:[%s0 + $0xe0] sm:$0xf]
  %v71 = vld [vmem:[%s0 + $0xe4] sm:$0xf]
  %v72 = vld [vmem:[%s0 + $0xe8] sm:$0xf]
  %v73 = vld [vmem:[%s0 + $0xec] sm:$0xf]
  %v74 = vld [vmem:[%s0 + $0xf0] sm:$0xf]
  %v75 = vld [vmem:[%s0 + $0xf4] sm:$0xf]
  %v76 = vld [vmem:[%s0 + $0xf8] sm:$0xf]
  %v77 = vld [vmem:[%s0 + $0xfc] sm:$0xf]
  %v78 = vld [vmem:[%s1] sm:$0xf]
  %v79 = vld [vmem:[%s1 + $0x4] sm:$0xf]
  %v80 = vld [vmem:[%s1 + $0x8] sm:$0xf]
  %v81 = vld [vmem:[%s1 + $0xc] sm:$0xf]
  %v82 = vld [vmem:[%s1 + $0x10] sm:$0xf]
  %v83 = vld [vmem:[%s1 + $0x14] sm:$0xf]
  %v84 = vld [vmem:[%s1 + $0x18] sm:$0xf]
  %v85 = vld [vmem:[%s1 + $0x1c] sm:$0xf]
  %v86 = vld [vmem:[%s1 + $0x20] sm:$0xf]
  %v87 = vld [vmem:[%s1 + $0x24] sm:$0xf]
  %v88 = vld [vmem:[%s1 + $0x28] sm:$0xf]
  %v89 = vld [vmem:[%s1 + $0x2c] sm:$0xf]
  %v90 = vld [vmem:[%s1 + $0x30] sm:$0xf]
  %v91 = vld [vmem:[%s1 + $0x34] sm:$0xf]
  %v92 = vld [vmem:[%s1 + $0x38] sm:$0xf]
  %v93 = vld [vmem:[%s1 + $0x3c] sm:$0xf]
  %v94 = vld [vmem:[%s2] sm:$0x1]
  %v96 = vperm.slane %v94, 0
  %v162 = vunpack.c.l.b16 %v14
  %v163 = vunpack.c.l.b16 %v15
  %v164 = vunpack.c.l.b16 %v16
  %v165 = vunpack.c.l.b16 %v17
  %v166 = vunpack.c.l.b16 %v18
  %v167 = vunpack.c.l.b16 %v19
  %v168 = vunpack.c.l.b16 %v20
  %v169 = vunpack.c.l.b16 %v21
  %v170 = vunpack.c.l.b16 %v22
  %v171 = vunpack.c.l.b16 %v23
  %v172 = vunpack.c.l.b16 %v24
  %v173 = vunpack.c.l.b16 %v25
  %v174 = vunpack.c.l.b16 %v26
  %v175 = vunpack.c.l.b16 %v27
  %v176 = vunpack.c.l.b16 %v28
  %v177 = vunpack.c.l.b16 %v29
  %v178 = vunpack.c.l.b16 %v30
  %v179 = vunpack.c.l.b16 %v31
  %v180 = vunpack.c.l.b16 %v32
  %v181 = vunpack.c.l.b16 %v33
  %v182 = vunpack.c.l.b16 %v34
  %v183 = vunpack.c.l.b16 %v35
  %v184 = vunpack.c.l.b16 %v36
  %v185 = vunpack.c.l.b16 %v37
  %v186 = vunpack.c.l.b16 %v38
  %v187 = vunpack.c.l.b16 %v39
  %v188 = vunpack.c.l.b16 %v40
  %v189 = vunpack.c.l.b16 %v41
  %v190 = vunpack.c.l.b16 %v42
  %v191 = vunpack.c.l.b16 %v43
  %v192 = vunpack.c.l.b16 %v44
  %v193 = vunpack.c.l.b16 %v45
  %v194 = vunpack.c.l.b16 %v46
  %v195 = vunpack.c.l.b16 %v47
  %v196 = vunpack.c.l.b16 %v48
  %v197 = vunpack.c.l.b16 %v49
  %v198 = vunpack.c.l.b16 %v50
  %v199 = vunpack.c.l.b16 %v51
  %v200 = vunpack.c.l.b16 %v52
  %v201 = vunpack.c.l.b16 %v53
  %v202 = vunpack.c.l.b16 %v54
  %v203 = vunpack.c.l.b16 %v55
  %v204 = vunpack.c.l.b16 %v56
  %v205 = vunpack.c.l.b16 %v57
  %v206 = vunpack.c.l.b16 %v58
  %v207 = vunpack.c.l.b16 %v59
  %v208 = vunpack.c.l.b16 %v60
  %v209 = vunpack.c.l.b16 %v61
  %v210 = vunpack.c.l.b16 %v62
  %v211 = vunpack.c.l.b16 %v63
  %v212 = vunpack.c.l.b16 %v64
  %v213 = vunpack.c.l.b16 %v65
  %v214 = vunpack.c.l.b16 %v66
  %v215 = vunpack.c.l.b16 %v67
  %v216 = vunpack.c.l.b16 %v68
  %v217 = vunpack.c.l.b16 %v69
  %v218 = vunpack.c.l.b16 %v70
  %v219 = vunpack.c.l.b16 %v71
  %v220 = vunpack.c.l.b16 %v72
  %v221 = vunpack.c.l.b16 %v73
  %v222 = vunpack.c.l.b16 %v74
  %v223 = vunpack.c.l.b16 %v75
  %v224 = vunpack.c.l.b16 %v76
  %v225 = vunpack.c.l.b16 %v77
  %v226 = vpack.c.b16 %v163, %v162
  %v227 = vpack.c.b16 %v165, %v164
  %v228 = vpack.c.b16 %v167, %v166
  %v229 = vpack.c.b16 %v169, %v168
  %v230 = vpack.c.b16 %v171, %v170
  %v231 = vpack.c.b16 %v173, %v172
  %v232 = vpack.c.b16 %v175, %v174
  %v233 = vpack.c.b16 %v177, %v176
  %v234 = vpack.c.b16 %v179, %v178
  %v235 = vpack.c.b16 %v181, %v180
  %v236 = vpack.c.b16 %v183, %v182
  %v237 = vpack.c.b16 %v185, %v184
  %v238 = vpack.c.b16 %v187, %v186
  %v239 = vpack.c.b16 %v189, %v188
  %v240 = vpack.c.b16 %v191, %v190
  %v241 = vpack.c.b16 %v193, %v192
  %v242 = vpack.c.b16 %v195, %v194
  %v243 = vpack.c.b16 %v197, %v196
  %v244 = vpack.c.b16 %v199, %v198
  %v245 = vpack.c.b16 %v201, %v200
  %v246 = vpack.c.b16 %v203, %v202
  %v247 = vpack.c.b16 %v205, %v204
  %v248 = vpack.c.b16 %v207, %v206
  %v249 = vpack.c.b16 %v209, %v208
  %v250 = vpack.c.b16 %v211, %v210
  %v251 = vpack.c.b16 %v213, %v212
  %v252 = vpack.c.b16 %v215, %v214
  %v253 = vpack.c.b16 %v217, %v216
  %v254 = vpack.c.b16 %v219, %v218
  %v255 = vpack.c.b16 %v221, %v220
  %v256 = vpack.c.b16 %v223, %v222
  %v257 = vpack.c.b16 %v225, %v224
  %v306 = vunpack.c.l.b16 %v78
  %v307 = vunpack.c.l.b16 %v79
  %v308 = vunpack.c.l.b16 %v80
  %v309 = vunpack.c.l.b16 %v81
  %v310 = vunpack.c.l.b16 %v82
  %v311 = vunpack.c.l.b16 %v83
  %v312 = vunpack.c.l.b16 %v84
  %v313 = vunpack.c.l.b16 %v85
  %v314 = vunpack.c.l.b16 %v86
  %v315 = vunpack.c.l.b16 %v87
  %v316 = vunpack.c.l.b16 %v88
  %v317 = vunpack.c.l.b16 %v89
  %v318 = vunpack.c.l.b16 %v90
  %v319 = vunpack.c.l.b16 %v91
  %v320 = vunpack.c.l.b16 %v92
  %v321 = vunpack.c.l.b16 %v93
  %v322 = vpack.c.b16 %v307, %v306
  %v323 = vpack.c.b16 %v309, %v308
  %v324 = vpack.c.b16 %v311, %v310
  %v325 = vpack.c.b16 %v313, %v312
  %v326 = vpack.c.b16 %v315, %v314
  %v327 = vpack.c.b16 %v317, %v316
  %v328 = vpack.c.b16 %v319, %v318
  %v329 = vpack.c.b16 %v321, %v320
  %338 = vmatpush.bf16.msra.mxu0 %v329
  %339 = vmatpush.bf16.msra.mxu0 %v328
  %340 = vmatpush.bf16.msra.mxu0 %v327
  %341 = vmatpush.bf16.msra.mxu0 %v326
  %342 = vmatpush.bf16.msra.mxu0 %v325
  %343 = vmatpush.bf16.msra.mxu0 %v324
  %344 = vmatpush.bf16.msra.mxu0 %v323
  %345 = vmatpush.bf16.msra.mxu0 %v322
  %346 = vmatmul.bf16.gmra.mxu0 %v226
  %v347 = vpop.f32.mrf.mxu0
  %v348 = vadd.f32 %v96, %v347
  %v349 = vpop.f32.mrf.mxu0
  %v350 = vadd.f32 %v96, %v349
  %351 = vmatmul.bf16.gmra.mxu0 %v227
  %v352 = vpop.f32.mrf.mxu0
  %v353 = vadd.f32 %v96, %v352
  %v354 = vpop.f32.mrf.mxu0
  %v355 = vadd.f32 %v96, %v354
  %356 = vmatmul.bf16.gmra.mxu0 %v228
  %v357 = vpop.f32.mrf.mxu0
  %v358 = vadd.f32 %v96, %v357
  %v359 = vpop.f32.mrf.mxu0
  %v360 = vadd.f32 %v96, %v359
  %361 = vmatmul.bf16.gmra.mxu0 %v229
  %v362 = vpop.f32.mrf.mxu0
  %v363 = vadd.f32 %v96, %v362
  %v364 = vpop.f32.mrf.mxu0
  %v365 = vadd.f32 %v96, %v364
  %366 = vmatmul.bf16.gmra.mxu0 %v230
  %v367 = vpop.f32.mrf.mxu0
  %v368 = vadd.f32 %v96, %v367
  %v369 = vpop.f32.mrf.mxu0
  %v370 = vadd.f32 %v96, %v369
  %371 = vmatmul.bf16.gmra.mxu0 %v231
  %v372 = vpop.f32.mrf.mxu0
  %v373 = vadd.f32 %v96, %v372
  %v374 = vpop.f32.mrf.mxu0
  %v375 = vadd.f32 %v96, %v374
  %376 = vmatmul.bf16.gmra.mxu0 %v232
  %v377 = vpop.f32.mrf.mxu0
  %v378 = vadd.f32 %v96, %v377
  %v379 = vpop.f32.mrf.mxu0
  %v380 = vadd.f32 %v96, %v379
  %381 = vmatmul.bf16.gmra.mxu0 %v233
  %v382 = vpop.f32.mrf.mxu0
  %v383 = vadd.f32 %v96, %v382
  %v384 = vpop.f32.mrf.mxu0
  %v385 = vadd.f32 %v96, %v384
  %386 = vmatmul.bf16.gmra.mxu0 %v234
  %v387 = vpop.f32.mrf.mxu0
  %v388 = vadd.f32 %v96, %v387
  %v389 = vpop.f32.mrf.mxu0
  %v390 = vadd.f32 %v96, %v389
  %391 = vmatmul.bf16.gmra.mxu0 %v235
  %v392 = vpop.f32.mrf.mxu0
  %v393 = vadd.f32 %v96, %v392
  %v394 = vpop.f32.mrf.mxu0
  %v395 = vadd.f32 %v96, %v394
  %396 = vmatmul.bf16.gmra.mxu0 %v236
  %v397 = vpop.f32.mrf.mxu0
  %v398 = vadd.f32 %v96, %v397
  %v399 = vpop.f32.mrf.mxu0
  %v400 = vadd.f32 %v96, %v399
  %401 = vmatmul.bf16.gmra.mxu0 %v237
  %v402 = vpop.f32.mrf.mxu0
  %v403 = vadd.f32 %v96, %v402
  %v404 = vpop.f32.mrf.mxu0
  %v405 = vadd.f32 %v96, %v404
  %406 = vmatmul.bf16.gmra.mxu0 %v238
  %v407 = vpop.f32.mrf.mxu0
  %v408 = vadd.f32 %v96, %v407
  %v409 = vpop.f32.mrf.mxu0
  %v410 = vadd.f32 %v96, %v409
  %411 = vmatmul.bf16.gmra.mxu0 %v239
  %v412 = vpop.f32.mrf.mxu0
  %v413 = vadd.f32 %v96, %v412
  %v414 = vpop.f32.mrf.mxu0
  %v415 = vadd.f32 %v96, %v414
  %416 = vmatmul.bf16.gmra.mxu0 %v240
  %v417 = vpop.f32.mrf.mxu0
  %v418 = vadd.f32 %v96, %v417
  %v419 = vpop.f32.mrf.mxu0
  %v420 = vadd.f32 %v96, %v419
  %421 = vmatmul.bf16.gmra.mxu0 %v241
  %v422 = vpop.f32.mrf.mxu0
  %v423 = vadd.f32 %v96, %v422
  %v424 = vpop.f32.mrf.mxu0
  %v425 = vadd.f32 %v96, %v424
  %426 = vmatmul.bf16.gmra.mxu0 %v242
  %v427 = vpop.f32.mrf.mxu0
  %v428 = vadd.f32 %v96, %v427
  %v429 = vpop.f32.mrf.mxu0
  %v430 = vadd.f32 %v96, %v429
  %431 = vmatmul.bf16.gmra.mxu0 %v243
  %v432 = vpop.f32.mrf.mxu0
  %v433 = vadd.f32 %v96, %v432
  %v434 = vpop.f32.mrf.mxu0
  %v435 = vadd.f32 %v96, %v434
  %436 = vmatmul.bf16.gmra.mxu0 %v244
  %v437 = vpop.f32.mrf.mxu0
  %v438 = vadd.f32 %v96, %v437
  %v439 = vpop.f32.mrf.mxu0
  %v440 = vadd.f32 %v96, %v439
  %441 = vmatmul.bf16.gmra.mxu0 %v245
  %v442 = vpop.f32.mrf.mxu0
  %v443 = vadd.f32 %v96, %v442
  %v444 = vpop.f32.mrf.mxu0
  %v445 = vadd.f32 %v96, %v444
  %446 = vmatmul.bf16.gmra.mxu0 %v246
  %v447 = vpop.f32.mrf.mxu0
  %v448 = vadd.f32 %v96, %v447
  %v449 = vpop.f32.mrf.mxu0
  %v450 = vadd.f32 %v96, %v449
  %451 = vmatmul.bf16.gmra.mxu0 %v247
  %v452 = vpop.f32.mrf.mxu0
  %v453 = vadd.f32 %v96, %v452
  %v454 = vpop.f32.mrf.mxu0
  %v455 = vadd.f32 %v96, %v454
  %456 = vmatmul.bf16.gmra.mxu0 %v248
  %v457 = vpop.f32.mrf.mxu0
  %v458 = vadd.f32 %v96, %v457
  %v459 = vpop.f32.mrf.mxu0
  %v460 = vadd.f32 %v96, %v459
  %461 = vmatmul.bf16.gmra.mxu0 %v249
  %v462 = vpop.f32.mrf.mxu0
  %v463 = vadd.f32 %v96, %v462
  %v464 = vpop.f32.mrf.mxu0
  %v465 = vadd.f32 %v96, %v464
  %466 = vmatmul.bf16.gmra.mxu0 %v250
  %v467 = vpop.f32.mrf.mxu0
  %v468 = vadd.f32 %v96, %v467
  %v469 = vpop.f32.mrf.mxu0
  %v470 = vadd.f32 %v96, %v469
  %471 = vmatmul.bf16.gmra.mxu0 %v251
  %v472 = vpop.f32.mrf.mxu0
  %v473 = vadd.f32 %v96, %v472
  %v474 = vpop.f32.mrf.mxu0
  %v475 = vadd.f32 %v96, %v474
  %476 = vmatmul.bf16.gmra.mxu0 %v252
  %v477 = vpop.f32.mrf.mxu0
  %v478 = vadd.f32 %v96, %v477
  %v479 = vpop.f32.mrf.mxu0
  %v480 = vadd.f32 %v96, %v479
  %481 = vmatmul.bf16.gmra.mxu0 %v253
  %v482 = vpop.f32.mrf.mxu0
  %v483 = vadd.f32 %v96, %v482
  %v484 = vpop.f32.mrf.mxu0
  %v485 = vadd.f32 %v96, %v484
  %486 = vmatmul.bf16.gmra.mxu0 %v254
  %v487 = vpop.f32.mrf.mxu0
  %v488 = vadd.f32 %v96, %v487
  %v489 = vpop.f32.mrf.mxu0
  %v490 = vadd.f32 %v96, %v489
  %491 = vmatmul.bf16.gmra.mxu0 %v255
  %v492 = vpop.f32.mrf.mxu0
  %v493 = vadd.f32 %v96, %v492
  %v494 = vpop.f32.mrf.mxu0
  %v495 = vadd.f32 %v96, %v494
  %496 = vmatmul.bf16.gmra.mxu0 %v256
  %v497 = vpop.f32.mrf.mxu0
  %v498 = vadd.f32 %v96, %v497
  %v499 = vpop.f32.mrf.mxu0
  %v500 = vadd.f32 %v96, %v499
  %501 = vmatmul.bf16.gmra.mxu0 %v257
  %v502 = vpop.f32.mrf.mxu0
  %v503 = vadd.f32 %v96, %v502
  %v504 = vpop.f32.mrf.mxu0
  %v505 = vadd.f32 %v96, %v504
  %506 = vdwg.mxu0
  %vm507 = vcmp.gt.f32.partialorder %v348, 0.0
  %vm508 = vcmp.gt.f32.partialorder %v350, 0.0
  %vm509 = vcmp.gt.f32.partialorder %v353, 0.0
  %vm510 = vcmp.gt.f32.partialorder %v355, 0.0
  %vm511 = vcmp.gt.f32.partialorder %v358, 0.0
  %vm512 = vcmp.gt.f32.partialorder %v360, 0.0
  %vm513 = vcmp.gt.f32.partialorder %v363, 0.0
  %vm514 = vcmp.gt.f32.partialorder %v365, 0.0
  %vm515 = vcmp.gt.f32.partialorder %v368, 0.0
  %vm516 = vcmp.gt.f32.partialorder %v370, 0.0
  %vm517 = vcmp.gt.f32.partialorder %v373, 0.0
  %vm518 = vcmp.gt.f32.partialorder %v375, 0.0
  %vm519 = vcmp.gt.f32.partialorder %v378, 0.0
  %vm520 = vcmp.gt.f32.partialorder %v380, 0.0
  %vm521 = vcmp.gt.f32.partialorder %v383, 0.0
  %vm522 = vcmp.gt.f32.partialorder %v385, 0.0
  %vm523 = vcmp.gt.f32.partialorder %v388, 0.0
  %vm524 = vcmp.gt.f32.partialorder %v390, 0.0
  %vm525 = vcmp.gt.f32.partialorder %v393, 0.0
  %vm526 = vcmp.gt.f32.partialorder %v395, 0.0
  %vm527 = vcmp.gt.f32.partialorder %v398, 0.0
  %vm528 = vcmp.gt.f32.partialorder %v400, 0.0
  %vm529 = vcmp.gt.f32.partialorder %v403, 0.0
  %vm530 = vcmp.gt.f32.partialorder %v405, 0.0
  %vm531 = vcmp.gt.f32.partialorder %v408, 0.0
  %vm532 = vcmp.gt.f32.partialorder %v410, 0.0
  %vm533 = vcmp.gt.f32.partialorder %v413, 0.0
  %vm534 = vcmp.gt.f32.partialorder %v415, 0.0
  %vm535 = vcmp.gt.f32.partialorder %v418, 0.0
  %vm536 = vcmp.gt.f32.partialorder %v420, 0.0
  %vm537 = vcmp.gt.f32.partialorder %v423, 0.0
  %vm538 = vcmp.gt.f32.partialorder %v425, 0.0
  %vm539 = vcmp.gt.f32.partialorder %v428, 0.0
  %vm540 = vcmp.gt.f32.partialorder %v430, 0.0
  %vm541 = vcmp.gt.f32.partialorder %v433, 0.0
  %vm542 = vcmp.gt.f32.partialorder %v435, 0.0
  %vm543 = vcmp.gt.f32.partialorder %v438, 0.0
  %vm544 = vcmp.gt.f32.partialorder %v440, 0.0
  %vm545 = vcmp.gt.f32.partialorder %v443, 0.0
  %vm546 = vcmp.gt.f32.partialorder %v445, 0.0
  %vm547 = vcmp.gt.f32.partialorder %v448, 0.0
  %vm548 = vcmp.gt.f32.partialorder %v450, 0.0
  %vm549 = vcmp.gt.f32.partialorder %v453, 0.0
  %vm550 = vcmp.gt.f32.partialorder %v455, 0.0
  %vm551 = vcmp.gt.f32.partialorder %v458, 0.0
  %vm552 = vcmp.gt.f32.partialorder %v460, 0.0
  %vm553 = vcmp.gt.f32.partialorder %v463, 0.0
  %vm554 = vcmp.gt.f32.partialorder %v465, 0.0
  %vm555 = vcmp.gt.f32.partialorder %v468, 0.0
  %vm556 = vcmp.gt.f32.partialorder %v470, 0.0
  %vm557 = vcmp.gt.f32.partialorder %v473, 0.0
  %vm558 = vcmp.gt.f32.partialorder %v475, 0.0
  %vm559 = vcmp.gt.f32.partialorder %v478, 0.0
  %vm560 = vcmp.gt.f32.partialorder %v480, 0.0
  %vm561 = vcmp.gt.f32.partialorder %v483, 0.0
  %vm562 = vcmp.gt.f32.partialorder %v485, 0.0
  %vm563 = vcmp.gt.f32.partialorder %v488, 0.0
  %vm564 = vcmp.gt.f32.partialorder %v490, 0.0
  %vm565 = vcmp.gt.f32.partialorder %v493, 0.0
  %vm566 = vcmp.gt.f32.partialorder %v495, 0.0
  %vm567 = vcmp.gt.f32.partialorder %v498, 0.0
  %vm568 = vcmp.gt.f32.partialorder %v500, 0.0
  %vm569 = vcmp.gt.f32.partialorder %v503, 0.0
  %vm570 = vcmp.gt.f32.partialorder %v505, 0.0
  %v571 = vmul.f32 %v348, 0.2
  %v572 = vmul.f32 %v350, 0.2
  %v573 = vmul.f32 %v353, 0.2
  %v574 = vmul.f32 %v355, 0.2
  %v575 = vmul.f32 %v358, 0.2
  %v576 = vmul.f32 %v360, 0.2
  %v577 = vmul.f32 %v363, 0.2
  %v578 = vmul.f32 %v365, 0.2
  %v579 = vmul.f32 %v368, 0.2
  %v580 = vmul.f32 %v370, 0.2
  %v581 = vmul.f32 %v373, 0.2
  %v582 = vmul.f32 %v375, 0.2
  %v583 = vmul.f32 %v378, 0.2
  %v584 = vmul.f32 %v380, 0.2
  %v585 = vmul.f32 %v383, 0.2
  %v586 = vmul.f32 %v385, 0.2
  %v587 = vmul.f32 %v388, 0.2
  %v588 = vmul.f32 %v390, 0.2
  %v589 = vmul.f32 %v393, 0.2
  %v590 = vmul.f32 %v395, 0.2
  %v591 = vmul.f32 %v398, 0.2
  %v592 = vmul.f32 %v400, 0.2
  %v593 = vmul.f32 %v403, 0.2
  %v594 = vmul.f32 %v405, 0.2
  %v595 = vmul.f32 %v408, 0.2
  %v596 = vmul.f32 %v410, 0.2
  %v597 = vmul.f32 %v413, 0.2
  %v598 = vmul.f32 %v415, 0.2
  %v599 = vmul.f32 %v418, 0.2
  %v600 = vmul.f32 %v420, 0.2
  %v601 = vmul.f32 %v423, 0.2
  %v602 = vmul.f32 %v425, 0.2
  %v603 = vmul.f32 %v428, 0.2
  %v604 = vmul.f32 %v430, 0.2
  %v605 = vmul.f32 %v433, 0.2
  %v606 = vmul.f32 %v435, 0.2
  %v607 = vmul.f32 %v438, 0.2
  %v608 = vmul.f32 %v440, 0.2
  %v609 = vmul.f32 %v443, 0.2
  %v610 = vmul.f32 %v445, 0.2
  %v611 = vmul.f32 %v448, 0.2
  %v612 = vmul.f32 %v450, 0.2
  %v613 = vmul.f32 %v453, 0.2
  %v614 = vmul.f32 %v455, 0.2
  %v615 = vmul.f32 %v458, 0.2
  %v616 = vmul.f32 %v460, 0.2
  %v617 = vmul.f32 %v463, 0.2
  %v618 = vmul.f32 %v465, 0.2
  %v619 = vmul.f32 %v468, 0.2
  %v620 = vmul.f32 %v470, 0.2
  %v621 = vmul.f32 %v473, 0.2
  %v622 = vmul.f32 %v475, 0.2
  %v623 = vmul.f32 %v478, 0.2
  %v624 = vmul.f32 %v480, 0.2
  %v625 = vmul.f32 %v483, 0.2
  %v626 = vmul.f32 %v485, 0.2
  %v627 = vmul.f32 %v488, 0.2
  %v628 = vmul.f32 %v490, 0.2
  %v629 = vmul.f32 %v493, 0.2
  %v630 = vmul.f32 %v495, 0.2
  %v631 = vmul.f32 %v498, 0.2
  %v632 = vmul.f32 %v500, 0.2
  %v633 = vmul.f32 %v503, 0.2
  %v634 = vmul.f32 %v505, 0.2
  %v635 = vsel %vm507, %v348, %v571
  %v636 = vsel %vm508, %v350, %v572
  %v637 = vsel %vm509, %v353, %v573
  %v638 = vsel %vm510, %v355, %v574
  %v639 = vsel %vm511, %v358, %v575
  %v640 = vsel %vm512, %v360, %v576
  %v641 = vsel %vm513, %v363, %v577
  %v642 = vsel %vm514, %v365, %v578
  %v643 = vsel %vm515, %v368, %v579
  %v644 = vsel %vm516, %v370, %v580
  %v645 = vsel %vm517, %v373, %v581
  %v646 = vsel %vm518, %v375, %v582
  %v647 = vsel %vm519, %v378, %v583
  %v648 = vsel %vm520, %v380, %v584
  %v649 = vsel %vm521, %v383, %v585
  %v650 = vsel %vm522, %v385, %v586
  %v651 = vsel %vm523, %v388, %v587
  %v652 = vsel %vm524, %v390, %v588
  %v653 = vsel %vm525, %v393, %v589
  %v654 = vsel %vm526, %v395, %v590
  %v655 = vsel %vm527, %v398, %v591
  %v656 = vsel %vm528, %v400, %v592
  %v657 = vsel %vm529, %v403, %v593
  %v658 = vsel %vm530, %v405, %v594
  %v659 = vsel %vm531, %v408, %v595
  %v660 = vsel %vm532, %v410, %v596
  %v661 = vsel %vm533, %v413, %v597
  %v662 = vsel %vm534, %v415, %v598
  %v663 = vsel %vm535, %v418, %v599
  %v664 = vsel %vm536, %v420, %v600
  %v665 = vsel %vm537, %v423, %v601
  %v666 = vsel %vm538, %v425, %v602
  %v667 = vsel %vm539, %v428, %v603
  %v668 = vsel %vm540, %v430, %v604
  %v669 = vsel %vm541, %v433, %v605
  %v670 = vsel %vm542, %v435, %v606
  %v671 = vsel %vm543, %v438, %v607
  %v672 = vsel %vm544, %v440, %v608
  %v673 = vsel %vm545, %v443, %v609
  %v674 = vsel %vm546, %v445, %v610
  %v675 = vsel %vm547, %v448, %v611
  %v676 = vsel %vm548, %v450, %v612
  %v677 = vsel %vm549, %v453, %v613
  %v678 = vsel %vm550, %v455, %v614
  %v679 = vsel %vm551, %v458, %v615
  %v680 = vsel %vm552, %v460, %v616
  %v681 = vsel %vm553, %v463, %v617
  %v682 = vsel %vm554, %v465, %v618
  %v683 = vsel %vm555, %v468, %v619
  %v684 = vsel %vm556, %v470, %v620
  %v685 = vsel %vm557, %v473, %v621
  %v686 = vsel %vm558, %v475, %v622
  %v687 = vsel %vm559, %v478, %v623
  %v688 = vsel %vm560, %v480, %v624
  %v689 = vsel %vm561, %v483, %v625
  %v690 = vsel %vm562, %v485, %v626
  %v691 = vsel %vm563, %v488, %v627
  %v692 = vsel %vm564, %v490, %v628
  %v693 = vsel %vm565, %v493, %v629
  %v694 = vsel %vm566, %v495, %v630
  %v695 = vsel %vm567, %v498, %v631
  %v696 = vsel %vm568, %v500, %v632
  %v697 = vsel %vm569, %v503, %v633
  %v698 = vsel %vm570, %v505, %v634
  %v699 = vpack.c.bf16 %v635, %v635
  %v700 = vpack.c.bf16 %v636, %v636
  %v701 = vpack.c.bf16 %v637, %v637
  %v702 = vpack.c.bf16 %v638, %v638
  %v703 = vpack.c.bf16 %v639, %v639
  %v704 = vpack.c.bf16 %v640, %v640
  %v705 = vpack.c.bf16 %v641, %v641
  %v706 = vpack.c.bf16 %v642, %v642
  %v707 = vpack.c.bf16 %v643, %v643
  %v708 = vpack.c.bf16 %v644, %v644
  %v709 = vpack.c.bf16 %v645, %v645
  %v710 = vpack.c.bf16 %v646, %v646
  %v711 = vpack.c.bf16 %v647, %v647
  %v712 = vpack.c.bf16 %v648, %v648
  %v713 = vpack.c.bf16 %v649, %v649
  %v714 = vpack.c.bf16 %v650, %v650
  %v715 = vpack.c.bf16 %v651, %v651
  %v716 = vpack.c.bf16 %v652, %v652
  %v717 = vpack.c.bf16 %v653, %v653
  %v718 = vpack.c.bf16 %v654, %v654
  %v719 = vpack.c.bf16 %v655, %v655
  %v720 = vpack.c.bf16 %v656, %v656
  %v721 = vpack.c.bf16 %v657, %v657
  %v722 = vpack.c.bf16 %v658, %v658
  %v723 = vpack.c.bf16 %v659, %v659
  %v724 = vpack.c.bf16 %v660, %v660
  %v725 = vpack.c.bf16 %v661, %v661
  %v726 = vpack.c.bf16 %v662, %v662
  %v727 = vpack.c.bf16 %v663, %v663
  %v728 = vpack.c.bf16 %v664, %v664
  %v729 = vpack.c.bf16 %v665, %v665
  %v730 = vpack.c.bf16 %v666, %v666
  %v731 = vpack.c.bf16 %v667, %v667
  %v732 = vpack.c.bf16 %v668, %v668
  %v733 = vpack.c.bf16 %v669, %v669
  %v734 = vpack.c.bf16 %v670, %v670
  %v735 = vpack.c.bf16 %v671, %v671
  %v736 = vpack.c.bf16 %v672, %v672
  %v737 = vpack.c.bf16 %v673, %v673
  %v738 = vpack.c.bf16 %v674, %v674
  %v739 = vpack.c.bf16 %v675, %v675
  %v740 = vpack.c.bf16 %v676, %v676
  %v741 = vpack.c.bf16 %v677, %v677
  %v742 = vpack.c.bf16 %v678, %v678
  %v743 = vpack.c.bf16 %v679, %v679
  %v744 = vpack.c.bf16 %v680, %v680
  %v745 = vpack.c.bf16 %v681, %v681
  %v746 = vpack.c.bf16 %v682, %v682
  %v747 = vpack.c.bf16 %v683, %v683
  %v748 = vpack.c.bf16 %v684, %v684
  %v749 = vpack.c.bf16 %v685, %v685
  %v750 = vpack.c.bf16 %v686, %v686
  %v751 = vpack.c.bf16 %v687, %v687
  %v752 = vpack.c.bf16 %v688, %v688
  %v753 = vpack.c.bf16 %v689, %v689
  %v754 = vpack.c.bf16 %v690, %v690
  %v755 = vpack.c.bf16 %v691, %v691
  %v756 = vpack.c.bf16 %v692, %v692
  %v757 = vpack.c.bf16 %v693, %v693
  %v758 = vpack.c.bf16 %v694, %v694
  %v759 = vpack.c.bf16 %v695, %v695
  %v760 = vpack.c.bf16 %v696, %v696
  %v761 = vpack.c.bf16 %v697, %v697
  %v762 = vpack.c.bf16 %v698, %v698
  %vm763 = vcmask 519168
  %764 = vst.msk [vmem:[%s3] sm:$0xf] %vm763, %v699
  %765 = vst.msk [vmem:[%s3 + $0x4] sm:$0xf] %vm763, %v700
  %766 = vst.msk [vmem:[%s3 + $0x8] sm:$0xf] %vm763, %v701
  %767 = vst.msk [vmem:[%s3 + $0xc] sm:$0xf] %vm763, %v702
  %768 = vst.msk [vmem:[%s3 + $0x10] sm:$0xf] %vm763, %v703
  %769 = vst.msk [vmem:[%s3 + $0x14] sm:$0xf] %vm763, %v704
  %770 = vst.msk [vmem:[%s3 + $0x18] sm:$0xf] %vm763, %v705
  %771 = vst.msk [vmem:[%s3 + $0x1c] sm:$0xf] %vm763, %v706
  %772 = vst.msk [vmem:[%s3 + $0x20] sm:$0xf] %vm763, %v707
  %773 = vst.msk [vmem:[%s3 + $0x24] sm:$0xf] %vm763, %v708
  %774 = vst.msk [vmem:[%s3 + $0x28] sm:$0xf] %vm763, %v709
  %775 = vst.msk [vmem:[%s3 + $0x2c] sm:$0xf] %vm763, %v710
  %776 = vst.msk [vmem:[%s3 + $0x30] sm:$0xf] %vm763, %v711
  %777 = vst.msk [vmem:[%s3 + $0x34] sm:$0xf] %vm763, %v712
  %778 = vst.msk [vmem:[%s3 + $0x38] sm:$0xf] %vm763, %v713
  %779 = vst.msk [vmem:[%s3 + $0x3c] sm:$0xf] %vm763, %v714
  %780 = vst.msk [vmem:[%s3 + $0x40] sm:$0xf] %vm763, %v715
  %781 = vst.msk [vmem:[%s3 + $0x44] sm:$0xf] %vm763, %v716
  %782 = vst.msk [vmem:[%s3 + $0x48] sm:$0xf] %vm763, %v717
  %783 = vst.msk [vmem:[%s3 + $0x4c] sm:$0xf] %vm763, %v718
  %784 = vst.msk [vmem:[%s3 + $0x50] sm:$0xf] %vm763, %v719
  %785 = vst.msk [vmem:[%s3 + $0x54] sm:$0xf] %vm763, %v720
  %786 = vst.msk [vmem:[%s3 + $0x58] sm:$0xf] %vm763, %v721
  %787 = vst.msk [vmem:[%s3 + $0x5c] sm:$0xf] %vm763, %v722
  %788 = vst.msk [vmem:[%s3 + $0x60] sm:$0xf] %vm763, %v723
  %789 = vst.msk [vmem:[%s3 + $0x64] sm:$0xf] %vm763, %v724
  %790 = vst.msk [vmem:[%s3 + $0x68] sm:$0xf] %vm763, %v725
  %791 = vst.msk [vmem:[%s3 + $0x6c] sm:$0xf] %vm763, %v726
  %792 = vst.msk [vmem:[%s3 + $0x70] sm:$0xf] %vm763, %v727
  %793 = vst.msk [vmem:[%s3 + $0x74] sm:$0xf] %vm763, %v728
  %794 = vst.msk [vmem:[%s3 + $0x78] sm:$0xf] %vm763, %v729
  %795 = vst.msk [vmem:[%s3 + $0x7c] sm:$0xf] %vm763, %v730
  %796 = vst.msk [vmem:[%s3 + $0x80] sm:$0xf] %vm763, %v731
  %797 = vst.msk [vmem:[%s3 + $0x84] sm:$0xf] %vm763, %v732
  %798 = vst.msk [vmem:[%s3 + $0x88] sm:$0xf] %vm763, %v733
  %799 = vst.msk [vmem:[%s3 + $0x8c] sm:$0xf] %vm763, %v734
  %800 = vst.msk [vmem:[%s3 + $0x90] sm:$0xf] %vm763, %v735
  %801 = vst.msk [vmem:[%s3 + $0x94] sm:$0xf] %vm763, %v736
  %802 = vst.msk [vmem:[%s3 + $0x98] sm:$0xf] %vm763, %v737
  %803 = vst.msk [vmem:[%s3 + $0x9c] sm:$0xf] %vm763, %v738
  %804 = vst.msk [vmem:[%s3 + $0xa0] sm:$0xf] %vm763, %v739
  %805 = vst.msk [vmem:[%s3 + $0xa4] sm:$0xf] %vm763, %v740
  %806 = vst.msk [vmem:[%s3 + $0xa8] sm:$0xf] %vm763, %v741
  %807 = vst.msk [vmem:[%s3 + $0xac] sm:$0xf] %vm763, %v742
  %808 = vst.msk [vmem:[%s3 + $0xb0] sm:$0xf] %vm763, %v743
  %809 = vst.msk [vmem:[%s3 + $0xb4] sm:$0xf] %vm763, %v744
  %810 = vst.msk [vmem:[%s3 + $0xb8] sm:$0xf] %vm763, %v745
  %811 = vst.msk [vmem:[%s3 + $0xbc] sm:$0xf] %vm763, %v746
  %812 = vst.msk [vmem:[%s3 + $0xc0] sm:$0xf] %vm763, %v747
  %813 = vst.msk [vmem:[%s3 + $0xc4] sm:$0xf] %vm763, %v748
  %814 = vst.msk [vmem:[%s3 + $0xc8] sm:$0xf] %vm763, %v749
  %815 = vst.msk [vmem:[%s3 + $0xcc] sm:$0xf] %vm763, %v750
  %816 = vst.msk [vmem:[%s3 + $0xd0] sm:$0xf] %vm763, %v751
  %817 = vst.msk [vmem:[%s3 + $0xd4] sm:$0xf] %vm763, %v752
  %818 = vst.msk [vmem:[%s3 + $0xd8] sm:$0xf] %vm763, %v753
  %819 = vst.msk [vmem:[%s3 + $0xdc] sm:$0xf] %vm763, %v754
  %820 = vst.msk [vmem:[%s3 + $0xe0] sm:$0xf] %vm763, %v755
  %821 = vst.msk [vmem:[%s3 + $0xe4] sm:$0xf] %vm763, %v756
  %822 = vst.msk [vmem:[%s3 + $0xe8] sm:$0xf] %vm763, %v757
  %823 = vst.msk [vmem:[%s3 + $0xec] sm:$0xf] %vm763, %v758
  %824 = vst.msk [vmem:[%s3 + $0xf0] sm:$0xf] %vm763, %v759
  %825 = vst.msk [vmem:[%s3 + $0xf4] sm:$0xf] %vm763, %v760
  %826 = vst.msk [vmem:[%s3 + $0xf8] sm:$0xf] %vm763, %v761
  %827 = vst.msk [vmem:[%s3 + $0xfc] sm:$0xf] %vm763, %v762
  // Predicated region
  $region14: #{discriminator_pallas.5} parent=0 // pred_check
    _
  $region15: #{discriminator_pallas.5} parent=0 // pred_check_branch
    %829 = sbr.rel (0) target = $region17
  $region16: #{discriminator_pallas.5} parent=0 // pred_region
    _
  $region17: #{discriminator_pallas.5} parent=0 // pred_fallthru
    _
  // Predicated region
  $region18: #{discriminator_pallas.5} parent=0 // pred_check
    _
  $region19: #{discriminator_pallas.5} parent=0 // pred_check_branch
    %831 = sbr.rel (0) target = $region21
  $region20: #{discriminator_pallas.5} parent=0 // pred_region
    _
  $region21: #{discriminator_pallas.5} parent=0 // pred_fallthru
    _

// kernel: discriminator_pallas.6
$region0: #{discriminator_pallas.6}
  #allocation0 [shape = 'u32[]', space=smem, size = 0x4, offset = 0x4, fixed_abs, tag = 'smem constant byte address 0x4 - core index']
  #allocation1 [shape = 'u32[72,128]{1,0:T(1,128)}', space=vmem, size = 0x9000, scoped, tag = 'internal scratch']
  #allocation2 [shape = 'f32[1,128]{1,0:T(1,128)}', space=vmem, size = 0x200, scoped, tag = 'scratch operand']
  #allocation3 [shape = 'f32[1,128]{1,0:T(1,128)}', space=vmem, size = 0x200, scoped, tag = 'scratch operand']
  %s0 = inlined_call_operand.vmem [shape: bf16[128,1024], index: 0, kind: input, shape index: {}]
  %s1 = inlined_call_operand.vmem [shape: bf16[1024,128], index: 1, kind: input, shape index: {}]
  %s2 = inlined_call_operand.vmem [shape: f32[1,128], index: 2, kind: input, shape index: {}]
  %s3 = inlined_call_operand.vmem [shape: f32[1,128], index: 3, kind: input, shape index: {}]
  %s4 = inlined_call_operand.vmem [shape: f32[1,128], index: 4, kind: input, shape index: {}]
  %s5 = inlined_call_operand.vmem [shape: bf16[128,128], index: 5, kind: output, shape index: {}]
  %s6 = sld [smem:[#allocation0]]
  $region38: #{discriminator_pallas.6} parent=0
    _
  %s8 = ssub.s32 1, %s6
  %s9 = scalar_select 0, %s8, %s6
  // Predicated region
  $region2: #{discriminator_pallas.6} parent=0 // pred_check
    _
  $region3: #{discriminator_pallas.6} parent=0 // pred_check_branch
    %11 = sbr.rel (0) target = $region5
  $region4: #{discriminator_pallas.6} parent=0 // pred_region
    _
  $region5: #{discriminator_pallas.6} parent=0 // pred_fallthru
    _
  // Predicated region
  $region6: #{discriminator_pallas.6} parent=0 // pred_check
    _
  $region7: #{discriminator_pallas.6} parent=0 // pred_check_branch
    %13 = sbr.rel (0) target = $region9
  $region8: #{discriminator_pallas.6} parent=0 // pred_region
    _
  $region9: #{discriminator_pallas.6} parent=0 // pred_fallthru
    _
  // Predicated region
  $region10: #{discriminator_pallas.6} parent=0 // pred_check
    _
  $region11: #{discriminator_pallas.6} parent=0 // pred_check_branch
    %15 = sbr.rel (0) target = $region13
  $region12: #{discriminator_pallas.6} parent=0 // pred_region
    _
  $region13: #{discriminator_pallas.6} parent=0 // pred_fallthru
    _
  // Predicated region
  $region14: #{discriminator_pallas.6} parent=0 // pred_check
    _
  $region15: #{discriminator_pallas.6} parent=0 // pred_check_branch
    %17 = sbr.rel (0) target = $region17
  $region16: #{discriminator_pallas.6} parent=0 // pred_region
    _
  $region17: #{discriminator_pallas.6} parent=0 // pred_fallthru
    _
  // Predicated region
  $region18: #{discriminator_pallas.6} parent=0 // pred_check
    _
  $region19: #{discriminator_pallas.6} parent=0 // pred_check_branch
    %19 = sbr.rel (0) target = $region21
  $region20: #{discriminator_pallas.6} parent=0 // pred_region
    _
  $region21: #{discriminator_pallas.6} parent=0 // pred_fallthru
    _
  %p20 = scmp.eq.s32.totalorder 0, 0
  // Predicated region
  $region22: #{discriminator_pallas.6} parent=0 // pred_check
    %p21 = pneg %p20
  $region23: #{discriminator_pallas.6} parent=0 // pred_check_branch
    %23 = sbr.rel (%p21) target = $region25
  $region24: #{discriminator_pallas.6} parent=0 // pred_region
    %24 = vst [vmem:[#allocation2] sm:$0x1] 0.0
    %25 = vst [vmem:[#allocation3] sm:$0x1] 0.0
  $region25: #{discriminator_pallas.6} parent=0 // pred_fallthru
    _
  %v26 = vld [vmem:[%s0] sm:$0xff]
  %v27 = vld [vmem:[%s0 + $0x8] sm:$0xff]
  %v28 = vld [vmem:[%s0 + $0x10] sm:$0xff]
  %v29 = vld [vmem:[%s0 + $0x18] sm:$0xff]
  %v30 = vld [vmem:[%s0 + $0x20] sm:$0xff]
  %v31 = vld [vmem:[%s0 + $0x28] sm:$0xff]
  %v32 = vld [vmem:[%s0 + $0x30] sm:$0xff]
  %v33 = vld [vmem:[%s0 + $0x38] sm:$0xff]
  %v34 = vld [vmem:[%s0 + $0x40] sm:$0xff]
  %v35 = vld [vmem:[%s0 + $0x48] sm:$0xff]
  %v36 = vld [vmem:[%s0 + $0x50] sm:$0xff]
  %v37 = vld [vmem:[%s0 + $0x58] sm:$0xff]
  %v38 = vld [vmem:[%s0 + $0x60] sm:$0xff]
  %v39 = vld [vmem:[%s0 + $0x68] sm:$0xff]
  %v40 = vld [vmem:[%s0 + $0x70] sm:$0xff]
  %v41 = vld [vmem:[%s0 + $0x78] sm:$0xff]
  %v42 = vld [vmem:[%s0 + $0x80] sm:$0xff]
  %v43 = vld [vmem:[%s0 + $0x88] sm:$0xff]
  %v44 = vld [vmem:[%s0 + $0x90] sm:$0xff]
  %v45 = vld [vmem:[%s0 + $0x98] sm:$0xff]
  %v46 = vld [vmem:[%s0 + $0xa0] sm:$0xff]
  %v47 = vld [vmem:[%s0 + $0xa8] sm:$0xff]
  %v48 = vld [vmem:[%s0 + $0xb0] sm:$0xff]
  %v49 = vld [vmem:[%s0 + $0xb8] sm:$0xff]
  %v50 = vld [vmem:[%s0 + $0xc0] sm:$0xff]
  %v51 = vld [vmem:[%s0 + $0xc8] sm:$0xff]
  %v52 = vld [vmem:[%s0 + $0xd0] sm:$0xff]
  %v53 = vld [vmem:[%s0 + $0xd8] sm:$0xff]
  %v54 = vld [vmem:[%s0 + $0xe0] sm:$0xff]
  %v55 = vld [vmem:[%s0 + $0xe8] sm:$0xff]
  %v56 = vld [vmem:[%s0 + $0xf0] sm:$0xff]
  %v57 = vld [vmem:[%s0 + $0xf8] sm:$0xff]
  %v58 = vld [vmem:[%s0 + $0x100] sm:$0xff]
  %v59 = vld [vmem:[%s0 + $0x108] sm:$0xff]
  %v60 = vld [vmem:[%s0 + $0x110] sm:$0xff]
  %v61 = vld [vmem:[%s0 + $0x118] sm:$0xff]
  %v62 = vld [vmem:[%s0 + $0x120] sm:$0xff]
  %v63 = vld [vmem:[%s0 + $0x128] sm:$0xff]
  %v64 = vld [vmem:[%s0 + $0x130] sm:$0xff]
  %v65 = vld [vmem:[%s0 + $0x138] sm:$0xff]
  %v66 = vld [vmem:[%s0 + $0x140] sm:$0xff]
  %v67 = vld [vmem:[%s0 + $0x148] sm:$0xff]
  %v68 = vld [vmem:[%s0 + $0x150] sm:$0xff]
  %v69 = vld [vmem:[%s0 + $0x158] sm:$0xff]
  %v70 = vld [vmem:[%s0 + $0x160] sm:$0xff]
  %v71 = vld [vmem:[%s0 + $0x168] sm:$0xff]
  %v72 = vld [vmem:[%s0 + $0x170] sm:$0xff]
  %v73 = vld [vmem:[%s0 + $0x178] sm:$0xff]
  %v74 = vld [vmem:[%s0 + $0x180] sm:$0xff]
  %v75 = vld [vmem:[%s0 + $0x188] sm:$0xff]
  %v76 = vld [vmem:[%s0 + $0x190] sm:$0xff]
  %v77 = vld [vmem:[%s0 + $0x198] sm:$0xff]
  %v78 = vld [vmem:[%s0 + $0x1a0] sm:$0xff]
  %v79 = vld [vmem:[%s0 + $0x1a8] sm:$0xff]
  %v80 = vld [vmem:[%s0 + $0x1b0] sm:$0xff]
  %v81 = vld [vmem:[%s0 + $0x1b8] sm:$0xff]
  %v82 = vld [vmem:[%s0 + $0x1c0] sm:$0xff]
  %v83 = vld [vmem:[%s0 + $0x1c8] sm:$0xff]
  %v84 = vld [vmem:[%s0 + $0x1d0] sm:$0xff]
  %v85 = vld [vmem:[%s0 + $0x1d8] sm:$0xff]
  %v86 = vld [vmem:[%s0 + $0x1e0] sm:$0xff]
  %v87 = vld [vmem:[%s0 + $0x1e8] sm:$0xff]
  %v88 = vld [vmem:[%s0 + $0x1f0] sm:$0xff]
  %v89 = vld [vmem:[%s0 + $0x1f8] sm:$0xff]
  %v90 = vld [vmem:[%s1] sm:$0xf]
  %v91 = vld [vmem:[%s1 + $0x4] sm:$0xf]
  %v92 = vld [vmem:[%s1 + $0x8] sm:$0xf]
  %v93 = vld [vmem:[%s1 + $0xc] sm:$0xf]
  %v94 = vld [vmem:[%s1 + $0x10] sm:$0xf]
  %v95 = vld [vmem:[%s1 + $0x14] sm:$0xf]
  %v96 = vld [vmem:[%s1 + $0x18] sm:$0xf]
  %v97 = vld [vmem:[%s1 + $0x1c] sm:$0xf]
  %v98 = vld [vmem:[%s1 + $0x20] sm:$0xf]
  %v99 = vld [vmem:[%s1 + $0x24] sm:$0xf]
  %v100 = vld [vmem:[%s1 + $0x28] sm:$0xf]
  %v101 = vld [vmem:[%s1 + $0x2c] sm:$0xf]
  %v102 = vld [vmem:[%s1 + $0x30] sm:$0xf]
  %v103 = vld [vmem:[%s1 + $0x34] sm:$0xf]
  %v104 = vld [vmem:[%s1 + $0x38] sm:$0xf]
  %v105 = vld [vmem:[%s1 + $0x3c] sm:$0xf]
  %v106 = vld [vmem:[%s1 + $0x40] sm:$0xf]
  %v107 = vld [vmem:[%s1 + $0x44] sm:$0xf]
  %v108 = vld [vmem:[%s1 + $0x48] sm:$0xf]
  %v109 = vld [vmem:[%s1 + $0x4c] sm:$0xf]
  %v110 = vld [vmem:[%s1 + $0x50] sm:$0xf]
  %v111 = vld [vmem:[%s1 + $0x54] sm:$0xf]
  %v112 = vld [vmem:[%s1 + $0x58] sm:$0xf]
  %v113 = vld [vmem:[%s1 + $0x5c] sm:$0xf]
  %v114 = vld [vmem:[%s1 + $0x60] sm:$0xf]
  %v115 = vld [vmem:[%s1 + $0x64] sm:$0xf]
  %v116 = vld [vmem:[%s1 + $0x68] sm:$0xf]
  %v117 = vld [vmem:[%s1 + $0x6c] sm:$0xf]
  %v118 = vld [vmem:[%s1 + $0x70] sm:$0xf]
  %v119 = vld [vmem:[%s1 + $0x74] sm:$0xf]
  %v120 = vld [vmem:[%s1 + $0x78] sm:$0xf]
  %v121 = vld [vmem:[%s1 + $0x7c] sm:$0xf]
  %v122 = vld [vmem:[%s1 + $0x80] sm:$0xf]
  %v123 = vld [vmem:[%s1 + $0x84] sm:$0xf]
  %v124 = vld [vmem:[%s1 + $0x88] sm:$0xf]
  %v125 = vld [vmem:[%s1 + $0x8c] sm:$0xf]
  %v126 = vld [vmem:[%s1 + $0x90] sm:$0xf]
  %v127 = vld [vmem:[%s1 + $0x94] sm:$0xf]
  %v128 = vld [vmem:[%s1 + $0x98] sm:$0xf]
  %v129 = vld [vmem:[%s1 + $0x9c] sm:$0xf]
  %v130 = vld [vmem:[%s1 + $0xa0] sm:$0xf]
  %v131 = vld [vmem:[%s1 + $0xa4] sm:$0xf]
  %v132 = vld [vmem:[%s1 + $0xa8] sm:$0xf]
  %v133 = vld [vmem:[%s1 + $0xac] sm:$0xf]
  %v134 = vld [vmem:[%s1 + $0xb0] sm:$0xf]
  %v135 = vld [vmem:[%s1 + $0xb4] sm:$0xf]
  %v136 = vld [vmem:[%s1 + $0xb8] sm:$0xf]
  %v137 = vld [vmem:[%s1 + $0xbc] sm:$0xf]
  %v138 = vld [vmem:[%s1 + $0xc0] sm:$0xf]
  %v139 = vld [vmem:[%s1 + $0xc4] sm:$0xf]
  %v140 = vld [vmem:[%s1 + $0xc8] sm:$0xf]
  %v141 = vld [vmem:[%s1 + $0xcc] sm:$0xf]
  %v142 = vld [vmem:[%s1 + $0xd0] sm:$0xf]
  %v143 = vld [vmem:[%s1 + $0xd4] sm:$0xf]
  %v144 = vld [vmem:[%s1 + $0xd8] sm:$0xf]
  %v145 = vld [vmem:[%s1 + $0xdc] sm:$0xf]
  %v146 = vld [vmem:[%s1 + $0xe0] sm:$0xf]
  %v147 = vld [vmem:[%s1 + $0xe4] sm:$0xf]
  %v148 = vld [vmem:[%s1 + $0xe8] sm:$0xf]
  %v149 = vld [vmem:[%s1 + $0xec] sm:$0xf]
  %v150 = vld [vmem:[%s1 + $0xf0] sm:$0xf]
  %v151 = vld [vmem:[%s1 + $0xf4] sm:$0xf]
  %v152 = vld [vmem:[%s1 + $0xf8] sm:$0xf]
  %v153 = vld [vmem:[%s1 + $0xfc] sm:$0xf]
  %v154 = vld [vmem:[%s1 + $0x100] sm:$0xf]
  %v155 = vld [vmem:[%s1 + $0x104] sm:$0xf]
  %v156 = vld [vmem:[%s1 + $0x108] sm:$0xf]
  %v157 = vld [vmem:[%s1 + $0x10c] sm:$0xf]
  %v158 = vld [vmem:[%s1 + $0x110] sm:$0xf]
  %v159 = vld [vmem:[%s1 + $0x114] sm:$0xf]
  %v160 = vld [vmem:[%s1 + $0x118] sm:$0xf]
  %v161 = vld [vmem:[%s1 + $0x11c] sm:$0xf]
  %v162 = vld [vmem:[%s1 + $0x120] sm:$0xf]
  %v163 = vld [vmem:[%s1 + $0x124] sm:$0xf]
  %v164 = vld [vmem:[%s1 + $0x128] sm:$0xf]
  %v165 = vld [vmem:[%s1 + $0x12c] sm:$0xf]
  %v166 = vld [vmem:[%s1 + $0x130] sm:$0xf]
  %v167 = vld [vmem:[%s1 + $0x134] sm:$0xf]
  %v168 = vld [vmem:[%s1 + $0x138] sm:$0xf]
  %v169 = vld [vmem:[%s1 + $0x13c] sm:$0xf]
  %v170 = vld [vmem:[%s1 + $0x140] sm:$0xf]
  %v171 = vld [vmem:[%s1 + $0x144] sm:$0xf]
  %v172 = vld [vmem:[%s1 + $0x148] sm:$0xf]
  %v173 = vld [vmem:[%s1 + $0x14c] sm:$0xf]
  %v174 = vld [vmem:[%s1 + $0x150] sm:$0xf]
  %v175 = vld [vmem:[%s1 + $0x154] sm:$0xf]
  %v176 = vld [vmem:[%s1 + $0x158] sm:$0xf]
  %v177 = vld [vmem:[%s1 + $0x15c] sm:$0xf]
  %v178 = vld [vmem:[%s1 + $0x160] sm:$0xf]
  %v179 = vld [vmem:[%s1 + $0x164] sm:$0xf]
  %v180 = vld [vmem:[%s1 + $0x168] sm:$0xf]
  %v181 = vld [vmem:[%s1 + $0x16c] sm:$0xf]
  %v182 = vld [vmem:[%s1 + $0x170] sm:$0xf]
  %v183 = vld [vmem:[%s1 + $0x174] sm:$0xf]
  %v184 = vld [vmem:[%s1 + $0x178] sm:$0xf]
  %v185 = vld [vmem:[%s1 + $0x17c] sm:$0xf]
  %v186 = vld [vmem:[%s1 + $0x180] sm:$0xf]
  %v187 = vld [vmem:[%s1 + $0x184] sm:$0xf]
  %v188 = vld [vmem:[%s1 + $0x188] sm:$0xf]
  %v189 = vld [vmem:[%s1 + $0x18c] sm:$0xf]
  %v190 = vld [vmem:[%s1 + $0x190] sm:$0xf]
  %v191 = vld [vmem:[%s1 + $0x194] sm:$0xf]
  %v192 = vld [vmem:[%s1 + $0x198] sm:$0xf]
  %v193 = vld [vmem:[%s1 + $0x19c] sm:$0xf]
  %v194 = vld [vmem:[%s1 + $0x1a0] sm:$0xf]
  %v195 = vld [vmem:[%s1 + $0x1a4] sm:$0xf]
  %v196 = vld [vmem:[%s1 + $0x1a8] sm:$0xf]
  %v197 = vld [vmem:[%s1 + $0x1ac] sm:$0xf]
  %v198 = vld [vmem:[%s1 + $0x1b0] sm:$0xf]
  %v199 = vld [vmem:[%s1 + $0x1b4] sm:$0xf]
  %v200 = vld [vmem:[%s1 + $0x1b8] sm:$0xf]
  %v201 = vld [vmem:[%s1 + $0x1bc] sm:$0xf]
  %v202 = vld [vmem:[%s1 + $0x1c0] sm:$0xf]
  %v203 = vld [vmem:[%s1 + $0x1c4] sm:$0xf]
  %v204 = vld [vmem:[%s1 + $0x1c8] sm:$0xf]
  %v205 = vld [vmem:[%s1 + $0x1cc] sm:$0xf]
  %v206 = vld [vmem:[%s1 + $0x1d0] sm:$0xf]
  %v207 = vld [vmem:[%s1 + $0x1d4] sm:$0xf]
  %v208 = vld [vmem:[%s1 + $0x1d8] sm:$0xf]
  %v209 = vld [vmem:[%s1 + $0x1dc] sm:$0xf]
  %v210 = vld [vmem:[%s1 + $0x1e0] sm:$0xf]
  %v211 = vld [vmem:[%s1 + $0x1e4] sm:$0xf]
  %v212 = vld [vmem:[%s1 + $0x1e8] sm:$0xf]
  %v213 = vld [vmem:[%s1 + $0x1ec] sm:$0xf]
  %v214 = vld [vmem:[%s1 + $0x1f0] sm:$0xf]
  %v215 = vld [vmem:[%s1 + $0x1f4] sm:$0xf]
  %v216 = vld [vmem:[%s1 + $0x1f8] sm:$0xf]
  %v217 = vld [vmem:[%s1 + $0x1fc] sm:$0xf]
  %v218 = vld [vmem:[%s2] sm:$0x1]
  %v220 = vperm.slane %v218, 0
  %v286 = vunpack.c.l.b16 %v26
  %v287 = vunpack.c.h.b16 %v26
  %v288 = vunpack.c.l.b16 %v27
  %v289 = vunpack.c.h.b16 %v27
  %v290 = vunpack.c.l.b16 %v28
  %v291 = vunpack.c.h.b16 %v28
  %v292 = vunpack.c.l.b16 %v29
  %v293 = vunpack.c.h.b16 %v29
  %v294 = vunpack.c.l.b16 %v30
  %v295 = vunpack.c.h.b16 %v30
  %v296 = vunpack.c.l.b16 %v31
  %v297 = vunpack.c.h.b16 %v31
  %v298 = vunpack.c.l.b16 %v32
  %v299 = vunpack.c.h.b16 %v32
  %v300 = vunpack.c.l.b16 %v33
  %v301 = vunpack.c.h.b16 %v33
  %v302 = vunpack.c.l.b16 %v34
  %v303 = vunpack.c.h.b16 %v34
  %v304 = vunpack.c.l.b16 %v35
  %v305 = vunpack.c.h.b16 %v35
  %v306 = vunpack.c.l.b16 %v36
  %v307 = vunpack.c.h.b16 %v36
  %v308 = vunpack.c.l.b16 %v37
  %v309 = vunpack.c.h.b16 %v37
  %v310 = vunpack.c.l.b16 %v38
  %v311 = vunpack.c.h.b16 %v38
  %v312 = vunpack.c.l.b16 %v39
  %v313 = vunpack.c.h.b16 %v39
  %v314 = vunpack.c.l.b16 %v40
  %v315 = vunpack.c.h.b16 %v40
  %v316 = vunpack.c.l.b16 %v41
  %v317 = vunpack.c.h.b16 %v41
  %v318 = vunpack.c.l.b16 %v42
  %v319 = vunpack.c.h.b16 %v42
  %v320 = vunpack.c.l.b16 %v43
  %v321 = vunpack.c.h.b16 %v43
  %v322 = vunpack.c.l.b16 %v44
  %v323 = vunpack.c.h.b16 %v44
  %v324 = vunpack.c.l.b16 %v45
  %v325 = vunpack.c.h.b16 %v45
  %v326 = vunpack.c.l.b16 %v46
  %v327 = vunpack.c.h.b16 %v46
  %v328 = vunpack.c.l.b16 %v47
  %v329 = vunpack.c.h.b16 %v47
  %v330 = vunpack.c.l.b16 %v48
  %v331 = vunpack.c.h.b16 %v48
  %v332 = vunpack.c.l.b16 %v49
  %v333 = vunpack.c.h.b16 %v49
  %v334 = vunpack.c.l.b16 %v50
  %v335 = vunpack.c.h.b16 %v50
  %v336 = vunpack.c.l.b16 %v51
  %v337 = vunpack.c.h.b16 %v51
  %v338 = vunpack.c.l.b16 %v52
  %v339 = vunpack.c.h.b16 %v52
  %v340 = vunpack.c.l.b16 %v53
  %v341 = vunpack.c.h.b16 %v53
  %v342 = vunpack.c.l.b16 %v54
  %v343 = vunpack.c.h.b16 %v54
  %v344 = vunpack.c.l.b16 %v55
  %v345 = vunpack.c.h.b16 %v55
  %v346 = vunpack.c.l.b16 %v56
  %v347 = vunpack.c.h.b16 %v56
  %v348 = vunpack.c.l.b16 %v57
  %v349 = vunpack.c.h.b16 %v57
  %v350 = vunpack.c.l.b16 %v58
  %v351 = vunpack.c.h.b16 %v58
  %v352 = vunpack.c.l.b16 %v59
  %v353 = vunpack.c.h.b16 %v59
  %v354 = vunpack.c.l.b16 %v60
  %v355 = vunpack.c.h.b16 %v60
  %v356 = vunpack.c.l.b16 %v61
  %v357 = vunpack.c.h.b16 %v61
  %v358 = vunpack.c.l.b16 %v62
  %v359 = vunpack.c.h.b16 %v62
  %v360 = vunpack.c.l.b16 %v63
  %v361 = vunpack.c.h.b16 %v63
  %v362 = vunpack.c.l.b16 %v64
  %v363 = vunpack.c.h.b16 %v64
  %v364 = vunpack.c.l.b16 %v65
  %v365 = vunpack.c.h.b16 %v65
  %v366 = vunpack.c.l.b16 %v66
  %v367 = vunpack.c.h.b16 %v66
  %v368 = vunpack.c.l.b16 %v67
  %v369 = vunpack.c.h.b16 %v67
  %v370 = vunpack.c.l.b16 %v68
  %v371 = vunpack.c.h.b16 %v68
  %v372 = vunpack.c.l.b16 %v69
  %v373 = vunpack.c.h.b16 %v69
  %v374 = vunpack.c.l.b16 %v70
  %v375 = vunpack.c.h.b16 %v70
  %v376 = vunpack.c.l.b16 %v71
  %v377 = vunpack.c.h.b16 %v71
  %v378 = vunpack.c.l.b16 %v72
  %v379 = vunpack.c.h.b16 %v72
  %v380 = vunpack.c.l.b16 %v73
  %v381 = vunpack.c.h.b16 %v73
  %v382 = vunpack.c.l.b16 %v74
  %v383 = vunpack.c.h.b16 %v74
  %v384 = vunpack.c.l.b16 %v75
  %v385 = vunpack.c.h.b16 %v75
  %v386 = vunpack.c.l.b16 %v76
  %v387 = vunpack.c.h.b16 %v76
  %v388 = vunpack.c.l.b16 %v77
  %v389 = vunpack.c.h.b16 %v77
  %v390 = vunpack.c.l.b16 %v78
  %v391 = vunpack.c.h.b16 %v78
  %v392 = vunpack.c.l.b16 %v79
  %v393 = vunpack.c.h.b16 %v79
  %v394 = vunpack.c.l.b16 %v80
  %v395 = vunpack.c.h.b16 %v80
  %v396 = vunpack.c.l.b16 %v81
  %v397 = vunpack.c.h.b16 %v81
  %v398 = vunpack.c.l.b16 %v82
  %v399 = vunpack.c.h.b16 %v82
  %v400 = vunpack.c.l.b16 %v83
  %v401 = vunpack.c.h.b16 %v83
  %v402 = vunpack.c.l.b16 %v84
  %v403 = vunpack.c.h.b16 %v84
  %v404 = vunpack.c.l.b16 %v85
  %v405 = vunpack.c.h.b16 %v85
  %v406 = vunpack.c.l.b16 %v86
  %v407 = vunpack.c.h.b16 %v86
  %v408 = vunpack.c.l.b16 %v87
  %v409 = vunpack.c.h.b16 %v87
  %v410 = vunpack.c.l.b16 %v88
  %v411 = vunpack.c.h.b16 %v88
  %v412 = vunpack.c.l.b16 %v89
  %v413 = vunpack.c.h.b16 %v89
  %v414 = vpack.c.b16 %v294, %v286
  %v415 = vpack.c.b16 %v295, %v287
  %v416 = vpack.c.b16 %v296, %v288
  %v417 = vpack.c.b16 %v297, %v289
  %v418 = vpack.c.b16 %v298, %v290
  %v419 = vpack.c.b16 %v299, %v291
  %v420 = vpack.c.b16 %v300, %v292
  %v421 = vpack.c.b16 %v301, %v293
  %v422 = vpack.c.b16 %v310, %v302
  %v423 = vpack.c.b16 %v311, %v303
  %v424 = vpack.c.b16 %v312, %v304
  %v425 = vpack.c.b16 %v313, %v305
  %v426 = vpack.c.b16 %v314, %v306
  %v427 = vpack.c.b16 %v315, %v307
  %v428 = vpack.c.b16 %v316, %v308
  %v429 = vpack.c.b16 %v317, %v309
  %v430 = vpack.c.b16 %v326, %v318
  %v431 = vpack.c.b16 %v327, %v319
  %v432 = vpack.c.b16 %v328, %v320
  %v433 = vpack.c.b16 %v329, %v321
  %v434 = vpack.c.b16 %v330, %v322
  %v435 = vpack.c.b16 %v331, %v323
  %v436 = vpack.c.b16 %v332, %v324
  %v437 = vpack.c.b16 %v333, %v325
  %v438 = vpack.c.b16 %v342, %v334
  %v439 = vpack.c.b16 %v343, %v335
  %v440 = vpack.c.b16 %v344, %v336
  %v441 = vpack.c.b16 %v345, %v337
  %v442 = vpack.c.b16 %v346, %v338
  %v443 = vpack.c.b16 %v347, %v339
  %v444 = vpack.c.b16 %v348, %v340
  %v445 = vpack.c.b16 %v349, %v341
  %v446 = vpack.c.b16 %v358, %v350
  %v447 = vpack.c.b16 %v359, %v351
  %v448 = vpack.c.b16 %v360, %v352
  %v449 = vpack.c.b16 %v361, %v353
  %v450 = vpack.c.b16 %v362, %v354
  %v451 = vpack.c.b16 %v363, %v355
  %v452 = vpack.c.b16 %v364, %v356
  %v453 = vpack.c.b16 %v365, %v357
  %v454 = vpack.c.b16 %v374, %v366
  %v455 = vpack.c.b16 %v375, %v367
  %v456 = vpack.c.b16 %v376, %v368
  %v457 = vpack.c.b16 %v377, %v369
  %v458 = vpack.c.b16 %v378, %v370
  %v459 = vpack.c.b16 %v379, %v371
  %v460 = vpack.c.b16 %v380, %v372
  %v461 = vpack.c.b16 %v381, %v373
  %v462 = vpack.c.b16 %v390, %v382
  %v463 = vpack.c.b16 %v391, %v383
  %v464 = vpack.c.b16 %v392, %v384
  %v465 = vpack.c.b16 %v393, %v385
  %v466 = vpack.c.b16 %v394, %v386
  %v467 = vpack.c.b16 %v395, %v387
  %v468 = vpack.c.b16 %v396, %v388
  %v469 = vpack.c.b16 %v397, %v389
  %v470 = vpack.c.b16 %v406, %v398
  %v471 = vpack.c.b16 %v407, %v399
  %v472 = vpack.c.b16 %v408, %v400
  %v473 = vpack.c.b16 %v409, %v401
  %v474 = vpack.c.b16 %v410, %v402
  %v475 = vpack.c.b16 %v411, %v403
  %v476 = vpack.c.b16 %v412, %v404
  %v477 = vpack.c.b16 %v413, %v405
  %v670 = vunpack.c.l.b16 %v90
  %v671 = vunpack.c.l.b16 %v91
  %v672 = vunpack.c.l.b16 %v92
  %v673 = vunpack.c.l.b16 %v93
  %v674 = vunpack.c.l.b16 %v94
  %v675 = vunpack.c.l.b16 %v95
  %v676 = vunpack.c.l.b16 %v96
  %v677 = vunpack.c.l.b16 %v97
  %v678 = vunpack.c.l.b16 %v98
  %v679 = vunpack.c.l.b16 %v99
  %v680 = vunpack.c.l.b16 %v100
  %v681 = vunpack.c.l.b16 %v101
  %v682 = vunpack.c.l.b16 %v102
  %v683 = vunpack.c.l.b16 %v103
  %v684 = vunpack.c.l.b16 %v104
  %v685 = vunpack.c.l.b16 %v105
  %v686 = vunpack.c.l.b16 %v106
  %v687 = vunpack.c.l.b16 %v107
  %v688 = vunpack.c.l.b16 %v108
  %v689 = vunpack.c.l.b16 %v109
  %v690 = vunpack.c.l.b16 %v110
  %v691 = vunpack.c.l.b16 %v111
  %v692 = vunpack.c.l.b16 %v112
  %v693 = vunpack.c.l.b16 %v113
  %v694 = vunpack.c.l.b16 %v114
  %v695 = vunpack.c.l.b16 %v115
  %v696 = vunpack.c.l.b16 %v116
  %v697 = vunpack.c.l.b16 %v117
  %v698 = vunpack.c.l.b16 %v118
  %v699 = vunpack.c.l.b16 %v119
  %v700 = vunpack.c.l.b16 %v120
  %v701 = vunpack.c.l.b16 %v121
  %v702 = vunpack.c.l.b16 %v122
  %v703 = vunpack.c.l.b16 %v123
  %v704 = vunpack.c.l.b16 %v124
  %v705 = vunpack.c.l.b16 %v125
  %v706 = vunpack.c.l.b16 %v126
  %v707 = vunpack.c.l.b16 %v127
  %v708 = vunpack.c.l.b16 %v128
  %v709 = vunpack.c.l.b16 %v129
  %v710 = vunpack.c.l.b16 %v130
  %v711 = vunpack.c.l.b16 %v131
  %v712 = vunpack.c.l.b16 %v132
  %v713 = vunpack.c.l.b16 %v133
  %v714 = vunpack.c.l.b16 %v134
  %v715 = vunpack.c.l.b16 %v135
  %v716 = vunpack.c.l.b16 %v136
  %v717 = vunpack.c.l.b16 %v137
  %v718 = vunpack.c.l.b16 %v138
  %v719 = vunpack.c.l.b16 %v139
  %v720 = vunpack.c.l.b16 %v140
  %v721 = vunpack.c.l.b16 %v141
  %v722 = vunpack.c.l.b16 %v142
  %v723 = vunpack.c.l.b16 %v143
  %v724 = vunpack.c.l.b16 %v144
  %v725 = vunpack.c.l.b16 %v145
  %v726 = vunpack.c.l.b16 %v146
  %v727 = vunpack.c.l.b16 %v147
  %v728 = vunpack.c.l.b16 %v148
  %v729 = vunpack.c.l.b16 %v149
  %v730 = vunpack.c.l.b16 %v150
  %v731 = vunpack.c.l.b16 %v151
  %v732 = vunpack.c.l.b16 %v152
  %v733 = vunpack.c.l.b16 %v153
  %v734 = vunpack.c.l.b16 %v154
  %v735 = vunpack.c.l.b16 %v155
  %v736 = vunpack.c.l.b16 %v156
  %v737 = vunpack.c.l.b16 %v157
  %v738 = vunpack.c.l.b16 %v158
  %v739 = vunpack.c.l.b16 %v159
  %v740 = vunpack.c.l.b16 %v160
  %v741 = vunpack.c.l.b16 %v161
  %v742 = vunpack.c.l.b16 %v162
  %v743 = vunpack.c.l.b16 %v163
  %v744 = vunpack.c.l.b16 %v164
  %v745 = vunpack.c.l.b16 %v165
  %v746 = vunpack.c.l.b16 %v166
  %v747 = vunpack.c.l.b16 %v167
  %v748 = vunpack.c.l.b16 %v168
  %v749 = vunpack.c.l.b16 %v169
  %v750 = vunpack.c.l.b16 %v170
  %v751 = vunpack.c.l.b16 %v171
  %v752 = vunpack.c.l.b16 %v172
  %v753 = vunpack.c.l.b16 %v173
  %v754 = vunpack.c.l.b16 %v174
  %v755 = vunpack.c.l.b16 %v175
  %v756 = vunpack.c.l.b16 %v176
  %v757 = vunpack.c.l.b16 %v177
  %v758 = vunpack.c.l.b16 %v178
  %v759 = vunpack.c.l.b16 %v179
  %v760 = vunpack.c.l.b16 %v180
  %v761 = vunpack.c.l.b16 %v181
  %v762 = vunpack.c.l.b16 %v182
  %v763 = vunpack.c.l.b16 %v183
  %v764 = vunpack.c.l.b16 %v184
  %v765 = vunpack.c.l.b16 %v185
  %v766 = vunpack.c.l.b16 %v186
  %v767 = vunpack.c.l.b16 %v187
  %v768 = vunpack.c.l.b16 %v188
  %v769 = vunpack.c.l.b16 %v189
  %v770 = vunpack.c.l.b16 %v190
  %v771 = vunpack.c.l.b16 %v191
  %v772 = vunpack.c.l.b16 %v192
  %v773 = vunpack.c.l.b16 %v193
  %v774 = vunpack.c.l.b16 %v194
  %v775 = vunpack.c.l.b16 %v195
  %v776 = vunpack.c.l.b16 %v196
  %v777 = vunpack.c.l.b16 %v197
  %v778 = vunpack.c.l.b16 %v198
  %v779 = vunpack.c.l.b16 %v199
  %v780 = vunpack.c.l.b16 %v200
  %v781 = vunpack.c.l.b16 %v201
  %v782 = vunpack.c.l.b16 %v202
  %v783 = vunpack.c.l.b16 %v203
  %v784 = vunpack.c.l.b16 %v204
  %v785 = vunpack.c.l.b16 %v205
  %v786 = vunpack.c.l.b16 %v206
  %v787 = vunpack.c.l.b16 %v207
  %v788 = vunpack.c.l.b16 %v208
  %v789 = vunpack.c.l.b16 %v209
  %v790 = vunpack.c.l.b16 %v210
  %v791 = vunpack.c.l.b16 %v211
  %v792 = vunpack.c.l.b16 %v212
  %v793 = vunpack.c.l.b16 %v213
  %v794 = vunpack.c.l.b16 %v214
  %v795 = vunpack.c.l.b16 %v215
  %v796 = vunpack.c.l.b16 %v216
  %v797 = vunpack.c.l.b16 %v217
  %v798 = vpack.c.b16 %v671, %v670
  %v799 = vpack.c.b16 %v673, %v672
  %v800 = vpack.c.b16 %v675, %v674
  %v801 = vpack.c.b16 %v677, %v676
  %v802 = vpack.c.b16 %v679, %v678
  %v803 = vpack.c.b16 %v681, %v680
  %v804 = vpack.c.b16 %v683, %v682
  %v805 = vpack.c.b16 %v685, %v684
  %v806 = vpack.c.b16 %v687, %v686
  %v807 = vpack.c.b16 %v689, %v688
  %v808 = vpack.c.b16 %v691, %v690
  %v809 = vpack.c.b16 %v693, %v692
  %v810 = vpack.c.b16 %v695, %v694
  %v811 = vpack.c.b16 %v697, %v696
  %v812 = vpack.c.b16 %v699, %v698
  %v813 = vpack.c.b16 %v701, %v700
  %v814 = vpack.c.b16 %v703, %v702
  %v815 = vpack.c.b16 %v705, %v704
  %v816 = vpack.c.b16 %v707, %v706
  %v817 = vpack.c.b16 %v709, %v708
  %v818 = vpack.c.b16 %v711, %v710
  %v819 = vpack.c.b16 %v713, %v712
  %v820 = vpack.c.b16 %v715, %v714
  %v821 = vpack.c.b16 %v717, %v716
  %v822 = vpack.c.b16 %v719, %v718
  %v823 = vpack.c.b16 %v721, %v720
  %v824 = vpack.c.b16 %v723, %v722
  %v825 = vpack.c.b16 %v725, %v724
  %v826 = vpack.c.b16 %v727, %v726
  %v827 = vpack.c.b16 %v729, %v728
  %v828 = vpack.c.b16 %v731, %v730
  %v829 = vpack.c.b16 %v733, %v732
  %v830 = vpack.c.b16 %v735, %v734
  %v831 = vpack.c.b16 %v737, %v736
  %v832 = vpack.c.b16 %v739, %v738
  %v833 = vpack.c.b16 %v741, %v740
  %v834 = vpack.c.b16 %v743, %v742
  %v835 = vpack.c.b16 %v745, %v744
  %v836 = vpack.c.b16 %v747, %v746
  %v837 = vpack.c.b16 %v749, %v748
  %v838 = vpack.c.b16 %v751, %v750
  %v839 = vpack.c.b16 %v753, %v752
  %v840 = vpack.c.b16 %v755, %v754
  %v841 = vpack.c.b16 %v757, %v756
  %v842 = vpack.c.b16 %v759, %v758
  %v843 = vpack.c.b16 %v761, %v760
  %v844 = vpack.c.b16 %v763, %v762
  %v845 = vpack.c.b16 %v765, %v764
  %v846 = vpack.c.b16 %v767, %v766
  %v847 = vpack.c.b16 %v769, %v768
  %v848 = vpack.c.b16 %v771, %v770
  %v849 = vpack.c.b16 %v773, %v772
  %v850 = vpack.c.b16 %v775, %v774
  %v851 = vpack.c.b16 %v777, %v776
  %v852 = vpack.c.b16 %v779, %v778
  %v853 = vpack.c.b16 %v781, %v780
  %v854 = vpack.c.b16 %v783, %v782
  %v855 = vpack.c.b16 %v785, %v784
  %v856 = vpack.c.b16 %v787, %v786
  %v857 = vpack.c.b16 %v789, %v788
  %v858 = vpack.c.b16 %v791, %v790
  %v859 = vpack.c.b16 %v793, %v792
  %v860 = vpack.c.b16 %v795, %v794
  %v861 = vpack.c.b16 %v797, %v796
  %926 = vmatpush.bf16.msra.mxu0 %v805
  %927 = vmatpush.bf16.msra.mxu0 %v804
  %928 = vmatpush.bf16.msra.mxu0 %v803
  %929 = vmatpush.bf16.msra.mxu0 %v802
  %930 = vmatpush.bf16.msra.mxu0 %v801
  %931 = vmatpush.bf16.msra.mxu0 %v800
  %932 = vmatpush.bf16.msra.mxu0 %v799
  %933 = vmatpush.bf16.msra.mxu0 %v798
  %934 = vmatmul.bf16.gmra.mxu0 %v414
  %v935 = vpop.f32.mrf.mxu0
  %v936 = vadd.f32 %v220, %v935
  %v937 = vpop.f32.mrf.mxu0
  %v938 = vadd.f32 %v220, %v937
  %939 = vmatmul.bf16.gmra.mxu0 %v422
  %v940 = vpop.f32.mrf.mxu0
  %v941 = vadd.f32 %v220, %v940
  %v942 = vpop.f32.mrf.mxu0
  %v943 = vadd.f32 %v220, %v942
  %944 = vmatmul.bf16.gmra.mxu0 %v430
  %v945 = vpop.f32.mrf.mxu0
  %v946 = vadd.f32 %v220, %v945
  %v947 = vpop.f32.mrf.mxu0
  %v948 = vadd.f32 %v220, %v947
  %949 = vmatmul.bf16.gmra.mxu0 %v438
  %v950 = vpop.f32.mrf.mxu0
  %v951 = vadd.f32 %v220, %v950
  %v952 = vpop.f32.mrf.mxu0
  %v953 = vadd.f32 %v220, %v952
  %954 = vmatmul.bf16.gmra.mxu0 %v446
  %v955 = vpop.f32.mrf.mxu0
  %v956 = vadd.f32 %v220, %v955
  %v957 = vpop.f32.mrf.mxu0
  %v958 = vadd.f32 %v220, %v957
  %959 = vmatmul.bf16.gmra.mxu0 %v454
  %v960 = vpop.f32.mrf.mxu0
  %v961 = vadd.f32 %v220, %v960
  %v962 = vpop.f32.mrf.mxu0
  %v963 = vadd.f32 %v220, %v962
  %964 = vmatmul.bf16.gmra.mxu0 %v462
  %v965 = vpop.f32.mrf.mxu0
  %v966 = vadd.f32 %v220, %v965
  %v967 = vpop.f32.mrf.mxu0
  %v968 = vadd.f32 %v220, %v967
  %969 = vmatmul.bf16.gmra.mxu0 %v470
  %v970 = vpop.f32.mrf.mxu0
  %v971 = vadd.f32 %v220, %v970
  %v972 = vpop.f32.mrf.mxu0
  %v973 = vadd.f32 %v220, %v972
  %974 = vdwg.mxu0
  %975 = vmatpush.bf16.msra.mxu0 %v813
  %976 = vmatpush.bf16.msra.mxu0 %v812
  %977 = vmatpush.bf16.msra.mxu0 %v811
  %978 = vmatpush.bf16.msra.mxu0 %v810
  %979 = vmatpush.bf16.msra.mxu0 %v809
  %980 = vmatpush.bf16.msra.mxu0 %v808
  %981 = vmatpush.bf16.msra.mxu0 %v807
  %982 = vmatpush.bf16.msra.mxu0 %v806
  %983 = vmatmul.bf16.gmra.mxu0 %v415
  %v984 = vpop.f32.mrf.mxu0
  %v985 = vadd.f32 %v936, %v984
  %v986 = vpop.f32.mrf.mxu0
  %v987 = vadd.f32 %v938, %v986
  %988 = vmatmul.bf16.gmra.mxu0 %v423
  %v989 = vpop.f32.mrf.mxu0
  %v990 = vadd.f32 %v941, %v989
  %v991 = vpop.f32.mrf.mxu0
  %v992 = vadd.f32 %v943, %v991
  %993 = vmatmul.bf16.gmra.mxu0 %v431
  %v994 = vpop.f32.mrf.mxu0
  %v995 = vadd.f32 %v946, %v994
  %v996 = vpop.f32.mrf.mxu0
  %v997 = vadd.f32 %v948, %v996
  %998 = vmatmul.bf16.gmra.mxu0 %v439
  %v999 = vpop.f32.mrf.mxu0
  %v1000 = vadd.f32 %v951, %v999
  %v1001 = vpop.f32.mrf.mxu0
  %v1002 = vadd.f32 %v953, %v1001
  %1003 = vmatmul.bf16.gmra.mxu0 %v447
  %v1004 = vpop.f32.mrf.mxu0
  %v1005 = vadd.f32 %v956, %v1004
  %v1006 = vpop.f32.mrf.mxu0
  %v1007 = vadd.f32 %v958, %v1006
  %1008 = vmatmul.bf16.gmra.mxu0 %v455
  %v1009 = vpop.f32.mrf.mxu0
  %v1010 = vadd.f32 %v961, %v1009
  %v1011 = vpop.f32.mrf.mxu0
  %v1012 = vadd.f32 %v963, %v1011
  %1013 = vmatmul.bf16.gmra.mxu0 %v463
  %v1014 = vpop.f32.mrf.mxu0
  %v1015 = vadd.f32 %v966, %v1014
  %v1016 = vpop.f32.mrf.mxu0
  %v1017 = vadd.f32 %v968, %v1016
  %1018 = vmatmul.bf16.gmra.mxu0 %v471
  %v1019 = vpop.f32.mrf.mxu0
  %v1020 = vadd.f32 %v971, %v1019
  %v1021 = vpop.f32.mrf.mxu0
  %v1022 = vadd.f32 %v973, %v1021
  %1023 = vdwg.mxu0
  %1024 = vmatpush.bf16.msra.mxu0 %v821
  %1025 = vmatpush.bf16.msra.mxu0 %v820
  %1026 = vmatpush.bf16.msra.mxu0 %v819
  %1027 = vmatpush.bf16.msra.mxu0 %v818
  %1028 = vmatpush.bf16.msra.mxu0 %v817
  %1029 = vmatpush.bf16.msra.mxu0 %v816
  %1030 = vmatpush.bf16.msra.mxu0 %v815
  %1031 = vmatpush.bf16.msra.mxu0 %v814
  %1032 = vmatmul.bf16.gmra.mxu0 %v416
  %v1033 = vpop.f32.mrf.mxu0
  %v1034 = vadd.f32 %v985, %v1033
  %v1035 = vpop.f32.mrf.mxu0
  %v1036 = vadd.f32 %v987, %v1035
  %1037 = vmatmul.bf16.gmra.mxu0 %v424
  %v1038 = vpop.f32.mrf.mxu0
  %v1039 = vadd.f32 %v990, %v1038
  %v1040 = vpop.f32.mrf.mxu0
  %v1041 = vadd.f32 %v992, %v1040
  %1042 = vmatmul.bf16.gmra.mxu0 %v432
  %v1043 = vpop.f32.mrf.mxu0
  %v1044 = vadd.f32 %v995, %v1043
  %v1045 = vpop.f32.mrf.mxu0
  %v1046 = vadd.f32 %v997, %v1045
  %1047 = vmatmul.bf16.gmra.mxu0 %v440
  %v1048 = vpop.f32.mrf.mxu0
  %v1049 = vadd.f32 %v1000, %v1048
  %v1050 = vpop.f32.mrf.mxu0
  %v1051 = vadd.f32 %v1002, %v1050
  %1052 = vmatmul.bf16.gmra.mxu0 %v448
  %v1053 = vpop.f32.mrf.mxu0
  %v1054 = vadd.f32 %v1005, %v1053
  %v1055 = vpop.f32.mrf.mxu0
  %v1056 = vadd.f32 %v1007, %v1055
  %1057 = vmatmul.bf16.gmra.mxu0 %v456
  %v1058 = vpop.f32.mrf.mxu0
  %v1059 = vadd.f32 %v1010, %v1058
  %v1060 = vpop.f32.mrf.mxu0
  %v1061 = vadd.f32 %v1012, %v1060
  %1062 = vmatmul.bf16.gmra.mxu0 %v464
  %v1063 = vpop.f32.mrf.mxu0
  %v1064 = vadd.f32 %v1015, %v1063
  %v1065 = vpop.f32.mrf.mxu0
  %v1066 = vadd.f32 %v1017, %v1065
  %1067 = vmatmul.bf16.gmra.mxu0 %v472
  %v1068 = vpop.f32.mrf.mxu0
  %v1069 = vadd.f32 %v1020, %v1068
  %v1070 = vpop.f32.mrf.mxu0
  %v1071 = vadd.f32 %v1022, %v1070
  %1072 = vdwg.mxu0
  %1073 = vmatpush.bf16.msra.mxu0 %v829
  %1074 = vmatpush.bf16.msra.mxu0 %v828
  %1075 = vmatpush.bf16.msra.mxu0 %v827
  %1076 = vmatpush.bf16.msra.mxu0 %v826
  %1077 = vmatpush.bf16.msra.mxu0 %v825
  %1078 = vmatpush.bf16.msra.mxu0 %v824
  %1079 = vmatpush.bf16.msra.mxu0 %v823
  %1080 = vmatpush.bf16.msra.mxu0 %v822
  %1081 = vmatmul.bf16.gmra.mxu0 %v417
  %v1082 = vpop.f32.mrf.mxu0
  %v1083 = vadd.f32 %v1034, %v1082
  %v1084 = vpop.f32.mrf.mxu0
  %v1085 = vadd.f32 %v1036, %v1084
  %1086 = vmatmul.bf16.gmra.mxu0 %v425
  %v1087 = vpop.f32.mrf.mxu0
  %v1088 = vadd.f32 %v1039, %v1087
  %v1089 = vpop.f32.mrf.mxu0
  %v1090 = vadd.f32 %v1041, %v1089
  %1091 = vmatmul.bf16.gmra.mxu0 %v433
  %v1092 = vpop.f32.mrf.mxu0
  %v1093 = vadd.f32 %v1044, %v1092
  %v1094 = vpop.f32.mrf.mxu0
  %v1095 = vadd.f32 %v1046, %v1094
  %1096 = vmatmul.bf16.gmra.mxu0 %v441
  %v1097 = vpop.f32.mrf.mxu0
  %v1098 = vadd.f32 %v1049, %v1097
  %v1099 = vpop.f32.mrf.mxu0
  %v1100 = vadd.f32 %v1051, %v1099
  %1101 = vmatmul.bf16.gmra.mxu0 %v449
  %v1102 = vpop.f32.mrf.mxu0
  %v1103 = vadd.f32 %v1054, %v1102
  %v1104 = vpop.f32.mrf.mxu0
  %v1105 = vadd.f32 %v1056, %v1104
  %1106 = vmatmul.bf16.gmra.mxu0 %v457
  %v1107 = vpop.f32.mrf.mxu0
  %v1108 = vadd.f32 %v1059, %v1107
  %v1109 = vpop.f32.mrf.mxu0
  %v1110 = vadd.f32 %v1061, %v1109
  %1111 = vmatmul.bf16.gmra.mxu0 %v465
  %v1112 = vpop.f32.mrf.mxu0
  %v1113 = vadd.f32 %v1064, %v1112
  %v1114 = vpop.f32.mrf.mxu0
  %v1115 = vadd.f32 %v1066, %v1114
  %1116 = vmatmul.bf16.gmra.mxu0 %v473
  %v1117 = vpop.f32.mrf.mxu0
  %v1118 = vadd.f32 %v1069, %v1117
  %v1119 = vpop.f32.mrf.mxu0
  %v1120 = vadd.f32 %v1071, %v1119
  %1121 = vdwg.mxu0
  %1122 = vmatpush.bf16.msra.mxu0 %v837
  %1123 = vmatpush.bf16.msra.mxu0 %v836
  %1124 = vmatpush.bf16.msra.mxu0 %v835
  %1125 = vmatpush.bf16.msra.mxu0 %v834
  %1126 = vmatpush.bf16.msra.mxu0 %v833
  %1127 = vmatpush.bf16.msra.mxu0 %v832
  %1128 = vmatpush.bf16.msra.mxu0 %v831
  %1129 = vmatpush.bf16.msra.mxu0 %v830
  %1130 = vmatmul.bf16.gmra.mxu0 %v418
  %v1131 = vpop.f32.mrf.mxu0
  %v1132 = vadd.f32 %v1083, %v1131
  %v1133 = vpop.f32.mrf.mxu0
  %v1134 = vadd.f32 %v1085, %v1133
  %1135 = vmatmul.bf16.gmra.mxu0 %v426
  %v1136 = vpop.f32.mrf.mxu0
  %v1137 = vadd.f32 %v1088, %v1136
  %v1138 = vpop.f32.mrf.mxu0
  %v1139 = vadd.f32 %v1090, %v1138
  %1140 = vmatmul.bf16.gmra.mxu0 %v434
  %v1141 = vpop.f32.mrf.mxu0
  %v1142 = vadd.f32 %v1093, %v1141
  %v1143 = vpop.f32.mrf.mxu0
  %v1144 = vadd.f32 %v1095, %v1143
  %1145 = vmatmul.bf16.gmra.mxu0 %v442
  %v1146 = vpop.f32.mrf.mxu0
  %v1147 = vadd.f32 %v1098, %v1146
  %v1148 = vpop.f32.mrf.mxu0
  %v1149 = vadd.f32 %v1100, %v1148
  %1150 = vmatmul.bf16.gmra.mxu0 %v450
  %v1151 = vpop.f32.mrf.mxu0
  %v1152 = vadd.f32 %v1103, %v1151
  %v1153 = vpop.f32.mrf.mxu0
  %v1154 = vadd.f32 %v1105, %v1153
  %1155 = vmatmul.bf16.gmra.mxu0 %v458
  %v1156 = vpop.f32.mrf.mxu0
  %v1157 = vadd.f32 %v1108, %v1156
  %v1158 = vpop.f32.mrf.mxu0
  %v1159 = vadd.f32 %v1110, %v1158
  %1160 = vmatmul.bf16.gmra.mxu0 %v466
  %v1161 = vpop.f32.mrf.mxu0
  %v1162 = vadd.f32 %v1113, %v1161
  %v1163 = vpop.f32.mrf.mxu0
  %v1164 = vadd.f32 %v1115, %v1163
  %1165 = vmatmul.bf16.gmra.mxu0 %v474
  %v1166 = vpop.f32.mrf.mxu0
  %v1167 = vadd.f32 %v1118, %v1166
  %v1168 = vpop.f32.mrf.mxu0
  %v1169 = vadd.f32 %v1120, %v1168
  %1170 = vdwg.mxu0
  %1171 = vmatpush.bf16.msra.mxu0 %v845
  %1172 = vmatpush.bf16.msra.mxu0 %v844
  %1173 = vmatpush.bf16.msra.mxu0 %v843
  %1174 = vmatpush.bf16.msra.mxu0 %v842
  %1175 = vmatpush.bf16.msra.mxu0 %v841
  %1176 = vmatpush.bf16.msra.mxu0 %v840
  %1177 = vmatpush.bf16.msra.mxu0 %v839
  %1178 = vmatpush.bf16.msra.mxu0 %v838
  %1179 = vmatmul.bf16.gmra.mxu0 %v419
  %v1180 = vpop.f32.mrf.mxu0
  %v1181 = vadd.f32 %v1132, %v1180
  %v1182 = vpop.f32.mrf.mxu0
  %v1183 = vadd.f32 %v1134, %v1182
  %1184 = vmatmul.bf16.gmra.mxu0 %v427
  %v1185 = vpop.f32.mrf.mxu0
  %v1186 = vadd.f32 %v1137, %v1185
  %v1187 = vpop.f32.mrf.mxu0
  %v1188 = vadd.f32 %v1139, %v1187
  %1189 = vmatmul.bf16.gmra.mxu0 %v435
  %v1190 = vpop.f32.mrf.mxu0
  %v1191 = vadd.f32 %v1142, %v1190
  %v1192 = vpop.f32.mrf.mxu0
  %v1193 = vadd.f32 %v1144, %v1192
  %1194 = vmatmul.bf16.gmra.mxu0 %v443
  %v1195 = vpop.f32.mrf.mxu0
  %v1196 = vadd.f32 %v1147, %v1195
  %v1197 = vpop.f32.mrf.mxu0
  %v1198 = vadd.f32 %v1149, %v1197
  %1199 = vmatmul.bf16.gmra.mxu0 %v451
  %v1200 = vpop.f32.mrf.mxu0
  %v1201 = vadd.f32 %v1152, %v1200
  %v1202 = vpop.f32.mrf.mxu0
  %v1203 = vadd.f32 %v1154, %v1202
  %1204 = vmatmul.bf16.gmra.mxu0 %v459
  %v1205 = vpop.f32.mrf.mxu0
  %v1206 = vadd.f32 %v1157, %v1205
  %v1207 = vpop.f32.mrf.mxu0
  %v1208 = vadd.f32 %v1159, %v1207
  %1209 = vmatmul.bf16.gmra.mxu0 %v467
  %v1210 = vpop.f32.mrf.mxu0
  %v1211 = vadd.f32 %v1162, %v1210
  %v1212 = vpop.f32.mrf.mxu0
  %v1213 = vadd.f32 %v1164, %v1212
  %1214 = vmatmul.bf16.gmra.mxu0 %v475
  %v1215 = vpop.f32.mrf.mxu0
  %v1216 = vadd.f32 %v1167, %v1215
  %v1217 = vpop.f32.mrf.mxu0
  %v1218 = vadd.f32 %v1169, %v1217
  %1219 = vdwg.mxu0
  %1220 = vmatpush.bf16.msra.mxu0 %v853
  %1221 = vmatpush.bf16.msra.mxu0 %v852
  %1222 = vmatpush.bf16.msra.mxu0 %v851
  %1223 = vmatpush.bf16.msra.mxu0 %v850
  %1224 = vmatpush.bf16.msra.mxu0 %v849
  %1225 = vmatpush.bf16.msra.mxu0 %v848
  %1226 = vmatpush.bf16.msra.mxu0 %v847
  %1227 = vmatpush.bf16.msra.mxu0 %v846
  %1228 = vmatmul.bf16.gmra.mxu0 %v420
  %v1229 = vpop.f32.mrf.mxu0
  %v1230 = vadd.f32 %v1181, %v1229
  %v1231 = vpop.f32.mrf.mxu0
  %v1232 = vadd.f32 %v1183, %v1231
  %1233 = vmatmul.bf16.gmra.mxu0 %v428
  %v1234 = vpop.f32.mrf.mxu0
  %v1235 = vadd.f32 %v1186, %v1234
  %v1236 = vpop.f32.mrf.mxu0
  %v1237 = vadd.f32 %v1188, %v1236
  %1238 = vmatmul.bf16.gmra.mxu0 %v436
  %v1239 = vpop.f32.mrf.mxu0
  %v1240 = vadd.f32 %v1191, %v1239
  %v1241 = vpop.f32.mrf.mxu0
  %v1242 = vadd.f32 %v1193, %v1241
  %1243 = vmatmul.bf16.gmra.mxu0 %v444
  %v1244 = vpop.f32.mrf.mxu0
  %v1245 = vadd.f32 %v1196, %v1244
  %v1246 = vpop.f32.mrf.mxu0
  %v1247 = vadd.f32 %v1198, %v1246
  %1248 = vmatmul.bf16.gmra.mxu0 %v452
  %v1249 = vpop.f32.mrf.mxu0
  %v1250 = vadd.f32 %v1201, %v1249
  %v1251 = vpop.f32.mrf.mxu0
  %v1252 = vadd.f32 %v1203, %v1251
  %1253 = vmatmul.bf16.gmra.mxu0 %v460
  %v1254 = vpop.f32.mrf.mxu0
  %v1255 = vadd.f32 %v1206, %v1254
  %v1256 = vpop.f32.mrf.mxu0
  %v1257 = vadd.f32 %v1208, %v1256
  %1258 = vmatmul.bf16.gmra.mxu0 %v468
  %v1259 = vpop.f32.mrf.mxu0
  %v1260 = vadd.f32 %v1211, %v1259
  %v1261 = vpop.f32.mrf.mxu0
  %v1262 = vadd.f32 %v1213, %v1261
  %1263 = vmatmul.bf16.gmra.mxu0 %v476
  %v1264 = vpop.f32.mrf.mxu0
  %v1265 = vadd.f32 %v1216, %v1264
  %v1266 = vpop.f32.mrf.mxu0
  %v1267 = vadd.f32 %v1218, %v1266
  %1268 = vdwg.mxu0
  %1269 = vmatpush.bf16.msra.mxu0 %v861
  %1270 = vmatpush.bf16.msra.mxu0 %v860
  %1271 = vmatpush.bf16.msra.mxu0 %v859
  %1272 = vmatpush.bf16.msra.mxu0 %v858
  %1273 = vmatpush.bf16.msra.mxu0 %v857
  %1274 = vmatpush.bf16.msra.mxu0 %v856
  %1275 = vmatpush.bf16.msra.mxu0 %v855
  %1276 = vmatpush.bf16.msra.mxu0 %v854
  %1277 = vmatmul.bf16.gmra.mxu0 %v421
  %v1278 = vpop.f32.mrf.mxu0
  %v1279 = vadd.f32 %v1230, %v1278
  %v1280 = vpop.f32.mrf.mxu0
  %v1281 = vadd.f32 %v1232, %v1280
  %1282 = vmatmul.bf16.gmra.mxu0 %v429
  %v1283 = vpop.f32.mrf.mxu0
  %v1284 = vadd.f32 %v1235, %v1283
  %v1285 = vpop.f32.mrf.mxu0
  %v1286 = vadd.f32 %v1237, %v1285
  %1287 = vmatmul.bf16.gmra.mxu0 %v437
  %v1288 = vpop.f32.mrf.mxu0
  %v1289 = vadd.f32 %v1240, %v1288
  %v1290 = vpop.f32.mrf.mxu0
  %v1291 = vadd.f32 %v1242, %v1290
  %1292 = vmatmul.bf16.gmra.mxu0 %v445
  %v1293 = vpop.f32.mrf.mxu0
  %v1294 = vadd.f32 %v1245, %v1293
  %v1295 = vpop.f32.mrf.mxu0
  %v1296 = vadd.f32 %v1247, %v1295
  %1297 = vmatmul.bf16.gmra.mxu0 %v453
  %v1298 = vpop.f32.mrf.mxu0
  %v1299 = vadd.f32 %v1250, %v1298
  %v1300 = vpop.f32.mrf.mxu0
  %v1301 = vadd.f32 %v1252, %v1300
  %1302 = vmatmul.bf16.gmra.mxu0 %v461
  %v1303 = vpop.f32.mrf.mxu0
  %v1304 = vadd.f32 %v1255, %v1303
  %v1305 = vpop.f32.mrf.mxu0
  %v1306 = vadd.f32 %v1257, %v1305
  %1307 = vmatmul.bf16.gmra.mxu0 %v469
  %v1308 = vpop.f32.mrf.mxu0
  %v1309 = vadd.f32 %v1260, %v1308
  %v1310 = vpop.f32.mrf.mxu0
  %v1311 = vadd.f32 %v1262, %v1310
  %1312 = vmatmul.bf16.gmra.mxu0 %v477
  %v1313 = vpop.f32.mrf.mxu0
  %v1314 = vadd.f32 %v1265, %v1313
  %v1315 = vpop.f32.mrf.mxu0
  %v1316 = vadd.f32 %v1267, %v1315
  %1317 = vdwg.mxu0
  %v1318 = vld [vmem:[#allocation2] sm:$0x1]
  %v1319 = vadd.f32 %v1279, %v1281
  %v1320 = vadd.f32 %v1319, %v1284
  %v1321 = vadd.f32 %v1320, %v1286
  %v1322 = vadd.f32 %v1321, %v1289
  %v1323 = vadd.f32 %v1322, %v1291
  %v1324 = vadd.f32 %v1323, %v1294
  %v1325 = vadd.f32 %v1324, %v1296
  %v1326 = vadd.f32 %v1325, %v1299
  %v1327 = vadd.f32 %v1326, %v1301
  %v1328 = vadd.f32 %v1327, %v1304
  %v1329 = vadd.f32 %v1328, %v1306
  %v1330 = vadd.f32 %v1329, %v1309
  %v1331 = vadd.f32 %v1330, %v1311
  %v1332 = vadd.f32 %v1331, %v1314
  %v1333 = vadd.f32 %v1332, %v1316
  %v1334 = vrot.slane %v1333, 4
  %v1335 = vadd.f32 %v1333, %v1334
  %v1336 = vrot.slane %v1335, 2
  %v1337 = vadd.f32 %v1335, %v1336
  %v1338 = vrot.slane %v1337, 1
  %v1339 = vadd.f32 %v1337, %v1338
  %v1340 = vadd.f32 %v1318, %v1339
  %1341 = vst [vmem:[#allocation2] sm:$0x1] %v1340
  %v1342 = vld [vmem:[#allocation3] sm:$0x1]
  %v1343 = vmul.f32 %v1279, %v1279
  %v1344 = vmul.f32 %v1281, %v1281
  %v1345 = vmul.f32 %v1284, %v1284
  %v1346 = vmul.f32 %v1286, %v1286
  %v1347 = vmul.f32 %v1289, %v1289
  %v1348 = vmul.f32 %v1291, %v1291
  %v1349 = vmul.f32 %v1294, %v1294
  %v1350 = vmul.f32 %v1296, %v1296
  %v1351 = vmul.f32 %v1299, %v1299
  %v1352 = vmul.f32 %v1301, %v1301
  %v1353 = vmul.f32 %v1304, %v1304
  %v1354 = vmul.f32 %v1306, %v1306
  %v1355 = vmul.f32 %v1309, %v1309
  %v1356 = vmul.f32 %v1311, %v1311
  %v1357 = vmul.f32 %v1314, %v1314
  %v1358 = vmul.f32 %v1316, %v1316
  %v1359 = vadd.f32 %v1343, %v1344
  %v1360 = vadd.f32 %v1359, %v1345
  %v1361 = vadd.f32 %v1360, %v1346
  %v1362 = vadd.f32 %v1361, %v1347
  %v1363 = vadd.f32 %v1362, %v1348
  %v1364 = vadd.f32 %v1363, %v1349
  %v1365 = vadd.f32 %v1364, %v1350
  %v1366 = vadd.f32 %v1365, %v1351
  %v1367 = vadd.f32 %v1366, %v1352
  %v1368 = vadd.f32 %v1367, %v1353
  %v1369 = vadd.f32 %v1368, %v1354
  %v1370 = vadd.f32 %v1369, %v1355
  %v1371 = vadd.f32 %v1370, %v1356
  %v1372 = vadd.f32 %v1371, %v1357
  %v1373 = vadd.f32 %v1372, %v1358
  %v1374 = vrot.slane %v1373, 4
  %v1375 = vadd.f32 %v1373, %v1374
  %v1376 = vrot.slane %v1375, 2
  %v1377 = vadd.f32 %v1375, %v1376
  %v1378 = vrot.slane %v1377, 1
  %v1379 = vadd.f32 %v1377, %v1378
  %v1380 = vadd.f32 %v1342, %v1379
  %1381 = vst [vmem:[#allocation3] sm:$0x1] %v1380
  %s1382 = smul.u32 0, 128
  %v1383 = vpack.c.bf16 %v1279, %v1279
  %v1384 = vpack.c.bf16 %v1281, %v1281
  %v1385 = vpack.c.bf16 %v1284, %v1284
  %v1386 = vpack.c.bf16 %v1286, %v1286
  %v1387 = vpack.c.bf16 %v1289, %v1289
  %v1388 = vpack.c.bf16 %v1291, %v1291
  %v1389 = vpack.c.bf16 %v1294, %v1294
  %v1390 = vpack.c.bf16 %v1296, %v1296
  %v1391 = vpack.c.bf16 %v1299, %v1299
  %v1392 = vpack.c.bf16 %v1301, %v1301
  %v1393 = vpack.c.bf16 %v1304, %v1304
  %v1394 = vpack.c.bf16 %v1306, %v1306
  %v1395 = vpack.c.bf16 %v1309, %v1309
  %v1396 = vpack.c.bf16 %v1311, %v1311
  %v1397 = vpack.c.bf16 %v1314, %v1314
  %v1398 = vpack.c.bf16 %v1316, %v1316
  %s1399 = sshra.s32 %s1382, 3
  %s1400 = sand.u32 %s1382, 7
  %s1401 = smul.addr %s1399, 4
  %s1402 = scalar_lea.vmem %s5, %s1401
  %1403 = vst [vmem:[%s1402] sm:$0xf] %v1383
  %1404 = vst [vmem:[%s1402 + $0x4] sm:$0xf] %v1384
  %1405 = vst [vmem:[%s1402 + $0x8] sm:$0xf] %v1385
  %1406 = vst [vmem:[%s1402 + $0xc] sm:$0xf] %v1386
  %1407 = vst [vmem:[%s1402 + $0x10] sm:$0xf] %v1387
  %1408 = vst [vmem:[%s1402 + $0x14] sm:$0xf] %v1388
  %1409 = vst [vmem:[%s1402 + $0x18] sm:$0xf] %v1389
  %1410 = vst [vmem:[%s1402 + $0x1c] sm:$0xf] %v1390
  %1411 = vst [vmem:[%s1402 + $0x20] sm:$0xf] %v1391
  %1412 = vst [vmem:[%s1402 + $0x24] sm:$0xf] %v1392
  %1413 = vst [vmem:[%s1402 + $0x28] sm:$0xf] %v1393
  %1414 = vst [vmem:[%s1402 + $0x2c] sm:$0xf] %v1394
  %1415 = vst [vmem:[%s1402 + $0x30] sm:$0xf] %v1395
  %1416 = vst [vmem:[%s1402 + $0x34] sm:$0xf] %v1396
  %1417 = vst [vmem:[%s1402 + $0x38] sm:$0xf] %v1397
  %1418 = vst [vmem:[%s1402 + $0x3c] sm:$0xf] %v1398
  // Predicated region
  $region26: #{discriminator_pallas.6} parent=0 // pred_check
    %p1419 = pneg %p20
  $region27: #{discriminator_pallas.6} parent=0 // pred_check_branch
    %1421 = sbr.rel (%p1419) target = $region29
  $region28: #{discriminator_pallas.6} parent=0 // pred_region
    %v1422 = vld [vmem:[#allocation2] sm:$0x1]
    %v1423 = vmul.f32 %v1422, 0.0078125
    %v1424 = vld [vmem:[#allocation3] sm:$0x1]
    %v1425 = vmul.f32 %v1424, 0.0078125
    %v1426 = vmul.f32 %v1423, %v1423
    %v1427 = vsub.f32 %v1425, %v1426
    %v1428 = vmax.f32 %v1427, 0.0
    %v1429 = vadd.f32 %v1428, 1e-05
    %v1430 = vrsqrt.pop %v1429
    %v1431 = vmul.f32 %v1430, %v1429
    %v1432 = vmul.f32 %v1431, %v1430
    %v1433 = vmul.f32 0.5, %v1432
    %v1434 = vsub.f32 1.5, %v1433
    %v1435 = vmul.f32 %v1430, %v1434
    %vm1436 = vweird.f32 %v1429
    %vm1437 = vweird.f32 %v1430
    %vm1438 = vmor %vm1436, %vm1437
    %v1439 = vsel %vm1438, %v1430, %v1435
    %v1440 = vld [vmem:[%s3] sm:$0x1]
    %v1441 = vmul.f32 %v1439, %v1440
    %v1442 = vld [vmem:[%s5] sm:$0xf]
    %v1443 = vld [vmem:[%s5 + $0x4] sm:$0xf]
    %v1444 = vld [vmem:[%s5 + $0x8] sm:$0xf]
    %v1445 = vld [vmem:[%s5 + $0xc] sm:$0xf]
    %v1446 = vld [vmem:[%s5 + $0x10] sm:$0xf]
    %v1447 = vld [vmem:[%s5 + $0x14] sm:$0xf]
    %v1448 = vld [vmem:[%s5 + $0x18] sm:$0xf]
    %v1449 = vld [vmem:[%s5 + $0x1c] sm:$0xf]
    %v1450 = vld [vmem:[%s5 + $0x20] sm:$0xf]
    %v1451 = vld [vmem:[%s5 + $0x24] sm:$0xf]
    %v1452 = vld [vmem:[%s5 + $0x28] sm:$0xf]
    %v1453 = vld [vmem:[%s5 + $0x2c] sm:$0xf]
    %v1454 = vld [vmem:[%s5 + $0x30] sm:$0xf]
    %v1455 = vld [vmem:[%s5 + $0x34] sm:$0xf]
    %v1456 = vld [vmem:[%s5 + $0x38] sm:$0xf]
    %v1457 = vld [vmem:[%s5 + $0x3c] sm:$0xf]
    %v1458 = vunpack.c.l.bf16 %v1442
    %v1459 = vunpack.c.l.bf16 %v1443
    %v1460 = vunpack.c.l.bf16 %v1444
    %v1461 = vunpack.c.l.bf16 %v1445
    %v1462 = vunpack.c.l.bf16 %v1446
    %v1463 = vunpack.c.l.bf16 %v1447
    %v1464 = vunpack.c.l.bf16 %v1448
    %v1465 = vunpack.c.l.bf16 %v1449
    %v1466 = vunpack.c.l.bf16 %v1450
    %v1467 = vunpack.c.l.bf16 %v1451
    %v1468 = vunpack.c.l.bf16 %v1452
    %v1469 = vunpack.c.l.bf16 %v1453
    %v1470 = vunpack.c.l.bf16 %v1454
    %v1471 = vunpack.c.l.bf16 %v1455
    %v1472 = vunpack.c.l.bf16 %v1456
    %v1473 = vunpack.c.l.bf16 %v1457
    %v1475 = vperm.slane %v1423, 0
    %v1477 = vsub.f32 %v1458, %v1475
    %v1478 = vsub.f32 %v1459, %v1475
    %v1479 = vsub.f32 %v1460, %v1475
    %v1480 = vsub.f32 %v1461, %v1475
    %v1481 = vsub.f32 %v1462, %v1475
    %v1482 = vsub.f32 %v1463, %v1475
    %v1483 = vsub.f32 %v1464, %v1475
    %v1484 = vsub.f32 %v1465, %v1475
    %v1485 = vsub.f32 %v1466, %v1475
    %v1486 = vsub.f32 %v1467, %v1475
    %v1487 = vsub.f32 %v1468, %v1475
    %v1488 = vsub.f32 %v1469, %v1475
    %v1489 = vsub.f32 %v1470, %v1475
    %v1490 = vsub.f32 %v1471, %v1475
    %v1491 = vsub.f32 %v1472, %v1475
    %v1492 = vsub.f32 %v1473, %v1475
    %v1494 = vperm.slane %v1441, 0
    %v1496 = vmul.f32 %v1477, %v1494
    %v1497 = vmul.f32 %v1478, %v1494
    %v1498 = vmul.f32 %v1479, %v1494
    %v1499 = vmul.f32 %v1480, %v1494
    %v1500 = vmul.f32 %v1481, %v1494
    %v1501 = vmul.f32 %v1482, %v1494
    %v1502 = vmul.f32 %v1483, %v1494
    %v1503 = vmul.f32 %v1484, %v1494
    %v1504 = vmul.f32 %v1485, %v1494
    %v1505 = vmul.f32 %v1486, %v1494
    %v1506 = vmul.f32 %v1487, %v1494
    %v1507 = vmul.f32 %v1488, %v1494
    %v1508 = vmul.f32 %v1489, %v1494
    %v1509 = vmul.f32 %v1490, %v1494
    %v1510 = vmul.f32 %v1491, %v1494
    %v1511 = vmul.f32 %v1492, %v1494
    %v1512 = vld [vmem:[%s4] sm:$0x1]
    %v1514 = vperm.slane %v1512, 0
    %v1516 = vadd.f32 %v1496, %v1514
    %v1517 = vadd.f32 %v1497, %v1514
    %v1518 = vadd.f32 %v1498, %v1514
    %v1519 = vadd.f32 %v1499, %v1514
    %v1520 = vadd.f32 %v1500, %v1514
    %v1521 = vadd.f32 %v1501, %v1514
    %v1522 = vadd.f32 %v1502, %v1514
    %v1523 = vadd.f32 %v1503, %v1514
    %v1524 = vadd.f32 %v1504, %v1514
    %v1525 = vadd.f32 %v1505, %v1514
    %v1526 = vadd.f32 %v1506, %v1514
    %v1527 = vadd.f32 %v1507, %v1514
    %v1528 = vadd.f32 %v1508, %v1514
    %v1529 = vadd.f32 %v1509, %v1514
    %v1530 = vadd.f32 %v1510, %v1514
    %v1531 = vadd.f32 %v1511, %v1514
    %vm1532 = vcmp.gt.f32.partialorder %v1516, 0.0
    %vm1533 = vcmp.gt.f32.partialorder %v1517, 0.0
    %vm1534 = vcmp.gt.f32.partialorder %v1518, 0.0
    %vm1535 = vcmp.gt.f32.partialorder %v1519, 0.0
    %vm1536 = vcmp.gt.f32.partialorder %v1520, 0.0
    %vm1537 = vcmp.gt.f32.partialorder %v1521, 0.0
    %vm1538 = vcmp.gt.f32.partialorder %v1522, 0.0
    %vm1539 = vcmp.gt.f32.partialorder %v1523, 0.0
    %vm1540 = vcmp.gt.f32.partialorder %v1524, 0.0
    %vm1541 = vcmp.gt.f32.partialorder %v1525, 0.0
    %vm1542 = vcmp.gt.f32.partialorder %v1526, 0.0
    %vm1543 = vcmp.gt.f32.partialorder %v1527, 0.0
    %vm1544 = vcmp.gt.f32.partialorder %v1528, 0.0
    %vm1545 = vcmp.gt.f32.partialorder %v1529, 0.0
    %vm1546 = vcmp.gt.f32.partialorder %v1530, 0.0
    %vm1547 = vcmp.gt.f32.partialorder %v1531, 0.0
    %v1548 = vmul.f32 %v1516, 0.2
    %v1549 = vmul.f32 %v1517, 0.2
    %v1550 = vmul.f32 %v1518, 0.2
    %v1551 = vmul.f32 %v1519, 0.2
    %v1552 = vmul.f32 %v1520, 0.2
    %v1553 = vmul.f32 %v1521, 0.2
    %v1554 = vmul.f32 %v1522, 0.2
    %v1555 = vmul.f32 %v1523, 0.2
    %v1556 = vmul.f32 %v1524, 0.2
    %v1557 = vmul.f32 %v1525, 0.2
    %v1558 = vmul.f32 %v1526, 0.2
    %v1559 = vmul.f32 %v1527, 0.2
    %v1560 = vmul.f32 %v1528, 0.2
    %v1561 = vmul.f32 %v1529, 0.2
    %v1562 = vmul.f32 %v1530, 0.2
    %v1563 = vmul.f32 %v1531, 0.2
    %v1564 = vsel %vm1532, %v1516, %v1548
    %v1565 = vsel %vm1533, %v1517, %v1549
    %v1566 = vsel %vm1534, %v1518, %v1550
    %v1567 = vsel %vm1535, %v1519, %v1551
    %v1568 = vsel %vm1536, %v1520, %v1552
    %v1569 = vsel %vm1537, %v1521, %v1553
    %v1570 = vsel %vm1538, %v1522, %v1554
    %v1571 = vsel %vm1539, %v1523, %v1555
    %v1572 = vsel %vm1540, %v1524, %v1556
    %v1573 = vsel %vm1541, %v1525, %v1557
    %v1574 = vsel %vm1542, %v1526, %v1558
    %v1575 = vsel %vm1543, %v1527, %v1559
    %v1576 = vsel %vm1544, %v1528, %v1560
    %v1577 = vsel %vm1545, %v1529, %v1561
    %v1578 = vsel %vm1546, %v1530, %v1562
    %v1579 = vsel %vm1547, %v1531, %v1563
    %v1580 = vpack.c.bf16 %v1564, %v1564
    %v1581 = vpack.c.bf16 %v1565, %v1565
    %v1582 = vpack.c.bf16 %v1566, %v1566
    %v1583 = vpack.c.bf16 %v1567, %v1567
    %v1584 = vpack.c.bf16 %v1568, %v1568
    %v1585 = vpack.c.bf16 %v1569, %v1569
    %v1586 = vpack.c.bf16 %v1570, %v1570
    %v1587 = vpack.c.bf16 %v1571, %v1571
    %v1588 = vpack.c.bf16 %v1572, %v1572
    %v1589 = vpack.c.bf16 %v1573, %v1573
    %v1590 = vpack.c.bf16 %v1574, %v1574
    %v1591 = vpack.c.bf16 %v1575, %v1575
    %v1592 = vpack.c.bf16 %v1576, %v1576
    %v1593 = vpack.c.bf16 %v1577, %v1577
    %v1594 = vpack.c.bf16 %v1578, %v1578
    %v1595 = vpack.c.bf16 %v1579, %v1579
    %1596 = vst [vmem:[%s5] sm:$0xf] %v1580
    %1597 = vst [vmem:[%s5 + $0x4] sm:$0xf] %v1581
    %1598 = vst [vmem:[%s5 + $0x8] sm:$0xf] %v1582
    %1599 = vst [vmem:[%s5 + $0xc] sm:$0xf] %v1583
    %1600 = vst [vmem:[%s5 + $0x10] sm:$0xf] %v1584
    %1601 = vst [vmem:[%s5 + $0x14] sm:$0xf] %v1585
    %1602 = vst [vmem:[%s5 + $0x18] sm:$0xf] %v1586
    %1603 = vst [vmem:[%s5 + $0x1c] sm:$0xf] %v1587
    %1604 = vst [vmem:[%s5 + $0x20] sm:$0xf] %v1588
    %1605 = vst [vmem:[%s5 + $0x24] sm:$0xf] %v1589
    %1606 = vst [vmem:[%s5 + $0x28] sm:$0xf] %v1590
    %1607 = vst [vmem:[%s5 + $0x2c] sm:$0xf] %v1591
    %1608 = vst [vmem:[%s5 + $0x30] sm:$0xf] %v1592
    %1609 = vst [vmem:[%s5 + $0x34] sm:$0xf] %v1593
    %1610 = vst [vmem:[%s5 + $0x38] sm:$0xf] %v1594
    %1611 = vst [vmem:[%s5 + $0x3c] sm:$0xf] %v1595
  $region29: #{discriminator_pallas.6} parent=0 // pred_fallthru
    _
  // Predicated region
  $region30: #{discriminator_pallas.6} parent=0 // pred_check
    _
  $region31: #{discriminator_pallas.6} parent=0 // pred_check_branch
    %1613 = sbr.rel (0) target = $region33
  $region32: #{discriminator_pallas.6} parent=0 // pred_region
    _
  $region33: #{discriminator_pallas.6} parent=0 // pred_fallthru
    _
  // Predicated region
  $region34: #{discriminator_pallas.6} parent=0 // pred_check
    _
  $region35: #{discriminator_pallas.6} parent=0 // pred_check_branch
    %1615 = sbr.rel (0) target = $region37
  $region36: #{discriminator_pallas.6} parent=0 // pred_region
    _
  $region37: #{discriminator_pallas.6} parent=0 // pred_fallthru
    _

// kernel: discriminator_pallas.7
$region0: #{discriminator_pallas.7}
  #allocation0 [shape = 'u32[]', space=smem, size = 0x4, offset = 0x4, fixed_abs, tag = 'smem constant byte address 0x4 - core index']
  #allocation1 [shape = 'u32[72,128]{1,0:T(1,128)}', space=vmem, size = 0x9000, scoped, tag = 'internal scratch']
  #allocation2 [shape = 'f32[1,256]{1,0:T(1,128)}', space=vmem, size = 0x400, scoped, tag = 'scratch operand']
  #allocation3 [shape = 'f32[1,256]{1,0:T(1,128)}', space=vmem, size = 0x400, scoped, tag = 'scratch operand']
  %s0 = inlined_call_operand.vmem [shape: bf16[32,2048], index: 0, kind: input, shape index: {}]
  %s1 = inlined_call_operand.vmem [shape: bf16[2048,256], index: 1, kind: input, shape index: {}]
  %s2 = inlined_call_operand.vmem [shape: f32[1,256], index: 2, kind: input, shape index: {}]
  %s3 = inlined_call_operand.vmem [shape: f32[1,256], index: 3, kind: input, shape index: {}]
  %s4 = inlined_call_operand.vmem [shape: f32[1,256], index: 4, kind: input, shape index: {}]
  %s5 = inlined_call_operand.vmem [shape: bf16[32,256], index: 5, kind: output, shape index: {}]
  %s6 = sld [smem:[#allocation0]]
  $region38: #{discriminator_pallas.7} parent=0
    _
  %s8 = ssub.s32 1, %s6
  %s9 = scalar_select 0, %s8, %s6
  // Predicated region
  $region2: #{discriminator_pallas.7} parent=0 // pred_check
    _
  $region3: #{discriminator_pallas.7} parent=0 // pred_check_branch
    %11 = sbr.rel (0) target = $region5
  $region4: #{discriminator_pallas.7} parent=0 // pred_region
    _
  $region5: #{discriminator_pallas.7} parent=0 // pred_fallthru
    _
  // Predicated region
  $region6: #{discriminator_pallas.7} parent=0 // pred_check
    _
  $region7: #{discriminator_pallas.7} parent=0 // pred_check_branch
    %13 = sbr.rel (0) target = $region9
  $region8: #{discriminator_pallas.7} parent=0 // pred_region
    _
  $region9: #{discriminator_pallas.7} parent=0 // pred_fallthru
    _
  // Predicated region
  $region10: #{discriminator_pallas.7} parent=0 // pred_check
    _
  $region11: #{discriminator_pallas.7} parent=0 // pred_check_branch
    %15 = sbr.rel (0) target = $region13
  $region12: #{discriminator_pallas.7} parent=0 // pred_region
    _
  $region13: #{discriminator_pallas.7} parent=0 // pred_fallthru
    _
  // Predicated region
  $region14: #{discriminator_pallas.7} parent=0 // pred_check
    _
  $region15: #{discriminator_pallas.7} parent=0 // pred_check_branch
    %17 = sbr.rel (0) target = $region17
  $region16: #{discriminator_pallas.7} parent=0 // pred_region
    _
  $region17: #{discriminator_pallas.7} parent=0 // pred_fallthru
    _
  // Predicated region
  $region18: #{discriminator_pallas.7} parent=0 // pred_check
    _
  $region19: #{discriminator_pallas.7} parent=0 // pred_check_branch
    %19 = sbr.rel (0) target = $region21
  $region20: #{discriminator_pallas.7} parent=0 // pred_region
    _
  $region21: #{discriminator_pallas.7} parent=0 // pred_fallthru
    _
  %p20 = scmp.eq.s32.totalorder 0, 0
  // Predicated region
  $region22: #{discriminator_pallas.7} parent=0 // pred_check
    %p21 = pneg %p20
  $region23: #{discriminator_pallas.7} parent=0 // pred_check_branch
    %23 = sbr.rel (%p21) target = $region25
  $region24: #{discriminator_pallas.7} parent=0 // pred_region
    %v24 = vlaneseq
    %vm25 = vcmp.ge.s32.totalorder %v24, 0
    %vm26 = vcmp.lt.s32.totalorder %v24, 256
    %vm27 = vmand %vm25, %vm26
    %28 = vst.msk [vmem:[#allocation2] sm:$0x3] %vm27, 0.0
    %29 = vst.msk [vmem:[#allocation3] sm:$0x3] %vm27, 0.0
  $region25: #{discriminator_pallas.7} parent=0 // pred_fallthru
    _
  %v30 = vld [vmem:[%s0] sm:$0xff]
  %v31 = vld [vmem:[%s0 + $0x8] sm:$0xff]
  %v32 = vld [vmem:[%s0 + $0x10] sm:$0xff]
  %v33 = vld [vmem:[%s0 + $0x18] sm:$0xff]
  %v34 = vld [vmem:[%s0 + $0x20] sm:$0xff]
  %v35 = vld [vmem:[%s0 + $0x28] sm:$0xff]
  %v36 = vld [vmem:[%s0 + $0x30] sm:$0xff]
  %v37 = vld [vmem:[%s0 + $0x38] sm:$0xff]
  %v38 = vld [vmem:[%s0 + $0x40] sm:$0xff]
  %v39 = vld [vmem:[%s0 + $0x48] sm:$0xff]
  %v40 = vld [vmem:[%s0 + $0x50] sm:$0xff]
  %v41 = vld [vmem:[%s0 + $0x58] sm:$0xff]
  %v42 = vld [vmem:[%s0 + $0x60] sm:$0xff]
  %v43 = vld [vmem:[%s0 + $0x68] sm:$0xff]
  %v44 = vld [vmem:[%s0 + $0x70] sm:$0xff]
  %v45 = vld [vmem:[%s0 + $0x78] sm:$0xff]
  %v46 = vld [vmem:[%s0 + $0x80] sm:$0xff]
  %v47 = vld [vmem:[%s0 + $0x88] sm:$0xff]
  %v48 = vld [vmem:[%s0 + $0x90] sm:$0xff]
  %v49 = vld [vmem:[%s0 + $0x98] sm:$0xff]
  %v50 = vld [vmem:[%s0 + $0xa0] sm:$0xff]
  %v51 = vld [vmem:[%s0 + $0xa8] sm:$0xff]
  %v52 = vld [vmem:[%s0 + $0xb0] sm:$0xff]
  %v53 = vld [vmem:[%s0 + $0xb8] sm:$0xff]
  %v54 = vld [vmem:[%s0 + $0xc0] sm:$0xff]
  %v55 = vld [vmem:[%s0 + $0xc8] sm:$0xff]
  %v56 = vld [vmem:[%s0 + $0xd0] sm:$0xff]
  %v57 = vld [vmem:[%s0 + $0xd8] sm:$0xff]
  %v58 = vld [vmem:[%s0 + $0xe0] sm:$0xff]
  %v59 = vld [vmem:[%s0 + $0xe8] sm:$0xff]
  %v60 = vld [vmem:[%s0 + $0xf0] sm:$0xff]
  %v61 = vld [vmem:[%s0 + $0xf8] sm:$0xff]
  %v62 = vld [vmem:[%s1] sm:$0xff]
  %v63 = vld [vmem:[%s1 + $0x8] sm:$0xff]
  %v64 = vld [vmem:[%s1 + $0x10] sm:$0xff]
  %v65 = vld [vmem:[%s1 + $0x18] sm:$0xff]
  %v66 = vld [vmem:[%s1 + $0x20] sm:$0xff]
  %v67 = vld [vmem:[%s1 + $0x28] sm:$0xff]
  %v68 = vld [vmem:[%s1 + $0x30] sm:$0xff]
  %v69 = vld [vmem:[%s1 + $0x38] sm:$0xff]
  %v70 = vld [vmem:[%s1 + $0x40] sm:$0xff]
  %v71 = vld [vmem:[%s1 + $0x48] sm:$0xff]
  %v72 = vld [vmem:[%s1 + $0x50] sm:$0xff]
  %v73 = vld [vmem:[%s1 + $0x58] sm:$0xff]
  %v74 = vld [vmem:[%s1 + $0x60] sm:$0xff]
  %v75 = vld [vmem:[%s1 + $0x68] sm:$0xff]
  %v76 = vld [vmem:[%s1 + $0x70] sm:$0xff]
  %v77 = vld [vmem:[%s1 + $0x78] sm:$0xff]
  %v78 = vld [vmem:[%s1 + $0x80] sm:$0xff]
  %v79 = vld [vmem:[%s1 + $0x88] sm:$0xff]
  %v80 = vld [vmem:[%s1 + $0x90] sm:$0xff]
  %v81 = vld [vmem:[%s1 + $0x98] sm:$0xff]
  %v82 = vld [vmem:[%s1 + $0xa0] sm:$0xff]
  %v83 = vld [vmem:[%s1 + $0xa8] sm:$0xff]
  %v84 = vld [vmem:[%s1 + $0xb0] sm:$0xff]
  %v85 = vld [vmem:[%s1 + $0xb8] sm:$0xff]
  %v86 = vld [vmem:[%s1 + $0xc0] sm:$0xff]
  %v87 = vld [vmem:[%s1 + $0xc8] sm:$0xff]
  %v88 = vld [vmem:[%s1 + $0xd0] sm:$0xff]
  %v89 = vld [vmem:[%s1 + $0xd8] sm:$0xff]
  %v90 = vld [vmem:[%s1 + $0xe0] sm:$0xff]
  %v91 = vld [vmem:[%s1 + $0xe8] sm:$0xff]
  %v92 = vld [vmem:[%s1 + $0xf0] sm:$0xff]
  %v93 = vld [vmem:[%s1 + $0xf8] sm:$0xff]
  %v94 = vld [vmem:[%s1 + $0x100] sm:$0xff]
  %v95 = vld [vmem:[%s1 + $0x108] sm:$0xff]
  %v96 = vld [vmem:[%s1 + $0x110] sm:$0xff]
  %v97 = vld [vmem:[%s1 + $0x118] sm:$0xff]
  %v98 = vld [vmem:[%s1 + $0x120] sm:$0xff]
  %v99 = vld [vmem:[%s1 + $0x128] sm:$0xff]
  %v100 = vld [vmem:[%s1 + $0x130] sm:$0xff]
  %v101 = vld [vmem:[%s1 + $0x138] sm:$0xff]
  %v102 = vld [vmem:[%s1 + $0x140] sm:$0xff]
  %v103 = vld [vmem:[%s1 + $0x148] sm:$0xff]
  %v104 = vld [vmem:[%s1 + $0x150] sm:$0xff]
  %v105 = vld [vmem:[%s1 + $0x158] sm:$0xff]
  %v106 = vld [vmem:[%s1 + $0x160] sm:$0xff]
  %v107 = vld [vmem:[%s1 + $0x168] sm:$0xff]
  %v108 = vld [vmem:[%s1 + $0x170] sm:$0xff]
  %v109 = vld [vmem:[%s1 + $0x178] sm:$0xff]
  %v110 = vld [vmem:[%s1 + $0x180] sm:$0xff]
  %v111 = vld [vmem:[%s1 + $0x188] sm:$0xff]
  %v112 = vld [vmem:[%s1 + $0x190] sm:$0xff]
  %v113 = vld [vmem:[%s1 + $0x198] sm:$0xff]
  %v114 = vld [vmem:[%s1 + $0x1a0] sm:$0xff]
  %v115 = vld [vmem:[%s1 + $0x1a8] sm:$0xff]
  %v116 = vld [vmem:[%s1 + $0x1b0] sm:$0xff]
  %v117 = vld [vmem:[%s1 + $0x1b8] sm:$0xff]
  %v118 = vld [vmem:[%s1 + $0x1c0] sm:$0xff]
  %v119 = vld [vmem:[%s1 + $0x1c8] sm:$0xff]
  %v120 = vld [vmem:[%s1 + $0x1d0] sm:$0xff]
  %v121 = vld [vmem:[%s1 + $0x1d8] sm:$0xff]
  %v122 = vld [vmem:[%s1 + $0x1e0] sm:$0xff]
  %v123 = vld [vmem:[%s1 + $0x1e8] sm:$0xff]
  %v124 = vld [vmem:[%s1 + $0x1f0] sm:$0xff]
  %v125 = vld [vmem:[%s1 + $0x1f8] sm:$0xff]
  %v126 = vld [vmem:[%s1 + $0x200] sm:$0xff]
  %v127 = vld [vmem:[%s1 + $0x208] sm:$0xff]
  %v128 = vld [vmem:[%s1 + $0x210] sm:$0xff]
  %v129 = vld [vmem:[%s1 + $0x218] sm:$0xff]
  %v130 = vld [vmem:[%s1 + $0x220] sm:$0xff]
  %v131 = vld [vmem:[%s1 + $0x228] sm:$0xff]
  %v132 = vld [vmem:[%s1 + $0x230] sm:$0xff]
  %v133 = vld [vmem:[%s1 + $0x238] sm:$0xff]
  %v134 = vld [vmem:[%s1 + $0x240] sm:$0xff]
  %v135 = vld [vmem:[%s1 + $0x248] sm:$0xff]
  %v136 = vld [vmem:[%s1 + $0x250] sm:$0xff]
  %v137 = vld [vmem:[%s1 + $0x258] sm:$0xff]
  %v138 = vld [vmem:[%s1 + $0x260] sm:$0xff]
  %v139 = vld [vmem:[%s1 + $0x268] sm:$0xff]
  %v140 = vld [vmem:[%s1 + $0x270] sm:$0xff]
  %v141 = vld [vmem:[%s1 + $0x278] sm:$0xff]
  %v142 = vld [vmem:[%s1 + $0x280] sm:$0xff]
  %v143 = vld [vmem:[%s1 + $0x288] sm:$0xff]
  %v144 = vld [vmem:[%s1 + $0x290] sm:$0xff]
  %v145 = vld [vmem:[%s1 + $0x298] sm:$0xff]
  %v146 = vld [vmem:[%s1 + $0x2a0] sm:$0xff]
  %v147 = vld [vmem:[%s1 + $0x2a8] sm:$0xff]
  %v148 = vld [vmem:[%s1 + $0x2b0] sm:$0xff]
  %v149 = vld [vmem:[%s1 + $0x2b8] sm:$0xff]
  %v150 = vld [vmem:[%s1 + $0x2c0] sm:$0xff]
  %v151 = vld [vmem:[%s1 + $0x2c8] sm:$0xff]
  %v152 = vld [vmem:[%s1 + $0x2d0] sm:$0xff]
  %v153 = vld [vmem:[%s1 + $0x2d8] sm:$0xff]
  %v154 = vld [vmem:[%s1 + $0x2e0] sm:$0xff]
  %v155 = vld [vmem:[%s1 + $0x2e8] sm:$0xff]
  %v156 = vld [vmem:[%s1 + $0x2f0] sm:$0xff]
  %v157 = vld [vmem:[%s1 + $0x2f8] sm:$0xff]
  %v158 = vld [vmem:[%s1 + $0x300] sm:$0xff]
  %v159 = vld [vmem:[%s1 + $0x308] sm:$0xff]
  %v160 = vld [vmem:[%s1 + $0x310] sm:$0xff]
  %v161 = vld [vmem:[%s1 + $0x318] sm:$0xff]
  %v162 = vld [vmem:[%s1 + $0x320] sm:$0xff]
  %v163 = vld [vmem:[%s1 + $0x328] sm:$0xff]
  %v164 = vld [vmem:[%s1 + $0x330] sm:$0xff]
  %v165 = vld [vmem:[%s1 + $0x338] sm:$0xff]
  %v166 = vld [vmem:[%s1 + $0x340] sm:$0xff]
  %v167 = vld [vmem:[%s1 + $0x348] sm:$0xff]
  %v168 = vld [vmem:[%s1 + $0x350] sm:$0xff]
  %v169 = vld [vmem:[%s1 + $0x358] sm:$0xff]
  %v170 = vld [vmem:[%s1 + $0x360] sm:$0xff]
  %v171 = vld [vmem:[%s1 + $0x368] sm:$0xff]
  %v172 = vld [vmem:[%s1 + $0x370] sm:$0xff]
  %v173 = vld [vmem:[%s1 + $0x378] sm:$0xff]
  %v174 = vld [vmem:[%s1 + $0x380] sm:$0xff]
  %v175 = vld [vmem:[%s1 + $0x388] sm:$0xff]
  %v176 = vld [vmem:[%s1 + $0x390] sm:$0xff]
  %v177 = vld [vmem:[%s1 + $0x398] sm:$0xff]
  %v178 = vld [vmem:[%s1 + $0x3a0] sm:$0xff]
  %v179 = vld [vmem:[%s1 + $0x3a8] sm:$0xff]
  %v180 = vld [vmem:[%s1 + $0x3b0] sm:$0xff]
  %v181 = vld [vmem:[%s1 + $0x3b8] sm:$0xff]
  %v182 = vld [vmem:[%s1 + $0x3c0] sm:$0xff]
  %v183 = vld [vmem:[%s1 + $0x3c8] sm:$0xff]
  %v184 = vld [vmem:[%s1 + $0x3d0] sm:$0xff]
  %v185 = vld [vmem:[%s1 + $0x3d8] sm:$0xff]
  %v186 = vld [vmem:[%s1 + $0x3e0] sm:$0xff]
  %v187 = vld [vmem:[%s1 + $0x3e8] sm:$0xff]
  %v188 = vld [vmem:[%s1 + $0x3f0] sm:$0xff]
  %v189 = vld [vmem:[%s1 + $0x3f8] sm:$0xff]
  %v190 = vld [vmem:[%s1 + $0x400] sm:$0xff]
  %v191 = vld [vmem:[%s1 + $0x408] sm:$0xff]
  %v192 = vld [vmem:[%s1 + $0x410] sm:$0xff]
  %v193 = vld [vmem:[%s1 + $0x418] sm:$0xff]
  %v194 = vld [vmem:[%s1 + $0x420] sm:$0xff]
  %v195 = vld [vmem:[%s1 + $0x428] sm:$0xff]
  %v196 = vld [vmem:[%s1 + $0x430] sm:$0xff]
  %v197 = vld [vmem:[%s1 + $0x438] sm:$0xff]
  %v198 = vld [vmem:[%s1 + $0x440] sm:$0xff]
  %v199 = vld [vmem:[%s1 + $0x448] sm:$0xff]
  %v200 = vld [vmem:[%s1 + $0x450] sm:$0xff]
  %v201 = vld [vmem:[%s1 + $0x458] sm:$0xff]
  %v202 = vld [vmem:[%s1 + $0x460] sm:$0xff]
  %v203 = vld [vmem:[%s1 + $0x468] sm:$0xff]
  %v204 = vld [vmem:[%s1 + $0x470] sm:$0xff]
  %v205 = vld [vmem:[%s1 + $0x478] sm:$0xff]
  %v206 = vld [vmem:[%s1 + $0x480] sm:$0xff]
  %v207 = vld [vmem:[%s1 + $0x488] sm:$0xff]
  %v208 = vld [vmem:[%s1 + $0x490] sm:$0xff]
  %v209 = vld [vmem:[%s1 + $0x498] sm:$0xff]
  %v210 = vld [vmem:[%s1 + $0x4a0] sm:$0xff]
  %v211 = vld [vmem:[%s1 + $0x4a8] sm:$0xff]
  %v212 = vld [vmem:[%s1 + $0x4b0] sm:$0xff]
  %v213 = vld [vmem:[%s1 + $0x4b8] sm:$0xff]
  %v214 = vld [vmem:[%s1 + $0x4c0] sm:$0xff]
  %v215 = vld [vmem:[%s1 + $0x4c8] sm:$0xff]
  %v216 = vld [vmem:[%s1 + $0x4d0] sm:$0xff]
  %v217 = vld [vmem:[%s1 + $0x4d8] sm:$0xff]
  %v218 = vld [vmem:[%s1 + $0x4e0] sm:$0xff]
  %v219 = vld [vmem:[%s1 + $0x4e8] sm:$0xff]
  %v220 = vld [vmem:[%s1 + $0x4f0] sm:$0xff]
  %v221 = vld [vmem:[%s1 + $0x4f8] sm:$0xff]
  %v222 = vld [vmem:[%s1 + $0x500] sm:$0xff]
  %v223 = vld [vmem:[%s1 + $0x508] sm:$0xff]
  %v224 = vld [vmem:[%s1 + $0x510] sm:$0xff]
  %v225 = vld [vmem:[%s1 + $0x518] sm:$0xff]
  %v226 = vld [vmem:[%s1 + $0x520] sm:$0xff]
  %v227 = vld [vmem:[%s1 + $0x528] sm:$0xff]
  %v228 = vld [vmem:[%s1 + $0x530] sm:$0xff]
  %v229 = vld [vmem:[%s1 + $0x538] sm:$0xff]
  %v230 = vld [vmem:[%s1 + $0x540] sm:$0xff]
  %v231 = vld [vmem:[%s1 + $0x548] sm:$0xff]
  %v232 = vld [vmem:[%s1 + $0x550] sm:$0xff]
  %v233 = vld [vmem:[%s1 + $0x558] sm:$0xff]
  %v234 = vld [vmem:[%s1 + $0x560] sm:$0xff]
  %v235 = vld [vmem:[%s1 + $0x568] sm:$0xff]
  %v236 = vld [vmem:[%s1 + $0x570] sm:$0xff]
  %v237 = vld [vmem:[%s1 + $0x578] sm:$0xff]
  %v238 = vld [vmem:[%s1 + $0x580] sm:$0xff]
  %v239 = vld [vmem:[%s1 + $0x588] sm:$0xff]
  %v240 = vld [vmem:[%s1 + $0x590] sm:$0xff]
  %v241 = vld [vmem:[%s1 + $0x598] sm:$0xff]
  %v242 = vld [vmem:[%s1 + $0x5a0] sm:$0xff]
  %v243 = vld [vmem:[%s1 + $0x5a8] sm:$0xff]
  %v244 = vld [vmem:[%s1 + $0x5b0] sm:$0xff]
  %v245 = vld [vmem:[%s1 + $0x5b8] sm:$0xff]
  %v246 = vld [vmem:[%s1 + $0x5c0] sm:$0xff]
  %v247 = vld [vmem:[%s1 + $0x5c8] sm:$0xff]
  %v248 = vld [vmem:[%s1 + $0x5d0] sm:$0xff]
  %v249 = vld [vmem:[%s1 + $0x5d8] sm:$0xff]
  %v250 = vld [vmem:[%s1 + $0x5e0] sm:$0xff]
  %v251 = vld [vmem:[%s1 + $0x5e8] sm:$0xff]
  %v252 = vld [vmem:[%s1 + $0x5f0] sm:$0xff]
  %v253 = vld [vmem:[%s1 + $0x5f8] sm:$0xff]
  %v254 = vld [vmem:[%s1 + $0x600] sm:$0xff]
  %v255 = vld [vmem:[%s1 + $0x608] sm:$0xff]
  %v256 = vld [vmem:[%s1 + $0x610] sm:$0xff]
  %v257 = vld [vmem:[%s1 + $0x618] sm:$0xff]
  %v258 = vld [vmem:[%s1 + $0x620] sm:$0xff]
  %v259 = vld [vmem:[%s1 + $0x628] sm:$0xff]
  %v260 = vld [vmem:[%s1 + $0x630] sm:$0xff]
  %v261 = vld [vmem:[%s1 + $0x638] sm:$0xff]
  %v262 = vld [vmem:[%s1 + $0x640] sm:$0xff]
  %v263 = vld [vmem:[%s1 + $0x648] sm:$0xff]
  %v264 = vld [vmem:[%s1 + $0x650] sm:$0xff]
  %v265 = vld [vmem:[%s1 + $0x658] sm:$0xff]
  %v266 = vld [vmem:[%s1 + $0x660] sm:$0xff]
  %v267 = vld [vmem:[%s1 + $0x668] sm:$0xff]
  %v268 = vld [vmem:[%s1 + $0x670] sm:$0xff]
  %v269 = vld [vmem:[%s1 + $0x678] sm:$0xff]
  %v270 = vld [vmem:[%s1 + $0x680] sm:$0xff]
  %v271 = vld [vmem:[%s1 + $0x688] sm:$0xff]
  %v272 = vld [vmem:[%s1 + $0x690] sm:$0xff]
  %v273 = vld [vmem:[%s1 + $0x698] sm:$0xff]
  %v274 = vld [vmem:[%s1 + $0x6a0] sm:$0xff]
  %v275 = vld [vmem:[%s1 + $0x6a8] sm:$0xff]
  %v276 = vld [vmem:[%s1 + $0x6b0] sm:$0xff]
  %v277 = vld [vmem:[%s1 + $0x6b8] sm:$0xff]
  %v278 = vld [vmem:[%s1 + $0x6c0] sm:$0xff]
  %v279 = vld [vmem:[%s1 + $0x6c8] sm:$0xff]
  %v280 = vld [vmem:[%s1 + $0x6d0] sm:$0xff]
  %v281 = vld [vmem:[%s1 + $0x6d8] sm:$0xff]
  %v282 = vld [vmem:[%s1 + $0x6e0] sm:$0xff]
  %v283 = vld [vmem:[%s1 + $0x6e8] sm:$0xff]
  %v284 = vld [vmem:[%s1 + $0x6f0] sm:$0xff]
  %v285 = vld [vmem:[%s1 + $0x6f8] sm:$0xff]
  %v286 = vld [vmem:[%s1 + $0x700] sm:$0xff]
  %v287 = vld [vmem:[%s1 + $0x708] sm:$0xff]
  %v288 = vld [vmem:[%s1 + $0x710] sm:$0xff]
  %v289 = vld [vmem:[%s1 + $0x718] sm:$0xff]
  %v290 = vld [vmem:[%s1 + $0x720] sm:$0xff]
  %v291 = vld [vmem:[%s1 + $0x728] sm:$0xff]
  %v292 = vld [vmem:[%s1 + $0x730] sm:$0xff]
  %v293 = vld [vmem:[%s1 + $0x738] sm:$0xff]
  %v294 = vld [vmem:[%s1 + $0x740] sm:$0xff]
  %v295 = vld [vmem:[%s1 + $0x748] sm:$0xff]
  %v296 = vld [vmem:[%s1 + $0x750] sm:$0xff]
  %v297 = vld [vmem:[%s1 + $0x758] sm:$0xff]
  %v298 = vld [vmem:[%s1 + $0x760] sm:$0xff]
  %v299 = vld [vmem:[%s1 + $0x768] sm:$0xff]
  %v300 = vld [vmem:[%s1 + $0x770] sm:$0xff]
  %v301 = vld [vmem:[%s1 + $0x778] sm:$0xff]
  %v302 = vld [vmem:[%s1 + $0x780] sm:$0xff]
  %v303 = vld [vmem:[%s1 + $0x788] sm:$0xff]
  %v304 = vld [vmem:[%s1 + $0x790] sm:$0xff]
  %v305 = vld [vmem:[%s1 + $0x798] sm:$0xff]
  %v306 = vld [vmem:[%s1 + $0x7a0] sm:$0xff]
  %v307 = vld [vmem:[%s1 + $0x7a8] sm:$0xff]
  %v308 = vld [vmem:[%s1 + $0x7b0] sm:$0xff]
  %v309 = vld [vmem:[%s1 + $0x7b8] sm:$0xff]
  %v310 = vld [vmem:[%s1 + $0x7c0] sm:$0xff]
  %v311 = vld [vmem:[%s1 + $0x7c8] sm:$0xff]
  %v312 = vld [vmem:[%s1 + $0x7d0] sm:$0xff]
  %v313 = vld [vmem:[%s1 + $0x7d8] sm:$0xff]
  %v314 = vld [vmem:[%s1 + $0x7e0] sm:$0xff]
  %v315 = vld [vmem:[%s1 + $0x7e8] sm:$0xff]
  %v316 = vld [vmem:[%s1 + $0x7f0] sm:$0xff]
  %v317 = vld [vmem:[%s1 + $0x7f8] sm:$0xff]
  %v318 = vld [vmem:[%s2] sm:$0x3]
  %v320 = vperm.slane %v318, 0
  %v321 = vperm.slane %v318, 1
  %v356 = vunpack.c.l.b16 %v30
  %v357 = vunpack.c.h.b16 %v30
  %v358 = vunpack.c.l.b16 %v31
  %v359 = vunpack.c.h.b16 %v31
  %v360 = vunpack.c.l.b16 %v32
  %v361 = vunpack.c.h.b16 %v32
  %v362 = vunpack.c.l.b16 %v33
  %v363 = vunpack.c.h.b16 %v33
  %v364 = vunpack.c.l.b16 %v34
  %v365 = vunpack.c.h.b16 %v34
  %v366 = vunpack.c.l.b16 %v35
  %v367 = vunpack.c.h.b16 %v35
  %v368 = vunpack.c.l.b16 %v36
  %v369 = vunpack.c.h.b16 %v36
  %v370 = vunpack.c.l.b16 %v37
  %v371 = vunpack.c.h.b16 %v37
  %v372 = vunpack.c.l.b16 %v38
  %v373 = vunpack.c.h.b16 %v38
  %v374 = vunpack.c.l.b16 %v39
  %v375 = vunpack.c.h.b16 %v39
  %v376 = vunpack.c.l.b16 %v40
  %v377 = vunpack.c.h.b16 %v40
  %v378 = vunpack.c.l.b16 %v41
  %v379 = vunpack.c.h.b16 %v41
  %v380 = vunpack.c.l.b16 %v42
  %v381 = vunpack.c.h.b16 %v42
  %v382 = vunpack.c.l.b16 %v43
  %v383 = vunpack.c.h.b16 %v43
  %v384 = vunpack.c.l.b16 %v44
  %v385 = vunpack.c.h.b16 %v44
  %v386 = vunpack.c.l.b16 %v45
  %v387 = vunpack.c.h.b16 %v45
  %v388 = vunpack.c.l.b16 %v46
  %v389 = vunpack.c.h.b16 %v46
  %v390 = vunpack.c.l.b16 %v47
  %v391 = vunpack.c.h.b16 %v47
  %v392 = vunpack.c.l.b16 %v48
  %v393 = vunpack.c.h.b16 %v48
  %v394 = vunpack.c.l.b16 %v49
  %v395 = vunpack.c.h.b16 %v49
  %v396 = vunpack.c.l.b16 %v50
  %v397 = vunpack.c.h.b16 %v50
  %v398 = vunpack.c.l.b16 %v51
  %v399 = vunpack.c.h.b16 %v51
  %v400 = vunpack.c.l.b16 %v52
  %v401 = vunpack.c.h.b16 %v52
  %v402 = vunpack.c.l.b16 %v53
  %v403 = vunpack.c.h.b16 %v53
  %v404 = vunpack.c.l.b16 %v54
  %v405 = vunpack.c.h.b16 %v54
  %v406 = vunpack.c.l.b16 %v55
  %v407 = vunpack.c.h.b16 %v55
  %v408 = vunpack.c.l.b16 %v56
  %v409 = vunpack.c.h.b16 %v56
  %v410 = vunpack.c.l.b16 %v57
  %v411 = vunpack.c.h.b16 %v57
  %v412 = vunpack.c.l.b16 %v58
  %v413 = vunpack.c.h.b16 %v58
  %v414 = vunpack.c.l.b16 %v59
  %v415 = vunpack.c.h.b16 %v59
  %v416 = vunpack.c.l.b16 %v60
  %v417 = vunpack.c.h.b16 %v60
  %v418 = vunpack.c.l.b16 %v61
  %v419 = vunpack.c.h.b16 %v61
  %v420 = vpack.c.b16 %v372, %v356
  %v421 = vpack.c.b16 %v373, %v357
  %v422 = vpack.c.b16 %v374, %v358
  %v423 = vpack.c.b16 %v375, %v359
  %v424 = vpack.c.b16 %v376, %v360
  %v425 = vpack.c.b16 %v377, %v361
  %v426 = vpack.c.b16 %v378, %v362
  %v427 = vpack.c.b16 %v379, %v363
  %v428 = vpack.c.b16 %v380, %v364
  %v429 = vpack.c.b16 %v381, %v365
  %v430 = vpack.c.b16 %v382, %v366
  %v431 = vpack.c.b16 %v383, %v367
  %v432 = vpack.c.b16 %v384, %v368
  %v433 = vpack.c.b16 %v385, %v369
  %v434 = vpack.c.b16 %v386, %v370
  %v435 = vpack.c.b16 %v387, %v371
  %v436 = vpack.c.b16 %v404, %v388
  %v437 = vpack.c.b16 %v405, %v389
  %v438 = vpack.c.b16 %v406, %v390
  %v439 = vpack.c.b16 %v407, %v391
  %v440 = vpack.c.b16 %v408, %v392
  %v441 = vpack.c.b16 %v409, %v393
  %v442 = vpack.c.b16 %v410, %v394
  %v443 = vpack.c.b16 %v411, %v395
  %v444 = vpack.c.b16 %v412, %v396
  %v445 = vpack.c.b16 %v413, %v397
  %v446 = vpack.c.b16 %v414, %v398
  %v447 = vpack.c.b16 %v415, %v399
  %v448 = vpack.c.b16 %v416, %v400
  %v449 = vpack.c.b16 %v417, %v401
  %v450 = vpack.c.b16 %v418, %v402
  %v451 = vpack.c.b16 %v419, %v403
  %v740 = vunpack.c.l.b16 %v62
  %v741 = vunpack.c.h.b16 %v62
  %v742 = vunpack.c.l.b16 %v63
  %v743 = vunpack.c.h.b16 %v63
  %v744 = vunpack.c.l.b16 %v64
  %v745 = vunpack.c.h.b16 %v64
  %v746 = vunpack.c.l.b16 %v65
  %v747 = vunpack.c.h.b16 %v65
  %v748 = vunpack.c.l.b16 %v66
  %v749 = vunpack.c.h.b16 %v66
  %v750 = vunpack.c.l.b16 %v67
  %v751 = vunpack.c.h.b16 %v67
  %v752 = vunpack.c.l.b16 %v68
  %v753 = vunpack.c.h.b16 %v68
  %v754 = vunpack.c.l.b16 %v69
  %v755 = vunpack.c.h.b16 %v69
  %v756 = vunpack.c.l.b16 %v70
  %v757 = vunpack.c.h.b16 %v70
  %v758 = vunpack.c.l.b16 %v71
  %v759 = vunpack.c.h.b16 %v71
  %v760 = vunpack.c.l.b16 %v72
  %v761 = vunpack.c.h.b16 %v72
  %v762 = vunpack.c.l.b16 %v73
  %v763 = vunpack.c.h.b16 %v73
  %v764 = vunpack.c.l.b16 %v74
  %v765 = vunpack.c.h.b16 %v74
  %v766 = vunpack.c.l.b16 %v75
  %v767 = vunpack.c.h.b16 %v75
  %v768 = vunpack.c.l.b16 %v76
  %v769 = vunpack.c.h.b16 %v76
  %v770 = vunpack.c.l.b16 %v77
  %v771 = vunpack.c.h.b16 %v77
  %v772 = vunpack.c.l.b16 %v78
  %v773 = vunpack.c.h.b16 %v78
  %v774 = vunpack.c.l.b16 %v79
  %v775 = vunpack.c.h.b16 %v79
  %v776 = vunpack.c.l.b16 %v80
  %v777 = vunpack.c.h.b16 %v80
  %v778 = vunpack.c.l.b16 %v81
  %v779 = vunpack.c.h.b16 %v81
  %v780 = vunpack.c.l.b16 %v82
  %v781 = vunpack.c.h.b16 %v82
  %v782 = vunpack.c.l.b16 %v83
  %v783 = vunpack.c.h.b16 %v83
  %v784 = vunpack.c.l.b16 %v84
  %v785 = vunpack.c.h.b16 %v84
  %v786 = vunpack.c.l.b16 %v85
  %v787 = vunpack.c.h.b16 %v85
  %v788 = vunpack.c.l.b16 %v86
  %v789 = vunpack.c.h.b16 %v86
  %v790 = vunpack.c.l.b16 %v87
  %v791 = vunpack.c.h.b16 %v87
  %v792 = vunpack.c.l.b16 %v88
  %v793 = vunpack.c.h.b16 %v88
  %v794 = vunpack.c.l.b16 %v89
  %v795 = vunpack.c.h.b16 %v89
  %v796 = vunpack.c.l.b16 %v90
  %v797 = vunpack.c.h.b16 %v90
  %v798 = vunpack.c.l.b16 %v91
  %v799 = vunpack.c.h.b16 %v91
  %v800 = vunpack.c.l.b16 %v92
  %v801 = vunpack.c.h.b16 %v92
  %v802 = vunpack.c.l.b16 %v93
  %v803 = vunpack.c.h.b16 %v93
  %v804 = vunpack.c.l.b16 %v94
  %v805 = vunpack.c.h.b16 %v94
  %v806 = vunpack.c.l.b16 %v95
  %v807 = vunpack.c.h.b16 %v95
  %v808 = vunpack.c.l.b16 %v96
  %v809 = vunpack.c.h.b16 %v96
  %v810 = vunpack.c.l.b16 %v97
  %v811 = vunpack.c.h.b16 %v97
  %v812 = vunpack.c.l.b16 %v98
  %v813 = vunpack.c.h.b16 %v98
  %v814 = vunpack.c.l.b16 %v99
  %v815 = vunpack.c.h.b16 %v99
  %v816 = vunpack.c.l.b16 %v100
  %v817 = vunpack.c.h.b16 %v100
  %v818 = vunpack.c.l.b16 %v101
  %v819 = vunpack.c.h.b16 %v101
  %v820 = vunpack.c.l.b16 %v102
  %v821 = vunpack.c.h.b16 %v102
  %v822 = vunpack.c.l.b16 %v103
  %v823 = vunpack.c.h.b16 %v103
  %v824 = vunpack.c.l.b16 %v104
  %v825 = vunpack.c.h.b16 %v104
  %v826 = vunpack.c.l.b16 %v105
  %v827 = vunpack.c.h.b16 %v105
  %v828 = vunpack.c.l.b16 %v106
  %v829 = vunpack.c.h.b16 %v106
  %v830 = vunpack.c.l.b16 %v107
  %v831 = vunpack.c.h.b16 %v107
  %v832 = vunpack.c.l.b16 %v108
  %v833 = vunpack.c.h.b16 %v108
  %v834 = vunpack.c.l.b16 %v109
  %v835 = vunpack.c.h.b16 %v109
  %v836 = vunpack.c.l.b16 %v110
  %v837 = vunpack.c.h.b16 %v110
  %v838 = vunpack.c.l.b16 %v111
  %v839 = vunpack.c.h.b16 %v111
  %v840 = vunpack.c.l.b16 %v112
  %v841 = vunpack.c.h.b16 %v112
  %v842 = vunpack.c.l.b16 %v113
  %v843 = vunpack.c.h.b16 %v113
  %v844 = vunpack.c.l.b16 %v114
  %v845 = vunpack.c.h.b16 %v114
  %v846 = vunpack.c.l.b16 %v115
  %v847 = vunpack.c.h.b16 %v115
  %v848 = vunpack.c.l.b16 %v116
  %v849 = vunpack.c.h.b16 %v116
  %v850 = vunpack.c.l.b16 %v117
  %v851 = vunpack.c.h.b16 %v117
  %v852 = vunpack.c.l.b16 %v118
  %v853 = vunpack.c.h.b16 %v118
  %v854 = vunpack.c.l.b16 %v119
  %v855 = vunpack.c.h.b16 %v119
  %v856 = vunpack.c.l.b16 %v120
  %v857 = vunpack.c.h.b16 %v120
  %v858 = vunpack.c.l.b16 %v121
  %v859 = vunpack.c.h.b16 %v121
  %v860 = vunpack.c.l.b16 %v122
  %v861 = vunpack.c.h.b16 %v122
  %v862 = vunpack.c.l.b16 %v123
  %v863 = vunpack.c.h.b16 %v123
  %v864 = vunpack.c.l.b16 %v124
  %v865 = vunpack.c.h.b16 %v124
  %v866 = vunpack.c.l.b16 %v125
  %v867 = vunpack.c.h.b16 %v125
  %v868 = vunpack.c.l.b16 %v126
  %v869 = vunpack.c.h.b16 %v126
  %v870 = vunpack.c.l.b16 %v127
  %v871 = vunpack.c.h.b16 %v127
  %v872 = vunpack.c.l.b16 %v128
  %v873 = vunpack.c.h.b16 %v128
  %v874 = vunpack.c.l.b16 %v129
  %v875 = vunpack.c.h.b16 %v129
  %v876 = vunpack.c.l.b16 %v130
  %v877 = vunpack.c.h.b16 %v130
  %v878 = vunpack.c.l.b16 %v131
  %v879 = vunpack.c.h.b16 %v131
  %v880 = vunpack.c.l.b16 %v132
  %v881 = vunpack.c.h.b16 %v132
  %v882 = vunpack.c.l.b16 %v133
  %v883 = vunpack.c.h.b16 %v133
  %v884 = vunpack.c.l.b16 %v134
  %v885 = vunpack.c.h.b16 %v134
  %v886 = vunpack.c.l.b16 %v135
  %v887 = vunpack.c.h.b16 %v135
  %v888 = vunpack.c.l.b16 %v136
  %v889 = vunpack.c.h.b16 %v136
  %v890 = vunpack.c.l.b16 %v137
  %v891 = vunpack.c.h.b16 %v137
  %v892 = vunpack.c.l.b16 %v138
  %v893 = vunpack.c.h.b16 %v138
  %v894 = vunpack.c.l.b16 %v139
  %v895 = vunpack.c.h.b16 %v139
  %v896 = vunpack.c.l.b16 %v140
  %v897 = vunpack.c.h.b16 %v140
  %v898 = vunpack.c.l.b16 %v141
  %v899 = vunpack.c.h.b16 %v141
  %v900 = vunpack.c.l.b16 %v142
  %v901 = vunpack.c.h.b16 %v142
  %v902 = vunpack.c.l.b16 %v143
  %v903 = vunpack.c.h.b16 %v143
  %v904 = vunpack.c.l.b16 %v144
  %v905 = vunpack.c.h.b16 %v144
  %v906 = vunpack.c.l.b16 %v145
  %v907 = vunpack.c.h.b16 %v145
  %v908 = vunpack.c.l.b16 %v146
  %v909 = vunpack.c.h.b16 %v146
  %v910 = vunpack.c.l.b16 %v147
  %v911 = vunpack.c.h.b16 %v147
  %v912 = vunpack.c.l.b16 %v148
  %v913 = vunpack.c.h.b16 %v148
  %v914 = vunpack.c.l.b16 %v149
  %v915 = vunpack.c.h.b16 %v149
  %v916 = vunpack.c.l.b16 %v150
  %v917 = vunpack.c.h.b16 %v150
  %v918 = vunpack.c.l.b16 %v151
  %v919 = vunpack.c.h.b16 %v151
  %v920 = vunpack.c.l.b16 %v152
  %v921 = vunpack.c.h.b16 %v152
  %v922 = vunpack.c.l.b16 %v153
  %v923 = vunpack.c.h.b16 %v153
  %v924 = vunpack.c.l.b16 %v154
  %v925 = vunpack.c.h.b16 %v154
  %v926 = vunpack.c.l.b16 %v155
  %v927 = vunpack.c.h.b16 %v155
  %v928 = vunpack.c.l.b16 %v156
  %v929 = vunpack.c.h.b16 %v156
  %v930 = vunpack.c.l.b16 %v157
  %v931 = vunpack.c.h.b16 %v157
  %v932 = vunpack.c.l.b16 %v158
  %v933 = vunpack.c.h.b16 %v158
  %v934 = vunpack.c.l.b16 %v159
  %v935 = vunpack.c.h.b16 %v159
  %v936 = vunpack.c.l.b16 %v160
  %v937 = vunpack.c.h.b16 %v160
  %v938 = vunpack.c.l.b16 %v161
  %v939 = vunpack.c.h.b16 %v161
  %v940 = vunpack.c.l.b16 %v162
  %v941 = vunpack.c.h.b16 %v162
  %v942 = vunpack.c.l.b16 %v163
  %v943 = vunpack.c.h.b16 %v163
  %v944 = vunpack.c.l.b16 %v164
  %v945 = vunpack.c.h.b16 %v164
  %v946 = vunpack.c.l.b16 %v165
  %v947 = vunpack.c.h.b16 %v165
  %v948 = vunpack.c.l.b16 %v166
  %v949 = vunpack.c.h.b16 %v166
  %v950 = vunpack.c.l.b16 %v167
  %v951 = vunpack.c.h.b16 %v167
  %v952 = vunpack.c.l.b16 %v168
  %v953 = vunpack.c.h.b16 %v168
  %v954 = vunpack.c.l.b16 %v169
  %v955 = vunpack.c.h.b16 %v169
  %v956 = vunpack.c.l.b16 %v170
  %v957 = vunpack.c.h.b16 %v170
  %v958 = vunpack.c.l.b16 %v171
  %v959 = vunpack.c.h.b16 %v171
  %v960 = vunpack.c.l.b16 %v172
  %v961 = vunpack.c.h.b16 %v172
  %v962 = vunpack.c.l.b16 %v173
  %v963 = vunpack.c.h.b16 %v173
  %v964 = vunpack.c.l.b16 %v174
  %v965 = vunpack.c.h.b16 %v174
  %v966 = vunpack.c.l.b16 %v175
  %v967 = vunpack.c.h.b16 %v175
  %v968 = vunpack.c.l.b16 %v176
  %v969 = vunpack.c.h.b16 %v176
  %v970 = vunpack.c.l.b16 %v177
  %v971 = vunpack.c.h.b16 %v177
  %v972 = vunpack.c.l.b16 %v178
  %v973 = vunpack.c.h.b16 %v178
  %v974 = vunpack.c.l.b16 %v179
  %v975 = vunpack.c.h.b16 %v179
  %v976 = vunpack.c.l.b16 %v180
  %v977 = vunpack.c.h.b16 %v180
  %v978 = vunpack.c.l.b16 %v181
  %v979 = vunpack.c.h.b16 %v181
  %v980 = vunpack.c.l.b16 %v182
  %v981 = vunpack.c.h.b16 %v182
  %v982 = vunpack.c.l.b16 %v183
  %v983 = vunpack.c.h.b16 %v183
  %v984 = vunpack.c.l.b16 %v184
  %v985 = vunpack.c.h.b16 %v184
  %v986 = vunpack.c.l.b16 %v185
  %v987 = vunpack.c.h.b16 %v185
  %v988 = vunpack.c.l.b16 %v186
  %v989 = vunpack.c.h.b16 %v186
  %v990 = vunpack.c.l.b16 %v187
  %v991 = vunpack.c.h.b16 %v187
  %v992 = vunpack.c.l.b16 %v188
  %v993 = vunpack.c.h.b16 %v188
  %v994 = vunpack.c.l.b16 %v189
  %v995 = vunpack.c.h.b16 %v189
  %v996 = vunpack.c.l.b16 %v190
  %v997 = vunpack.c.h.b16 %v190
  %v998 = vunpack.c.l.b16 %v191
  %v999 = vunpack.c.h.b16 %v191
  %v1000 = vunpack.c.l.b16 %v192
  %v1001 = vunpack.c.h.b16 %v192
  %v1002 = vunpack.c.l.b16 %v193
  %v1003 = vunpack.c.h.b16 %v193
  %v1004 = vunpack.c.l.b16 %v194
  %v1005 = vunpack.c.h.b16 %v194
  %v1006 = vunpack.c.l.b16 %v195
  %v1007 = vunpack.c.h.b16 %v195
  %v1008 = vunpack.c.l.b16 %v196
  %v1009 = vunpack.c.h.b16 %v196
  %v1010 = vunpack.c.l.b16 %v197
  %v1011 = vunpack.c.h.b16 %v197
  %v1012 = vunpack.c.l.b16 %v198
  %v1013 = vunpack.c.h.b16 %v198
  %v1014 = vunpack.c.l.b16 %v199
  %v1015 = vunpack.c.h.b16 %v199
  %v1016 = vunpack.c.l.b16 %v200
  %v1017 = vunpack.c.h.b16 %v200
  %v1018 = vunpack.c.l.b16 %v201
  %v1019 = vunpack.c.h.b16 %v201
  %v1020 = vunpack.c.l.b16 %v202
  %v1021 = vunpack.c.h.b16 %v202
  %v1022 = vunpack.c.l.b16 %v203
  %v1023 = vunpack.c.h.b16 %v203
  %v1024 = vunpack.c.l.b16 %v204
  %v1025 = vunpack.c.h.b16 %v204
  %v1026 = vunpack.c.l.b16 %v205
  %v1027 = vunpack.c.h.b16 %v205
  %v1028 = vunpack.c.l.b16 %v206
  %v1029 = vunpack.c.h.b16 %v206
  %v1030 = vunpack.c.l.b16 %v207
  %v1031 = vunpack.c.h.b16 %v207
  %v1032 = vunpack.c.l.b16 %v208
  %v1033 = vunpack.c.h.b16 %v208
  %v1034 = vunpack.c.l.b16 %v209
  %v1035 = vunpack.c.h.b16 %v209
  %v1036 = vunpack.c.l.b16 %v210
  %v1037 = vunpack.c.h.b16 %v210
  %v1038 = vunpack.c.l.b16 %v211
  %v1039 = vunpack.c.h.b16 %v211
  %v1040 = vunpack.c.l.b16 %v212
  %v1041 = vunpack.c.h.b16 %v212
  %v1042 = vunpack.c.l.b16 %v213
  %v1043 = vunpack.c.h.b16 %v213
  %v1044 = vunpack.c.l.b16 %v214
  %v1045 = vunpack.c.h.b16 %v214
  %v1046 = vunpack.c.l.b16 %v215
  %v1047 = vunpack.c.h.b16 %v215
  %v1048 = vunpack.c.l.b16 %v216
  %v1049 = vunpack.c.h.b16 %v216
  %v1050 = vunpack.c.l.b16 %v217
  %v1051 = vunpack.c.h.b16 %v217
  %v1052 = vunpack.c.l.b16 %v218
  %v1053 = vunpack.c.h.b16 %v218
  %v1054 = vunpack.c.l.b16 %v219
  %v1055 = vunpack.c.h.b16 %v219
  %v1056 = vunpack.c.l.b16 %v220
  %v1057 = vunpack.c.h.b16 %v220
  %v1058 = vunpack.c.l.b16 %v221
  %v1059 = vunpack.c.h.b16 %v221
  %v1060 = vunpack.c.l.b16 %v222
  %v1061 = vunpack.c.h.b16 %v222
  %v1062 = vunpack.c.l.b16 %v223
  %v1063 = vunpack.c.h.b16 %v223
  %v1064 = vunpack.c.l.b16 %v224
  %v1065 = vunpack.c.h.b16 %v224
  %v1066 = vunpack.c.l.b16 %v225
  %v1067 = vunpack.c.h.b16 %v225
  %v1068 = vunpack.c.l.b16 %v226
  %v1069 = vunpack.c.h.b16 %v226
  %v1070 = vunpack.c.l.b16 %v227
  %v1071 = vunpack.c.h.b16 %v227
  %v1072 = vunpack.c.l.b16 %v228
  %v1073 = vunpack.c.h.b16 %v228
  %v1074 = vunpack.c.l.b16 %v229
  %v1075 = vunpack.c.h.b16 %v229
  %v1076 = vunpack.c.l.b16 %v230
  %v1077 = vunpack.c.h.b16 %v230
  %v1078 = vunpack.c.l.b16 %v231
  %v1079 = vunpack.c.h.b16 %v231
  %v1080 = vunpack.c.l.b16 %v232
  %v1081 = vunpack.c.h.b16 %v232
  %v1082 = vunpack.c.l.b16 %v233
  %v1083 = vunpack.c.h.b16 %v233
  %v1084 = vunpack.c.l.b16 %v234
  %v1085 = vunpack.c.h.b16 %v234
  %v1086 = vunpack.c.l.b16 %v235
  %v1087 = vunpack.c.h.b16 %v235
  %v1088 = vunpack.c.l.b16 %v236
  %v1089 = vunpack.c.h.b16 %v236
  %v1090 = vunpack.c.l.b16 %v237
  %v1091 = vunpack.c.h.b16 %v237
  %v1092 = vunpack.c.l.b16 %v238
  %v1093 = vunpack.c.h.b16 %v238
  %v1094 = vunpack.c.l.b16 %v239
  %v1095 = vunpack.c.h.b16 %v239
  %v1096 = vunpack.c.l.b16 %v240
  %v1097 = vunpack.c.h.b16 %v240
  %v1098 = vunpack.c.l.b16 %v241
  %v1099 = vunpack.c.h.b16 %v241
  %v1100 = vunpack.c.l.b16 %v242
  %v1101 = vunpack.c.h.b16 %v242
  %v1102 = vunpack.c.l.b16 %v243
  %v1103 = vunpack.c.h.b16 %v243
  %v1104 = vunpack.c.l.b16 %v244
  %v1105 = vunpack.c.h.b16 %v244
  %v1106 = vunpack.c.l.b16 %v245
  %v1107 = vunpack.c.h.b16 %v245
  %v1108 = vunpack.c.l.b16 %v246
  %v1109 = vunpack.c.h.b16 %v246
  %v1110 = vunpack.c.l.b16 %v247
  %v1111 = vunpack.c.h.b16 %v247
  %v1112 = vunpack.c.l.b16 %v248
  %v1113 = vunpack.c.h.b16 %v248
  %v1114 = vunpack.c.l.b16 %v249
  %v1115 = vunpack.c.h.b16 %v249
  %v1116 = vunpack.c.l.b16 %v250
  %v1117 = vunpack.c.h.b16 %v250
  %v1118 = vunpack.c.l.b16 %v251
  %v1119 = vunpack.c.h.b16 %v251
  %v1120 = vunpack.c.l.b16 %v252
  %v1121 = vunpack.c.h.b16 %v252
  %v1122 = vunpack.c.l.b16 %v253
  %v1123 = vunpack.c.h.b16 %v253
  %v1124 = vunpack.c.l.b16 %v254
  %v1125 = vunpack.c.h.b16 %v254
  %v1126 = vunpack.c.l.b16 %v255
  %v1127 = vunpack.c.h.b16 %v255
  %v1128 = vunpack.c.l.b16 %v256
  %v1129 = vunpack.c.h.b16 %v256
  %v1130 = vunpack.c.l.b16 %v257
  %v1131 = vunpack.c.h.b16 %v257
  %v1132 = vunpack.c.l.b16 %v258
  %v1133 = vunpack.c.h.b16 %v258
  %v1134 = vunpack.c.l.b16 %v259
  %v1135 = vunpack.c.h.b16 %v259
  %v1136 = vunpack.c.l.b16 %v260
  %v1137 = vunpack.c.h.b16 %v260
  %v1138 = vunpack.c.l.b16 %v261
  %v1139 = vunpack.c.h.b16 %v261
  %v1140 = vunpack.c.l.b16 %v262
  %v1141 = vunpack.c.h.b16 %v262
  %v1142 = vunpack.c.l.b16 %v263
  %v1143 = vunpack.c.h.b16 %v263
  %v1144 = vunpack.c.l.b16 %v264
  %v1145 = vunpack.c.h.b16 %v264
  %v1146 = vunpack.c.l.b16 %v265
  %v1147 = vunpack.c.h.b16 %v265
  %v1148 = vunpack.c.l.b16 %v266
  %v1149 = vunpack.c.h.b16 %v266
  %v1150 = vunpack.c.l.b16 %v267
  %v1151 = vunpack.c.h.b16 %v267
  %v1152 = vunpack.c.l.b16 %v268
  %v1153 = vunpack.c.h.b16 %v268
  %v1154 = vunpack.c.l.b16 %v269
  %v1155 = vunpack.c.h.b16 %v269
  %v1156 = vunpack.c.l.b16 %v270
  %v1157 = vunpack.c.h.b16 %v270
  %v1158 = vunpack.c.l.b16 %v271
  %v1159 = vunpack.c.h.b16 %v271
  %v1160 = vunpack.c.l.b16 %v272
  %v1161 = vunpack.c.h.b16 %v272
  %v1162 = vunpack.c.l.b16 %v273
  %v1163 = vunpack.c.h.b16 %v273
  %v1164 = vunpack.c.l.b16 %v274
  %v1165 = vunpack.c.h.b16 %v274
  %v1166 = vunpack.c.l.b16 %v275
  %v1167 = vunpack.c.h.b16 %v275
  %v1168 = vunpack.c.l.b16 %v276
  %v1169 = vunpack.c.h.b16 %v276
  %v1170 = vunpack.c.l.b16 %v277
  %v1171 = vunpack.c.h.b16 %v277
  %v1172 = vunpack.c.l.b16 %v278
  %v1173 = vunpack.c.h.b16 %v278
  %v1174 = vunpack.c.l.b16 %v279
  %v1175 = vunpack.c.h.b16 %v279
  %v1176 = vunpack.c.l.b16 %v280
  %v1177 = vunpack.c.h.b16 %v280
  %v1178 = vunpack.c.l.b16 %v281
  %v1179 = vunpack.c.h.b16 %v281
  %v1180 = vunpack.c.l.b16 %v282
  %v1181 = vunpack.c.h.b16 %v282
  %v1182 = vunpack.c.l.b16 %v283
  %v1183 = vunpack.c.h.b16 %v283
  %v1184 = vunpack.c.l.b16 %v284
  %v1185 = vunpack.c.h.b16 %v284
  %v1186 = vunpack.c.l.b16 %v285
  %v1187 = vunpack.c.h.b16 %v285
  %v1188 = vunpack.c.l.b16 %v286
  %v1189 = vunpack.c.h.b16 %v286
  %v1190 = vunpack.c.l.b16 %v287
  %v1191 = vunpack.c.h.b16 %v287
  %v1192 = vunpack.c.l.b16 %v288
  %v1193 = vunpack.c.h.b16 %v288
  %v1194 = vunpack.c.l.b16 %v289
  %v1195 = vunpack.c.h.b16 %v289
  %v1196 = vunpack.c.l.b16 %v290
  %v1197 = vunpack.c.h.b16 %v290
  %v1198 = vunpack.c.l.b16 %v291
  %v1199 = vunpack.c.h.b16 %v291
  %v1200 = vunpack.c.l.b16 %v292
  %v1201 = vunpack.c.h.b16 %v292
  %v1202 = vunpack.c.l.b16 %v293
  %v1203 = vunpack.c.h.b16 %v293
  %v1204 = vunpack.c.l.b16 %v294
  %v1205 = vunpack.c.h.b16 %v294
  %v1206 = vunpack.c.l.b16 %v295
  %v1207 = vunpack.c.h.b16 %v295
  %v1208 = vunpack.c.l.b16 %v296
  %v1209 = vunpack.c.h.b16 %v296
  %v1210 = vunpack.c.l.b16 %v297
  %v1211 = vunpack.c.h.b16 %v297
  %v1212 = vunpack.c.l.b16 %v298
  %v1213 = vunpack.c.h.b16 %v298
  %v1214 = vunpack.c.l.b16 %v299
  %v1215 = vunpack.c.h.b16 %v299
  %v1216 = vunpack.c.l.b16 %v300
  %v1217 = vunpack.c.h.b16 %v300
  %v1218 = vunpack.c.l.b16 %v301
  %v1219 = vunpack.c.h.b16 %v301
  %v1220 = vunpack.c.l.b16 %v302
  %v1221 = vunpack.c.h.b16 %v302
  %v1222 = vunpack.c.l.b16 %v303
  %v1223 = vunpack.c.h.b16 %v303
  %v1224 = vunpack.c.l.b16 %v304
  %v1225 = vunpack.c.h.b16 %v304
  %v1226 = vunpack.c.l.b16 %v305
  %v1227 = vunpack.c.h.b16 %v305
  %v1228 = vunpack.c.l.b16 %v306
  %v1229 = vunpack.c.h.b16 %v306
  %v1230 = vunpack.c.l.b16 %v307
  %v1231 = vunpack.c.h.b16 %v307
  %v1232 = vunpack.c.l.b16 %v308
  %v1233 = vunpack.c.h.b16 %v308
  %v1234 = vunpack.c.l.b16 %v309
  %v1235 = vunpack.c.h.b16 %v309
  %v1236 = vunpack.c.l.b16 %v310
  %v1237 = vunpack.c.h.b16 %v310
  %v1238 = vunpack.c.l.b16 %v311
  %v1239 = vunpack.c.h.b16 %v311
  %v1240 = vunpack.c.l.b16 %v312
  %v1241 = vunpack.c.h.b16 %v312
  %v1242 = vunpack.c.l.b16 %v313
  %v1243 = vunpack.c.h.b16 %v313
  %v1244 = vunpack.c.l.b16 %v314
  %v1245 = vunpack.c.h.b16 %v314
  %v1246 = vunpack.c.l.b16 %v315
  %v1247 = vunpack.c.h.b16 %v315
  %v1248 = vunpack.c.l.b16 %v316
  %v1249 = vunpack.c.h.b16 %v316
  %v1250 = vunpack.c.l.b16 %v317
  %v1251 = vunpack.c.h.b16 %v317
  %v1252 = vpack.c.b16 %v742, %v740
  %v1253 = vpack.c.b16 %v743, %v741
  %v1254 = vpack.c.b16 %v746, %v744
  %v1255 = vpack.c.b16 %v747, %v745
  %v1256 = vpack.c.b16 %v750, %v748
  %v1257 = vpack.c.b16 %v751, %v749
  %v1258 = vpack.c.b16 %v754, %v752
  %v1259 = vpack.c.b16 %v755, %v753
  %v1260 = vpack.c.b16 %v758, %v756
  %v1261 = vpack.c.b16 %v759, %v757
  %v1262 = vpack.c.b16 %v762, %v760
  %v1263 = vpack.c.b16 %v763, %v761
  %v1264 = vpack.c.b16 %v766, %v764
  %v1265 = vpack.c.b16 %v767, %v765
  %v1266 = vpack.c.b16 %v770, %v768
  %v1267 = vpack.c.b16 %v771, %v769
  %v1268 = vpack.c.b16 %v774, %v772
  %v1269 = vpack.c.b16 %v775, %v773
  %v1270 = vpack.c.b16 %v778, %v776
  %v1271 = vpack.c.b16 %v779, %v777
  %v1272 = vpack.c.b16 %v782, %v780
  %v1273 = vpack.c.b16 %v783, %v781
  %v1274 = vpack.c.b16 %v786, %v784
  %v1275 = vpack.c.b16 %v787, %v785
  %v1276 = vpack.c.b16 %v790, %v788
  %v1277 = vpack.c.b16 %v791, %v789
  %v1278 = vpack.c.b16 %v794, %v792
  %v1279 = vpack.c.b16 %v795, %v793
  %v1280 = vpack.c.b16 %v798, %v796
  %v1281 = vpack.c.b16 %v799, %v797
  %v1282 = vpack.c.b16 %v802, %v800
  %v1283 = vpack.c.b16 %v803, %v801
  %v1284 = vpack.c.b16 %v806, %v804
  %v1285 = vpack.c.b16 %v807, %v805
  %v1286 = vpack.c.b16 %v810, %v808
  %v1287 = vpack.c.b16 %v811, %v809
  %v1288 = vpack.c.b16 %v814, %v812
  %v1289 = vpack.c.b16 %v815, %v813
  %v1290 = vpack.c.b16 %v818, %v816
  %v1291 = vpack.c.b16 %v819, %v817
  %v1292 = vpack.c.b16 %v822, %v820
  %v1293 = vpack.c.b16 %v823, %v821
  %v1294 = vpack.c.b16 %v826, %v824
  %v1295 = vpack.c.b16 %v827, %v825
  %v1296 = vpack.c.b16 %v830, %v828
  %v1297 = vpack.c.b16 %v831, %v829
  %v1298 = vpack.c.b16 %v834, %v832
  %v1299 = vpack.c.b16 %v835, %v833
  %v1300 = vpack.c.b16 %v838, %v836
  %v1301 = vpack.c.b16 %v839, %v837
  %v1302 = vpack.c.b16 %v842, %v840
  %v1303 = vpack.c.b16 %v843, %v841
  %v1304 = vpack.c.b16 %v846, %v844
  %v1305 = vpack.c.b16 %v847, %v845
  %v1306 = vpack.c.b16 %v850, %v848
  %v1307 = vpack.c.b16 %v851, %v849
  %v1308 = vpack.c.b16 %v854, %v852
  %v1309 = vpack.c.b16 %v855, %v853
  %v1310 = vpack.c.b16 %v858, %v856
  %v1311 = vpack.c.b16 %v859, %v857
  %v1312 = vpack.c.b16 %v862, %v860
  %v1313 = vpack.c.b16 %v863, %v861
  %v1314 = vpack.c.b16 %v866, %v864
  %v1315 = vpack.c.b16 %v867, %v865
  %v1316 = vpack.c.b16 %v870, %v868
  %v1317 = vpack.c.b16 %v871, %v869
  %v1318 = vpack.c.b16 %v874, %v872
  %v1319 = vpack.c.b16 %v875, %v873
  %v1320 = vpack.c.b16 %v878, %v876
  %v1321 = vpack.c.b16 %v879, %v877
  %v1322 = vpack.c.b16 %v882, %v880
  %v1323 = vpack.c.b16 %v883, %v881
  %v1324 = vpack.c.b16 %v886, %v884
  %v1325 = vpack.c.b16 %v887, %v885
  %v1326 = vpack.c.b16 %v890, %v888
  %v1327 = vpack.c.b16 %v891, %v889
  %v1328 = vpack.c.b16 %v894, %v892
  %v1329 = vpack.c.b16 %v895, %v893
  %v1330 = vpack.c.b16 %v898, %v896
  %v1331 = vpack.c.b16 %v899, %v897
  %v1332 = vpack.c.b16 %v902, %v900
  %v1333 = vpack.c.b16 %v903, %v901
  %v1334 = vpack.c.b16 %v906, %v904
  %v1335 = vpack.c.b16 %v907, %v905
  %v1336 = vpack.c.b16 %v910, %v908
  %v1337 = vpack.c.b16 %v911, %v909
  %v1338 = vpack.c.b16 %v914, %v912
  %v1339 = vpack.c.b16 %v915, %v913
  %v1340 = vpack.c.b16 %v918, %v916
  %v1341 = vpack.c.b16 %v919, %v917
  %v1342 = vpack.c.b16 %v922, %v920
  %v1343 = vpack.c.b16 %v923, %v921
  %v1344 = vpack.c.b16 %v926, %v924
  %v1345 = vpack.c.b16 %v927, %v925
  %v1346 = vpack.c.b16 %v930, %v928
  %v1347 = vpack.c.b16 %v931, %v929
  %v1348 = vpack.c.b16 %v934, %v932
  %v1349 = vpack.c.b16 %v935, %v933
  %v1350 = vpack.c.b16 %v938, %v936
  %v1351 = vpack.c.b16 %v939, %v937
  %v1352 = vpack.c.b16 %v942, %v940
  %v1353 = vpack.c.b16 %v943, %v941
  %v1354 = vpack.c.b16 %v946, %v944
  %v1355 = vpack.c.b16 %v947, %v945
  %v1356 = vpack.c.b16 %v950, %v948
  %v1357 = vpack.c.b16 %v951, %v949
  %v1358 = vpack.c.b16 %v954, %v952
  %v1359 = vpack.c.b16 %v955, %v953
  %v1360 = vpack.c.b16 %v958, %v956
  %v1361 = vpack.c.b16 %v959, %v957
  %v1362 = vpack.c.b16 %v962, %v960
  %v1363 = vpack.c.b16 %v963, %v961
  %v1364 = vpack.c.b16 %v966, %v964
  %v1365 = vpack.c.b16 %v967, %v965
  %v1366 = vpack.c.b16 %v970, %v968
  %v1367 = vpack.c.b16 %v971, %v969
  %v1368 = vpack.c.b16 %v974, %v972
  %v1369 = vpack.c.b16 %v975, %v973
  %v1370 = vpack.c.b16 %v978, %v976
  %v1371 = vpack.c.b16 %v979, %v977
  %v1372 = vpack.c.b16 %v982, %v980
  %v1373 = vpack.c.b16 %v983, %v981
  %v1374 = vpack.c.b16 %v986, %v984
  %v1375 = vpack.c.b16 %v987, %v985
  %v1376 = vpack.c.b16 %v990, %v988
  %v1377 = vpack.c.b16 %v991, %v989
  %v1378 = vpack.c.b16 %v994, %v992
  %v1379 = vpack.c.b16 %v995, %v993
  %v1380 = vpack.c.b16 %v998, %v996
  %v1381 = vpack.c.b16 %v999, %v997
  %v1382 = vpack.c.b16 %v1002, %v1000
  %v1383 = vpack.c.b16 %v1003, %v1001
  %v1384 = vpack.c.b16 %v1006, %v1004
  %v1385 = vpack.c.b16 %v1007, %v1005
  %v1386 = vpack.c.b16 %v1010, %v1008
  %v1387 = vpack.c.b16 %v1011, %v1009
  %v1388 = vpack.c.b16 %v1014, %v1012
  %v1389 = vpack.c.b16 %v1015, %v1013
  %v1390 = vpack.c.b16 %v1018, %v1016
  %v1391 = vpack.c.b16 %v1019, %v1017
  %v1392 = vpack.c.b16 %v1022, %v1020
  %v1393 = vpack.c.b16 %v1023, %v1021
  %v1394 = vpack.c.b16 %v1026, %v1024
  %v1395 = vpack.c.b16 %v1027, %v1025
  %v1396 = vpack.c.b16 %v1030, %v1028
  %v1397 = vpack.c.b16 %v1031, %v1029
  %v1398 = vpack.c.b16 %v1034, %v1032
  %v1399 = vpack.c.b16 %v1035, %v1033
  %v1400 = vpack.c.b16 %v1038, %v1036
  %v1401 = vpack.c.b16 %v1039, %v1037
  %v1402 = vpack.c.b16 %v1042, %v1040
  %v1403 = vpack.c.b16 %v1043, %v1041
  %v1404 = vpack.c.b16 %v1046, %v1044
  %v1405 = vpack.c.b16 %v1047, %v1045
  %v1406 = vpack.c.b16 %v1050, %v1048
  %v1407 = vpack.c.b16 %v1051, %v1049
  %v1408 = vpack.c.b16 %v1054, %v1052
  %v1409 = vpack.c.b16 %v1055, %v1053
  %v1410 = vpack.c.b16 %v1058, %v1056
  %v1411 = vpack.c.b16 %v1059, %v1057
  %v1412 = vpack.c.b16 %v1062, %v1060
  %v1413 = vpack.c.b16 %v1063, %v1061
  %v1414 = vpack.c.b16 %v1066, %v1064
  %v1415 = vpack.c.b16 %v1067, %v1065
  %v1416 = vpack.c.b16 %v1070, %v1068
  %v1417 = vpack.c.b16 %v1071, %v1069
  %v1418 = vpack.c.b16 %v1074, %v1072
  %v1419 = vpack.c.b16 %v1075, %v1073
  %v1420 = vpack.c.b16 %v1078, %v1076
  %v1421 = vpack.c.b16 %v1079, %v1077
  %v1422 = vpack.c.b16 %v1082, %v1080
  %v1423 = vpack.c.b16 %v1083, %v1081
  %v1424 = vpack.c.b16 %v1086, %v1084
  %v1425 = vpack.c.b16 %v1087, %v1085
  %v1426 = vpack.c.b16 %v1090, %v1088
  %v1427 = vpack.c.b16 %v1091, %v1089
  %v1428 = vpack.c.b16 %v1094, %v1092
  %v1429 = vpack.c.b16 %v1095, %v1093
  %v1430 = vpack.c.b16 %v1098, %v1096
  %v1431 = vpack.c.b16 %v1099, %v1097
  %v1432 = vpack.c.b16 %v1102, %v1100
  %v1433 = vpack.c.b16 %v1103, %v1101
  %v1434 = vpack.c.b16 %v1106, %v1104
  %v1435 = vpack.c.b16 %v1107, %v1105
  %v1436 = vpack.c.b16 %v1110, %v1108
  %v1437 = vpack.c.b16 %v1111, %v1109
  %v1438 = vpack.c.b16 %v1114, %v1112
  %v1439 = vpack.c.b16 %v1115, %v1113
  %v1440 = vpack.c.b16 %v1118, %v1116
  %v1441 = vpack.c.b16 %v1119, %v1117
  %v1442 = vpack.c.b16 %v1122, %v1120
  %v1443 = vpack.c.b16 %v1123, %v1121
  %v1444 = vpack.c.b16 %v1126, %v1124
  %v1445 = vpack.c.b16 %v1127, %v1125
  %v1446 = vpack.c.b16 %v1130, %v1128
  %v1447 = vpack.c.b16 %v1131, %v1129
  %v1448 = vpack.c.b16 %v1134, %v1132
  %v1449 = vpack.c.b16 %v1135, %v1133
  %v1450 = vpack.c.b16 %v1138, %v1136
  %v1451 = vpack.c.b16 %v1139, %v1137
  %v1452 = vpack.c.b16 %v1142, %v1140
  %v1453 = vpack.c.b16 %v1143, %v1141
  %v1454 = vpack.c.b16 %v1146, %v1144
  %v1455 = vpack.c.b16 %v1147, %v1145
  %v1456 = vpack.c.b16 %v1150, %v1148
  %v1457 = vpack.c.b16 %v1151, %v1149
  %v1458 = vpack.c.b16 %v1154, %v1152
  %v1459 = vpack.c.b16 %v1155, %v1153
  %v1460 = vpack.c.b16 %v1158, %v1156
  %v1461 = vpack.c.b16 %v1159, %v1157
  %v1462 = vpack.c.b16 %v1162, %v1160
  %v1463 = vpack.c.b16 %v1163, %v1161
  %v1464 = vpack.c.b16 %v1166, %v1164
  %v1465 = vpack.c.b16 %v1167, %v1165
  %v1466 = vpack.c.b16 %v1170, %v1168
  %v1467 = vpack.c.b16 %v1171, %v1169
  %v1468 = vpack.c.b16 %v1174, %v1172
  %v1469 = vpack.c.b16 %v1175, %v1173
  %v1470 = vpack.c.b16 %v1178, %v1176
  %v1471 = vpack.c.b16 %v1179, %v1177
  %v1472 = vpack.c.b16 %v1182, %v1180
  %v1473 = vpack.c.b16 %v1183, %v1181
  %v1474 = vpack.c.b16 %v1186, %v1184
  %v1475 = vpack.c.b16 %v1187, %v1185
  %v1476 = vpack.c.b16 %v1190, %v1188
  %v1477 = vpack.c.b16 %v1191, %v1189
  %v1478 = vpack.c.b16 %v1194, %v1192
  %v1479 = vpack.c.b16 %v1195, %v1193
  %v1480 = vpack.c.b16 %v1198, %v1196
  %v1481 = vpack.c.b16 %v1199, %v1197
  %v1482 = vpack.c.b16 %v1202, %v1200
  %v1483 = vpack.c.b16 %v1203, %v1201
  %v1484 = vpack.c.b16 %v1206, %v1204
  %v1485 = vpack.c.b16 %v1207, %v1205
  %v1486 = vpack.c.b16 %v1210, %v1208
  %v1487 = vpack.c.b16 %v1211, %v1209
  %v1488 = vpack.c.b16 %v1214, %v1212
  %v1489 = vpack.c.b16 %v1215, %v1213
  %v1490 = vpack.c.b16 %v1218, %v1216
  %v1491 = vpack.c.b16 %v1219, %v1217
  %v1492 = vpack.c.b16 %v1222, %v1220
  %v1493 = vpack.c.b16 %v1223, %v1221
  %v1494 = vpack.c.b16 %v1226, %v1224
  %v1495 = vpack.c.b16 %v1227, %v1225
  %v1496 = vpack.c.b16 %v1230, %v1228
  %v1497 = vpack.c.b16 %v1231, %v1229
  %v1498 = vpack.c.b16 %v1234, %v1232
  %v1499 = vpack.c.b16 %v1235, %v1233
  %v1500 = vpack.c.b16 %v1238, %v1236
  %v1501 = vpack.c.b16 %v1239, %v1237
  %v1502 = vpack.c.b16 %v1242, %v1240
  %v1503 = vpack.c.b16 %v1243, %v1241
  %v1504 = vpack.c.b16 %v1246, %v1244
  %v1505 = vpack.c.b16 %v1247, %v1245
  %v1506 = vpack.c.b16 %v1250, %v1248
  %v1507 = vpack.c.b16 %v1251, %v1249
  %1764 = vmatpush.bf16.msra.mxu0 %v1266
  %1765 = vmatpush.bf16.msra.mxu0 %v1264
  %1766 = vmatpush.bf16.msra.mxu0 %v1262
  %1767 = vmatpush.bf16.msra.mxu0 %v1260
  %1768 = vmatpush.bf16.msra.mxu0 %v1258
  %1769 = vmatpush.bf16.msra.mxu0 %v1256
  %1770 = vmatpush.bf16.msra.mxu0 %v1254
  %1771 = vmatpush.bf16.msra.mxu0 %v1252
  %1772 = vmatmul.bf16.gmra.mxu0 %v420
  %v1773 = vpop.f32.mrf.mxu0
  %v1774 = vadd.f32 %v320, %v1773
  %v1775 = vpop.f32.mrf.mxu0
  %v1776 = vadd.f32 %v320, %v1775
  %1777 = vmatmul.bf16.gmra.mxu0 %v436
  %v1778 = vpop.f32.mrf.mxu0
  %v1779 = vadd.f32 %v320, %v1778
  %v1780 = vpop.f32.mrf.mxu0
  %v1781 = vadd.f32 %v320, %v1780
  %1782 = vdwg.mxu0
  %1783 = vmatpush.bf16.msra.mxu0 %v1282
  %1784 = vmatpush.bf16.msra.mxu0 %v1280
  %1785 = vmatpush.bf16.msra.mxu0 %v1278
  %1786 = vmatpush.bf16.msra.mxu0 %v1276
  %1787 = vmatpush.bf16.msra.mxu0 %v1274
  %1788 = vmatpush.bf16.msra.mxu0 %v1272
  %1789 = vmatpush.bf16.msra.mxu0 %v1270
  %1790 = vmatpush.bf16.msra.mxu0 %v1268
  %1791 = vmatmul.bf16.gmra.mxu0 %v421
  %v1792 = vpop.f32.mrf.mxu0
  %v1793 = vadd.f32 %v1774, %v1792
  %v1794 = vpop.f32.mrf.mxu0
  %v1795 = vadd.f32 %v1776, %v1794
  %1796 = vmatmul.bf16.gmra.mxu0 %v437
  %v1797 = vpop.f32.mrf.mxu0
  %v1798 = vadd.f32 %v1779, %v1797
  %v1799 = vpop.f32.mrf.mxu0
  %v1800 = vadd.f32 %v1781, %v1799
  %1801 = vdwg.mxu0
  %1802 = vmatpush.bf16.msra.mxu0 %v1298
  %1803 = vmatpush.bf16.msra.mxu0 %v1296
  %1804 = vmatpush.bf16.msra.mxu0 %v1294
  %1805 = vmatpush.bf16.msra.mxu0 %v1292
  %1806 = vmatpush.bf16.msra.mxu0 %v1290
  %1807 = vmatpush.bf16.msra.mxu0 %v1288
  %1808 = vmatpush.bf16.msra.mxu0 %v1286
  %1809 = vmatpush.bf16.msra.mxu0 %v1284
  %1810 = vmatmul.bf16.gmra.mxu0 %v422
  %v1811 = vpop.f32.mrf.mxu0
  %v1812 = vadd.f32 %v1793, %v1811
  %v1813 = vpop.f32.mrf.mxu0
  %v1814 = vadd.f32 %v1795, %v1813
  %1815 = vmatmul.bf16.gmra.mxu0 %v438
  %v1816 = vpop.f32.mrf.mxu0
  %v1817 = vadd.f32 %v1798, %v1816
  %v1818 = vpop.f32.mrf.mxu0
  %v1819 = vadd.f32 %v1800, %v1818
  %1820 = vdwg.mxu0
  %1821 = vmatpush.bf16.msra.mxu0 %v1314
  %1822 = vmatpush.bf16.msra.mxu0 %v1312
  %1823 = vmatpush.bf16.msra.mxu0 %v1310
  %1824 = vmatpush.bf16.msra.mxu0 %v1308
  %1825 = vmatpush.bf16.msra.mxu0 %v1306
  %1826 = vmatpush.bf16.msra.mxu0 %v1304
  %1827 = vmatpush.bf16.msra.mxu0 %v1302
  %1828 = vmatpush.bf16.msra.mxu0 %v1300
  %1829 = vmatmul.bf16.gmra.mxu0 %v423
  %v1830 = vpop.f32.mrf.mxu0
  %v1831 = vadd.f32 %v1812, %v1830
  %v1832 = vpop.f32.mrf.mxu0
  %v1833 = vadd.f32 %v1814, %v1832
  %1834 = vmatmul.bf16.gmra.mxu0 %v439
  %v1835 = vpop.f32.mrf.mxu0
  %v1836 = vadd.f32 %v1817, %v1835
  %v1837 = vpop.f32.mrf.mxu0
  %v1838 = vadd.f32 %v1819, %v1837
  %1839 = vdwg.mxu0
  %1840 = vmatpush.bf16.msra.mxu0 %v1330
  %1841 = vmatpush.bf16.msra.mxu0 %v1328
  %1842 = vmatpush.bf16.msra.mxu0 %v1326
  %1843 = vmatpush.bf16.msra.mxu0 %v1324
  %1844 = vmatpush.bf16.msra.mxu0 %v1322
  %1845 = vmatpush.bf16.msra.mxu0 %v1320
  %1846 = vmatpush.bf16.msra.mxu0 %v1318
  %1847 = vmatpush.bf16.msra.mxu0 %v1316
  %1848 = vmatmul.bf16.gmra.mxu0 %v424
  %v1849 = vpop.f32.mrf.mxu0
  %v1850 = vadd.f32 %v1831, %v1849
  %v1851 = vpop.f32.mrf.mxu0
  %v1852 = vadd.f32 %v1833, %v1851
  %1853 = vmatmul.bf16.gmra.mxu0 %v440
  %v1854 = vpop.f32.mrf.mxu0
  %v1855 = vadd.f32 %v1836, %v1854
  %v1856 = vpop.f32.mrf.mxu0
  %v1857 = vadd.f32 %v1838, %v1856
  %1858 = vdwg.mxu0
  %1859 = vmatpush.bf16.msra.mxu0 %v1346
  %1860 = vmatpush.bf16.msra.mxu0 %v1344
  %1861 = vmatpush.bf16.msra.mxu0 %v1342
  %1862 = vmatpush.bf16.msra.mxu0 %v1340
  %1863 = vmatpush.bf16.msra.mxu0 %v1338
  %1864 = vmatpush.bf16.msra.mxu0 %v1336
  %1865 = vmatpush.bf16.msra.mxu0 %v1334
  %1866 = vmatpush.bf16.msra.mxu0 %v1332
  %1867 = vmatmul.bf16.gmra.mxu0 %v425
  %v1868 = vpop.f32.mrf.mxu0
  %v1869 = vadd.f32 %v1850, %v1868
  %v1870 = vpop.f32.mrf.mxu0
  %v1871 = vadd.f32 %v1852, %v1870
  %1872 = vmatmul.bf16.gmra.mxu0 %v441
  %v1873 = vpop.f32.mrf.mxu0
  %v1874 = vadd.f32 %v1855, %v1873
  %v1875 = vpop.f32.mrf.mxu0
  %v1876 = vadd.f32 %v1857, %v1875
  %1877 = vdwg.mxu0
  %1878 = vmatpush.bf16.msra.mxu0 %v1362
  %1879 = vmatpush.bf16.msra.mxu0 %v1360
  %1880 = vmatpush.bf16.msra.mxu0 %v1358
  %1881 = vmatpush.bf16.msra.mxu0 %v1356
  %1882 = vmatpush.bf16.msra.mxu0 %v1354
  %1883 = vmatpush.bf16.msra.mxu0 %v1352
  %1884 = vmatpush.bf16.msra.mxu0 %v1350
  %1885 = vmatpush.bf16.msra.mxu0 %v1348
  %1886 = vmatmul.bf16.gmra.mxu0 %v426
  %v1887 = vpop.f32.mrf.mxu0
  %v1888 = vadd.f32 %v1869, %v1887
  %v1889 = vpop.f32.mrf.mxu0
  %v1890 = vadd.f32 %v1871, %v1889
  %1891 = vmatmul.bf16.gmra.mxu0 %v442
  %v1892 = vpop.f32.mrf.mxu0
  %v1893 = vadd.f32 %v1874, %v1892
  %v1894 = vpop.f32.mrf.mxu0
  %v1895 = vadd.f32 %v1876, %v1894
  %1896 = vdwg.mxu0
  %1897 = vmatpush.bf16.msra.mxu0 %v1378
  %1898 = vmatpush.bf16.msra.mxu0 %v1376
  %1899 = vmatpush.bf16.msra.mxu0 %v1374
  %1900 = vmatpush.bf16.msra.mxu0 %v1372
  %1901 = vmatpush.bf16.msra.mxu0 %v1370
  %1902 = vmatpush.bf16.msra.mxu0 %v1368
  %1903 = vmatpush.bf16.msra.mxu0 %v1366
  %1904 = vmatpush.bf16.msra.mxu0 %v1364
  %1905 = vmatmul.bf16.gmra.mxu0 %v427
  %v1906 = vpop.f32.mrf.mxu0
  %v1907 = vadd.f32 %v1888, %v1906
  %v1908 = vpop.f32.mrf.mxu0
  %v1909 = vadd.f32 %v1890, %v1908
  %1910 = vmatmul.bf16.gmra.mxu0 %v443
  %v1911 = vpop.f32.mrf.mxu0
  %v1912 = vadd.f32 %v1893, %v1911
  %v1913 = vpop.f32.mrf.mxu0
  %v1914 = vadd.f32 %v1895, %v1913
  %1915 = vdwg.mxu0
  %1916 = vmatpush.bf16.msra.mxu0 %v1394
  %1917 = vmatpush.bf16.msra.mxu0 %v1392
  %1918 = vmatpush.bf16.msra.mxu0 %v1390
  %1919 = vmatpush.bf16.msra.mxu0 %v1388
  %1920 = vmatpush.bf16.msra.mxu0 %v1386
  %1921 = vmatpush.bf16.msra.mxu0 %v1384
  %1922 = vmatpush.bf16.msra.mxu0 %v1382
  %1923 = vmatpush.bf16.msra.mxu0 %v1380
  %1924 = vmatmul.bf16.gmra.mxu0 %v428
  %v1925 = vpop.f32.mrf.mxu0
  %v1926 = vadd.f32 %v1907, %v1925
  %v1927 = vpop.f32.mrf.mxu0
  %v1928 = vadd.f32 %v1909, %v1927
  %1929 = vmatmul.bf16.gmra.mxu0 %v444
  %v1930 = vpop.f32.mrf.mxu0
  %v1931 = vadd.f32 %v1912, %v1930
  %v1932 = vpop.f32.mrf.mxu0
  %v1933 = vadd.f32 %v1914, %v1932
  %1934 = vdwg.mxu0
  %1935 = vmatpush.bf16.msra.mxu0 %v1410
  %1936 = vmatpush.bf16.msra.mxu0 %v1408
  %1937 = vmatpush.bf16.msra.mxu0 %v1406
  %1938 = vmatpush.bf16.msra.mxu0 %v1404
  %1939 = vmatpush.bf16.msra.mxu0 %v1402
  %1940 = vmatpush.bf16.msra.mxu0 %v1400
  %1941 = vmatpush.bf16.msra.mxu0 %v1398
  %1942 = vmatpush.bf16.msra.mxu0 %v1396
  %1943 = vmatmul.bf16.gmra.mxu0 %v429
  %v1944 = vpop.f32.mrf.mxu0
  %v1945 = vadd.f32 %v1926, %v1944
  %v1946 = vpop.f32.mrf.mxu0
  %v1947 = vadd.f32 %v1928, %v1946
  %1948 = vmatmul.bf16.gmra.mxu0 %v445
  %v1949 = vpop.f32.mrf.mxu0
  %v1950 = vadd.f32 %v1931, %v1949
  %v1951 = vpop.f32.mrf.mxu0
  %v1952 = vadd.f32 %v1933, %v1951
  %1953 = vdwg.mxu0
  %1954 = vmatpush.bf16.msra.mxu0 %v1426
  %1955 = vmatpush.bf16.msra.mxu0 %v1424
  %1956 = vmatpush.bf16.msra.mxu0 %v1422
  %1957 = vmatpush.bf16.msra.mxu0 %v1420
  %1958 = vmatpush.bf16.msra.mxu0 %v1418
  %1959 = vmatpush.bf16.msra.mxu0 %v1416
  %1960 = vmatpush.bf16.msra.mxu0 %v1414
  %1961 = vmatpush.bf16.msra.mxu0 %v1412
  %1962 = vmatmul.bf16.gmra.mxu0 %v430
  %v1963 = vpop.f32.mrf.mxu0
  %v1964 = vadd.f32 %v1945, %v1963
  %v1965 = vpop.f32.mrf.mxu0
  %v1966 = vadd.f32 %v1947, %v1965
  %1967 = vmatmul.bf16.gmra.mxu0 %v446
  %v1968 = vpop.f32.mrf.mxu0
  %v1969 = vadd.f32 %v1950, %v1968
  %v1970 = vpop.f32.mrf.mxu0
  %v1971 = vadd.f32 %v1952, %v1970
  %1972 = vdwg.mxu0
  %1973 = vmatpush.bf16.msra.mxu0 %v1442
  %1974 = vmatpush.bf16.msra.mxu0 %v1440
  %1975 = vmatpush.bf16.msra.mxu0 %v1438
  %1976 = vmatpush.bf16.msra.mxu0 %v1436
  %1977 = vmatpush.bf16.msra.mxu0 %v1434
  %1978 = vmatpush.bf16.msra.mxu0 %v1432
  %1979 = vmatpush.bf16.msra.mxu0 %v1430
  %1980 = vmatpush.bf16.msra.mxu0 %v1428
  %1981 = vmatmul.bf16.gmra.mxu0 %v431
  %v1982 = vpop.f32.mrf.mxu0
  %v1983 = vadd.f32 %v1964, %v1982
  %v1984 = vpop.f32.mrf.mxu0
  %v1985 = vadd.f32 %v1966, %v1984
  %1986 = vmatmul.bf16.gmra.mxu0 %v447
  %v1987 = vpop.f32.mrf.mxu0
  %v1988 = vadd.f32 %v1969, %v1987
  %v1989 = vpop.f32.mrf.mxu0
  %v1990 = vadd.f32 %v1971, %v1989
  %1991 = vdwg.mxu0
  %1992 = vmatpush.bf16.msra.mxu0 %v1458
  %1993 = vmatpush.bf16.msra.mxu0 %v1456
  %1994 = vmatpush.bf16.msra.mxu0 %v1454
  %1995 = vmatpush.bf16.msra.mxu0 %v1452
  %1996 = vmatpush.bf16.msra.mxu0 %v1450
  %1997 = vmatpush.bf16.msra.mxu0 %v1448
  %1998 = vmatpush.bf16.msra.mxu0 %v1446
  %1999 = vmatpush.bf16.msra.mxu0 %v1444
  %2000 = vmatmul.bf16.gmra.mxu0 %v432
  %v2001 = vpop.f32.mrf.mxu0
  %v2002 = vadd.f32 %v1983, %v2001
  %v2003 = vpop.f32.mrf.mxu0
  %v2004 = vadd.f32 %v1985, %v2003
  %2005 = vmatmul.bf16.gmra.mxu0 %v448
  %v2006 = vpop.f32.mrf.mxu0
  %v2007 = vadd.f32 %v1988, %v2006
  %v2008 = vpop.f32.mrf.mxu0
  %v2009 = vadd.f32 %v1990, %v2008
  %2010 = vdwg.mxu0
  %2011 = vmatpush.bf16.msra.mxu0 %v1474
  %2012 = vmatpush.bf16.msra.mxu0 %v1472
  %2013 = vmatpush.bf16.msra.mxu0 %v1470
  %2014 = vmatpush.bf16.msra.mxu0 %v1468
  %2015 = vmatpush.bf16.msra.mxu0 %v1466
  %2016 = vmatpush.bf16.msra.mxu0 %v1464
  %2017 = vmatpush.bf16.msra.mxu0 %v1462
  %2018 = vmatpush.bf16.msra.mxu0 %v1460
  %2019 = vmatmul.bf16.gmra.mxu0 %v433
  %v2020 = vpop.f32.mrf.mxu0
  %v2021 = vadd.f32 %v2002, %v2020
  %v2022 = vpop.f32.mrf.mxu0
  %v2023 = vadd.f32 %v2004, %v2022
  %2024 = vmatmul.bf16.gmra.mxu0 %v449
  %v2025 = vpop.f32.mrf.mxu0
  %v2026 = vadd.f32 %v2007, %v2025
  %v2027 = vpop.f32.mrf.mxu0
  %v2028 = vadd.f32 %v2009, %v2027
  %2029 = vdwg.mxu0
  %2030 = vmatpush.bf16.msra.mxu0 %v1490
  %2031 = vmatpush.bf16.msra.mxu0 %v1488
  %2032 = vmatpush.bf16.msra.mxu0 %v1486
  %2033 = vmatpush.bf16.msra.mxu0 %v1484
  %2034 = vmatpush.bf16.msra.mxu0 %v1482
  %2035 = vmatpush.bf16.msra.mxu0 %v1480
  %2036 = vmatpush.bf16.msra.mxu0 %v1478
  %2037 = vmatpush.bf16.msra.mxu0 %v1476
  %2038 = vmatmul.bf16.gmra.mxu0 %v434
  %v2039 = vpop.f32.mrf.mxu0
  %v2040 = vadd.f32 %v2021, %v2039
  %v2041 = vpop.f32.mrf.mxu0
  %v2042 = vadd.f32 %v2023, %v2041
  %2043 = vmatmul.bf16.gmra.mxu0 %v450
  %v2044 = vpop.f32.mrf.mxu0
  %v2045 = vadd.f32 %v2026, %v2044
  %v2046 = vpop.f32.mrf.mxu0
  %v2047 = vadd.f32 %v2028, %v2046
  %2048 = vdwg.mxu0
  %2049 = vmatpush.bf16.msra.mxu0 %v1506
  %2050 = vmatpush.bf16.msra.mxu0 %v1504
  %2051 = vmatpush.bf16.msra.mxu0 %v1502
  %2052 = vmatpush.bf16.msra.mxu0 %v1500
  %2053 = vmatpush.bf16.msra.mxu0 %v1498
  %2054 = vmatpush.bf16.msra.mxu0 %v1496
  %2055 = vmatpush.bf16.msra.mxu0 %v1494
  %2056 = vmatpush.bf16.msra.mxu0 %v1492
  %2057 = vmatmul.bf16.gmra.mxu0 %v435
  %v2058 = vpop.f32.mrf.mxu0
  %v2059 = vadd.f32 %v2040, %v2058
  %v2060 = vpop.f32.mrf.mxu0
  %v2061 = vadd.f32 %v2042, %v2060
  %2062 = vmatmul.bf16.gmra.mxu0 %v451
  %v2063 = vpop.f32.mrf.mxu0
  %v2064 = vadd.f32 %v2045, %v2063
  %v2065 = vpop.f32.mrf.mxu0
  %v2066 = vadd.f32 %v2047, %v2065
  %2067 = vdwg.mxu0
  %2068 = vmatpush.bf16.msra.mxu0 %v1267
  %2069 = vmatpush.bf16.msra.mxu0 %v1265
  %2070 = vmatpush.bf16.msra.mxu0 %v1263
  %2071 = vmatpush.bf16.msra.mxu0 %v1261
  %2072 = vmatpush.bf16.msra.mxu0 %v1259
  %2073 = vmatpush.bf16.msra.mxu0 %v1257
  %2074 = vmatpush.bf16.msra.mxu0 %v1255
  %2075 = vmatpush.bf16.msra.mxu0 %v1253
  %2076 = vmatmul.bf16.gmra.mxu0 %v420
  %v2077 = vpop.f32.mrf.mxu0
  %v2078 = vadd.f32 %v321, %v2077
  %v2079 = vpop.f32.mrf.mxu0
  %v2080 = vadd.f32 %v321, %v2079
  %2081 = vmatmul.bf16.gmra.mxu0 %v436
  %v2082 = vpop.f32.mrf.mxu0
  %v2083 = vadd.f32 %v321, %v2082
  %v2084 = vpop.f32.mrf.mxu0
  %v2085 = vadd.f32 %v321, %v2084
  %2086 = vdwg.mxu0
  %2087 = vmatpush.bf16.msra.mxu0 %v1283
  %2088 = vmatpush.bf16.msra.mxu0 %v1281
  %2089 = vmatpush.bf16.msra.mxu0 %v1279
  %2090 = vmatpush.bf16.msra.mxu0 %v1277
  %2091 = vmatpush.bf16.msra.mxu0 %v1275
  %2092 = vmatpush.bf16.msra.mxu0 %v1273
  %2093 = vmatpush.bf16.msra.mxu0 %v1271
  %2094 = vmatpush.bf16.msra.mxu0 %v1269
  %2095 = vmatmul.bf16.gmra.mxu0 %v421
  %v2096 = vpop.f32.mrf.mxu0
  %v2097 = vadd.f32 %v2078, %v2096
  %v2098 = vpop.f32.mrf.mxu0
  %v2099 = vadd.f32 %v2080, %v2098
  %2100 = vmatmul.bf16.gmra.mxu0 %v437
  %v2101 = vpop.f32.mrf.mxu0
  %v2102 = vadd.f32 %v2083, %v2101
  %v2103 = vpop.f32.mrf.mxu0
  %v2104 = vadd.f32 %v2085, %v2103
  %2105 = vdwg.mxu0
  %2106 = vmatpush.bf16.msra.mxu0 %v1299
  %2107 = vmatpush.bf16.msra.mxu0 %v1297
  %2108 = vmatpush.bf16.msra.mxu0 %v1295
  %2109 = vmatpush.bf16.msra.mxu0 %v1293
  %2110 = vmatpush.bf16.msra.mxu0 %v1291
  %2111 = vmatpush.bf16.msra.mxu0 %v1289
  %2112 = vmatpush.bf16.msra.mxu0 %v1287
  %2113 = vmatpush.bf16.msra.mxu0 %v1285
  %2114 = vmatmul.bf16.gmra.mxu0 %v422
  %v2115 = vpop.f32.mrf.mxu0
  %v2116 = vadd.f32 %v2097, %v2115
  %v2117 = vpop.f32.mrf.mxu0
  %v2118 = vadd.f32 %v2099, %v2117
  %2119 = vmatmul.bf16.gmra.mxu0 %v438
  %v2120 = vpop.f32.mrf.mxu0
  %v2121 = vadd.f32 %v2102, %v2120
  %v2122 = vpop.f32.mrf.mxu0
  %v2123 = vadd.f32 %v2104, %v2122
  %2124 = vdwg.mxu0
  %2125 = vmatpush.bf16.msra.mxu0 %v1315
  %2126 = vmatpush.bf16.msra.mxu0 %v1313
  %2127 = vmatpush.bf16.msra.mxu0 %v1311
  %2128 = vmatpush.bf16.msra.mxu0 %v1309
  %2129 = vmatpush.bf16.msra.mxu0 %v1307
  %2130 = vmatpush.bf16.msra.mxu0 %v1305
  %2131 = vmatpush.bf16.msra.mxu0 %v1303
  %2132 = vmatpush.bf16.msra.mxu0 %v1301
  %2133 = vmatmul.bf16.gmra.mxu0 %v423
  %v2134 = vpop.f32.mrf.mxu0
  %v2135 = vadd.f32 %v2116, %v2134
  %v2136 = vpop.f32.mrf.mxu0
  %v2137 = vadd.f32 %v2118, %v2136
  %2138 = vmatmul.bf16.gmra.mxu0 %v439
  %v2139 = vpop.f32.mrf.mxu0
  %v2140 = vadd.f32 %v2121, %v2139
  %v2141 = vpop.f32.mrf.mxu0
  %v2142 = vadd.f32 %v2123, %v2141
  %2143 = vdwg.mxu0
  %2144 = vmatpush.bf16.msra.mxu0 %v1331
  %2145 = vmatpush.bf16.msra.mxu0 %v1329
  %2146 = vmatpush.bf16.msra.mxu0 %v1327
  %2147 = vmatpush.bf16.msra.mxu0 %v1325
  %2148 = vmatpush.bf16.msra.mxu0 %v1323
  %2149 = vmatpush.bf16.msra.mxu0 %v1321
  %2150 = vmatpush.bf16.msra.mxu0 %v1319
  %2151 = vmatpush.bf16.msra.mxu0 %v1317
  %2152 = vmatmul.bf16.gmra.mxu0 %v424
  %v2153 = vpop.f32.mrf.mxu0
  %v2154 = vadd.f32 %v2135, %v2153
  %v2155 = vpop.f32.mrf.mxu0
  %v2156 = vadd.f32 %v2137, %v2155
  %2157 = vmatmul.bf16.gmra.mxu0 %v440
  %v2158 = vpop.f32.mrf.mxu0
  %v2159 = vadd.f32 %v2140, %v2158
  %v2160 = vpop.f32.mrf.mxu0
  %v2161 = vadd.f32 %v2142, %v2160
  %2162 = vdwg.mxu0
  %2163 = vmatpush.bf16.msra.mxu0 %v1347
  %2164 = vmatpush.bf16.msra.mxu0 %v1345
  %2165 = vmatpush.bf16.msra.mxu0 %v1343
  %2166 = vmatpush.bf16.msra.mxu0 %v1341
  %2167 = vmatpush.bf16.msra.mxu0 %v1339
  %2168 = vmatpush.bf16.msra.mxu0 %v1337
  %2169 = vmatpush.bf16.msra.mxu0 %v1335
  %2170 = vmatpush.bf16.msra.mxu0 %v1333
  %2171 = vmatmul.bf16.gmra.mxu0 %v425
  %v2172 = vpop.f32.mrf.mxu0
  %v2173 = vadd.f32 %v2154, %v2172
  %v2174 = vpop.f32.mrf.mxu0
  %v2175 = vadd.f32 %v2156, %v2174
  %2176 = vmatmul.bf16.gmra.mxu0 %v441
  %v2177 = vpop.f32.mrf.mxu0
  %v2178 = vadd.f32 %v2159, %v2177
  %v2179 = vpop.f32.mrf.mxu0
  %v2180 = vadd.f32 %v2161, %v2179
  %2181 = vdwg.mxu0
  %2182 = vmatpush.bf16.msra.mxu0 %v1363
  %2183 = vmatpush.bf16.msra.mxu0 %v1361
  %2184 = vmatpush.bf16.msra.mxu0 %v1359
  %2185 = vmatpush.bf16.msra.mxu0 %v1357
  %2186 = vmatpush.bf16.msra.mxu0 %v1355
  %2187 = vmatpush.bf16.msra.mxu0 %v1353
  %2188 = vmatpush.bf16.msra.mxu0 %v1351
  %2189 = vmatpush.bf16.msra.mxu0 %v1349
  %2190 = vmatmul.bf16.gmra.mxu0 %v426
  %v2191 = vpop.f32.mrf.mxu0
  %v2192 = vadd.f32 %v2173, %v2191
  %v2193 = vpop.f32.mrf.mxu0
  %v2194 = vadd.f32 %v2175, %v2193
  %2195 = vmatmul.bf16.gmra.mxu0 %v442
  %v2196 = vpop.f32.mrf.mxu0
  %v2197 = vadd.f32 %v2178, %v2196
  %v2198 = vpop.f32.mrf.mxu0
  %v2199 = vadd.f32 %v2180, %v2198
  %2200 = vdwg.mxu0
  %2201 = vmatpush.bf16.msra.mxu0 %v1379
  %2202 = vmatpush.bf16.msra.mxu0 %v1377
  %2203 = vmatpush.bf16.msra.mxu0 %v1375
  %2204 = vmatpush.bf16.msra.mxu0 %v1373
  %2205 = vmatpush.bf16.msra.mxu0 %v1371
  %2206 = vmatpush.bf16.msra.mxu0 %v1369
  %2207 = vmatpush.bf16.msra.mxu0 %v1367
  %2208 = vmatpush.bf16.msra.mxu0 %v1365
  %2209 = vmatmul.bf16.gmra.mxu0 %v427
  %v2210 = vpop.f32.mrf.mxu0
  %v2211 = vadd.f32 %v2192, %v2210
  %v2212 = vpop.f32.mrf.mxu0
  %v2213 = vadd.f32 %v2194, %v2212
  %2214 = vmatmul.bf16.gmra.mxu0 %v443
  %v2215 = vpop.f32.mrf.mxu0
  %v2216 = vadd.f32 %v2197, %v2215
  %v2217 = vpop.f32.mrf.mxu0
  %v2218 = vadd.f32 %v2199, %v2217
  %2219 = vdwg.mxu0
  %2220 = vmatpush.bf16.msra.mxu0 %v1395
  %2221 = vmatpush.bf16.msra.mxu0 %v1393
  %2222 = vmatpush.bf16.msra.mxu0 %v1391
  %2223 = vmatpush.bf16.msra.mxu0 %v1389
  %2224 = vmatpush.bf16.msra.mxu0 %v1387
  %2225 = vmatpush.bf16.msra.mxu0 %v1385
  %2226 = vmatpush.bf16.msra.mxu0 %v1383
  %2227 = vmatpush.bf16.msra.mxu0 %v1381
  %2228 = vmatmul.bf16.gmra.mxu0 %v428
  %v2229 = vpop.f32.mrf.mxu0
  %v2230 = vadd.f32 %v2211, %v2229
  %v2231 = vpop.f32.mrf.mxu0
  %v2232 = vadd.f32 %v2213, %v2231
  %2233 = vmatmul.bf16.gmra.mxu0 %v444
  %v2234 = vpop.f32.mrf.mxu0
  %v2235 = vadd.f32 %v2216, %v2234
  %v2236 = vpop.f32.mrf.mxu0
  %v2237 = vadd.f32 %v2218, %v2236
  %2238 = vdwg.mxu0
  %2239 = vmatpush.bf16.msra.mxu0 %v1411
  %2240 = vmatpush.bf16.msra.mxu0 %v1409
  %2241 = vmatpush.bf16.msra.mxu0 %v1407
  %2242 = vmatpush.bf16.msra.mxu0 %v1405
  %2243 = vmatpush.bf16.msra.mxu0 %v1403
  %2244 = vmatpush.bf16.msra.mxu0 %v1401
  %2245 = vmatpush.bf16.msra.mxu0 %v1399
  %2246 = vmatpush.bf16.msra.mxu0 %v1397
  %2247 = vmatmul.bf16.gmra.mxu0 %v429
  %v2248 = vpop.f32.mrf.mxu0
  %v2249 = vadd.f32 %v2230, %v2248
  %v2250 = vpop.f32.mrf.mxu0
  %v2251 = vadd.f32 %v2232, %v2250
  %2252 = vmatmul.bf16.gmra.mxu0 %v445
  %v2253 = vpop.f32.mrf.mxu0
  %v2254 = vadd.f32 %v2235, %v2253
  %v2255 = vpop.f32.mrf.mxu0
  %v2256 = vadd.f32 %v2237, %v2255
  %2257 = vdwg.mxu0
  %2258 = vmatpush.bf16.msra.mxu0 %v1427
  %2259 = vmatpush.bf16.msra.mxu0 %v1425
  %2260 = vmatpush.bf16.msra.mxu0 %v1423
  %2261 = vmatpush.bf16.msra.mxu0 %v1421
  %2262 = vmatpush.bf16.msra.mxu0 %v1419
  %2263 = vmatpush.bf16.msra.mxu0 %v1417
  %2264 = vmatpush.bf16.msra.mxu0 %v1415
  %2265 = vmatpush.bf16.msra.mxu0 %v1413
  %2266 = vmatmul.bf16.gmra.mxu0 %v430
  %v2267 = vpop.f32.mrf.mxu0
  %v2268 = vadd.f32 %v2249, %v2267
  %v2269 = vpop.f32.mrf.mxu0
  %v2270 = vadd.f32 %v2251, %v2269
  %2271 = vmatmul.bf16.gmra.mxu0 %v446
  %v2272 = vpop.f32.mrf.mxu0
  %v2273 = vadd.f32 %v2254, %v2272
  %v2274 = vpop.f32.mrf.mxu0
  %v2275 = vadd.f32 %v2256, %v2274
  %2276 = vdwg.mxu0
  %2277 = vmatpush.bf16.msra.mxu0 %v1443
  %2278 = vmatpush.bf16.msra.mxu0 %v1441
  %2279 = vmatpush.bf16.msra.mxu0 %v1439
  %2280 = vmatpush.bf16.msra.mxu0 %v1437
  %2281 = vmatpush.bf16.msra.mxu0 %v1435
  %2282 = vmatpush.bf16.msra.mxu0 %v1433
  %2283 = vmatpush.bf16.msra.mxu0 %v1431
  %2284 = vmatpush.bf16.msra.mxu0 %v1429
  %2285 = vmatmul.bf16.gmra.mxu0 %v431
  %v2286 = vpop.f32.mrf.mxu0
  %v2287 = vadd.f32 %v2268, %v2286
  %v2288 = vpop.f32.mrf.mxu0
  %v2289 = vadd.f32 %v2270, %v2288
  %2290 = vmatmul.bf16.gmra.mxu0 %v447
  %v2291 = vpop.f32.mrf.mxu0
  %v2292 = vadd.f32 %v2273, %v2291
  %v2293 = vpop.f32.mrf.mxu0
  %v2294 = vadd.f32 %v2275, %v2293
  %2295 = vdwg.mxu0
  %2296 = vmatpush.bf16.msra.mxu0 %v1459
  %2297 = vmatpush.bf16.msra.mxu0 %v1457
  %2298 = vmatpush.bf16.msra.mxu0 %v1455
  %2299 = vmatpush.bf16.msra.mxu0 %v1453
  %2300 = vmatpush.bf16.msra.mxu0 %v1451
  %2301 = vmatpush.bf16.msra.mxu0 %v1449
  %2302 = vmatpush.bf16.msra.mxu0 %v1447
  %2303 = vmatpush.bf16.msra.mxu0 %v1445
  %2304 = vmatmul.bf16.gmra.mxu0 %v432
  %v2305 = vpop.f32.mrf.mxu0
  %v2306 = vadd.f32 %v2287, %v2305
  %v2307 = vpop.f32.mrf.mxu0
  %v2308 = vadd.f32 %v2289, %v2307
  %2309 = vmatmul.bf16.gmra.mxu0 %v448
  %v2310 = vpop.f32.mrf.mxu0
  %v2311 = vadd.f32 %v2292, %v2310
  %v2312 = vpop.f32.mrf.mxu0
  %v2313 = vadd.f32 %v2294, %v2312
  %2314 = vdwg.mxu0
  %2315 = vmatpush.bf16.msra.mxu0 %v1475
  %2316 = vmatpush.bf16.msra.mxu0 %v1473
  %2317 = vmatpush.bf16.msra.mxu0 %v1471
  %2318 = vmatpush.bf16.msra.mxu0 %v1469
  %2319 = vmatpush.bf16.msra.mxu0 %v1467
  %2320 = vmatpush.bf16.msra.mxu0 %v1465
  %2321 = vmatpush.bf16.msra.mxu0 %v1463
  %2322 = vmatpush.bf16.msra.mxu0 %v1461
  %2323 = vmatmul.bf16.gmra.mxu0 %v433
  %v2324 = vpop.f32.mrf.mxu0
  %v2325 = vadd.f32 %v2306, %v2324
  %v2326 = vpop.f32.mrf.mxu0
  %v2327 = vadd.f32 %v2308, %v2326
  %2328 = vmatmul.bf16.gmra.mxu0 %v449
  %v2329 = vpop.f32.mrf.mxu0
  %v2330 = vadd.f32 %v2311, %v2329
  %v2331 = vpop.f32.mrf.mxu0
  %v2332 = vadd.f32 %v2313, %v2331
  %2333 = vdwg.mxu0
  %2334 = vmatpush.bf16.msra.mxu0 %v1491
  %2335 = vmatpush.bf16.msra.mxu0 %v1489
  %2336 = vmatpush.bf16.msra.mxu0 %v1487
  %2337 = vmatpush.bf16.msra.mxu0 %v1485
  %2338 = vmatpush.bf16.msra.mxu0 %v1483
  %2339 = vmatpush.bf16.msra.mxu0 %v1481
  %2340 = vmatpush.bf16.msra.mxu0 %v1479
  %2341 = vmatpush.bf16.msra.mxu0 %v1477
  %2342 = vmatmul.bf16.gmra.mxu0 %v434
  %v2343 = vpop.f32.mrf.mxu0
  %v2344 = vadd.f32 %v2325, %v2343
  %v2345 = vpop.f32.mrf.mxu0
  %v2346 = vadd.f32 %v2327, %v2345
  %2347 = vmatmul.bf16.gmra.mxu0 %v450
  %v2348 = vpop.f32.mrf.mxu0
  %v2349 = vadd.f32 %v2330, %v2348
  %v2350 = vpop.f32.mrf.mxu0
  %v2351 = vadd.f32 %v2332, %v2350
  %2352 = vdwg.mxu0
  %2353 = vmatpush.bf16.msra.mxu0 %v1507
  %2354 = vmatpush.bf16.msra.mxu0 %v1505
  %2355 = vmatpush.bf16.msra.mxu0 %v1503
  %2356 = vmatpush.bf16.msra.mxu0 %v1501
  %2357 = vmatpush.bf16.msra.mxu0 %v1499
  %2358 = vmatpush.bf16.msra.mxu0 %v1497
  %2359 = vmatpush.bf16.msra.mxu0 %v1495
  %2360 = vmatpush.bf16.msra.mxu0 %v1493
  %2361 = vmatmul.bf16.gmra.mxu0 %v435
  %v2362 = vpop.f32.mrf.mxu0
  %v2363 = vadd.f32 %v2344, %v2362
  %v2364 = vpop.f32.mrf.mxu0
  %v2365 = vadd.f32 %v2346, %v2364
  %2366 = vmatmul.bf16.gmra.mxu0 %v451
  %v2367 = vpop.f32.mrf.mxu0
  %v2368 = vadd.f32 %v2349, %v2367
  %v2369 = vpop.f32.mrf.mxu0
  %v2370 = vadd.f32 %v2351, %v2369
  %2371 = vdwg.mxu0
  %v2372 = vld [vmem:[#allocation2] sm:$0x3]
  %v2373 = vadd.f32 %v2059, %v2061
  %v2374 = vadd.f32 %v2373, %v2064
  %v2375 = vadd.f32 %v2374, %v2066
  %v2376 = vrot.slane %v2375, 4
  %v2377 = vadd.f32 %v2375, %v2376
  %v2378 = vrot.slane %v2377, 2
  %v2379 = vadd.f32 %v2377, %v2378
  %v2380 = vrot.slane %v2379, 1
  %v2381 = vadd.f32 %v2379, %v2380
  %v2382 = vadd.f32 %v2363, %v2365
  %v2383 = vadd.f32 %v2382, %v2368
  %v2384 = vadd.f32 %v2383, %v2370
  %v2385 = vrot.slane %v2384, 4
  %v2386 = vadd.f32 %v2384, %v2385
  %v2387 = vrot.slane %v2386, 2
  %v2388 = vadd.f32 %v2386, %v2387
  %v2389 = vrot.slane %v2388, 1
  %v2390 = vadd.f32 %v2388, %v2389
  %v2393 = vrot.slane %v2390, 7
  %vm2394 = vcmask 1040384
  %v2395 = vsel %vm2394, %v2381, %v2393
  %v2397 = vadd.f32 %v2372, %v2395
  %v2398 = vlaneseq
  %vm2399 = vcmp.ge.s32.totalorder %v2398, 0
  %vm2400 = vcmp.lt.s32.totalorder %v2398, 256
  %vm2401 = vmand %vm2399, %vm2400
  %2402 = vst.msk [vmem:[#allocation2] sm:$0x3] %vm2401, %v2397
  %v2403 = vld [vmem:[#allocation3] sm:$0x3]
  %v2404 = vmul.f32 %v2059, %v2059
  %v2405 = vmul.f32 %v2363, %v2363
  %v2406 = vmul.f32 %v2061, %v2061
  %v2407 = vmul.f32 %v2365, %v2365
  %v2408 = vmul.f32 %v2064, %v2064
  %v2409 = vmul.f32 %v2368, %v2368
  %v2410 = vmul.f32 %v2066, %v2066
  %v2411 = vmul.f32 %v2370, %v2370
  %v2412 = vadd.f32 %v2404, %v2406
  %v2413 = vadd.f32 %v2412, %v2408
  %v2414 = vadd.f32 %v2413, %v2410
  %v2415 = vrot.slane %v2414, 4
  %v2416 = vadd.f32 %v2414, %v2415
  %v2417 = vrot.slane %v2416, 2
  %v2418 = vadd.f32 %v2416, %v2417
  %v2419 = vrot.slane %v2418, 1
  %v2420 = vadd.f32 %v2418, %v2419
  %v2421 = vadd.f32 %v2405, %v2407
  %v2422 = vadd.f32 %v2421, %v2409
  %v2423 = vadd.f32 %v2422, %v2411
  %v2424 = vrot.slane %v2423, 4
  %v2425 = vadd.f32 %v2423, %v2424
  %v2426 = vrot.slane %v2425, 2
  %v2427 = vadd.f32 %v2425, %v2426
  %v2428 = vrot.slane %v2427, 1
  %v2429 = vadd.f32 %v2427, %v2428
  %v2432 = vrot.slane %v2429, 7
  %v2433 = vsel %vm2394, %v2420, %v2432
  %v2435 = vadd.f32 %v2403, %v2433
  %2436 = vst.msk [vmem:[#allocation3] sm:$0x3] %vm2401, %v2435
  %s2437 = smul.u32 0, 32
  %v2438 = vpack.c.bf16 %v2363, %v2059
  %v2439 = vpack.c.bf16 %v2365, %v2061
  %v2440 = vpack.c.bf16 %v2368, %v2064
  %v2441 = vpack.c.bf16 %v2370, %v2066
  %s2442 = sshra.s32 %s2437, 3
  %s2443 = sand.u32 %s2437, 7
  %s2444 = smul.u32 %s2442, 2
  %s2445 = smul.addr %s2444, 4
  %s2446 = scalar_lea.vmem %s5, %s2445
  %2447 = vst [vmem:[%s2446] sm:$0xff] %v2438
  %2448 = vst [vmem:[%s2446 + $0x8] sm:$0xff] %v2439
  %2449 = vst [vmem:[%s2446 + $0x10] sm:$0xff] %v2440
  %2450 = vst [vmem:[%s2446 + $0x18] sm:$0xff] %v2441
  // Predicated region
  $region26: #{discriminator_pallas.7} parent=0 // pred_check
    %p2451 = pneg %p20
  $region27: #{discriminator_pallas.7} parent=0 // pred_check_branch
    %2453 = sbr.rel (%p2451) target = $region29
  $region28: #{discriminator_pallas.7} parent=0 // pred_region
    %v2454 = vld [vmem:[#allocation2] sm:$0x3]
    %v2455 = vmul.f32 %v2454, 0.03125
    %v2456 = vld [vmem:[#allocation3] sm:$0x3]
    %v2457 = vmul.f32 %v2456, 0.03125
    %v2458 = vmul.f32 %v2455, %v2455
    %v2459 = vsub.f32 %v2457, %v2458
    %v2460 = vmax.f32 %v2459, 0.0
    %v2461 = vadd.f32 %v2460, 1e-05
    %v2462 = vrsqrt.pop %v2461
    %v2463 = vmul.f32 %v2462, %v2461
    %v2464 = vmul.f32 %v2463, %v2462
    %v2465 = vmul.f32 0.5, %v2464
    %v2466 = vsub.f32 1.5, %v2465
    %v2467 = vmul.f32 %v2462, %v2466
    %vm2468 = vweird.f32 %v2461
    %vm2469 = vweird.f32 %v2462
    %vm2470 = vmor %vm2468, %vm2469
    %v2471 = vsel %vm2470, %v2462, %v2467
    %v2472 = vld [vmem:[%s3] sm:$0x3]
    %v2473 = vmul.f32 %v2471, %v2472
    %v2474 = vld [vmem:[%s5] sm:$0xff]
    %v2475 = vld [vmem:[%s5 + $0x8] sm:$0xff]
    %v2476 = vld [vmem:[%s5 + $0x10] sm:$0xff]
    %v2477 = vld [vmem:[%s5 + $0x18] sm:$0xff]
    %v2478 = vunpack.c.l.bf16 %v2474
    %v2479 = vunpack.c.h.bf16 %v2474
    %v2480 = vunpack.c.l.bf16 %v2475
    %v2481 = vunpack.c.h.bf16 %v2475
    %v2482 = vunpack.c.l.bf16 %v2476
    %v2483 = vunpack.c.h.bf16 %v2476
    %v2484 = vunpack.c.l.bf16 %v2477
    %v2485 = vunpack.c.h.bf16 %v2477
    %v2487 = vperm.slane %v2455, 0
    %v2488 = vperm.slane %v2455, 1
    %v2491 = vsub.f32 %v2478, %v2487
    %v2492 = vsub.f32 %v2479, %v2488
    %v2493 = vsub.f32 %v2480, %v2487
    %v2494 = vsub.f32 %v2481, %v2488
    %v2495 = vsub.f32 %v2482, %v2487
    %v2496 = vsub.f32 %v2483, %v2488
    %v2497 = vsub.f32 %v2484, %v2487
    %v2498 = vsub.f32 %v2485, %v2488
    %v2500 = vperm.slane %v2473, 0
    %v2501 = vperm.slane %v2473, 1
    %v2504 = vmul.f32 %v2491, %v2500
    %v2505 = vmul.f32 %v2492, %v2501
    %v2506 = vmul.f32 %v2493, %v2500
    %v2507 = vmul.f32 %v2494, %v2501
    %v2508 = vmul.f32 %v2495, %v2500
    %v2509 = vmul.f32 %v2496, %v2501
    %v2510 = vmul.f32 %v2497, %v2500
    %v2511 = vmul.f32 %v2498, %v2501
    %v2512 = vld [vmem:[%s4] sm:$0x3]
    %v2514 = vperm.slane %v2512, 0
    %v2515 = vperm.slane %v2512, 1
    %v2518 = vadd.f32 %v2504, %v2514
    %v2519 = vadd.f32 %v2505, %v2515
    %v2520 = vadd.f32 %v2506, %v2514
    %v2521 = vadd.f32 %v2507, %v2515
    %v2522 = vadd.f32 %v2508, %v2514
    %v2523 = vadd.f32 %v2509, %v2515
    %v2524 = vadd.f32 %v2510, %v2514
    %v2525 = vadd.f32 %v2511, %v2515
    %vm2526 = vcmp.gt.f32.partialorder %v2518, 0.0
    %vm2527 = vcmp.gt.f32.partialorder %v2519, 0.0
    %vm2528 = vcmp.gt.f32.partialorder %v2520, 0.0
    %vm2529 = vcmp.gt.f32.partialorder %v2521, 0.0
    %vm2530 = vcmp.gt.f32.partialorder %v2522, 0.0
    %vm2531 = vcmp.gt.f32.partialorder %v2523, 0.0
    %vm2532 = vcmp.gt.f32.partialorder %v2524, 0.0
    %vm2533 = vcmp.gt.f32.partialorder %v2525, 0.0
    %v2534 = vmul.f32 %v2518, 0.2
    %v2535 = vmul.f32 %v2519, 0.2
    %v2536 = vmul.f32 %v2520, 0.2
    %v2537 = vmul.f32 %v2521, 0.2
    %v2538 = vmul.f32 %v2522, 0.2
    %v2539 = vmul.f32 %v2523, 0.2
    %v2540 = vmul.f32 %v2524, 0.2
    %v2541 = vmul.f32 %v2525, 0.2
    %v2542 = vsel %vm2526, %v2518, %v2534
    %v2543 = vsel %vm2527, %v2519, %v2535
    %v2544 = vsel %vm2528, %v2520, %v2536
    %v2545 = vsel %vm2529, %v2521, %v2537
    %v2546 = vsel %vm2530, %v2522, %v2538
    %v2547 = vsel %vm2531, %v2523, %v2539
    %v2548 = vsel %vm2532, %v2524, %v2540
    %v2549 = vsel %vm2533, %v2525, %v2541
    %v2550 = vpack.c.bf16 %v2543, %v2542
    %v2551 = vpack.c.bf16 %v2545, %v2544
    %v2552 = vpack.c.bf16 %v2547, %v2546
    %v2553 = vpack.c.bf16 %v2549, %v2548
    %2554 = vst [vmem:[%s5] sm:$0xff] %v2550
    %2555 = vst [vmem:[%s5 + $0x8] sm:$0xff] %v2551
    %2556 = vst [vmem:[%s5 + $0x10] sm:$0xff] %v2552
    %2557 = vst [vmem:[%s5 + $0x18] sm:$0xff] %v2553
  $region29: #{discriminator_pallas.7} parent=0 // pred_fallthru
    _
  // Predicated region
  $region30: #{discriminator_pallas.7} parent=0 // pred_check
    _
  $region31: #{discriminator_pallas.7} parent=0 // pred_check_branch
    %2559 = sbr.rel (0) target = $region33
  $region32: #{discriminator_pallas.7} parent=0 // pred_region
    _
  $region33: #{discriminator_pallas.7} parent=0 // pred_fallthru
    _
  // Predicated region
  $region34: #{discriminator_pallas.7} parent=0 // pred_check
    _
  $region35: #{discriminator_pallas.7} parent=0 // pred_check_branch
    %2561 = sbr.rel (0) target = $region37
  $region36: #{discriminator_pallas.7} parent=0 // pred_region
    _
  $region37: #{discriminator_pallas.7} parent=0 // pred_fallthru
    _

// kernel: discriminator_pallas.9
$region0: #{discriminator_pallas.9}
  #allocation0 [shape = 'u32[]', space=smem, size = 0x4, offset = 0x4, fixed_abs, tag = 'smem constant byte address 0x4 - core index']
  #allocation1 [shape = 'u32[72,128]{1,0:T(1,128)}', space=vmem, size = 0x9000, scoped, tag = 'internal scratch']
  #allocation2 [shape = 'f32[1,1]{1,0:T(1,128)S(1)}', space=vmem, size = 0x200, scoped, tag = 'scoped memory for discriminator_pallas.9']
  %s0 = inlined_call_operand.vmem [shape: bf16[2,2048], index: 0, kind: input, shape index: {}]
  %s1 = inlined_call_operand.vmem [shape: bf16[1,2048], index: 1, kind: input, shape index: {}]
  %s2 = inlined_call_operand.<no memory space> [shape: f32[1,1], index: 2, kind: input, shape index: {}]
  %s3 = inlined_call_operand.vmem [shape: f32[2,1], index: 3, kind: output, shape index: {}]
  %s4 = sld [smem:[#allocation0]]
  $region22: #{discriminator_pallas.9} parent=0
    _
  %s6 = ssub.s32 1, %s4
  %s7 = scalar_select 0, %s6, %s4
  %v8 = vstv %s2
  %9 = vst [vmem:[#allocation2] sm:$0x1] %v8
  // Predicated region
  $region2: #{discriminator_pallas.9} parent=0 // pred_check
    _
  $region3: #{discriminator_pallas.9} parent=0 // pred_check_branch
    %11 = sbr.rel (0) target = $region5
  $region4: #{discriminator_pallas.9} parent=0 // pred_region
    _
  $region5: #{discriminator_pallas.9} parent=0 // pred_fallthru
    _
  // Predicated region
  $region6: #{discriminator_pallas.9} parent=0 // pred_check
    _
  $region7: #{discriminator_pallas.9} parent=0 // pred_check_branch
    %13 = sbr.rel (0) target = $region9
  $region8: #{discriminator_pallas.9} parent=0 // pred_region
    _
  $region9: #{discriminator_pallas.9} parent=0 // pred_fallthru
    _
  // Predicated region
  $region10: #{discriminator_pallas.9} parent=0 // pred_check
    _
  $region11: #{discriminator_pallas.9} parent=0 // pred_check_branch
    %15 = sbr.rel (0) target = $region13
  $region12: #{discriminator_pallas.9} parent=0 // pred_region
    _
  $region13: #{discriminator_pallas.9} parent=0 // pred_fallthru
    _
  %v16 = vld [vmem:[%s0] sm:$0xff]
  %v17 = vld [vmem:[%s0 + $0x8] sm:$0xff]
  %v18 = vunpack.c.l.bf16 %v16
  %v19 = vunpack.c.h.bf16 %v16
  %v20 = vunpack.c.l.bf16 %v17
  %v21 = vunpack.c.h.bf16 %v17
  %v22 = vld [vmem:[%s1] sm:$0xff]
  %v23 = vld [vmem:[%s1 + $0x8] sm:$0xff]
  %v24 = vunpack.c.l.bf16 %v22
  %v25 = vunpack.c.h.bf16 %v22
  %v26 = vunpack.c.l.bf16 %v23
  %v27 = vunpack.c.h.bf16 %v23
  %v32 = vperm.slane %v24, 0
  %v33 = vperm.slane %v24, 2
  %v34 = vperm.slane %v24, 4
  %v35 = vperm.slane %v24, 6
  %v36 = vperm.slane %v25, 0
  %v37 = vperm.slane %v25, 2
  %v38 = vperm.slane %v25, 4
  %v39 = vperm.slane %v25, 6
  %v40 = vperm.slane %v26, 0
  %v41 = vperm.slane %v26, 2
  %v42 = vperm.slane %v26, 4
  %v43 = vperm.slane %v26, 6
  %v44 = vperm.slane %v27, 0
  %v45 = vperm.slane %v27, 2
  %v46 = vperm.slane %v27, 4
  %v47 = vperm.slane %v27, 6
  %v64 = vperm.slane %v32, 0
  %v65 = vperm.slane %v33, 0
  %v66 = vperm.slane %v34, 0
  %v67 = vperm.slane %v35, 0
  %v68 = vperm.slane %v36, 0
  %v69 = vperm.slane %v37, 0
  %v70 = vperm.slane %v38, 0
  %v71 = vperm.slane %v39, 0
  %v72 = vperm.slane %v40, 0
  %v73 = vperm.slane %v41, 0
  %v74 = vperm.slane %v42, 0
  %v75 = vperm.slane %v43, 0
  %v76 = vperm.slane %v44, 0
  %v77 = vperm.slane %v45, 0
  %v78 = vperm.slane %v46, 0
  %v79 = vperm.slane %v47, 0
  %v96 = vrot.slane %v65, 6
  %v97 = vrot.slane %v66, 4
  %v98 = vrot.slane %v67, 2
  %v99 = vrot.slane %v69, 6
  %v100 = vrot.slane %v70, 4
  %v101 = vrot.slane %v71, 2
  %v102 = vrot.slane %v73, 6
  %v103 = vrot.slane %v74, 4
  %v104 = vrot.slane %v75, 2
  %v105 = vrot.slane %v77, 6
  %v106 = vrot.slane %v78, 4
  %v107 = vrot.slane %v79, 2
  %vm108 = vcmask 1041408
  %v109 = vsel %vm108, %v64, %v96
  %vm110 = vcmask 1045508
  %v111 = vsel %vm110, %v97, %v98
  %vm112 = vcmask 1043456
  %v113 = vsel %vm112, %v109, %v111
  %v114 = vsel %vm108, %v68, %v99
  %v115 = vsel %vm110, %v100, %v101
  %v116 = vsel %vm112, %v114, %v115
  %v117 = vsel %vm108, %v72, %v102
  %v118 = vsel %vm110, %v103, %v104
  %v119 = vsel %vm112, %v117, %v118
  %v120 = vsel %vm108, %v76, %v105
  %v121 = vsel %vm110, %v106, %v107
  %v122 = vsel %vm112, %v120, %v121
  %v127 = vmul.f32 %v18, %v113
  %v128 = vmul.f32 %v19, %v116
  %v129 = vmul.f32 %v20, %v119
  %v130 = vmul.f32 %v21, %v122
  %135 = vst [vmem:[#allocation1] ss:$4 sm:$0xff] %v127
  %s136 = scalar_lea.vmem [#allocation1], 32
  %137 = vst [vmem:[%s136] ss:$4 sm:$0xff] %v128
  %v138 = vld.sshfl [vmem:[#allocation1] sm:$0xff pattern:$0x73625140]
  %v139 = vld.sshfl [vmem:[#allocation1 + $0x8] sm:$0xff pattern:$0x73625140]
  %v140 = vld.sshfl [vmem:[#allocation1 + $0x10] sm:$0xff pattern:$0x73625140]
  %v141 = vld.sshfl [vmem:[#allocation1 + $0x18] sm:$0xff pattern:$0x73625140]
  %v142 = vld.sshfl [vmem:[#allocation1 + $0x20] sm:$0xff pattern:$0x73625140]
  %v143 = vld.sshfl [vmem:[#allocation1 + $0x28] sm:$0xff pattern:$0x73625140]
  %v144 = vld.sshfl [vmem:[#allocation1 + $0x30] sm:$0xff pattern:$0x73625140]
  %v145 = vld.sshfl [vmem:[#allocation1 + $0x38] sm:$0xff pattern:$0x73625140]
  %146 = vst [vmem:[#allocation1] ss:$4 sm:$0xff] %v129
  %147 = vst [vmem:[%s136] ss:$4 sm:$0xff] %v130
  %v148 = vld.sshfl [vmem:[#allocation1] sm:$0xff pattern:$0x73625140]
  %v149 = vld.sshfl [vmem:[#allocation1 + $0x8] sm:$0xff pattern:$0x73625140]
  %v150 = vld.sshfl [vmem:[#allocation1 + $0x10] sm:$0xff pattern:$0x73625140]
  %v151 = vld.sshfl [vmem:[#allocation1 + $0x18] sm:$0xff pattern:$0x73625140]
  %v152 = vld.sshfl [vmem:[#allocation1 + $0x20] sm:$0xff pattern:$0x73625140]
  %v153 = vld.sshfl [vmem:[#allocation1 + $0x28] sm:$0xff pattern:$0x73625140]
  %v154 = vld.sshfl [vmem:[#allocation1 + $0x30] sm:$0xff pattern:$0x73625140]
  %v155 = vld.sshfl [vmem:[#allocation1 + $0x38] sm:$0xff pattern:$0x73625140]
  %v172 = vsel %vm108, %v138, 0.0
  %v173 = vsel %vm108, %v139, 0.0
  %v174 = vadd.f32 %v172, %v173
  %v175 = vsel %vm108, %v140, 0.0
  %v176 = vadd.f32 %v174, %v175
  %v177 = vsel %vm108, %v141, 0.0
  %v178 = vadd.f32 %v176, %v177
  %v179 = vsel %vm108, %v142, 0.0
  %v180 = vadd.f32 %v178, %v179
  %v181 = vsel %vm108, %v143, 0.0
  %v182 = vadd.f32 %v180, %v181
  %v183 = vsel %vm108, %v144, 0.0
  %v184 = vadd.f32 %v182, %v183
  %v185 = vsel %vm108, %v145, 0.0
  %v186 = vadd.f32 %v184, %v185
  %v187 = vsel %vm108, %v148, 0.0
  %v188 = vadd.f32 %v186, %v187
  %v189 = vsel %vm108, %v149, 0.0
  %v190 = vadd.f32 %v188, %v189
  %v191 = vsel %vm108, %v150, 0.0
  %v192 = vadd.f32 %v190, %v191
  %v193 = vsel %vm108, %v151, 0.0
  %v194 = vadd.f32 %v192, %v193
  %v195 = vsel %vm108, %v152, 0.0
  %v196 = vadd.f32 %v194, %v195
  %v197 = vsel %vm108, %v153, 0.0
  %v198 = vadd.f32 %v196, %v197
  %v199 = vsel %vm108, %v154, 0.0
  %v200 = vadd.f32 %v198, %v199
  %v201 = vsel %vm108, %v155, 0.0
  %v202 = vadd.f32 %v200, %v201
  %203 = vadd.xlane.f32.xlu0 %v202
  %v204 = vpop.xlane.xlu0 %203
  %v205 = vld [vmem:[#allocation2] sm:$0x1]
  %v207 = vperm.slane %v205, 0
  %v209 = vadd.f32 %v204, %v207
  %vm210 = vcmask 1024
  %211 = vst.msk [vmem:[%s3] sm:$0x3] %vm210, %v209
  // Predicated region
  $region14: #{discriminator_pallas.9} parent=0 // pred_check
    _
  $region15: #{discriminator_pallas.9} parent=0 // pred_check_branch
    %213 = sbr.rel (0) target = $region17
  $region16: #{discriminator_pallas.9} parent=0 // pred_region
    _
  $region17: #{discriminator_pallas.9} parent=0 // pred_fallthru
    _
  // Predicated region
  $region18: #{discriminator_pallas.9} parent=0 // pred_check
    _
  $region19: #{discriminator_pallas.9} parent=0 // pred_check_branch
    %215 = sbr.rel (0) target = $region21
  $region20: #{discriminator_pallas.9} parent=0 // pred_region
    _
  $region21: #{discriminator_pallas.9} parent=0 // pred_fallthru
    _

// kernel: discriminator_pallas.8
$region0: #{discriminator_pallas.8}
  #allocation0 [shape = 'u32[]', space=smem, size = 0x4, offset = 0x4, fixed_abs, tag = 'smem constant byte address 0x4 - core index']
  #allocation1 [shape = 'u32[72,128]{1,0:T(1,128)}', space=vmem, size = 0x9000, scoped, tag = 'internal scratch']
  #allocation2 [shape = 'f32[1,512]{1,0:T(1,128)}', space=vmem, size = 0x800, scoped, tag = 'scratch operand']
  #allocation3 [shape = 'f32[1,512]{1,0:T(1,128)}', space=vmem, size = 0x800, scoped, tag = 'scratch operand']
  %s0 = inlined_call_operand.vmem [shape: bf16[8,4096], index: 0, kind: input, shape index: {}]
  %s1 = inlined_call_operand.vmem [shape: bf16[4096,512], index: 1, kind: input, shape index: {}]
  %s2 = inlined_call_operand.vmem [shape: f32[1,512], index: 2, kind: input, shape index: {}]
  %s3 = inlined_call_operand.vmem [shape: f32[1,512], index: 3, kind: input, shape index: {}]
  %s4 = inlined_call_operand.vmem [shape: f32[1,512], index: 4, kind: input, shape index: {}]
  %s5 = inlined_call_operand.vmem [shape: bf16[8,512], index: 5, kind: output, shape index: {}]
  %s6 = sld [smem:[#allocation0]]
  $region38: #{discriminator_pallas.8} parent=0
    _
  %s8 = ssub.s32 1, %s6
  %s9 = scalar_select 0, %s8, %s6
  // Predicated region
  $region2: #{discriminator_pallas.8} parent=0 // pred_check
    _
  $region3: #{discriminator_pallas.8} parent=0 // pred_check_branch
    %11 = sbr.rel (0) target = $region5
  $region4: #{discriminator_pallas.8} parent=0 // pred_region
    _
  $region5: #{discriminator_pallas.8} parent=0 // pred_fallthru
    _
  // Predicated region
  $region6: #{discriminator_pallas.8} parent=0 // pred_check
    _
  $region7: #{discriminator_pallas.8} parent=0 // pred_check_branch
    %13 = sbr.rel (0) target = $region9
  $region8: #{discriminator_pallas.8} parent=0 // pred_region
    _
  $region9: #{discriminator_pallas.8} parent=0 // pred_fallthru
    _
  // Predicated region
  $region10: #{discriminator_pallas.8} parent=0 // pred_check
    _
  $region11: #{discriminator_pallas.8} parent=0 // pred_check_branch
    %15 = sbr.rel (0) target = $region13
  $region12: #{discriminator_pallas.8} parent=0 // pred_region
    _
  $region13: #{discriminator_pallas.8} parent=0 // pred_fallthru
    _
  // Predicated region
  $region14: #{discriminator_pallas.8} parent=0 // pred_check
    _
  $region15: #{discriminator_pallas.8} parent=0 // pred_check_branch
    %17 = sbr.rel (0) target = $region17
  $region16: #{discriminator_pallas.8} parent=0 // pred_region
    _
  $region17: #{discriminator_pallas.8} parent=0 // pred_fallthru
    _
  // Predicated region
  $region18: #{discriminator_pallas.8} parent=0 // pred_check
    _
  $region19: #{discriminator_pallas.8} parent=0 // pred_check_branch
    %19 = sbr.rel (0) target = $region21
  $region20: #{discriminator_pallas.8} parent=0 // pred_region
    _
  $region21: #{discriminator_pallas.8} parent=0 // pred_fallthru
    _
  %p20 = scmp.eq.s32.totalorder 0, 0
  // Predicated region
  $region22: #{discriminator_pallas.8} parent=0 // pred_check
    %p21 = pneg %p20
  $region23: #{discriminator_pallas.8} parent=0 // pred_check_branch
    %23 = sbr.rel (%p21) target = $region25
  $region24: #{discriminator_pallas.8} parent=0 // pred_region
    %v24 = vlaneseq
    %vm25 = vcmp.ge.s32.totalorder %v24, 0
    %vm26 = vcmp.lt.s32.totalorder %v24, 512
    %vm27 = vmand %vm25, %vm26
    %28 = vst.msk [vmem:[#allocation2] sm:$0xf] %vm27, 0.0
    %29 = vst.msk [vmem:[#allocation3] sm:$0xf] %vm27, 0.0
  $region25: #{discriminator_pallas.8} parent=0 // pred_fallthru
    _
  %v30 = vld [vmem:[%s0] sm:$0xff]
  %v31 = vld [vmem:[%s0 + $0x8] sm:$0xff]
  %v32 = vld [vmem:[%s0 + $0x10] sm:$0xff]
  %v33 = vld [vmem:[%s0 + $0x18] sm:$0xff]
  %v34 = vld [vmem:[%s0 + $0x20] sm:$0xff]
  %v35 = vld [vmem:[%s0 + $0x28] sm:$0xff]
  %v36 = vld [vmem:[%s0 + $0x30] sm:$0xff]
  %v37 = vld [vmem:[%s0 + $0x38] sm:$0xff]
  %v38 = vld [vmem:[%s0 + $0x40] sm:$0xff]
  %v39 = vld [vmem:[%s0 + $0x48] sm:$0xff]
  %v40 = vld [vmem:[%s0 + $0x50] sm:$0xff]
  %v41 = vld [vmem:[%s0 + $0x58] sm:$0xff]
  %v42 = vld [vmem:[%s0 + $0x60] sm:$0xff]
  %v43 = vld [vmem:[%s0 + $0x68] sm:$0xff]
  %v44 = vld [vmem:[%s0 + $0x70] sm:$0xff]
  %v45 = vld [vmem:[%s0 + $0x78] sm:$0xff]
  %v46 = vld [vmem:[%s1] sm:$0xff]
  %v47 = vld [vmem:[%s1 + $0x8] sm:$0xff]
  %v48 = vld [vmem:[%s1 + $0x10] sm:$0xff]
  %v49 = vld [vmem:[%s1 + $0x18] sm:$0xff]
  %v50 = vld [vmem:[%s1 + $0x20] sm:$0xff]
  %v51 = vld [vmem:[%s1 + $0x28] sm:$0xff]
  %v52 = vld [vmem:[%s1 + $0x30] sm:$0xff]
  %v53 = vld [vmem:[%s1 + $0x38] sm:$0xff]
  %v54 = vld [vmem:[%s1 + $0x40] sm:$0xff]
  %v55 = vld [vmem:[%s1 + $0x48] sm:$0xff]
  %v56 = vld [vmem:[%s1 + $0x50] sm:$0xff]
  %v57 = vld [vmem:[%s1 + $0x58] sm:$0xff]
  %v58 = vld [vmem:[%s1 + $0x60] sm:$0xff]
  %v59 = vld [vmem:[%s1 + $0x68] sm:$0xff]
  %v60 = vld [vmem:[%s1 + $0x70] sm:$0xff]
  %v61 = vld [vmem:[%s1 + $0x78] sm:$0xff]
  %v62 = vld [vmem:[%s1 + $0x80] sm:$0xff]
  %v63 = vld [vmem:[%s1 + $0x88] sm:$0xff]
  %v64 = vld [vmem:[%s1 + $0x90] sm:$0xff]
  %v65 = vld [vmem:[%s1 + $0x98] sm:$0xff]
  %v66 = vld [vmem:[%s1 + $0xa0] sm:$0xff]
  %v67 = vld [vmem:[%s1 + $0xa8] sm:$0xff]
  %v68 = vld [vmem:[%s1 + $0xb0] sm:$0xff]
  %v69 = vld [vmem:[%s1 + $0xb8] sm:$0xff]
  %v70 = vld [vmem:[%s1 + $0xc0] sm:$0xff]
  %v71 = vld [vmem:[%s1 + $0xc8] sm:$0xff]
  %v72 = vld [vmem:[%s1 + $0xd0] sm:$0xff]
  %v73 = vld [vmem:[%s1 + $0xd8] sm:$0xff]
  %v74 = vld [vmem:[%s1 + $0xe0] sm:$0xff]
  %v75 = vld [vmem:[%s1 + $0xe8] sm:$0xff]
  %v76 = vld [vmem:[%s1 + $0xf0] sm:$0xff]
  %v77 = vld [vmem:[%s1 + $0xf8] sm:$0xff]
  %v78 = vld [vmem:[%s1 + $0x100] sm:$0xff]
  %v79 = vld [vmem:[%s1 + $0x108] sm:$0xff]
  %v80 = vld [vmem:[%s1 + $0x110] sm:$0xff]
  %v81 = vld [vmem:[%s1 + $0x118] sm:$0xff]
  %v82 = vld [vmem:[%s1 + $0x120] sm:$0xff]
  %v83 = vld [vmem:[%s1 + $0x128] sm:$0xff]
  %v84 = vld [vmem:[%s1 + $0x130] sm:$0xff]
  %v85 = vld [vmem:[%s1 + $0x138] sm:$0xff]
  %v86 = vld [vmem:[%s1 + $0x140] sm:$0xff]
  %v87 = vld [vmem:[%s1 + $0x148] sm:$0xff]
  %v88 = vld [vmem:[%s1 + $0x150] sm:$0xff]
  %v89 = vld [vmem:[%s1 + $0x158] sm:$0xff]
  %v90 = vld [vmem:[%s1 + $0x160] sm:$0xff]
  %v91 = vld [vmem:[%s1 + $0x168] sm:$0xff]
  %v92 = vld [vmem:[%s1 + $0x170] sm:$0xff]
  %v93 = vld [vmem:[%s1 + $0x178] sm:$0xff]
  %v94 = vld [vmem:[%s1 + $0x180] sm:$0xff]
  %v95 = vld [vmem:[%s1 + $0x188] sm:$0xff]
  %v96 = vld [vmem:[%s1 + $0x190] sm:$0xff]
  %v97 = vld [vmem:[%s1 + $0x198] sm:$0xff]
  %v98 = vld [vmem:[%s1 + $0x1a0] sm:$0xff]
  %v99 = vld [vmem:[%s1 + $0x1a8] sm:$0xff]
  %v100 = vld [vmem:[%s1 + $0x1b0] sm:$0xff]
  %v101 = vld [vmem:[%s1 + $0x1b8] sm:$0xff]
  %v102 = vld [vmem:[%s1 + $0x1c0] sm:$0xff]
  %v103 = vld [vmem:[%s1 + $0x1c8] sm:$0xff]
  %v104 = vld [vmem:[%s1 + $0x1d0] sm:$0xff]
  %v105 = vld [vmem:[%s1 + $0x1d8] sm:$0xff]
  %v106 = vld [vmem:[%s1 + $0x1e0] sm:$0xff]
  %v107 = vld [vmem:[%s1 + $0x1e8] sm:$0xff]
  %v108 = vld [vmem:[%s1 + $0x1f0] sm:$0xff]
  %v109 = vld [vmem:[%s1 + $0x1f8] sm:$0xff]
  %v110 = vld [vmem:[%s1 + $0x200] sm:$0xff]
  %v111 = vld [vmem:[%s1 + $0x208] sm:$0xff]
  %v112 = vld [vmem:[%s1 + $0x210] sm:$0xff]
  %v113 = vld [vmem:[%s1 + $0x218] sm:$0xff]
  %v114 = vld [vmem:[%s1 + $0x220] sm:$0xff]
  %v115 = vld [vmem:[%s1 + $0x228] sm:$0xff]
  %v116 = vld [vmem:[%s1 + $0x230] sm:$0xff]
  %v117 = vld [vmem:[%s1 + $0x238] sm:$0xff]
  %v118 = vld [vmem:[%s1 + $0x240] sm:$0xff]
  %v119 = vld [vmem:[%s1 + $0x248] sm:$0xff]
  %v120 = vld [vmem:[%s1 + $0x250] sm:$0xff]
  %v121 = vld [vmem:[%s1 + $0x258] sm:$0xff]
  %v122 = vld [vmem:[%s1 + $0x260] sm:$0xff]
  %v123 = vld [vmem:[%s1 + $0x268] sm:$0xff]
  %v124 = vld [vmem:[%s1 + $0x270] sm:$0xff]
  %v125 = vld [vmem:[%s1 + $0x278] sm:$0xff]
  %v126 = vld [vmem:[%s1 + $0x280] sm:$0xff]
  %v127 = vld [vmem:[%s1 + $0x288] sm:$0xff]
  %v128 = vld [vmem:[%s1 + $0x290] sm:$0xff]
  %v129 = vld [vmem:[%s1 + $0x298] sm:$0xff]
  %v130 = vld [vmem:[%s1 + $0x2a0] sm:$0xff]
  %v131 = vld [vmem:[%s1 + $0x2a8] sm:$0xff]
  %v132 = vld [vmem:[%s1 + $0x2b0] sm:$0xff]
  %v133 = vld [vmem:[%s1 + $0x2b8] sm:$0xff]
  %v134 = vld [vmem:[%s1 + $0x2c0] sm:$0xff]
  %v135 = vld [vmem:[%s1 + $0x2c8] sm:$0xff]
  %v136 = vld [vmem:[%s1 + $0x2d0] sm:$0xff]
  %v137 = vld [vmem:[%s1 + $0x2d8] sm:$0xff]
  %v138 = vld [vmem:[%s1 + $0x2e0] sm:$0xff]
  %v139 = vld [vmem:[%s1 + $0x2e8] sm:$0xff]
  %v140 = vld [vmem:[%s1 + $0x2f0] sm:$0xff]
  %v141 = vld [vmem:[%s1 + $0x2f8] sm:$0xff]
  %v142 = vld [vmem:[%s1 + $0x300] sm:$0xff]
  %v143 = vld [vmem:[%s1 + $0x308] sm:$0xff]
  %v144 = vld [vmem:[%s1 + $0x310] sm:$0xff]
  %v145 = vld [vmem:[%s1 + $0x318] sm:$0xff]
  %v146 = vld [vmem:[%s1 + $0x320] sm:$0xff]
  %v147 = vld [vmem:[%s1 + $0x328] sm:$0xff]
  %v148 = vld [vmem:[%s1 + $0x330] sm:$0xff]
  %v149 = vld [vmem:[%s1 + $0x338] sm:$0xff]
  %v150 = vld [vmem:[%s1 + $0x340] sm:$0xff]
  %v151 = vld [vmem:[%s1 + $0x348] sm:$0xff]
  %v152 = vld [vmem:[%s1 + $0x350] sm:$0xff]
  %v153 = vld [vmem:[%s1 + $0x358] sm:$0xff]
  %v154 = vld [vmem:[%s1 + $0x360] sm:$0xff]
  %v155 = vld [vmem:[%s1 + $0x368] sm:$0xff]
  %v156 = vld [vmem:[%s1 + $0x370] sm:$0xff]
  %v157 = vld [vmem:[%s1 + $0x378] sm:$0xff]
  %v158 = vld [vmem:[%s1 + $0x380] sm:$0xff]
  %v159 = vld [vmem:[%s1 + $0x388] sm:$0xff]
  %v160 = vld [vmem:[%s1 + $0x390] sm:$0xff]
  %v161 = vld [vmem:[%s1 + $0x398] sm:$0xff]
  %v162 = vld [vmem:[%s1 + $0x3a0] sm:$0xff]
  %v163 = vld [vmem:[%s1 + $0x3a8] sm:$0xff]
  %v164 = vld [vmem:[%s1 + $0x3b0] sm:$0xff]
  %v165 = vld [vmem:[%s1 + $0x3b8] sm:$0xff]
  %v166 = vld [vmem:[%s1 + $0x3c0] sm:$0xff]
  %v167 = vld [vmem:[%s1 + $0x3c8] sm:$0xff]
  %v168 = vld [vmem:[%s1 + $0x3d0] sm:$0xff]
  %v169 = vld [vmem:[%s1 + $0x3d8] sm:$0xff]
  %v170 = vld [vmem:[%s1 + $0x3e0] sm:$0xff]
  %v171 = vld [vmem:[%s1 + $0x3e8] sm:$0xff]
  %v172 = vld [vmem:[%s1 + $0x3f0] sm:$0xff]
  %v173 = vld [vmem:[%s1 + $0x3f8] sm:$0xff]
  %v174 = vld [vmem:[%s1 + $0x400] sm:$0xff]
  %v175 = vld [vmem:[%s1 + $0x408] sm:$0xff]
  %v176 = vld [vmem:[%s1 + $0x410] sm:$0xff]
  %v177 = vld [vmem:[%s1 + $0x418] sm:$0xff]
  %v178 = vld [vmem:[%s1 + $0x420] sm:$0xff]
  %v179 = vld [vmem:[%s1 + $0x428] sm:$0xff]
  %v180 = vld [vmem:[%s1 + $0x430] sm:$0xff]
  %v181 = vld [vmem:[%s1 + $0x438] sm:$0xff]
  %v182 = vld [vmem:[%s1 + $0x440] sm:$0xff]
  %v183 = vld [vmem:[%s1 + $0x448] sm:$0xff]
  %v184 = vld [vmem:[%s1 + $0x450] sm:$0xff]
  %v185 = vld [vmem:[%s1 + $0x458] sm:$0xff]
  %v186 = vld [vmem:[%s1 + $0x460] sm:$0xff]
  %v187 = vld [vmem:[%s1 + $0x468] sm:$0xff]
  %v188 = vld [vmem:[%s1 + $0x470] sm:$0xff]
  %v189 = vld [vmem:[%s1 + $0x478] sm:$0xff]
  %v190 = vld [vmem:[%s1 + $0x480] sm:$0xff]
  %v191 = vld [vmem:[%s1 + $0x488] sm:$0xff]
  %v192 = vld [vmem:[%s1 + $0x490] sm:$0xff]
  %v193 = vld [vmem:[%s1 + $0x498] sm:$0xff]
  %v194 = vld [vmem:[%s1 + $0x4a0] sm:$0xff]
  %v195 = vld [vmem:[%s1 + $0x4a8] sm:$0xff]
  %v196 = vld [vmem:[%s1 + $0x4b0] sm:$0xff]
  %v197 = vld [vmem:[%s1 + $0x4b8] sm:$0xff]
  %v198 = vld [vmem:[%s1 + $0x4c0] sm:$0xff]
  %v199 = vld [vmem:[%s1 + $0x4c8] sm:$0xff]
  %v200 = vld [vmem:[%s1 + $0x4d0] sm:$0xff]
  %v201 = vld [vmem:[%s1 + $0x4d8] sm:$0xff]
  %v202 = vld [vmem:[%s1 + $0x4e0] sm:$0xff]
  %v203 = vld [vmem:[%s1 + $0x4e8] sm:$0xff]
  %v204 = vld [vmem:[%s1 + $0x4f0] sm:$0xff]
  %v205 = vld [vmem:[%s1 + $0x4f8] sm:$0xff]
  %v206 = vld [vmem:[%s1 + $0x500] sm:$0xff]
  %v207 = vld [vmem:[%s1 + $0x508] sm:$0xff]
  %v208 = vld [vmem:[%s1 + $0x510] sm:$0xff]
  %v209 = vld [vmem:[%s1 + $0x518] sm:$0xff]
  %v210 = vld [vmem:[%s1 + $0x520] sm:$0xff]
  %v211 = vld [vmem:[%s1 + $0x528] sm:$0xff]
  %v212 = vld [vmem:[%s1 + $0x530] sm:$0xff]
  %v213 = vld [vmem:[%s1 + $0x538] sm:$0xff]
  %v214 = vld [vmem:[%s1 + $0x540] sm:$0xff]
  %v215 = vld [vmem:[%s1 + $0x548] sm:$0xff]
  %v216 = vld [vmem:[%s1 + $0x550] sm:$0xff]
  %v217 = vld [vmem:[%s1 + $0x558] sm:$0xff]
  %v218 = vld [vmem:[%s1 + $0x560] sm:$0xff]
  %v219 = vld [vmem:[%s1 + $0x568] sm:$0xff]
  %v220 = vld [vmem:[%s1 + $0x570] sm:$0xff]
  %v221 = vld [vmem:[%s1 + $0x578] sm:$0xff]
  %v222 = vld [vmem:[%s1 + $0x580] sm:$0xff]
  %v223 = vld [vmem:[%s1 + $0x588] sm:$0xff]
  %v224 = vld [vmem:[%s1 + $0x590] sm:$0xff]
  %v225 = vld [vmem:[%s1 + $0x598] sm:$0xff]
  %v226 = vld [vmem:[%s1 + $0x5a0] sm:$0xff]
  %v227 = vld [vmem:[%s1 + $0x5a8] sm:$0xff]
  %v228 = vld [vmem:[%s1 + $0x5b0] sm:$0xff]
  %v229 = vld [vmem:[%s1 + $0x5b8] sm:$0xff]
  %v230 = vld [vmem:[%s1 + $0x5c0] sm:$0xff]
  %v231 = vld [vmem:[%s1 + $0x5c8] sm:$0xff]
  %v232 = vld [vmem:[%s1 + $0x5d0] sm:$0xff]
  %v233 = vld [vmem:[%s1 + $0x5d8] sm:$0xff]
  %v234 = vld [vmem:[%s1 + $0x5e0] sm:$0xff]
  %v235 = vld [vmem:[%s1 + $0x5e8] sm:$0xff]
  %v236 = vld [vmem:[%s1 + $0x5f0] sm:$0xff]
  %v237 = vld [vmem:[%s1 + $0x5f8] sm:$0xff]
  %v238 = vld [vmem:[%s1 + $0x600] sm:$0xff]
  %v239 = vld [vmem:[%s1 + $0x608] sm:$0xff]
  %v240 = vld [vmem:[%s1 + $0x610] sm:$0xff]
  %v241 = vld [vmem:[%s1 + $0x618] sm:$0xff]
  %v242 = vld [vmem:[%s1 + $0x620] sm:$0xff]
  %v243 = vld [vmem:[%s1 + $0x628] sm:$0xff]
  %v244 = vld [vmem:[%s1 + $0x630] sm:$0xff]
  %v245 = vld [vmem:[%s1 + $0x638] sm:$0xff]
  %v246 = vld [vmem:[%s1 + $0x640] sm:$0xff]
  %v247 = vld [vmem:[%s1 + $0x648] sm:$0xff]
  %v248 = vld [vmem:[%s1 + $0x650] sm:$0xff]
  %v249 = vld [vmem:[%s1 + $0x658] sm:$0xff]
  %v250 = vld [vmem:[%s1 + $0x660] sm:$0xff]
  %v251 = vld [vmem:[%s1 + $0x668] sm:$0xff]
  %v252 = vld [vmem:[%s1 + $0x670] sm:$0xff]
  %v253 = vld [vmem:[%s1 + $0x678] sm:$0xff]
  %v254 = vld [vmem:[%s1 + $0x680] sm:$0xff]
  %v255 = vld [vmem:[%s1 + $0x688] sm:$0xff]
  %v256 = vld [vmem:[%s1 + $0x690] sm:$0xff]
  %v257 = vld [vmem:[%s1 + $0x698] sm:$0xff]
  %v258 = vld [vmem:[%s1 + $0x6a0] sm:$0xff]
  %v259 = vld [vmem:[%s1 + $0x6a8] sm:$0xff]
  %v260 = vld [vmem:[%s1 + $0x6b0] sm:$0xff]
  %v261 = vld [vmem:[%s1 + $0x6b8] sm:$0xff]
  %v262 = vld [vmem:[%s1 + $0x6c0] sm:$0xff]
  %v263 = vld [vmem:[%s1 + $0x6c8] sm:$0xff]
  %v264 = vld [vmem:[%s1 + $0x6d0] sm:$0xff]
  %v265 = vld [vmem:[%s1 + $0x6d8] sm:$0xff]
  %v266 = vld [vmem:[%s1 + $0x6e0] sm:$0xff]
  %v267 = vld [vmem:[%s1 + $0x6e8] sm:$0xff]
  %v268 = vld [vmem:[%s1 + $0x6f0] sm:$0xff]
  %v269 = vld [vmem:[%s1 + $0x6f8] sm:$0xff]
  %v270 = vld [vmem:[%s1 + $0x700] sm:$0xff]
  %v271 = vld [vmem:[%s1 + $0x708] sm:$0xff]
  %v272 = vld [vmem:[%s1 + $0x710] sm:$0xff]
  %v273 = vld [vmem:[%s1 + $0x718] sm:$0xff]
  %v274 = vld [vmem:[%s1 + $0x720] sm:$0xff]
  %v275 = vld [vmem:[%s1 + $0x728] sm:$0xff]
  %v276 = vld [vmem:[%s1 + $0x730] sm:$0xff]
  %v277 = vld [vmem:[%s1 + $0x738] sm:$0xff]
  %v278 = vld [vmem:[%s1 + $0x740] sm:$0xff]
  %v279 = vld [vmem:[%s1 + $0x748] sm:$0xff]
  %v280 = vld [vmem:[%s1 + $0x750] sm:$0xff]
  %v281 = vld [vmem:[%s1 + $0x758] sm:$0xff]
  %v282 = vld [vmem:[%s1 + $0x760] sm:$0xff]
  %v283 = vld [vmem:[%s1 + $0x768] sm:$0xff]
  %v284 = vld [vmem:[%s1 + $0x770] sm:$0xff]
  %v285 = vld [vmem:[%s1 + $0x778] sm:$0xff]
  %v286 = vld [vmem:[%s1 + $0x780] sm:$0xff]
  %v287 = vld [vmem:[%s1 + $0x788] sm:$0xff]
  %v288 = vld [vmem:[%s1 + $0x790] sm:$0xff]
  %v289 = vld [vmem:[%s1 + $0x798] sm:$0xff]
  %v290 = vld [vmem:[%s1 + $0x7a0] sm:$0xff]
  %v291 = vld [vmem:[%s1 + $0x7a8] sm:$0xff]
  %v292 = vld [vmem:[%s1 + $0x7b0] sm:$0xff]
  %v293 = vld [vmem:[%s1 + $0x7b8] sm:$0xff]
  %v294 = vld [vmem:[%s1 + $0x7c0] sm:$0xff]
  %v295 = vld [vmem:[%s1 + $0x7c8] sm:$0xff]
  %v296 = vld [vmem:[%s1 + $0x7d0] sm:$0xff]
  %v297 = vld [vmem:[%s1 + $0x7d8] sm:$0xff]
  %v298 = vld [vmem:[%s1 + $0x7e0] sm:$0xff]
  %v299 = vld [vmem:[%s1 + $0x7e8] sm:$0xff]
  %v300 = vld [vmem:[%s1 + $0x7f0] sm:$0xff]
  %v301 = vld [vmem:[%s1 + $0x7f8] sm:$0xff]
  %v302 = vld [vmem:[%s1 + $0x800] sm:$0xff]
  %v303 = vld [vmem:[%s1 + $0x808] sm:$0xff]
  %v304 = vld [vmem:[%s1 + $0x810] sm:$0xff]
  %v305 = vld [vmem:[%s1 + $0x818] sm:$0xff]
  %v306 = vld [vmem:[%s1 + $0x820] sm:$0xff]
  %v307 = vld [vmem:[%s1 + $0x828] sm:$0xff]
  %v308 = vld [vmem:[%s1 + $0x830] sm:$0xff]
  %v309 = vld [vmem:[%s1 + $0x838] sm:$0xff]
  %v310 = vld [vmem:[%s1 + $0x840] sm:$0xff]
  %v311 = vld [vmem:[%s1 + $0x848] sm:$0xff]
  %v312 = vld [vmem:[%s1 + $0x850] sm:$0xff]
  %v313 = vld [vmem:[%s1 + $0x858] sm:$0xff]
  %v314 = vld [vmem:[%s1 + $0x860] sm:$0xff]
  %v315 = vld [vmem:[%s1 + $0x868] sm:$0xff]
  %v316 = vld [vmem:[%s1 + $0x870] sm:$0xff]
  %v317 = vld [vmem:[%s1 + $0x878] sm:$0xff]
  %v318 = vld [vmem:[%s1 + $0x880] sm:$0xff]
  %v319 = vld [vmem:[%s1 + $0x888] sm:$0xff]
  %v320 = vld [vmem:[%s1 + $0x890] sm:$0xff]
  %v321 = vld [vmem:[%s1 + $0x898] sm:$0xff]
  %v322 = vld [vmem:[%s1 + $0x8a0] sm:$0xff]
  %v323 = vld [vmem:[%s1 + $0x8a8] sm:$0xff]
  %v324 = vld [vmem:[%s1 + $0x8b0] sm:$0xff]
  %v325 = vld [vmem:[%s1 + $0x8b8] sm:$0xff]
  %v326 = vld [vmem:[%s1 + $0x8c0] sm:$0xff]
  %v327 = vld [vmem:[%s1 + $0x8c8] sm:$0xff]
  %v328 = vld [vmem:[%s1 + $0x8d0] sm:$0xff]
  %v329 = vld [vmem:[%s1 + $0x8d8] sm:$0xff]
  %v330 = vld [vmem:[%s1 + $0x8e0] sm:$0xff]
  %v331 = vld [vmem:[%s1 + $0x8e8] sm:$0xff]
  %v332 = vld [vmem:[%s1 + $0x8f0] sm:$0xff]
  %v333 = vld [vmem:[%s1 + $0x8f8] sm:$0xff]
  %v334 = vld [vmem:[%s1 + $0x900] sm:$0xff]
  %v335 = vld [vmem:[%s1 + $0x908] sm:$0xff]
  %v336 = vld [vmem:[%s1 + $0x910] sm:$0xff]
  %v337 = vld [vmem:[%s1 + $0x918] sm:$0xff]
  %v338 = vld [vmem:[%s1 + $0x920] sm:$0xff]
  %v339 = vld [vmem:[%s1 + $0x928] sm:$0xff]
  %v340 = vld [vmem:[%s1 + $0x930] sm:$0xff]
  %v341 = vld [vmem:[%s1 + $0x938] sm:$0xff]
  %v342 = vld [vmem:[%s1 + $0x940] sm:$0xff]
  %v343 = vld [vmem:[%s1 + $0x948] sm:$0xff]
  %v344 = vld [vmem:[%s1 + $0x950] sm:$0xff]
  %v345 = vld [vmem:[%s1 + $0x958] sm:$0xff]
  %v346 = vld [vmem:[%s1 + $0x960] sm:$0xff]
  %v347 = vld [vmem:[%s1 + $0x968] sm:$0xff]
  %v348 = vld [vmem:[%s1 + $0x970] sm:$0xff]
  %v349 = vld [vmem:[%s1 + $0x978] sm:$0xff]
  %v350 = vld [vmem:[%s1 + $0x980] sm:$0xff]
  %v351 = vld [vmem:[%s1 + $0x988] sm:$0xff]
  %v352 = vld [vmem:[%s1 + $0x990] sm:$0xff]
  %v353 = vld [vmem:[%s1 + $0x998] sm:$0xff]
  %v354 = vld [vmem:[%s1 + $0x9a0] sm:$0xff]
  %v355 = vld [vmem:[%s1 + $0x9a8] sm:$0xff]
  %v356 = vld [vmem:[%s1 + $0x9b0] sm:$0xff]
  %v357 = vld [vmem:[%s1 + $0x9b8] sm:$0xff]
  %v358 = vld [vmem:[%s1 + $0x9c0] sm:$0xff]
  %v359 = vld [vmem:[%s1 + $0x9c8] sm:$0xff]
  %v360 = vld [vmem:[%s1 + $0x9d0] sm:$0xff]
  %v361 = vld [vmem:[%s1 + $0x9d8] sm:$0xff]
  %v362 = vld [vmem:[%s1 + $0x9e0] sm:$0xff]
  %v363 = vld [vmem:[%s1 + $0x9e8] sm:$0xff]
  %v364 = vld [vmem:[%s1 + $0x9f0] sm:$0xff]
  %v365 = vld [vmem:[%s1 + $0x9f8] sm:$0xff]
  %v366 = vld [vmem:[%s1 + $0xa00] sm:$0xff]
  %v367 = vld [vmem:[%s1 + $0xa08] sm:$0xff]
  %v368 = vld [vmem:[%s1 + $0xa10] sm:$0xff]
  %v369 = vld [vmem:[%s1 + $0xa18] sm:$0xff]
  %v370 = vld [vmem:[%s1 + $0xa20] sm:$0xff]
  %v371 = vld [vmem:[%s1 + $0xa28] sm:$0xff]
  %v372 = vld [vmem:[%s1 + $0xa30] sm:$0xff]
  %v373 = vld [vmem:[%s1 + $0xa38] sm:$0xff]
  %v374 = vld [vmem:[%s1 + $0xa40] sm:$0xff]
  %v375 = vld [vmem:[%s1 + $0xa48] sm:$0xff]
  %v376 = vld [vmem:[%s1 + $0xa50] sm:$0xff]
  %v377 = vld [vmem:[%s1 + $0xa58] sm:$0xff]
  %v378 = vld [vmem:[%s1 + $0xa60] sm:$0xff]
  %v379 = vld [vmem:[%s1 + $0xa68] sm:$0xff]
  %v380 = vld [vmem:[%s1 + $0xa70] sm:$0xff]
  %v381 = vld [vmem:[%s1 + $0xa78] sm:$0xff]
  %v382 = vld [vmem:[%s1 + $0xa80] sm:$0xff]
  %v383 = vld [vmem:[%s1 + $0xa88] sm:$0xff]
  %v384 = vld [vmem:[%s1 + $0xa90] sm:$0xff]
  %v385 = vld [vmem:[%s1 + $0xa98] sm:$0xff]
  %v386 = vld [vmem:[%s1 + $0xaa0] sm:$0xff]
  %v387 = vld [vmem:[%s1 + $0xaa8] sm:$0xff]
  %v388 = vld [vmem:[%s1 + $0xab0] sm:$0xff]
  %v389 = vld [vmem:[%s1 + $0xab8] sm:$0xff]
  %v390 = vld [vmem:[%s1 + $0xac0] sm:$0xff]
  %v391 = vld [vmem:[%s1 + $0xac8] sm:$0xff]
  %v392 = vld [vmem:[%s1 + $0xad0] sm:$0xff]
  %v393 = vld [vmem:[%s1 + $0xad8] sm:$0xff]
  %v394 = vld [vmem:[%s1 + $0xae0] sm:$0xff]
  %v395 = vld [vmem:[%s1 + $0xae8] sm:$0xff]
  %v396 = vld [vmem:[%s1 + $0xaf0] sm:$0xff]
  %v397 = vld [vmem:[%s1 + $0xaf8] sm:$0xff]
  %v398 = vld [vmem:[%s1 + $0xb00] sm:$0xff]
  %v399 = vld [vmem:[%s1 + $0xb08] sm:$0xff]
  %v400 = vld [vmem:[%s1 + $0xb10] sm:$0xff]
  %v401 = vld [vmem:[%s1 + $0xb18] sm:$0xff]
  %v402 = vld [vmem:[%s1 + $0xb20] sm:$0xff]
  %v403 = vld [vmem:[%s1 + $0xb28] sm:$0xff]
  %v404 = vld [vmem:[%s1 + $0xb30] sm:$0xff]
  %v405 = vld [vmem:[%s1 + $0xb38] sm:$0xff]
  %v406 = vld [vmem:[%s1 + $0xb40] sm:$0xff]
  %v407 = vld [vmem:[%s1 + $0xb48] sm:$0xff]
  %v408 = vld [vmem:[%s1 + $0xb50] sm:$0xff]
  %v409 = vld [vmem:[%s1 + $0xb58] sm:$0xff]
  %v410 = vld [vmem:[%s1 + $0xb60] sm:$0xff]
  %v411 = vld [vmem:[%s1 + $0xb68] sm:$0xff]
  %v412 = vld [vmem:[%s1 + $0xb70] sm:$0xff]
  %v413 = vld [vmem:[%s1 + $0xb78] sm:$0xff]
  %v414 = vld [vmem:[%s1 + $0xb80] sm:$0xff]
  %v415 = vld [vmem:[%s1 + $0xb88] sm:$0xff]
  %v416 = vld [vmem:[%s1 + $0xb90] sm:$0xff]
  %v417 = vld [vmem:[%s1 + $0xb98] sm:$0xff]
  %v418 = vld [vmem:[%s1 + $0xba0] sm:$0xff]
  %v419 = vld [vmem:[%s1 + $0xba8] sm:$0xff]
  %v420 = vld [vmem:[%s1 + $0xbb0] sm:$0xff]
  %v421 = vld [vmem:[%s1 + $0xbb8] sm:$0xff]
  %v422 = vld [vmem:[%s1 + $0xbc0] sm:$0xff]
  %v423 = vld [vmem:[%s1 + $0xbc8] sm:$0xff]
  %v424 = vld [vmem:[%s1 + $0xbd0] sm:$0xff]
  %v425 = vld [vmem:[%s1 + $0xbd8] sm:$0xff]
  %v426 = vld [vmem:[%s1 + $0xbe0] sm:$0xff]
  %v427 = vld [vmem:[%s1 + $0xbe8] sm:$0xff]
  %v428 = vld [vmem:[%s1 + $0xbf0] sm:$0xff]
  %v429 = vld [vmem:[%s1 + $0xbf8] sm:$0xff]
  %v430 = vld [vmem:[%s1 + $0xc00] sm:$0xff]
  %v431 = vld [vmem:[%s1 + $0xc08] sm:$0xff]
  %v432 = vld [vmem:[%s1 + $0xc10] sm:$0xff]
  %v433 = vld [vmem:[%s1 + $0xc18] sm:$0xff]
  %v434 = vld [vmem:[%s1 + $0xc20] sm:$0xff]
  %v435 = vld [vmem:[%s1 + $0xc28] sm:$0xff]
  %v436 = vld [vmem:[%s1 + $0xc30] sm:$0xff]
  %v437 = vld [vmem:[%s1 + $0xc38] sm:$0xff]
  %v438 = vld [vmem:[%s1 + $0xc40] sm:$0xff]
  %v439 = vld [vmem:[%s1 + $0xc48] sm:$0xff]
  %v440 = vld [vmem:[%s1 + $0xc50] sm:$0xff]
  %v441 = vld [vmem:[%s1 + $0xc58] sm:$0xff]
  %v442 = vld [vmem:[%s1 + $0xc60] sm:$0xff]
  %v443 = vld [vmem:[%s1 + $0xc68] sm:$0xff]
  %v444 = vld [vmem:[%s1 + $0xc70] sm:$0xff]
  %v445 = vld [vmem:[%s1 + $0xc78] sm:$0xff]
  %v446 = vld [vmem:[%s1 + $0xc80] sm:$0xff]
  %v447 = vld [vmem:[%s1 + $0xc88] sm:$0xff]
  %v448 = vld [vmem:[%s1 + $0xc90] sm:$0xff]
  %v449 = vld [vmem:[%s1 + $0xc98] sm:$0xff]
  %v450 = vld [vmem:[%s1 + $0xca0] sm:$0xff]
  %v451 = vld [vmem:[%s1 + $0xca8] sm:$0xff]
  %v452 = vld [vmem:[%s1 + $0xcb0] sm:$0xff]
  %v453 = vld [vmem:[%s1 + $0xcb8] sm:$0xff]
  %v454 = vld [vmem:[%s1 + $0xcc0] sm:$0xff]
  %v455 = vld [vmem:[%s1 + $0xcc8] sm:$0xff]
  %v456 = vld [vmem:[%s1 + $0xcd0] sm:$0xff]
  %v457 = vld [vmem:[%s1 + $0xcd8] sm:$0xff]
  %v458 = vld [vmem:[%s1 + $0xce0] sm:$0xff]
  %v459 = vld [vmem:[%s1 + $0xce8] sm:$0xff]
  %v460 = vld [vmem:[%s1 + $0xcf0] sm:$0xff]
  %v461 = vld [vmem:[%s1 + $0xcf8] sm:$0xff]
  %v462 = vld [vmem:[%s1 + $0xd00] sm:$0xff]
  %v463 = vld [vmem:[%s1 + $0xd08] sm:$0xff]
  %v464 = vld [vmem:[%s1 + $0xd10] sm:$0xff]
  %v465 = vld [vmem:[%s1 + $0xd18] sm:$0xff]
  %v466 = vld [vmem:[%s1 + $0xd20] sm:$0xff]
  %v467 = vld [vmem:[%s1 + $0xd28] sm:$0xff]
  %v468 = vld [vmem:[%s1 + $0xd30] sm:$0xff]
  %v469 = vld [vmem:[%s1 + $0xd38] sm:$0xff]
  %v470 = vld [vmem:[%s1 + $0xd40] sm:$0xff]
  %v471 = vld [vmem:[%s1 + $0xd48] sm:$0xff]
  %v472 = vld [vmem:[%s1 + $0xd50] sm:$0xff]
  %v473 = vld [vmem:[%s1 + $0xd58] sm:$0xff]
  %v474 = vld [vmem:[%s1 + $0xd60] sm:$0xff]
  %v475 = vld [vmem:[%s1 + $0xd68] sm:$0xff]
  %v476 = vld [vmem:[%s1 + $0xd70] sm:$0xff]
  %v477 = vld [vmem:[%s1 + $0xd78] sm:$0xff]
  %v478 = vld [vmem:[%s1 + $0xd80] sm:$0xff]
  %v479 = vld [vmem:[%s1 + $0xd88] sm:$0xff]
  %v480 = vld [vmem:[%s1 + $0xd90] sm:$0xff]
  %v481 = vld [vmem:[%s1 + $0xd98] sm:$0xff]
  %v482 = vld [vmem:[%s1 + $0xda0] sm:$0xff]
  %v483 = vld [vmem:[%s1 + $0xda8] sm:$0xff]
  %v484 = vld [vmem:[%s1 + $0xdb0] sm:$0xff]
  %v485 = vld [vmem:[%s1 + $0xdb8] sm:$0xff]
  %v486 = vld [vmem:[%s1 + $0xdc0] sm:$0xff]
  %v487 = vld [vmem:[%s1 + $0xdc8] sm:$0xff]
  %v488 = vld [vmem:[%s1 + $0xdd0] sm:$0xff]
  %v489 = vld [vmem:[%s1 + $0xdd8] sm:$0xff]
  %v490 = vld [vmem:[%s1 + $0xde0] sm:$0xff]
  %v491 = vld [vmem:[%s1 + $0xde8] sm:$0xff]
  %v492 = vld [vmem:[%s1 + $0xdf0] sm:$0xff]
  %v493 = vld [vmem:[%s1 + $0xdf8] sm:$0xff]
  %v494 = vld [vmem:[%s1 + $0xe00] sm:$0xff]
  %v495 = vld [vmem:[%s1 + $0xe08] sm:$0xff]
  %v496 = vld [vmem:[%s1 + $0xe10] sm:$0xff]
  %v497 = vld [vmem:[%s1 + $0xe18] sm:$0xff]
  %v498 = vld [vmem:[%s1 + $0xe20] sm:$0xff]
  %v499 = vld [vmem:[%s1 + $0xe28] sm:$0xff]
  %v500 = vld [vmem:[%s1 + $0xe30] sm:$0xff]
  %v501 = vld [vmem:[%s1 + $0xe38] sm:$0xff]
  %v502 = vld [vmem:[%s1 + $0xe40] sm:$0xff]
  %v503 = vld [vmem:[%s1 + $0xe48] sm:$0xff]
  %v504 = vld [vmem:[%s1 + $0xe50] sm:$0xff]
  %v505 = vld [vmem:[%s1 + $0xe58] sm:$0xff]
  %v506 = vld [vmem:[%s1 + $0xe60] sm:$0xff]
  %v507 = vld [vmem:[%s1 + $0xe68] sm:$0xff]
  %v508 = vld [vmem:[%s1 + $0xe70] sm:$0xff]
  %v509 = vld [vmem:[%s1 + $0xe78] sm:$0xff]
  %v510 = vld [vmem:[%s1 + $0xe80] sm:$0xff]
  %v511 = vld [vmem:[%s1 + $0xe88] sm:$0xff]
  %v512 = vld [vmem:[%s1 + $0xe90] sm:$0xff]
  %v513 = vld [vmem:[%s1 + $0xe98] sm:$0xff]
  %v514 = vld [vmem:[%s1 + $0xea0] sm:$0xff]
  %v515 = vld [vmem:[%s1 + $0xea8] sm:$0xff]
  %v516 = vld [vmem:[%s1 + $0xeb0] sm:$0xff]
  %v517 = vld [vmem:[%s1 + $0xeb8] sm:$0xff]
  %v518 = vld [vmem:[%s1 + $0xec0] sm:$0xff]
  %v519 = vld [vmem:[%s1 + $0xec8] sm:$0xff]
  %v520 = vld [vmem:[%s1 + $0xed0] sm:$0xff]
  %v521 = vld [vmem:[%s1 + $0xed8] sm:$0xff]
  %v522 = vld [vmem:[%s1 + $0xee0] sm:$0xff]
  %v523 = vld [vmem:[%s1 + $0xee8] sm:$0xff]
  %v524 = vld [vmem:[%s1 + $0xef0] sm:$0xff]
  %v525 = vld [vmem:[%s1 + $0xef8] sm:$0xff]
  %v526 = vld [vmem:[%s1 + $0xf00] sm:$0xff]
  %v527 = vld [vmem:[%s1 + $0xf08] sm:$0xff]
  %v528 = vld [vmem:[%s1 + $0xf10] sm:$0xff]
  %v529 = vld [vmem:[%s1 + $0xf18] sm:$0xff]
  %v530 = vld [vmem:[%s1 + $0xf20] sm:$0xff]
  %v531 = vld [vmem:[%s1 + $0xf28] sm:$0xff]
  %v532 = vld [vmem:[%s1 + $0xf30] sm:$0xff]
  %v533 = vld [vmem:[%s1 + $0xf38] sm:$0xff]
  %v534 = vld [vmem:[%s1 + $0xf40] sm:$0xff]
  %v535 = vld [vmem:[%s1 + $0xf48] sm:$0xff]
  %v536 = vld [vmem:[%s1 + $0xf50] sm:$0xff]
  %v537 = vld [vmem:[%s1 + $0xf58] sm:$0xff]
  %v538 = vld [vmem:[%s1 + $0xf60] sm:$0xff]
  %v539 = vld [vmem:[%s1 + $0xf68] sm:$0xff]
  %v540 = vld [vmem:[%s1 + $0xf70] sm:$0xff]
  %v541 = vld [vmem:[%s1 + $0xf78] sm:$0xff]
  %v542 = vld [vmem:[%s1 + $0xf80] sm:$0xff]
  %v543 = vld [vmem:[%s1 + $0xf88] sm:$0xff]
  %v544 = vld [vmem:[%s1 + $0xf90] sm:$0xff]
  %v545 = vld [vmem:[%s1 + $0xf98] sm:$0xff]
  %v546 = vld [vmem:[%s1 + $0xfa0] sm:$0xff]
  %v547 = vld [vmem:[%s1 + $0xfa8] sm:$0xff]
  %v548 = vld [vmem:[%s1 + $0xfb0] sm:$0xff]
  %v549 = vld [vmem:[%s1 + $0xfb8] sm:$0xff]
  %v550 = vld [vmem:[%s1 + $0xfc0] sm:$0xff]
  %v551 = vld [vmem:[%s1 + $0xfc8] sm:$0xff]
  %v552 = vld [vmem:[%s1 + $0xfd0] sm:$0xff]
  %v553 = vld [vmem:[%s1 + $0xfd8] sm:$0xff]
  %v554 = vld [vmem:[%s1 + $0xfe0] sm:$0xff]
  %v555 = vld [vmem:[%s1 + $0xfe8] sm:$0xff]
  %v556 = vld [vmem:[%s1 + $0xff0] sm:$0xff]
  %v557 = vld [vmem:[%s1 + $0xff8] sm:$0xff]
  %v558 = vld [vmem:[%s1 + $0x1000] sm:$0xff]
  %v559 = vld [vmem:[%s1 + $0x1008] sm:$0xff]
  %v560 = vld [vmem:[%s1 + $0x1010] sm:$0xff]
  %v561 = vld [vmem:[%s1 + $0x1018] sm:$0xff]
  %v562 = vld [vmem:[%s1 + $0x1020] sm:$0xff]
  %v563 = vld [vmem:[%s1 + $0x1028] sm:$0xff]
  %v564 = vld [vmem:[%s1 + $0x1030] sm:$0xff]
  %v565 = vld [vmem:[%s1 + $0x1038] sm:$0xff]
  %v566 = vld [vmem:[%s1 + $0x1040] sm:$0xff]
  %v567 = vld [vmem:[%s1 + $0x1048] sm:$0xff]
  %v568 = vld [vmem:[%s1 + $0x1050] sm:$0xff]
  %v569 = vld [vmem:[%s1 + $0x1058] sm:$0xff]
  %v570 = vld [vmem:[%s1 + $0x1060] sm:$0xff]
  %v571 = vld [vmem:[%s1 + $0x1068] sm:$0xff]
  %v572 = vld [vmem:[%s1 + $0x1070] sm:$0xff]
  %v573 = vld [vmem:[%s1 + $0x1078] sm:$0xff]
  %v574 = vld [vmem:[%s1 + $0x1080] sm:$0xff]
  %v575 = vld [vmem:[%s1 + $0x1088] sm:$0xff]
  %v576 = vld [vmem:[%s1 + $0x1090] sm:$0xff]
  %v577 = vld [vmem:[%s1 + $0x1098] sm:$0xff]
  %v578 = vld [vmem:[%s1 + $0x10a0] sm:$0xff]
  %v579 = vld [vmem:[%s1 + $0x10a8] sm:$0xff]
  %v580 = vld [vmem:[%s1 + $0x10b0] sm:$0xff]
  %v581 = vld [vmem:[%s1 + $0x10b8] sm:$0xff]
  %v582 = vld [vmem:[%s1 + $0x10c0] sm:$0xff]
  %v583 = vld [vmem:[%s1 + $0x10c8] sm:$0xff]
  %v584 = vld [vmem:[%s1 + $0x10d0] sm:$0xff]
  %v585 = vld [vmem:[%s1 + $0x10d8] sm:$0xff]
  %v586 = vld [vmem:[%s1 + $0x10e0] sm:$0xff]
  %v587 = vld [vmem:[%s1 + $0x10e8] sm:$0xff]
  %v588 = vld [vmem:[%s1 + $0x10f0] sm:$0xff]
  %v589 = vld [vmem:[%s1 + $0x10f8] sm:$0xff]
  %v590 = vld [vmem:[%s1 + $0x1100] sm:$0xff]
  %v591 = vld [vmem:[%s1 + $0x1108] sm:$0xff]
  %v592 = vld [vmem:[%s1 + $0x1110] sm:$0xff]
  %v593 = vld [vmem:[%s1 + $0x1118] sm:$0xff]
  %v594 = vld [vmem:[%s1 + $0x1120] sm:$0xff]
  %v595 = vld [vmem:[%s1 + $0x1128] sm:$0xff]
  %v596 = vld [vmem:[%s1 + $0x1130] sm:$0xff]
  %v597 = vld [vmem:[%s1 + $0x1138] sm:$0xff]
  %v598 = vld [vmem:[%s1 + $0x1140] sm:$0xff]
  %v599 = vld [vmem:[%s1 + $0x1148] sm:$0xff]
  %v600 = vld [vmem:[%s1 + $0x1150] sm:$0xff]
  %v601 = vld [vmem:[%s1 + $0x1158] sm:$0xff]
  %v602 = vld [vmem:[%s1 + $0x1160] sm:$0xff]
  %v603 = vld [vmem:[%s1 + $0x1168] sm:$0xff]
  %v604 = vld [vmem:[%s1 + $0x1170] sm:$0xff]
  %v605 = vld [vmem:[%s1 + $0x1178] sm:$0xff]
  %v606 = vld [vmem:[%s1 + $0x1180] sm:$0xff]
  %v607 = vld [vmem:[%s1 + $0x1188] sm:$0xff]
  %v608 = vld [vmem:[%s1 + $0x1190] sm:$0xff]
  %v609 = vld [vmem:[%s1 + $0x1198] sm:$0xff]
  %v610 = vld [vmem:[%s1 + $0x11a0] sm:$0xff]
  %v611 = vld [vmem:[%s1 + $0x11a8] sm:$0xff]
  %v612 = vld [vmem:[%s1 + $0x11b0] sm:$0xff]
  %v613 = vld [vmem:[%s1 + $0x11b8] sm:$0xff]
  %v614 = vld [vmem:[%s1 + $0x11c0] sm:$0xff]
  %v615 = vld [vmem:[%s1 + $0x11c8] sm:$0xff]
  %v616 = vld [vmem:[%s1 + $0x11d0] sm:$0xff]
  %v617 = vld [vmem:[%s1 + $0x11d8] sm:$0xff]
  %v618 = vld [vmem:[%s1 + $0x11e0] sm:$0xff]
  %v619 = vld [vmem:[%s1 + $0x11e8] sm:$0xff]
  %v620 = vld [vmem:[%s1 + $0x11f0] sm:$0xff]
  %v621 = vld [vmem:[%s1 + $0x11f8] sm:$0xff]
  %v622 = vld [vmem:[%s1 + $0x1200] sm:$0xff]
  %v623 = vld [vmem:[%s1 + $0x1208] sm:$0xff]
  %v624 = vld [vmem:[%s1 + $0x1210] sm:$0xff]
  %v625 = vld [vmem:[%s1 + $0x1218] sm:$0xff]
  %v626 = vld [vmem:[%s1 + $0x1220] sm:$0xff]
  %v627 = vld [vmem:[%s1 + $0x1228] sm:$0xff]
  %v628 = vld [vmem:[%s1 + $0x1230] sm:$0xff]
  %v629 = vld [vmem:[%s1 + $0x1238] sm:$0xff]
  %v630 = vld [vmem:[%s1 + $0x1240] sm:$0xff]
  %v631 = vld [vmem:[%s1 + $0x1248] sm:$0xff]
  %v632 = vld [vmem:[%s1 + $0x1250] sm:$0xff]
  %v633 = vld [vmem:[%s1 + $0x1258] sm:$0xff]
  %v634 = vld [vmem:[%s1 + $0x1260] sm:$0xff]
  %v635 = vld [vmem:[%s1 + $0x1268] sm:$0xff]
  %v636 = vld [vmem:[%s1 + $0x1270] sm:$0xff]
  %v637 = vld [vmem:[%s1 + $0x1278] sm:$0xff]
  %v638 = vld [vmem:[%s1 + $0x1280] sm:$0xff]
  %v639 = vld [vmem:[%s1 + $0x1288] sm:$0xff]
  %v640 = vld [vmem:[%s1 + $0x1290] sm:$0xff]
  %v641 = vld [vmem:[%s1 + $0x1298] sm:$0xff]
  %v642 = vld [vmem:[%s1 + $0x12a0] sm:$0xff]
  %v643 = vld [vmem:[%s1 + $0x12a8] sm:$0xff]
  %v644 = vld [vmem:[%s1 + $0x12b0] sm:$0xff]
  %v645 = vld [vmem:[%s1 + $0x12b8] sm:$0xff]
  %v646 = vld [vmem:[%s1 + $0x12c0] sm:$0xff]
  %v647 = vld [vmem:[%s1 + $0x12c8] sm:$0xff]
  %v648 = vld [vmem:[%s1 + $0x12d0] sm:$0xff]
  %v649 = vld [vmem:[%s1 + $0x12d8] sm:$0xff]
  %v650 = vld [vmem:[%s1 + $0x12e0] sm:$0xff]
  %v651 = vld [vmem:[%s1 + $0x12e8] sm:$0xff]
  %v652 = vld [vmem:[%s1 + $0x12f0] sm:$0xff]
  %v653 = vld [vmem:[%s1 + $0x12f8] sm:$0xff]
  %v654 = vld [vmem:[%s1 + $0x1300] sm:$0xff]
  %v655 = vld [vmem:[%s1 + $0x1308] sm:$0xff]
  %v656 = vld [vmem:[%s1 + $0x1310] sm:$0xff]
  %v657 = vld [vmem:[%s1 + $0x1318] sm:$0xff]
  %v658 = vld [vmem:[%s1 + $0x1320] sm:$0xff]
  %v659 = vld [vmem:[%s1 + $0x1328] sm:$0xff]
  %v660 = vld [vmem:[%s1 + $0x1330] sm:$0xff]
  %v661 = vld [vmem:[%s1 + $0x1338] sm:$0xff]
  %v662 = vld [vmem:[%s1 + $0x1340] sm:$0xff]
  %v663 = vld [vmem:[%s1 + $0x1348] sm:$0xff]
  %v664 = vld [vmem:[%s1 + $0x1350] sm:$0xff]
  %v665 = vld [vmem:[%s1 + $0x1358] sm:$0xff]
  %v666 = vld [vmem:[%s1 + $0x1360] sm:$0xff]
  %v667 = vld [vmem:[%s1 + $0x1368] sm:$0xff]
  %v668 = vld [vmem:[%s1 + $0x1370] sm:$0xff]
  %v669 = vld [vmem:[%s1 + $0x1378] sm:$0xff]
  %v670 = vld [vmem:[%s1 + $0x1380] sm:$0xff]
  %v671 = vld [vmem:[%s1 + $0x1388] sm:$0xff]
  %v672 = vld [vmem:[%s1 + $0x1390] sm:$0xff]
  %v673 = vld [vmem:[%s1 + $0x1398] sm:$0xff]
  %v674 = vld [vmem:[%s1 + $0x13a0] sm:$0xff]
  %v675 = vld [vmem:[%s1 + $0x13a8] sm:$0xff]
  %v676 = vld [vmem:[%s1 + $0x13b0] sm:$0xff]
  %v677 = vld [vmem:[%s1 + $0x13b8] sm:$0xff]
  %v678 = vld [vmem:[%s1 + $0x13c0] sm:$0xff]
  %v679 = vld [vmem:[%s1 + $0x13c8] sm:$0xff]
  %v680 = vld [vmem:[%s1 + $0x13d0] sm:$0xff]
  %v681 = vld [vmem:[%s1 + $0x13d8] sm:$0xff]
  %v682 = vld [vmem:[%s1 + $0x13e0] sm:$0xff]
  %v683 = vld [vmem:[%s1 + $0x13e8] sm:$0xff]
  %v684 = vld [vmem:[%s1 + $0x13f0] sm:$0xff]
  %v685 = vld [vmem:[%s1 + $0x13f8] sm:$0xff]
  %v686 = vld [vmem:[%s1 + $0x1400] sm:$0xff]
  %v687 = vld [vmem:[%s1 + $0x1408] sm:$0xff]
  %v688 = vld [vmem:[%s1 + $0x1410] sm:$0xff]
  %v689 = vld [vmem:[%s1 + $0x1418] sm:$0xff]
  %v690 = vld [vmem:[%s1 + $0x1420] sm:$0xff]
  %v691 = vld [vmem:[%s1 + $0x1428] sm:$0xff]
  %v692 = vld [vmem:[%s1 + $0x1430] sm:$0xff]
  %v693 = vld [vmem:[%s1 + $0x1438] sm:$0xff]
  %v694 = vld [vmem:[%s1 + $0x1440] sm:$0xff]
  %v695 = vld [vmem:[%s1 + $0x1448] sm:$0xff]
  %v696 = vld [vmem:[%s1 + $0x1450] sm:$0xff]
  %v697 = vld [vmem:[%s1 + $0x1458] sm:$0xff]
  %v698 = vld [vmem:[%s1 + $0x1460] sm:$0xff]
  %v699 = vld [vmem:[%s1 + $0x1468] sm:$0xff]
  %v700 = vld [vmem:[%s1 + $0x1470] sm:$0xff]
  %v701 = vld [vmem:[%s1 + $0x1478] sm:$0xff]
  %v702 = vld [vmem:[%s1 + $0x1480] sm:$0xff]
  %v703 = vld [vmem:[%s1 + $0x1488] sm:$0xff]
  %v704 = vld [vmem:[%s1 + $0x1490] sm:$0xff]
  %v705 = vld [vmem:[%s1 + $0x1498] sm:$0xff]
  %v706 = vld [vmem:[%s1 + $0x14a0] sm:$0xff]
  %v707 = vld [vmem:[%s1 + $0x14a8] sm:$0xff]
  %v708 = vld [vmem:[%s1 + $0x14b0] sm:$0xff]
  %v709 = vld [vmem:[%s1 + $0x14b8] sm:$0xff]
  %v710 = vld [vmem:[%s1 + $0x14c0] sm:$0xff]
  %v711 = vld [vmem:[%s1 + $0x14c8] sm:$0xff]
  %v712 = vld [vmem:[%s1 + $0x14d0] sm:$0xff]
  %v713 = vld [vmem:[%s1 + $0x14d8] sm:$0xff]
  %v714 = vld [vmem:[%s1 + $0x14e0] sm:$0xff]
  %v715 = vld [vmem:[%s1 + $0x14e8] sm:$0xff]
  %v716 = vld [vmem:[%s1 + $0x14f0] sm:$0xff]
  %v717 = vld [vmem:[%s1 + $0x14f8] sm:$0xff]
  %v718 = vld [vmem:[%s1 + $0x1500] sm:$0xff]
  %v719 = vld [vmem:[%s1 + $0x1508] sm:$0xff]
  %v720 = vld [vmem:[%s1 + $0x1510] sm:$0xff]
  %v721 = vld [vmem:[%s1 + $0x1518] sm:$0xff]
  %v722 = vld [vmem:[%s1 + $0x1520] sm:$0xff]
  %v723 = vld [vmem:[%s1 + $0x1528] sm:$0xff]
  %v724 = vld [vmem:[%s1 + $0x1530] sm:$0xff]
  %v725 = vld [vmem:[%s1 + $0x1538] sm:$0xff]
  %v726 = vld [vmem:[%s1 + $0x1540] sm:$0xff]
  %v727 = vld [vmem:[%s1 + $0x1548] sm:$0xff]
  %v728 = vld [vmem:[%s1 + $0x1550] sm:$0xff]
  %v729 = vld [vmem:[%s1 + $0x1558] sm:$0xff]
  %v730 = vld [vmem:[%s1 + $0x1560] sm:$0xff]
  %v731 = vld [vmem:[%s1 + $0x1568] sm:$0xff]
  %v732 = vld [vmem:[%s1 + $0x1570] sm:$0xff]
  %v733 = vld [vmem:[%s1 + $0x1578] sm:$0xff]
  %v734 = vld [vmem:[%s1 + $0x1580] sm:$0xff]
  %v735 = vld [vmem:[%s1 + $0x1588] sm:$0xff]
  %v736 = vld [vmem:[%s1 + $0x1590] sm:$0xff]
  %v737 = vld [vmem:[%s1 + $0x1598] sm:$0xff]
  %v738 = vld [vmem:[%s1 + $0x15a0] sm:$0xff]
  %v739 = vld [vmem:[%s1 + $0x15a8] sm:$0xff]
  %v740 = vld [vmem:[%s1 + $0x15b0] sm:$0xff]
  %v741 = vld [vmem:[%s1 + $0x15b8] sm:$0xff]
  %v742 = vld [vmem:[%s1 + $0x15c0] sm:$0xff]
  %v743 = vld [vmem:[%s1 + $0x15c8] sm:$0xff]
  %v744 = vld [vmem:[%s1 + $0x15d0] sm:$0xff]
  %v745 = vld [vmem:[%s1 + $0x15d8] sm:$0xff]
  %v746 = vld [vmem:[%s1 + $0x15e0] sm:$0xff]
  %v747 = vld [vmem:[%s1 + $0x15e8] sm:$0xff]
  %v748 = vld [vmem:[%s1 + $0x15f0] sm:$0xff]
  %v749 = vld [vmem:[%s1 + $0x15f8] sm:$0xff]
  %v750 = vld [vmem:[%s1 + $0x1600] sm:$0xff]
  %v751 = vld [vmem:[%s1 + $0x1608] sm:$0xff]
  %v752 = vld [vmem:[%s1 + $0x1610] sm:$0xff]
  %v753 = vld [vmem:[%s1 + $0x1618] sm:$0xff]
  %v754 = vld [vmem:[%s1 + $0x1620] sm:$0xff]
  %v755 = vld [vmem:[%s1 + $0x1628] sm:$0xff]
  %v756 = vld [vmem:[%s1 + $0x1630] sm:$0xff]
  %v757 = vld [vmem:[%s1 + $0x1638] sm:$0xff]
  %v758 = vld [vmem:[%s1 + $0x1640] sm:$0xff]
  %v759 = vld [vmem:[%s1 + $0x1648] sm:$0xff]
  %v760 = vld [vmem:[%s1 + $0x1650] sm:$0xff]
  %v761 = vld [vmem:[%s1 + $0x1658] sm:$0xff]
  %v762 = vld [vmem:[%s1 + $0x1660] sm:$0xff]
  %v763 = vld [vmem:[%s1 + $0x1668] sm:$0xff]
  %v764 = vld [vmem:[%s1 + $0x1670] sm:$0xff]
  %v765 = vld [vmem:[%s1 + $0x1678] sm:$0xff]
  %v766 = vld [vmem:[%s1 + $0x1680] sm:$0xff]
  %v767 = vld [vmem:[%s1 + $0x1688] sm:$0xff]
  %v768 = vld [vmem:[%s1 + $0x1690] sm:$0xff]
  %v769 = vld [vmem:[%s1 + $0x1698] sm:$0xff]
  %v770 = vld [vmem:[%s1 + $0x16a0] sm:$0xff]
  %v771 = vld [vmem:[%s1 + $0x16a8] sm:$0xff]
  %v772 = vld [vmem:[%s1 + $0x16b0] sm:$0xff]
  %v773 = vld [vmem:[%s1 + $0x16b8] sm:$0xff]
  %v774 = vld [vmem:[%s1 + $0x16c0] sm:$0xff]
  %v775 = vld [vmem:[%s1 + $0x16c8] sm:$0xff]
  %v776 = vld [vmem:[%s1 + $0x16d0] sm:$0xff]
  %v777 = vld [vmem:[%s1 + $0x16d8] sm:$0xff]
  %v778 = vld [vmem:[%s1 + $0x16e0] sm:$0xff]
  %v779 = vld [vmem:[%s1 + $0x16e8] sm:$0xff]
  %v780 = vld [vmem:[%s1 + $0x16f0] sm:$0xff]
  %v781 = vld [vmem:[%s1 + $0x16f8] sm:$0xff]
  %v782 = vld [vmem:[%s1 + $0x1700] sm:$0xff]
  %v783 = vld [vmem:[%s1 + $0x1708] sm:$0xff]
  %v784 = vld [vmem:[%s1 + $0x1710] sm:$0xff]
  %v785 = vld [vmem:[%s1 + $0x1718] sm:$0xff]
  %v786 = vld [vmem:[%s1 + $0x1720] sm:$0xff]
  %v787 = vld [vmem:[%s1 + $0x1728] sm:$0xff]
  %v788 = vld [vmem:[%s1 + $0x1730] sm:$0xff]
  %v789 = vld [vmem:[%s1 + $0x1738] sm:$0xff]
  %v790 = vld [vmem:[%s1 + $0x1740] sm:$0xff]
  %v791 = vld [vmem:[%s1 + $0x1748] sm:$0xff]
  %v792 = vld [vmem:[%s1 + $0x1750] sm:$0xff]
  %v793 = vld [vmem:[%s1 + $0x1758] sm:$0xff]
  %v794 = vld [vmem:[%s1 + $0x1760] sm:$0xff]
  %v795 = vld [vmem:[%s1 + $0x1768] sm:$0xff]
  %v796 = vld [vmem:[%s1 + $0x1770] sm:$0xff]
  %v797 = vld [vmem:[%s1 + $0x1778] sm:$0xff]
  %v798 = vld [vmem:[%s1 + $0x1780] sm:$0xff]
  %v799 = vld [vmem:[%s1 + $0x1788] sm:$0xff]
  %v800 = vld [vmem:[%s1 + $0x1790] sm:$0xff]
  %v801 = vld [vmem:[%s1 + $0x1798] sm:$0xff]
  %v802 = vld [vmem:[%s1 + $0x17a0] sm:$0xff]
  %v803 = vld [vmem:[%s1 + $0x17a8] sm:$0xff]
  %v804 = vld [vmem:[%s1 + $0x17b0] sm:$0xff]
  %v805 = vld [vmem:[%s1 + $0x17b8] sm:$0xff]
  %v806 = vld [vmem:[%s1 + $0x17c0] sm:$0xff]
  %v807 = vld [vmem:[%s1 + $0x17c8] sm:$0xff]
  %v808 = vld [vmem:[%s1 + $0x17d0] sm:$0xff]
  %v809 = vld [vmem:[%s1 + $0x17d8] sm:$0xff]
  %v810 = vld [vmem:[%s1 + $0x17e0] sm:$0xff]
  %v811 = vld [vmem:[%s1 + $0x17e8] sm:$0xff]
  %v812 = vld [vmem:[%s1 + $0x17f0] sm:$0xff]
  %v813 = vld [vmem:[%s1 + $0x17f8] sm:$0xff]
  %v814 = vld [vmem:[%s1 + $0x1800] sm:$0xff]
  %v815 = vld [vmem:[%s1 + $0x1808] sm:$0xff]
  %v816 = vld [vmem:[%s1 + $0x1810] sm:$0xff]
  %v817 = vld [vmem:[%s1 + $0x1818] sm:$0xff]
  %v818 = vld [vmem:[%s1 + $0x1820] sm:$0xff]
  %v819 = vld [vmem:[%s1 + $0x1828] sm:$0xff]
  %v820 = vld [vmem:[%s1 + $0x1830] sm:$0xff]
  %v821 = vld [vmem:[%s1 + $0x1838] sm:$0xff]
  %v822 = vld [vmem:[%s1 + $0x1840] sm:$0xff]
  %v823 = vld [vmem:[%s1 + $0x1848] sm:$0xff]
  %v824 = vld [vmem:[%s1 + $0x1850] sm:$0xff]
  %v825 = vld [vmem:[%s1 + $0x1858] sm:$0xff]
  %v826 = vld [vmem:[%s1 + $0x1860] sm:$0xff]
  %v827 = vld [vmem:[%s1 + $0x1868] sm:$0xff]
  %v828 = vld [vmem:[%s1 + $0x1870] sm:$0xff]
  %v829 = vld [vmem:[%s1 + $0x1878] sm:$0xff]
  %v830 = vld [vmem:[%s1 + $0x1880] sm:$0xff]
  %v831 = vld [vmem:[%s1 + $0x1888] sm:$0xff]
  %v832 = vld [vmem:[%s1 + $0x1890] sm:$0xff]
  %v833 = vld [vmem:[%s1 + $0x1898] sm:$0xff]
  %v834 = vld [vmem:[%s1 + $0x18a0] sm:$0xff]
  %v835 = vld [vmem:[%s1 + $0x18a8] sm:$0xff]
  %v836 = vld [vmem:[%s1 + $0x18b0] sm:$0xff]
  %v837 = vld [vmem:[%s1 + $0x18b8] sm:$0xff]
  %v838 = vld [vmem:[%s1 + $0x18c0] sm:$0xff]
  %v839 = vld [vmem:[%s1 + $0x18c8] sm:$0xff]
  %v840 = vld [vmem:[%s1 + $0x18d0] sm:$0xff]
  %v841 = vld [vmem:[%s1 + $0x18d8] sm:$0xff]
  %v842 = vld [vmem:[%s1 + $0x18e0] sm:$0xff]
  %v843 = vld [vmem:[%s1 + $0x18e8] sm:$0xff]
  %v844 = vld [vmem:[%s1 + $0x18f0] sm:$0xff]
  %v845 = vld [vmem:[%s1 + $0x18f8] sm:$0xff]
  %v846 = vld [vmem:[%s1 + $0x1900] sm:$0xff]
  %v847 = vld [vmem:[%s1 + $0x1908] sm:$0xff]
  %v848 = vld [vmem:[%s1 + $0x1910] sm:$0xff]
  %v849 = vld [vmem:[%s1 + $0x1918] sm:$0xff]
  %v850 = vld [vmem:[%s1 + $0x1920] sm:$0xff]
  %v851 = vld [vmem:[%s1 + $0x1928] sm:$0xff]
  %v852 = vld [vmem:[%s1 + $0x1930] sm:$0xff]
  %v853 = vld [vmem:[%s1 + $0x1938] sm:$0xff]
  %v854 = vld [vmem:[%s1 + $0x1940] sm:$0xff]
  %v855 = vld [vmem:[%s1 + $0x1948] sm:$0xff]
  %v856 = vld [vmem:[%s1 + $0x1950] sm:$0xff]
  %v857 = vld [vmem:[%s1 + $0x1958] sm:$0xff]
  %v858 = vld [vmem:[%s1 + $0x1960] sm:$0xff]
  %v859 = vld [vmem:[%s1 + $0x1968] sm:$0xff]
  %v860 = vld [vmem:[%s1 + $0x1970] sm:$0xff]
  %v861 = vld [vmem:[%s1 + $0x1978] sm:$0xff]
  %v862 = vld [vmem:[%s1 + $0x1980] sm:$0xff]
  %v863 = vld [vmem:[%s1 + $0x1988] sm:$0xff]
  %v864 = vld [vmem:[%s1 + $0x1990] sm:$0xff]
  %v865 = vld [vmem:[%s1 + $0x1998] sm:$0xff]
  %v866 = vld [vmem:[%s1 + $0x19a0] sm:$0xff]
  %v867 = vld [vmem:[%s1 + $0x19a8] sm:$0xff]
  %v868 = vld [vmem:[%s1 + $0x19b0] sm:$0xff]
  %v869 = vld [vmem:[%s1 + $0x19b8] sm:$0xff]
  %v870 = vld [vmem:[%s1 + $0x19c0] sm:$0xff]
  %v871 = vld [vmem:[%s1 + $0x19c8] sm:$0xff]
  %v872 = vld [vmem:[%s1 + $0x19d0] sm:$0xff]
  %v873 = vld [vmem:[%s1 + $0x19d8] sm:$0xff]
  %v874 = vld [vmem:[%s1 + $0x19e0] sm:$0xff]
  %v875 = vld [vmem:[%s1 + $0x19e8] sm:$0xff]
  %v876 = vld [vmem:[%s1 + $0x19f0] sm:$0xff]
  %v877 = vld [vmem:[%s1 + $0x19f8] sm:$0xff]
  %v878 = vld [vmem:[%s1 + $0x1a00] sm:$0xff]
  %v879 = vld [vmem:[%s1 + $0x1a08] sm:$0xff]
  %v880 = vld [vmem:[%s1 + $0x1a10] sm:$0xff]
  %v881 = vld [vmem:[%s1 + $0x1a18] sm:$0xff]
  %v882 = vld [vmem:[%s1 + $0x1a20] sm:$0xff]
  %v883 = vld [vmem:[%s1 + $0x1a28] sm:$0xff]
  %v884 = vld [vmem:[%s1 + $0x1a30] sm:$0xff]
  %v885 = vld [vmem:[%s1 + $0x1a38] sm:$0xff]
  %v886 = vld [vmem:[%s1 + $0x1a40] sm:$0xff]
  %v887 = vld [vmem:[%s1 + $0x1a48] sm:$0xff]
  %v888 = vld [vmem:[%s1 + $0x1a50] sm:$0xff]
  %v889 = vld [vmem:[%s1 + $0x1a58] sm:$0xff]
  %v890 = vld [vmem:[%s1 + $0x1a60] sm:$0xff]
  %v891 = vld [vmem:[%s1 + $0x1a68] sm:$0xff]
  %v892 = vld [vmem:[%s1 + $0x1a70] sm:$0xff]
  %v893 = vld [vmem:[%s1 + $0x1a78] sm:$0xff]
  %v894 = vld [vmem:[%s1 + $0x1a80] sm:$0xff]
  %v895 = vld [vmem:[%s1 + $0x1a88] sm:$0xff]
  %v896 = vld [vmem:[%s1 + $0x1a90] sm:$0xff]
  %v897 = vld [vmem:[%s1 + $0x1a98] sm:$0xff]
  %v898 = vld [vmem:[%s1 + $0x1aa0] sm:$0xff]
  %v899 = vld [vmem:[%s1 + $0x1aa8] sm:$0xff]
  %v900 = vld [vmem:[%s1 + $0x1ab0] sm:$0xff]
  %v901 = vld [vmem:[%s1 + $0x1ab8] sm:$0xff]
  %v902 = vld [vmem:[%s1 + $0x1ac0] sm:$0xff]
  %v903 = vld [vmem:[%s1 + $0x1ac8] sm:$0xff]
  %v904 = vld [vmem:[%s1 + $0x1ad0] sm:$0xff]
  %v905 = vld [vmem:[%s1 + $0x1ad8] sm:$0xff]
  %v906 = vld [vmem:[%s1 + $0x1ae0] sm:$0xff]
  %v907 = vld [vmem:[%s1 + $0x1ae8] sm:$0xff]
  %v908 = vld [vmem:[%s1 + $0x1af0] sm:$0xff]
  %v909 = vld [vmem:[%s1 + $0x1af8] sm:$0xff]
  %v910 = vld [vmem:[%s1 + $0x1b00] sm:$0xff]
  %v911 = vld [vmem:[%s1 + $0x1b08] sm:$0xff]
  %v912 = vld [vmem:[%s1 + $0x1b10] sm:$0xff]
  %v913 = vld [vmem:[%s1 + $0x1b18] sm:$0xff]
  %v914 = vld [vmem:[%s1 + $0x1b20] sm:$0xff]
  %v915 = vld [vmem:[%s1 + $0x1b28] sm:$0xff]
  %v916 = vld [vmem:[%s1 + $0x1b30] sm:$0xff]
  %v917 = vld [vmem:[%s1 + $0x1b38] sm:$0xff]
  %v918 = vld [vmem:[%s1 + $0x1b40] sm:$0xff]
  %v919 = vld [vmem:[%s1 + $0x1b48] sm:$0xff]
  %v920 = vld [vmem:[%s1 + $0x1b50] sm:$0xff]
  %v921 = vld [vmem:[%s1 + $0x1b58] sm:$0xff]
  %v922 = vld [vmem:[%s1 + $0x1b60] sm:$0xff]
  %v923 = vld [vmem:[%s1 + $0x1b68] sm:$0xff]
  %v924 = vld [vmem:[%s1 + $0x1b70] sm:$0xff]
  %v925 = vld [vmem:[%s1 + $0x1b78] sm:$0xff]
  %v926 = vld [vmem:[%s1 + $0x1b80] sm:$0xff]
  %v927 = vld [vmem:[%s1 + $0x1b88] sm:$0xff]
  %v928 = vld [vmem:[%s1 + $0x1b90] sm:$0xff]
  %v929 = vld [vmem:[%s1 + $0x1b98] sm:$0xff]
  %v930 = vld [vmem:[%s1 + $0x1ba0] sm:$0xff]
  %v931 = vld [vmem:[%s1 + $0x1ba8] sm:$0xff]
  %v932 = vld [vmem:[%s1 + $0x1bb0] sm:$0xff]
  %v933 = vld [vmem:[%s1 + $0x1bb8] sm:$0xff]
  %v934 = vld [vmem:[%s1 + $0x1bc0] sm:$0xff]
  %v935 = vld [vmem:[%s1 + $0x1bc8] sm:$0xff]
  %v936 = vld [vmem:[%s1 + $0x1bd0] sm:$0xff]
  %v937 = vld [vmem:[%s1 + $0x1bd8] sm:$0xff]
  %v938 = vld [vmem:[%s1 + $0x1be0] sm:$0xff]
  %v939 = vld [vmem:[%s1 + $0x1be8] sm:$0xff]
  %v940 = vld [vmem:[%s1 + $0x1bf0] sm:$0xff]
  %v941 = vld [vmem:[%s1 + $0x1bf8] sm:$0xff]
  %v942 = vld [vmem:[%s1 + $0x1c00] sm:$0xff]
  %v943 = vld [vmem:[%s1 + $0x1c08] sm:$0xff]
  %v944 = vld [vmem:[%s1 + $0x1c10] sm:$0xff]
  %v945 = vld [vmem:[%s1 + $0x1c18] sm:$0xff]
  %v946 = vld [vmem:[%s1 + $0x1c20] sm:$0xff]
  %v947 = vld [vmem:[%s1 + $0x1c28] sm:$0xff]
  %v948 = vld [vmem:[%s1 + $0x1c30] sm:$0xff]
  %v949 = vld [vmem:[%s1 + $0x1c38] sm:$0xff]
  %v950 = vld [vmem:[%s1 + $0x1c40] sm:$0xff]
  %v951 = vld [vmem:[%s1 + $0x1c48] sm:$0xff]
  %v952 = vld [vmem:[%s1 + $0x1c50] sm:$0xff]
  %v953 = vld [vmem:[%s1 + $0x1c58] sm:$0xff]
  %v954 = vld [vmem:[%s1 + $0x1c60] sm:$0xff]
  %v955 = vld [vmem:[%s1 + $0x1c68] sm:$0xff]
  %v956 = vld [vmem:[%s1 + $0x1c70] sm:$0xff]
  %v957 = vld [vmem:[%s1 + $0x1c78] sm:$0xff]
  %v958 = vld [vmem:[%s1 + $0x1c80] sm:$0xff]
  %v959 = vld [vmem:[%s1 + $0x1c88] sm:$0xff]
  %v960 = vld [vmem:[%s1 + $0x1c90] sm:$0xff]
  %v961 = vld [vmem:[%s1 + $0x1c98] sm:$0xff]
  %v962 = vld [vmem:[%s1 + $0x1ca0] sm:$0xff]
  %v963 = vld [vmem:[%s1 + $0x1ca8] sm:$0xff]
  %v964 = vld [vmem:[%s1 + $0x1cb0] sm:$0xff]
  %v965 = vld [vmem:[%s1 + $0x1cb8] sm:$0xff]
  %v966 = vld [vmem:[%s1 + $0x1cc0] sm:$0xff]
  %v967 = vld [vmem:[%s1 + $0x1cc8] sm:$0xff]
  %v968 = vld [vmem:[%s1 + $0x1cd0] sm:$0xff]
  %v969 = vld [vmem:[%s1 + $0x1cd8] sm:$0xff]
  %v970 = vld [vmem:[%s1 + $0x1ce0] sm:$0xff]
  %v971 = vld [vmem:[%s1 + $0x1ce8] sm:$0xff]
  %v972 = vld [vmem:[%s1 + $0x1cf0] sm:$0xff]
  %v973 = vld [vmem:[%s1 + $0x1cf8] sm:$0xff]
  %v974 = vld [vmem:[%s1 + $0x1d00] sm:$0xff]
  %v975 = vld [vmem:[%s1 + $0x1d08] sm:$0xff]
  %v976 = vld [vmem:[%s1 + $0x1d10] sm:$0xff]
  %v977 = vld [vmem:[%s1 + $0x1d18] sm:$0xff]
  %v978 = vld [vmem:[%s1 + $0x1d20] sm:$0xff]
  %v979 = vld [vmem:[%s1 + $0x1d28] sm:$0xff]
  %v980 = vld [vmem:[%s1 + $0x1d30] sm:$0xff]
  %v981 = vld [vmem:[%s1 + $0x1d38] sm:$0xff]
  %v982 = vld [vmem:[%s1 + $0x1d40] sm:$0xff]
  %v983 = vld [vmem:[%s1 + $0x1d48] sm:$0xff]
  %v984 = vld [vmem:[%s1 + $0x1d50] sm:$0xff]
  %v985 = vld [vmem:[%s1 + $0x1d58] sm:$0xff]
  %v986 = vld [vmem:[%s1 + $0x1d60] sm:$0xff]
  %v987 = vld [vmem:[%s1 + $0x1d68] sm:$0xff]
  %v988 = vld [vmem:[%s1 + $0x1d70] sm:$0xff]
  %v989 = vld [vmem:[%s1 + $0x1d78] sm:$0xff]
  %v990 = vld [vmem:[%s1 + $0x1d80] sm:$0xff]
  %v991 = vld [vmem:[%s1 + $0x1d88] sm:$0xff]
  %v992 = vld [vmem:[%s1 + $0x1d90] sm:$0xff]
  %v993 = vld [vmem:[%s1 + $0x1d98] sm:$0xff]
  %v994 = vld [vmem:[%s1 + $0x1da0] sm:$0xff]
  %v995 = vld [vmem:[%s1 + $0x1da8] sm:$0xff]
  %v996 = vld [vmem:[%s1 + $0x1db0] sm:$0xff]
  %v997 = vld [vmem:[%s1 + $0x1db8] sm:$0xff]
  %v998 = vld [vmem:[%s1 + $0x1dc0] sm:$0xff]
  %v999 = vld [vmem:[%s1 + $0x1dc8] sm:$0xff]
  %v1000 = vld [vmem:[%s1 + $0x1dd0] sm:$0xff]
  %v1001 = vld [vmem:[%s1 + $0x1dd8] sm:$0xff]
  %v1002 = vld [vmem:[%s1 + $0x1de0] sm:$0xff]
  %v1003 = vld [vmem:[%s1 + $0x1de8] sm:$0xff]
  %v1004 = vld [vmem:[%s1 + $0x1df0] sm:$0xff]
  %v1005 = vld [vmem:[%s1 + $0x1df8] sm:$0xff]
  %v1006 = vld [vmem:[%s1 + $0x1e00] sm:$0xff]
  %v1007 = vld [vmem:[%s1 + $0x1e08] sm:$0xff]
  %v1008 = vld [vmem:[%s1 + $0x1e10] sm:$0xff]
  %v1009 = vld [vmem:[%s1 + $0x1e18] sm:$0xff]
  %v1010 = vld [vmem:[%s1 + $0x1e20] sm:$0xff]
  %v1011 = vld [vmem:[%s1 + $0x1e28] sm:$0xff]
  %v1012 = vld [vmem:[%s1 + $0x1e30] sm:$0xff]
  %v1013 = vld [vmem:[%s1 + $0x1e38] sm:$0xff]
  %v1014 = vld [vmem:[%s1 + $0x1e40] sm:$0xff]
  %v1015 = vld [vmem:[%s1 + $0x1e48] sm:$0xff]
  %v1016 = vld [vmem:[%s1 + $0x1e50] sm:$0xff]
  %v1017 = vld [vmem:[%s1 + $0x1e58] sm:$0xff]
  %v1018 = vld [vmem:[%s1 + $0x1e60] sm:$0xff]
  %v1019 = vld [vmem:[%s1 + $0x1e68] sm:$0xff]
  %v1020 = vld [vmem:[%s1 + $0x1e70] sm:$0xff]
  %v1021 = vld [vmem:[%s1 + $0x1e78] sm:$0xff]
  %v1022 = vld [vmem:[%s1 + $0x1e80] sm:$0xff]
  %v1023 = vld [vmem:[%s1 + $0x1e88] sm:$0xff]
  %v1024 = vld [vmem:[%s1 + $0x1e90] sm:$0xff]
  %v1025 = vld [vmem:[%s1 + $0x1e98] sm:$0xff]
  %v1026 = vld [vmem:[%s1 + $0x1ea0] sm:$0xff]
  %v1027 = vld [vmem:[%s1 + $0x1ea8] sm:$0xff]
  %v1028 = vld [vmem:[%s1 + $0x1eb0] sm:$0xff]
  %v1029 = vld [vmem:[%s1 + $0x1eb8] sm:$0xff]
  %v1030 = vld [vmem:[%s1 + $0x1ec0] sm:$0xff]
  %v1031 = vld [vmem:[%s1 + $0x1ec8] sm:$0xff]
  %v1032 = vld [vmem:[%s1 + $0x1ed0] sm:$0xff]
  %v1033 = vld [vmem:[%s1 + $0x1ed8] sm:$0xff]
  %v1034 = vld [vmem:[%s1 + $0x1ee0] sm:$0xff]
  %v1035 = vld [vmem:[%s1 + $0x1ee8] sm:$0xff]
  %v1036 = vld [vmem:[%s1 + $0x1ef0] sm:$0xff]
  %v1037 = vld [vmem:[%s1 + $0x1ef8] sm:$0xff]
  %v1038 = vld [vmem:[%s1 + $0x1f00] sm:$0xff]
  %v1039 = vld [vmem:[%s1 + $0x1f08] sm:$0xff]
  %v1040 = vld [vmem:[%s1 + $0x1f10] sm:$0xff]
  %v1041 = vld [vmem:[%s1 + $0x1f18] sm:$0xff]
  %v1042 = vld [vmem:[%s1 + $0x1f20] sm:$0xff]
  %v1043 = vld [vmem:[%s1 + $0x1f28] sm:$0xff]
  %v1044 = vld [vmem:[%s1 + $0x1f30] sm:$0xff]
  %v1045 = vld [vmem:[%s1 + $0x1f38] sm:$0xff]
  %v1046 = vld [vmem:[%s1 + $0x1f40] sm:$0xff]
  %v1047 = vld [vmem:[%s1 + $0x1f48] sm:$0xff]
  %v1048 = vld [vmem:[%s1 + $0x1f50] sm:$0xff]
  %v1049 = vld [vmem:[%s1 + $0x1f58] sm:$0xff]
  %v1050 = vld [vmem:[%s1 + $0x1f60] sm:$0xff]
  %v1051 = vld [vmem:[%s1 + $0x1f68] sm:$0xff]
  %v1052 = vld [vmem:[%s1 + $0x1f70] sm:$0xff]
  %v1053 = vld [vmem:[%s1 + $0x1f78] sm:$0xff]
  %v1054 = vld [vmem:[%s1 + $0x1f80] sm:$0xff]
  %v1055 = vld [vmem:[%s1 + $0x1f88] sm:$0xff]
  %v1056 = vld [vmem:[%s1 + $0x1f90] sm:$0xff]
  %v1057 = vld [vmem:[%s1 + $0x1f98] sm:$0xff]
  %v1058 = vld [vmem:[%s1 + $0x1fa0] sm:$0xff]
  %v1059 = vld [vmem:[%s1 + $0x1fa8] sm:$0xff]
  %v1060 = vld [vmem:[%s1 + $0x1fb0] sm:$0xff]
  %v1061 = vld [vmem:[%s1 + $0x1fb8] sm:$0xff]
  %v1062 = vld [vmem:[%s1 + $0x1fc0] sm:$0xff]
  %v1063 = vld [vmem:[%s1 + $0x1fc8] sm:$0xff]
  %v1064 = vld [vmem:[%s1 + $0x1fd0] sm:$0xff]
  %v1065 = vld [vmem:[%s1 + $0x1fd8] sm:$0xff]
  %v1066 = vld [vmem:[%s1 + $0x1fe0] sm:$0xff]
  %v1067 = vld [vmem:[%s1 + $0x1fe8] sm:$0xff]
  %v1068 = vld [vmem:[%s1 + $0x1ff0] sm:$0xff]
  %v1069 = vld [vmem:[%s1 + $0x1ff8] sm:$0xff]
  %v1070 = vld [vmem:[%s2] sm:$0xf]
  %v1072 = vperm.slane %v1070, 0
  %v1073 = vperm.slane %v1070, 1
  %v1074 = vperm.slane %v1070, 2
  %v1075 = vperm.slane %v1070, 3
  %v1096 = vunpack.c.l.b16 %v30
  %v1097 = vunpack.c.h.b16 %v30
  %v1098 = vunpack.c.l.b16 %v31
  %v1099 = vunpack.c.h.b16 %v31
  %v1100 = vunpack.c.l.b16 %v32
  %v1101 = vunpack.c.h.b16 %v32
  %v1102 = vunpack.c.l.b16 %v33
  %v1103 = vunpack.c.h.b16 %v33
  %v1104 = vunpack.c.l.b16 %v34
  %v1105 = vunpack.c.h.b16 %v34
  %v1106 = vunpack.c.l.b16 %v35
  %v1107 = vunpack.c.h.b16 %v35
  %v1108 = vunpack.c.l.b16 %v36
  %v1109 = vunpack.c.h.b16 %v36
  %v1110 = vunpack.c.l.b16 %v37
  %v1111 = vunpack.c.h.b16 %v37
  %v1112 = vunpack.c.l.b16 %v38
  %v1113 = vunpack.c.h.b16 %v38
  %v1114 = vunpack.c.l.b16 %v39
  %v1115 = vunpack.c.h.b16 %v39
  %v1116 = vunpack.c.l.b16 %v40
  %v1117 = vunpack.c.h.b16 %v40
  %v1118 = vunpack.c.l.b16 %v41
  %v1119 = vunpack.c.h.b16 %v41
  %v1120 = vunpack.c.l.b16 %v42
  %v1121 = vunpack.c.h.b16 %v42
  %v1122 = vunpack.c.l.b16 %v43
  %v1123 = vunpack.c.h.b16 %v43
  %v1124 = vunpack.c.l.b16 %v44
  %v1125 = vunpack.c.h.b16 %v44
  %v1126 = vunpack.c.l.b16 %v45
  %v1127 = vunpack.c.h.b16 %v45
  %v1128 = vpack.c.b16 %v1096, %v1096
  %v1129 = vpack.c.b16 %v1097, %v1097
  %v1130 = vpack.c.b16 %v1098, %v1098
  %v1131 = vpack.c.b16 %v1099, %v1099
  %v1132 = vpack.c.b16 %v1100, %v1100
  %v1133 = vpack.c.b16 %v1101, %v1101
  %v1134 = vpack.c.b16 %v1102, %v1102
  %v1135 = vpack.c.b16 %v1103, %v1103
  %v1136 = vpack.c.b16 %v1104, %v1104
  %v1137 = vpack.c.b16 %v1105, %v1105
  %v1138 = vpack.c.b16 %v1106, %v1106
  %v1139 = vpack.c.b16 %v1107, %v1107
  %v1140 = vpack.c.b16 %v1108, %v1108
  %v1141 = vpack.c.b16 %v1109, %v1109
  %v1142 = vpack.c.b16 %v1110, %v1110
  %v1143 = vpack.c.b16 %v1111, %v1111
  %v1144 = vpack.c.b16 %v1112, %v1112
  %v1145 = vpack.c.b16 %v1113, %v1113
  %v1146 = vpack.c.b16 %v1114, %v1114
  %v1147 = vpack.c.b16 %v1115, %v1115
  %v1148 = vpack.c.b16 %v1116, %v1116
  %v1149 = vpack.c.b16 %v1117, %v1117
  %v1150 = vpack.c.b16 %v1118, %v1118
  %v1151 = vpack.c.b16 %v1119, %v1119
  %v1152 = vpack.c.b16 %v1120, %v1120
  %v1153 = vpack.c.b16 %v1121, %v1121
  %v1154 = vpack.c.b16 %v1122, %v1122
  %v1155 = vpack.c.b16 %v1123, %v1123
  %v1156 = vpack.c.b16 %v1124, %v1124
  %v1157 = vpack.c.b16 %v1125, %v1125
  %v1158 = vpack.c.b16 %v1126, %v1126
  %v1159 = vpack.c.b16 %v1127, %v1127
  %v2216 = vunpack.c.l.b16 %v46
  %v2217 = vunpack.c.h.b16 %v46
  %v2218 = vunpack.c.l.b16 %v47
  %v2219 = vunpack.c.h.b16 %v47
  %v2220 = vunpack.c.l.b16 %v48
  %v2221 = vunpack.c.h.b16 %v48
  %v2222 = vunpack.c.l.b16 %v49
  %v2223 = vunpack.c.h.b16 %v49
  %v2224 = vunpack.c.l.b16 %v50
  %v2225 = vunpack.c.h.b16 %v50
  %v2226 = vunpack.c.l.b16 %v51
  %v2227 = vunpack.c.h.b16 %v51
  %v2228 = vunpack.c.l.b16 %v52
  %v2229 = vunpack.c.h.b16 %v52
  %v2230 = vunpack.c.l.b16 %v53
  %v2231 = vunpack.c.h.b16 %v53
  %v2232 = vunpack.c.l.b16 %v54
  %v2233 = vunpack.c.h.b16 %v54
  %v2234 = vunpack.c.l.b16 %v55
  %v2235 = vunpack.c.h.b16 %v55
  %v2236 = vunpack.c.l.b16 %v56
  %v2237 = vunpack.c.h.b16 %v56
  %v2238 = vunpack.c.l.b16 %v57
  %v2239 = vunpack.c.h.b16 %v57
  %v2240 = vunpack.c.l.b16 %v58
  %v2241 = vunpack.c.h.b16 %v58
  %v2242 = vunpack.c.l.b16 %v59
  %v2243 = vunpack.c.h.b16 %v59
  %v2244 = vunpack.c.l.b16 %v60
  %v2245 = vunpack.c.h.b16 %v60
  %v2246 = vunpack.c.l.b16 %v61
  %v2247 = vunpack.c.h.b16 %v61
  %v2248 = vunpack.c.l.b16 %v62
  %v2249 = vunpack.c.h.b16 %v62
  %v2250 = vunpack.c.l.b16 %v63
  %v2251 = vunpack.c.h.b16 %v63
  %v2252 = vunpack.c.l.b16 %v64
  %v2253 = vunpack.c.h.b16 %v64
  %v2254 = vunpack.c.l.b16 %v65
  %v2255 = vunpack.c.h.b16 %v65
  %v2256 = vunpack.c.l.b16 %v66
  %v2257 = vunpack.c.h.b16 %v66
  %v2258 = vunpack.c.l.b16 %v67
  %v2259 = vunpack.c.h.b16 %v67
  %v2260 = vunpack.c.l.b16 %v68
  %v2261 = vunpack.c.h.b16 %v68
  %v2262 = vunpack.c.l.b16 %v69
  %v2263 = vunpack.c.h.b16 %v69
  %v2264 = vunpack.c.l.b16 %v70
  %v2265 = vunpack.c.h.b16 %v70
  %v2266 = vunpack.c.l.b16 %v71
  %v2267 = vunpack.c.h.b16 %v71
  %v2268 = vunpack.c.l.b16 %v72
  %v2269 = vunpack.c.h.b16 %v72
  %v2270 = vunpack.c.l.b16 %v73
  %v2271 = vunpack.c.h.b16 %v73
  %v2272 = vunpack.c.l.b16 %v74
  %v2273 = vunpack.c.h.b16 %v74
  %v2274 = vunpack.c.l.b16 %v75
  %v2275 = vunpack.c.h.b16 %v75
  %v2276 = vunpack.c.l.b16 %v76
  %v2277 = vunpack.c.h.b16 %v76
  %v2278 = vunpack.c.l.b16 %v77
  %v2279 = vunpack.c.h.b16 %v77
  %v2280 = vunpack.c.l.b16 %v78
  %v2281 = vunpack.c.h.b16 %v78
  %v2282 = vunpack.c.l.b16 %v79
  %v2283 = vunpack.c.h.b16 %v79
  %v2284 = vunpack.c.l.b16 %v80
  %v2285 = vunpack.c.h.b16 %v80
  %v2286 = vunpack.c.l.b16 %v81
  %v2287 = vunpack.c.h.b16 %v81
  %v2288 = vunpack.c.l.b16 %v82
  %v2289 = vunpack.c.h.b16 %v82
  %v2290 = vunpack.c.l.b16 %v83
  %v2291 = vunpack.c.h.b16 %v83
  %v2292 = vunpack.c.l.b16 %v84
  %v2293 = vunpack.c.h.b16 %v84
  %v2294 = vunpack.c.l.b16 %v85
  %v2295 = vunpack.c.h.b16 %v85
  %v2296 = vunpack.c.l.b16 %v86
  %v2297 = vunpack.c.h.b16 %v86
  %v2298 = vunpack.c.l.b16 %v87
  %v2299 = vunpack.c.h.b16 %v87
  %v2300 = vunpack.c.l.b16 %v88
  %v2301 = vunpack.c.h.b16 %v88
  %v2302 = vunpack.c.l.b16 %v89
  %v2303 = vunpack.c.h.b16 %v89
  %v2304 = vunpack.c.l.b16 %v90
  %v2305 = vunpack.c.h.b16 %v90
  %v2306 = vunpack.c.l.b16 %v91
  %v2307 = vunpack.c.h.b16 %v91
  %v2308 = vunpack.c.l.b16 %v92
  %v2309 = vunpack.c.h.b16 %v92
  %v2310 = vunpack.c.l.b16 %v93
  %v2311 = vunpack.c.h.b16 %v93
  %v2312 = vunpack.c.l.b16 %v94
  %v2313 = vunpack.c.h.b16 %v94
  %v2314 = vunpack.c.l.b16 %v95
  %v2315 = vunpack.c.h.b16 %v95
  %v2316 = vunpack.c.l.b16 %v96
  %v2317 = vunpack.c.h.b16 %v96
  %v2318 = vunpack.c.l.b16 %v97
  %v2319 = vunpack.c.h.b16 %v97
  %v2320 = vunpack.c.l.b16 %v98
  %v2321 = vunpack.c.h.b16 %v98
  %v2322 = vunpack.c.l.b16 %v99
  %v2323 = vunpack.c.h.b16 %v99
  %v2324 = vunpack.c.l.b16 %v100
  %v2325 = vunpack.c.h.b16 %v100
  %v2326 = vunpack.c.l.b16 %v101
  %v2327 = vunpack.c.h.b16 %v101
  %v2328 = vunpack.c.l.b16 %v102
  %v2329 = vunpack.c.h.b16 %v102
  %v2330 = vunpack.c.l.b16 %v103
  %v2331 = vunpack.c.h.b16 %v103
  %v2332 = vunpack.c.l.b16 %v104
  %v2333 = vunpack.c.h.b16 %v104
  %v2334 = vunpack.c.l.b16 %v105
  %v2335 = vunpack.c.h.b16 %v105
  %v2336 = vunpack.c.l.b16 %v106
  %v2337 = vunpack.c.h.b16 %v106
  %v2338 = vunpack.c.l.b16 %v107
  %v2339 = vunpack.c.h.b16 %v107
  %v2340 = vunpack.c.l.b16 %v108
  %v2341 = vunpack.c.h.b16 %v108
  %v2342 = vunpack.c.l.b16 %v109
  %v2343 = vunpack.c.h.b16 %v109
  %v2344 = vunpack.c.l.b16 %v110
  %v2345 = vunpack.c.h.b16 %v110
  %v2346 = vunpack.c.l.b16 %v111
  %v2347 = vunpack.c.h.b16 %v111
  %v2348 = vunpack.c.l.b16 %v112
  %v2349 = vunpack.c.h.b16 %v112
  %v2350 = vunpack.c.l.b16 %v113
  %v2351 = vunpack.c.h.b16 %v113
  %v2352 = vunpack.c.l.b16 %v114
  %v2353 = vunpack.c.h.b16 %v114
  %v2354 = vunpack.c.l.b16 %v115
  %v2355 = vunpack.c.h.b16 %v115
  %v2356 = vunpack.c.l.b16 %v116
  %v2357 = vunpack.c.h.b16 %v116
  %v2358 = vunpack.c.l.b16 %v117
  %v2359 = vunpack.c.h.b16 %v117
  %v2360 = vunpack.c.l.b16 %v118
  %v2361 = vunpack.c.h.b16 %v118
  %v2362 = vunpack.c.l.b16 %v119
  %v2363 = vunpack.c.h.b16 %v119
  %v2364 = vunpack.c.l.b16 %v120
  %v2365 = vunpack.c.h.b16 %v120
  %v2366 = vunpack.c.l.b16 %v121
  %v2367 = vunpack.c.h.b16 %v121
  %v2368 = vunpack.c.l.b16 %v122
  %v2369 = vunpack.c.h.b16 %v122
  %v2370 = vunpack.c.l.b16 %v123
  %v2371 = vunpack.c.h.b16 %v123
  %v2372 = vunpack.c.l.b16 %v124
  %v2373 = vunpack.c.h.b16 %v124
  %v2374 = vunpack.c.l.b16 %v125
  %v2375 = vunpack.c.h.b16 %v125
  %v2376 = vunpack.c.l.b16 %v126
  %v2377 = vunpack.c.h.b16 %v126
  %v2378 = vunpack.c.l.b16 %v127
  %v2379 = vunpack.c.h.b16 %v127
  %v2380 = vunpack.c.l.b16 %v128
  %v2381 = vunpack.c.h.b16 %v128
  %v2382 = vunpack.c.l.b16 %v129
  %v2383 = vunpack.c.h.b16 %v129
  %v2384 = vunpack.c.l.b16 %v130
  %v2385 = vunpack.c.h.b16 %v130
  %v2386 = vunpack.c.l.b16 %v131
  %v2387 = vunpack.c.h.b16 %v131
  %v2388 = vunpack.c.l.b16 %v132
  %v2389 = vunpack.c.h.b16 %v132
  %v2390 = vunpack.c.l.b16 %v133
  %v2391 = vunpack.c.h.b16 %v133
  %v2392 = vunpack.c.l.b16 %v134
  %v2393 = vunpack.c.h.b16 %v134
  %v2394 = vunpack.c.l.b16 %v135
  %v2395 = vunpack.c.h.b16 %v135
  %v2396 = vunpack.c.l.b16 %v136
  %v2397 = vunpack.c.h.b16 %v136
  %v2398 = vunpack.c.l.b16 %v137
  %v2399 = vunpack.c.h.b16 %v137
  %v2400 = vunpack.c.l.b16 %v138
  %v2401 = vunpack.c.h.b16 %v138
  %v2402 = vunpack.c.l.b16 %v139
  %v2403 = vunpack.c.h.b16 %v139
  %v2404 = vunpack.c.l.b16 %v140
  %v2405 = vunpack.c.h.b16 %v140
  %v2406 = vunpack.c.l.b16 %v141
  %v2407 = vunpack.c.h.b16 %v141
  %v2408 = vunpack.c.l.b16 %v142
  %v2409 = vunpack.c.h.b16 %v142
  %v2410 = vunpack.c.l.b16 %v143
  %v2411 = vunpack.c.h.b16 %v143
  %v2412 = vunpack.c.l.b16 %v144
  %v2413 = vunpack.c.h.b16 %v144
  %v2414 = vunpack.c.l.b16 %v145
  %v2415 = vunpack.c.h.b16 %v145
  %v2416 = vunpack.c.l.b16 %v146
  %v2417 = vunpack.c.h.b16 %v146
  %v2418 = vunpack.c.l.b16 %v147
  %v2419 = vunpack.c.h.b16 %v147
  %v2420 = vunpack.c.l.b16 %v148
  %v2421 = vunpack.c.h.b16 %v148
  %v2422 = vunpack.c.l.b16 %v149
  %v2423 = vunpack.c.h.b16 %v149
  %v2424 = vunpack.c.l.b16 %v150
  %v2425 = vunpack.c.h.b16 %v150
  %v2426 = vunpack.c.l.b16 %v151
  %v2427 = vunpack.c.h.b16 %v151
  %v2428 = vunpack.c.l.b16 %v152
  %v2429 = vunpack.c.h.b16 %v152
  %v2430 = vunpack.c.l.b16 %v153
  %v2431 = vunpack.c.h.b16 %v153
  %v2432 = vunpack.c.l.b16 %v154
  %v2433 = vunpack.c.h.b16 %v154
  %v2434 = vunpack.c.l.b16 %v155
  %v2435 = vunpack.c.h.b16 %v155
  %v2436 = vunpack.c.l.b16 %v156
  %v2437 = vunpack.c.h.b16 %v156
  %v2438 = vunpack.c.l.b16 %v157
  %v2439 = vunpack.c.h.b16 %v157
  %v2440 = vunpack.c.l.b16 %v158
  %v2441 = vunpack.c.h.b16 %v158
  %v2442 = vunpack.c.l.b16 %v159
  %v2443 = vunpack.c.h.b16 %v159
  %v2444 = vunpack.c.l.b16 %v160
  %v2445 = vunpack.c.h.b16 %v160
  %v2446 = vunpack.c.l.b16 %v161
  %v2447 = vunpack.c.h.b16 %v161
  %v2448 = vunpack.c.l.b16 %v162
  %v2449 = vunpack.c.h.b16 %v162
  %v2450 = vunpack.c.l.b16 %v163
  %v2451 = vunpack.c.h.b16 %v163
  %v2452 = vunpack.c.l.b16 %v164
  %v2453 = vunpack.c.h.b16 %v164
  %v2454 = vunpack.c.l.b16 %v165
  %v2455 = vunpack.c.h.b16 %v165
  %v2456 = vunpack.c.l.b16 %v166
  %v2457 = vunpack.c.h.b16 %v166
  %v2458 = vunpack.c.l.b16 %v167
  %v2459 = vunpack.c.h.b16 %v167
  %v2460 = vunpack.c.l.b16 %v168
  %v2461 = vunpack.c.h.b16 %v168
  %v2462 = vunpack.c.l.b16 %v169
  %v2463 = vunpack.c.h.b16 %v169
  %v2464 = vunpack.c.l.b16 %v170
  %v2465 = vunpack.c.h.b16 %v170
  %v2466 = vunpack.c.l.b16 %v171
  %v2467 = vunpack.c.h.b16 %v171
  %v2468 = vunpack.c.l.b16 %v172
  %v2469 = vunpack.c.h.b16 %v172
  %v2470 = vunpack.c.l.b16 %v173
  %v2471 = vunpack.c.h.b16 %v173
  %v2472 = vunpack.c.l.b16 %v174
  %v2473 = vunpack.c.h.b16 %v174
  %v2474 = vunpack.c.l.b16 %v175
  %v2475 = vunpack.c.h.b16 %v175
  %v2476 = vunpack.c.l.b16 %v176
  %v2477 = vunpack.c.h.b16 %v176
  %v2478 = vunpack.c.l.b16 %v177
  %v2479 = vunpack.c.h.b16 %v177
  %v2480 = vunpack.c.l.b16 %v178
  %v2481 = vunpack.c.h.b16 %v178
  %v2482 = vunpack.c.l.b16 %v179
  %v2483 = vunpack.c.h.b16 %v179
  %v2484 = vunpack.c.l.b16 %v180
  %v2485 = vunpack.c.h.b16 %v180
  %v2486 = vunpack.c.l.b16 %v181
  %v2487 = vunpack.c.h.b16 %v181
  %v2488 = vunpack.c.l.b16 %v182
  %v2489 = vunpack.c.h.b16 %v182
  %v2490 = vunpack.c.l.b16 %v183
  %v2491 = vunpack.c.h.b16 %v183
  %v2492 = vunpack.c.l.b16 %v184
  %v2493 = vunpack.c.h.b16 %v184
  %v2494 = vunpack.c.l.b16 %v185
  %v2495 = vunpack.c.h.b16 %v185
  %v2496 = vunpack.c.l.b16 %v186
  %v2497 = vunpack.c.h.b16 %v186
  %v2498 = vunpack.c.l.b16 %v187
  %v2499 = vunpack.c.h.b16 %v187
  %v2500 = vunpack.c.l.b16 %v188
  %v2501 = vunpack.c.h.b16 %v188
  %v2502 = vunpack.c.l.b16 %v189
  %v2503 = vunpack.c.h.b16 %v189
  %v2504 = vunpack.c.l.b16 %v190
  %v2505 = vunpack.c.h.b16 %v190
  %v2506 = vunpack.c.l.b16 %v191
  %v2507 = vunpack.c.h.b16 %v191
  %v2508 = vunpack.c.l.b16 %v192
  %v2509 = vunpack.c.h.b16 %v192
  %v2510 = vunpack.c.l.b16 %v193
  %v2511 = vunpack.c.h.b16 %v193
  %v2512 = vunpack.c.l.b16 %v194
  %v2513 = vunpack.c.h.b16 %v194
  %v2514 = vunpack.c.l.b16 %v195
  %v2515 = vunpack.c.h.b16 %v195
  %v2516 = vunpack.c.l.b16 %v196
  %v2517 = vunpack.c.h.b16 %v196
  %v2518 = vunpack.c.l.b16 %v197
  %v2519 = vunpack.c.h.b16 %v197
  %v2520 = vunpack.c.l.b16 %v198
  %v2521 = vunpack.c.h.b16 %v198
  %v2522 = vunpack.c.l.b16 %v199
  %v2523 = vunpack.c.h.b16 %v199
  %v2524 = vunpack.c.l.b16 %v200
  %v2525 = vunpack.c.h.b16 %v200
  %v2526 = vunpack.c.l.b16 %v201
  %v2527 = vunpack.c.h.b16 %v201
  %v2528 = vunpack.c.l.b16 %v202
  %v2529 = vunpack.c.h.b16 %v202
  %v2530 = vunpack.c.l.b16 %v203
  %v2531 = vunpack.c.h.b16 %v203
  %v2532 = vunpack.c.l.b16 %v204
  %v2533 = vunpack.c.h.b16 %v204
  %v2534 = vunpack.c.l.b16 %v205
  %v2535 = vunpack.c.h.b16 %v205
  %v2536 = vunpack.c.l.b16 %v206
  %v2537 = vunpack.c.h.b16 %v206
  %v2538 = vunpack.c.l.b16 %v207
  %v2539 = vunpack.c.h.b16 %v207
  %v2540 = vunpack.c.l.b16 %v208
  %v2541 = vunpack.c.h.b16 %v208
  %v2542 = vunpack.c.l.b16 %v209
  %v2543 = vunpack.c.h.b16 %v209
  %v2544 = vunpack.c.l.b16 %v210
  %v2545 = vunpack.c.h.b16 %v210
  %v2546 = vunpack.c.l.b16 %v211
  %v2547 = vunpack.c.h.b16 %v211
  %v2548 = vunpack.c.l.b16 %v212
  %v2549 = vunpack.c.h.b16 %v212
  %v2550 = vunpack.c.l.b16 %v213
  %v2551 = vunpack.c.h.b16 %v213
  %v2552 = vunpack.c.l.b16 %v214
  %v2553 = vunpack.c.h.b16 %v214
  %v2554 = vunpack.c.l.b16 %v215
  %v2555 = vunpack.c.h.b16 %v215
  %v2556 = vunpack.c.l.b16 %v216
  %v2557 = vunpack.c.h.b16 %v216
  %v2558 = vunpack.c.l.b16 %v217
  %v2559 = vunpack.c.h.b16 %v217
  %v2560 = vunpack.c.l.b16 %v218
  %v2561 = vunpack.c.h.b16 %v218
  %v2562 = vunpack.c.l.b16 %v219
  %v2563 = vunpack.c.h.b16 %v219
  %v2564 = vunpack.c.l.b16 %v220
  %v2565 = vunpack.c.h.b16 %v220
  %v2566 = vunpack.c.l.b16 %v221
  %v2567 = vunpack.c.h.b16 %v221
  %v2568 = vunpack.c.l.b16 %v222
  %v2569 = vunpack.c.h.b16 %v222
  %v2570 = vunpack.c.l.b16 %v223
  %v2571 = vunpack.c.h.b16 %v223
  %v2572 = vunpack.c.l.b16 %v224
  %v2573 = vunpack.c.h.b16 %v224
  %v2574 = vunpack.c.l.b16 %v225
  %v2575 = vunpack.c.h.b16 %v225
  %v2576 = vunpack.c.l.b16 %v226
  %v2577 = vunpack.c.h.b16 %v226
  %v2578 = vunpack.c.l.b16 %v227
  %v2579 = vunpack.c.h.b16 %v227
  %v2580 = vunpack.c.l.b16 %v228
  %v2581 = vunpack.c.h.b16 %v228
  %v2582 = vunpack.c.l.b16 %v229
  %v2583 = vunpack.c.h.b16 %v229
  %v2584 = vunpack.c.l.b16 %v230
  %v2585 = vunpack.c.h.b16 %v230
  %v2586 = vunpack.c.l.b16 %v231
  %v2587 = vunpack.c.h.b16 %v231
  %v2588 = vunpack.c.l.b16 %v232
  %v2589 = vunpack.c.h.b16 %v232
  %v2590 = vunpack.c.l.b16 %v233
  %v2591 = vunpack.c.h.b16 %v233
  %v2592 = vunpack.c.l.b16 %v234
  %v2593 = vunpack.c.h.b16 %v234
  %v2594 = vunpack.c.l.b16 %v235
  %v2595 = vunpack.c.h.b16 %v235
  %v2596 = vunpack.c.l.b16 %v236
  %v2597 = vunpack.c.h.b16 %v236
  %v2598 = vunpack.c.l.b16 %v237
  %v2599 = vunpack.c.h.b16 %v237
  %v2600 = vunpack.c.l.b16 %v238
  %v2601 = vunpack.c.h.b16 %v238
  %v2602 = vunpack.c.l.b16 %v239
  %v2603 = vunpack.c.h.b16 %v239
  %v2604 = vunpack.c.l.b16 %v240
  %v2605 = vunpack.c.h.b16 %v240
  %v2606 = vunpack.c.l.b16 %v241
  %v2607 = vunpack.c.h.b16 %v241
  %v2608 = vunpack.c.l.b16 %v242
  %v2609 = vunpack.c.h.b16 %v242
  %v2610 = vunpack.c.l.b16 %v243
  %v2611 = vunpack.c.h.b16 %v243
  %v2612 = vunpack.c.l.b16 %v244
  %v2613 = vunpack.c.h.b16 %v244
  %v2614 = vunpack.c.l.b16 %v245
  %v2615 = vunpack.c.h.b16 %v245
  %v2616 = vunpack.c.l.b16 %v246
  %v2617 = vunpack.c.h.b16 %v246
  %v2618 = vunpack.c.l.b16 %v247
  %v2619 = vunpack.c.h.b16 %v247
  %v2620 = vunpack.c.l.b16 %v248
  %v2621 = vunpack.c.h.b16 %v248
  %v2622 = vunpack.c.l.b16 %v249
  %v2623 = vunpack.c.h.b16 %v249
  %v2624 = vunpack.c.l.b16 %v250
  %v2625 = vunpack.c.h.b16 %v250
  %v2626 = vunpack.c.l.b16 %v251
  %v2627 = vunpack.c.h.b16 %v251
  %v2628 = vunpack.c.l.b16 %v252
  %v2629 = vunpack.c.h.b16 %v252
  %v2630 = vunpack.c.l.b16 %v253
  %v2631 = vunpack.c.h.b16 %v253
  %v2632 = vunpack.c.l.b16 %v254
  %v2633 = vunpack.c.h.b16 %v254
  %v2634 = vunpack.c.l.b16 %v255
  %v2635 = vunpack.c.h.b16 %v255
  %v2636 = vunpack.c.l.b16 %v256
  %v2637 = vunpack.c.h.b16 %v256
  %v2638 = vunpack.c.l.b16 %v257
  %v2639 = vunpack.c.h.b16 %v257
  %v2640 = vunpack.c.l.b16 %v258
  %v2641 = vunpack.c.h.b16 %v258
  %v2642 = vunpack.c.l.b16 %v259
  %v2643 = vunpack.c.h.b16 %v259
  %v2644 = vunpack.c.l.b16 %v260
  %v2645 = vunpack.c.h.b16 %v260
  %v2646 = vunpack.c.l.b16 %v261
  %v2647 = vunpack.c.h.b16 %v261
  %v2648 = vunpack.c.l.b16 %v262
  %v2649 = vunpack.c.h.b16 %v262
  %v2650 = vunpack.c.l.b16 %v263
  %v2651 = vunpack.c.h.b16 %v263
  %v2652 = vunpack.c.l.b16 %v264
  %v2653 = vunpack.c.h.b16 %v264
  %v2654 = vunpack.c.l.b16 %v265
  %v2655 = vunpack.c.h.b16 %v265
  %v2656 = vunpack.c.l.b16 %v266
  %v2657 = vunpack.c.h.b16 %v266
  %v2658 = vunpack.c.l.b16 %v267
  %v2659 = vunpack.c.h.b16 %v267
  %v2660 = vunpack.c.l.b16 %v268
  %v2661 = vunpack.c.h.b16 %v268
  %v2662 = vunpack.c.l.b16 %v269
  %v2663 = vunpack.c.h.b16 %v269
  %v2664 = vunpack.c.l.b16 %v270
  %v2665 = vunpack.c.h.b16 %v270
  %v2666 = vunpack.c.l.b16 %v271
  %v2667 = vunpack.c.h.b16 %v271
  %v2668 = vunpack.c.l.b16 %v272
  %v2669 = vunpack.c.h.b16 %v272
  %v2670 = vunpack.c.l.b16 %v273
  %v2671 = vunpack.c.h.b16 %v273
  %v2672 = vunpack.c.l.b16 %v274
  %v2673 = vunpack.c.h.b16 %v274
  %v2674 = vunpack.c.l.b16 %v275
  %v2675 = vunpack.c.h.b16 %v275
  %v2676 = vunpack.c.l.b16 %v276
  %v2677 = vunpack.c.h.b16 %v276
  %v2678 = vunpack.c.l.b16 %v277
  %v2679 = vunpack.c.h.b16 %v277
  %v2680 = vunpack.c.l.b16 %v278
  %v2681 = vunpack.c.h.b16 %v278
  %v2682 = vunpack.c.l.b16 %v279
  %v2683 = vunpack.c.h.b16 %v279
  %v2684 = vunpack.c.l.b16 %v280
  %v2685 = vunpack.c.h.b16 %v280
  %v2686 = vunpack.c.l.b16 %v281
  %v2687 = vunpack.c.h.b16 %v281
  %v2688 = vunpack.c.l.b16 %v282
  %v2689 = vunpack.c.h.b16 %v282
  %v2690 = vunpack.c.l.b16 %v283
  %v2691 = vunpack.c.h.b16 %v283
  %v2692 = vunpack.c.l.b16 %v284
  %v2693 = vunpack.c.h.b16 %v284
  %v2694 = vunpack.c.l.b16 %v285
  %v2695 = vunpack.c.h.b16 %v285
  %v2696 = vunpack.c.l.b16 %v286
  %v2697 = vunpack.c.h.b16 %v286
  %v2698 = vunpack.c.l.b16 %v287
  %v2699 = vunpack.c.h.b16 %v287
  %v2700 = vunpack.c.l.b16 %v288
  %v2701 = vunpack.c.h.b16 %v288
  %v2702 = vunpack.c.l.b16 %v289
  %v2703 = vunpack.c.h.b16 %v289
  %v2704 = vunpack.c.l.b16 %v290
  %v2705 = vunpack.c.h.b16 %v290
  %v2706 = vunpack.c.l.b16 %v291
  %v2707 = vunpack.c.h.b16 %v291
  %v2708 = vunpack.c.l.b16 %v292
  %v2709 = vunpack.c.h.b16 %v292
  %v2710 = vunpack.c.l.b16 %v293
  %v2711 = vunpack.c.h.b16 %v293
  %v2712 = vunpack.c.l.b16 %v294
  %v2713 = vunpack.c.h.b16 %v294
  %v2714 = vunpack.c.l.b16 %v295
  %v2715 = vunpack.c.h.b16 %v295
  %v2716 = vunpack.c.l.b16 %v296
  %v2717 = vunpack.c.h.b16 %v296
  %v2718 = vunpack.c.l.b16 %v297
  %v2719 = vunpack.c.h.b16 %v297
  %v2720 = vunpack.c.l.b16 %v298
  %v2721 = vunpack.c.h.b16 %v298
  %v2722 = vunpack.c.l.b16 %v299
  %v2723 = vunpack.c.h.b16 %v299
  %v2724 = vunpack.c.l.b16 %v300
  %v2725 = vunpack.c.h.b16 %v300
  %v2726 = vunpack.c.l.b16 %v301
  %v2727 = vunpack.c.h.b16 %v301
  %v2728 = vunpack.c.l.b16 %v302
  %v2729 = vunpack.c.h.b16 %v302
  %v2730 = vunpack.c.l.b16 %v303
  %v2731 = vunpack.c.h.b16 %v303
  %v2732 = vunpack.c.l.b16 %v304
  %v2733 = vunpack.c.h.b16 %v304
  %v2734 = vunpack.c.l.b16 %v305
  %v2735 = vunpack.c.h.b16 %v305
  %v2736 = vunpack.c.l.b16 %v306
  %v2737 = vunpack.c.h.b16 %v306
  %v2738 = vunpack.c.l.b16 %v307
  %v2739 = vunpack.c.h.b16 %v307
  %v2740 = vunpack.c.l.b16 %v308
  %v2741 = vunpack.c.h.b16 %v308
  %v2742 = vunpack.c.l.b16 %v309
  %v2743 = vunpack.c.h.b16 %v309
  %v2744 = vunpack.c.l.b16 %v310
  %v2745 = vunpack.c.h.b16 %v310
  %v2746 = vunpack.c.l.b16 %v311
  %v2747 = vunpack.c.h.b16 %v311
  %v2748 = vunpack.c.l.b16 %v312
  %v2749 = vunpack.c.h.b16 %v312
  %v2750 = vunpack.c.l.b16 %v313
  %v2751 = vunpack.c.h.b16 %v313
  %v2752 = vunpack.c.l.b16 %v314
  %v2753 = vunpack.c.h.b16 %v314
  %v2754 = vunpack.c.l.b16 %v315
  %v2755 = vunpack.c.h.b16 %v315
  %v2756 = vunpack.c.l.b16 %v316
  %v2757 = vunpack.c.h.b16 %v316
  %v2758 = vunpack.c.l.b16 %v317
  %v2759 = vunpack.c.h.b16 %v317
  %v2760 = vunpack.c.l.b16 %v318
  %v2761 = vunpack.c.h.b16 %v318
  %v2762 = vunpack.c.l.b16 %v319
  %v2763 = vunpack.c.h.b16 %v319
  %v2764 = vunpack.c.l.b16 %v320
  %v2765 = vunpack.c.h.b16 %v320
  %v2766 = vunpack.c.l.b16 %v321
  %v2767 = vunpack.c.h.b16 %v321
  %v2768 = vunpack.c.l.b16 %v322
  %v2769 = vunpack.c.h.b16 %v322
  %v2770 = vunpack.c.l.b16 %v323
  %v2771 = vunpack.c.h.b16 %v323
  %v2772 = vunpack.c.l.b16 %v324
  %v2773 = vunpack.c.h.b16 %v324
  %v2774 = vunpack.c.l.b16 %v325
  %v2775 = vunpack.c.h.b16 %v325
  %v2776 = vunpack.c.l.b16 %v326
  %v2777 = vunpack.c.h.b16 %v326
  %v2778 = vunpack.c.l.b16 %v327
  %v2779 = vunpack.c.h.b16 %v327
  %v2780 = vunpack.c.l.b16 %v328
  %v2781 = vunpack.c.h.b16 %v328
  %v2782 = vunpack.c.l.b16 %v329
  %v2783 = vunpack.c.h.b16 %v329
  %v2784 = vunpack.c.l.b16 %v330
  %v2785 = vunpack.c.h.b16 %v330
  %v2786 = vunpack.c.l.b16 %v331
  %v2787 = vunpack.c.h.b16 %v331
  %v2788 = vunpack.c.l.b16 %v332
  %v2789 = vunpack.c.h.b16 %v332
  %v2790 = vunpack.c.l.b16 %v333
  %v2791 = vunpack.c.h.b16 %v333
  %v2792 = vunpack.c.l.b16 %v334
  %v2793 = vunpack.c.h.b16 %v334
  %v2794 = vunpack.c.l.b16 %v335
  %v2795 = vunpack.c.h.b16 %v335
  %v2796 = vunpack.c.l.b16 %v336
  %v2797 = vunpack.c.h.b16 %v336
  %v2798 = vunpack.c.l.b16 %v337
  %v2799 = vunpack.c.h.b16 %v337
  %v2800 = vunpack.c.l.b16 %v338
  %v2801 = vunpack.c.h.b16 %v338
  %v2802 = vunpack.c.l.b16 %v339
  %v2803 = vunpack.c.h.b16 %v339
  %v2804 = vunpack.c.l.b16 %v340
  %v2805 = vunpack.c.h.b16 %v340
  %v2806 = vunpack.c.l.b16 %v341
  %v2807 = vunpack.c.h.b16 %v341
  %v2808 = vunpack.c.l.b16 %v342
  %v2809 = vunpack.c.h.b16 %v342
  %v2810 = vunpack.c.l.b16 %v343
  %v2811 = vunpack.c.h.b16 %v343
  %v2812 = vunpack.c.l.b16 %v344
  %v2813 = vunpack.c.h.b16 %v344
  %v2814 = vunpack.c.l.b16 %v345
  %v2815 = vunpack.c.h.b16 %v345
  %v2816 = vunpack.c.l.b16 %v346
  %v2817 = vunpack.c.h.b16 %v346
  %v2818 = vunpack.c.l.b16 %v347
  %v2819 = vunpack.c.h.b16 %v347
  %v2820 = vunpack.c.l.b16 %v348
  %v2821 = vunpack.c.h.b16 %v348
  %v2822 = vunpack.c.l.b16 %v349
  %v2823 = vunpack.c.h.b16 %v349
  %v2824 = vunpack.c.l.b16 %v350
  %v2825 = vunpack.c.h.b16 %v350
  %v2826 = vunpack.c.l.b16 %v351
  %v2827 = vunpack.c.h.b16 %v351
  %v2828 = vunpack.c.l.b16 %v352
  %v2829 = vunpack.c.h.b16 %v352
  %v2830 = vunpack.c.l.b16 %v353
  %v2831 = vunpack.c.h.b16 %v353
  %v2832 = vunpack.c.l.b16 %v354
  %v2833 = vunpack.c.h.b16 %v354
  %v2834 = vunpack.c.l.b16 %v355
  %v2835 = vunpack.c.h.b16 %v355
  %v2836 = vunpack.c.l.b16 %v356
  %v2837 = vunpack.c.h.b16 %v356
  %v2838 = vunpack.c.l.b16 %v357
  %v2839 = vunpack.c.h.b16 %v357
  %v2840 = vunpack.c.l.b16 %v358
  %v2841 = vunpack.c.h.b16 %v358
  %v2842 = vunpack.c.l.b16 %v359
  %v2843 = vunpack.c.h.b16 %v359
  %v2844 = vunpack.c.l.b16 %v360
  %v2845 = vunpack.c.h.b16 %v360
  %v2846 = vunpack.c.l.b16 %v361
  %v2847 = vunpack.c.h.b16 %v361
  %v2848 = vunpack.c.l.b16 %v362
  %v2849 = vunpack.c.h.b16 %v362
  %v2850 = vunpack.c.l.b16 %v363
  %v2851 = vunpack.c.h.b16 %v363
  %v2852 = vunpack.c.l.b16 %v364
  %v2853 = vunpack.c.h.b16 %v364
  %v2854 = vunpack.c.l.b16 %v365
  %v2855 = vunpack.c.h.b16 %v365
  %v2856 = vunpack.c.l.b16 %v366
  %v2857 = vunpack.c.h.b16 %v366
  %v2858 = vunpack.c.l.b16 %v367
  %v2859 = vunpack.c.h.b16 %v367
  %v2860 = vunpack.c.l.b16 %v368
  %v2861 = vunpack.c.h.b16 %v368
  %v2862 = vunpack.c.l.b16 %v369
  %v2863 = vunpack.c.h.b16 %v369
  %v2864 = vunpack.c.l.b16 %v370
  %v2865 = vunpack.c.h.b16 %v370
  %v2866 = vunpack.c.l.b16 %v371
  %v2867 = vunpack.c.h.b16 %v371
  %v2868 = vunpack.c.l.b16 %v372
  %v2869 = vunpack.c.h.b16 %v372
  %v2870 = vunpack.c.l.b16 %v373
  %v2871 = vunpack.c.h.b16 %v373
  %v2872 = vunpack.c.l.b16 %v374
  %v2873 = vunpack.c.h.b16 %v374
  %v2874 = vunpack.c.l.b16 %v375
  %v2875 = vunpack.c.h.b16 %v375
  %v2876 = vunpack.c.l.b16 %v376
  %v2877 = vunpack.c.h.b16 %v376
  %v2878 = vunpack.c.l.b16 %v377
  %v2879 = vunpack.c.h.b16 %v377
  %v2880 = vunpack.c.l.b16 %v378
  %v2881 = vunpack.c.h.b16 %v378
  %v2882 = vunpack.c.l.b16 %v379
  %v2883 = vunpack.c.h.b16 %v379
  %v2884 = vunpack.c.l.b16 %v380
  %v2885 = vunpack.c.h.b16 %v380
  %v2886 = vunpack.c.l.b16 %v381
  %v2887 = vunpack.c.h.b16 %v381
  %v2888 = vunpack.c.l.b16 %v382
  %v2889 = vunpack.c.h.b16 %v382
  %v2890 = vunpack.c.l.b16 %v383
  %v2891 = vunpack.c.h.b16 %v383
  %v2892 = vunpack.c.l.b16 %v384
  %v2893 = vunpack.c.h.b16 %v384
  %v2894 = vunpack.c.l.b16 %v385
  %v2895 = vunpack.c.h.b16 %v385
  %v2896 = vunpack.c.l.b16 %v386
  %v2897 = vunpack.c.h.b16 %v386
  %v2898 = vunpack.c.l.b16 %v387
  %v2899 = vunpack.c.h.b16 %v387
  %v2900 = vunpack.c.l.b16 %v388
  %v2901 = vunpack.c.h.b16 %v388
  %v2902 = vunpack.c.l.b16 %v389
  %v2903 = vunpack.c.h.b16 %v389
  %v2904 = vunpack.c.l.b16 %v390
  %v2905 = vunpack.c.h.b16 %v390
  %v2906 = vunpack.c.l.b16 %v391
  %v2907 = vunpack.c.h.b16 %v391
  %v2908 = vunpack.c.l.b16 %v392
  %v2909 = vunpack.c.h.b16 %v392
  %v2910 = vunpack.c.l.b16 %v393
  %v2911 = vunpack.c.h.b16 %v393
  %v2912 = vunpack.c.l.b16 %v394
  %v2913 = vunpack.c.h.b16 %v394
  %v2914 = vunpack.c.l.b16 %v395
  %v2915 = vunpack.c.h.b16 %v395
  %v2916 = vunpack.c.l.b16 %v396
  %v2917 = vunpack.c.h.b16 %v396
  %v2918 = vunpack.c.l.b16 %v397
  %v2919 = vunpack.c.h.b16 %v397
  %v2920 = vunpack.c.l.b16 %v398
  %v2921 = vunpack.c.h.b16 %v398
  %v2922 = vunpack.c.l.b16 %v399
  %v2923 = vunpack.c.h.b16 %v399
  %v2924 = vunpack.c.l.b16 %v400
  %v2925 = vunpack.c.h.b16 %v400
  %v2926 = vunpack.c.l.b16 %v401
  %v2927 = vunpack.c.h.b16 %v401
  %v2928 = vunpack.c.l.b16 %v402
  %v2929 = vunpack.c.h.b16 %v402
  %v2930 = vunpack.c.l.b16 %v403
  %v2931 = vunpack.c.h.b16 %v403
  %v2932 = vunpack.c.l.b16 %v404
  %v2933 = vunpack.c.h.b16 %v404
  %v2934 = vunpack.c.l.b16 %v405
  %v2935 = vunpack.c.h.b16 %v405
  %v2936 = vunpack.c.l.b16 %v406
  %v2937 = vunpack.c.h.b16 %v406
  %v2938 = vunpack.c.l.b16 %v407
  %v2939 = vunpack.c.h.b16 %v407
  %v2940 = vunpack.c.l.b16 %v408
  %v2941 = vunpack.c.h.b16 %v408
  %v2942 = vunpack.c.l.b16 %v409
  %v2943 = vunpack.c.h.b16 %v409
  %v2944 = vunpack.c.l.b16 %v410
  %v2945 = vunpack.c.h.b16 %v410
  %v2946 = vunpack.c.l.b16 %v411
  %v2947 = vunpack.c.h.b16 %v411
  %v2948 = vunpack.c.l.b16 %v412
  %v2949 = vunpack.c.h.b16 %v412
  %v2950 = vunpack.c.l.b16 %v413
  %v2951 = vunpack.c.h.b16 %v413
  %v2952 = vunpack.c.l.b16 %v414
  %v2953 = vunpack.c.h.b16 %v414
  %v2954 = vunpack.c.l.b16 %v415
  %v2955 = vunpack.c.h.b16 %v415
  %v2956 = vunpack.c.l.b16 %v416
  %v2957 = vunpack.c.h.b16 %v416
  %v2958 = vunpack.c.l.b16 %v417
  %v2959 = vunpack.c.h.b16 %v417
  %v2960 = vunpack.c.l.b16 %v418
  %v2961 = vunpack.c.h.b16 %v418
  %v2962 = vunpack.c.l.b16 %v419
  %v2963 = vunpack.c.h.b16 %v419
  %v2964 = vunpack.c.l.b16 %v420
  %v2965 = vunpack.c.h.b16 %v420
  %v2966 = vunpack.c.l.b16 %v421
  %v2967 = vunpack.c.h.b16 %v421
  %v2968 = vunpack.c.l.b16 %v422
  %v2969 = vunpack.c.h.b16 %v422
  %v2970 = vunpack.c.l.b16 %v423
  %v2971 = vunpack.c.h.b16 %v423
  %v2972 = vunpack.c.l.b16 %v424
  %v2973 = vunpack.c.h.b16 %v424
  %v2974 = vunpack.c.l.b16 %v425
  %v2975 = vunpack.c.h.b16 %v425
  %v2976 = vunpack.c.l.b16 %v426
  %v2977 = vunpack.c.h.b16 %v426
  %v2978 = vunpack.c.l.b16 %v427
  %v2979 = vunpack.c.h.b16 %v427
  %v2980 = vunpack.c.l.b16 %v428
  %v2981 = vunpack.c.h.b16 %v428
  %v2982 = vunpack.c.l.b16 %v429
  %v2983 = vunpack.c.h.b16 %v429
  %v2984 = vunpack.c.l.b16 %v430
  %v2985 = vunpack.c.h.b16 %v430
  %v2986 = vunpack.c.l.b16 %v431
  %v2987 = vunpack.c.h.b16 %v431
  %v2988 = vunpack.c.l.b16 %v432
  %v2989 = vunpack.c.h.b16 %v432
  %v2990 = vunpack.c.l.b16 %v433
  %v2991 = vunpack.c.h.b16 %v433
  %v2992 = vunpack.c.l.b16 %v434
  %v2993 = vunpack.c.h.b16 %v434
  %v2994 = vunpack.c.l.b16 %v435
  %v2995 = vunpack.c.h.b16 %v435
  %v2996 = vunpack.c.l.b16 %v436
  %v2997 = vunpack.c.h.b16 %v436
  %v2998 = vunpack.c.l.b16 %v437
  %v2999 = vunpack.c.h.b16 %v437
  %v3000 = vunpack.c.l.b16 %v438
  %v3001 = vunpack.c.h.b16 %v438
  %v3002 = vunpack.c.l.b16 %v439
  %v3003 = vunpack.c.h.b16 %v439
  %v3004 = vunpack.c.l.b16 %v440
  %v3005 = vunpack.c.h.b16 %v440
  %v3006 = vunpack.c.l.b16 %v441
  %v3007 = vunpack.c.h.b16 %v441
  %v3008 = vunpack.c.l.b16 %v442
  %v3009 = vunpack.c.h.b16 %v442
  %v3010 = vunpack.c.l.b16 %v443
  %v3011 = vunpack.c.h.b16 %v443
  %v3012 = vunpack.c.l.b16 %v444
  %v3013 = vunpack.c.h.b16 %v444
  %v3014 = vunpack.c.l.b16 %v445
  %v3015 = vunpack.c.h.b16 %v445
  %v3016 = vunpack.c.l.b16 %v446
  %v3017 = vunpack.c.h.b16 %v446
  %v3018 = vunpack.c.l.b16 %v447
  %v3019 = vunpack.c.h.b16 %v447
  %v3020 = vunpack.c.l.b16 %v448
  %v3021 = vunpack.c.h.b16 %v448
  %v3022 = vunpack.c.l.b16 %v449
  %v3023 = vunpack.c.h.b16 %v449
  %v3024 = vunpack.c.l.b16 %v450
  %v3025 = vunpack.c.h.b16 %v450
  %v3026 = vunpack.c.l.b16 %v451
  %v3027 = vunpack.c.h.b16 %v451
  %v3028 = vunpack.c.l.b16 %v452
  %v3029 = vunpack.c.h.b16 %v452
  %v3030 = vunpack.c.l.b16 %v453
  %v3031 = vunpack.c.h.b16 %v453
  %v3032 = vunpack.c.l.b16 %v454
  %v3033 = vunpack.c.h.b16 %v454
  %v3034 = vunpack.c.l.b16 %v455
  %v3035 = vunpack.c.h.b16 %v455
  %v3036 = vunpack.c.l.b16 %v456
  %v3037 = vunpack.c.h.b16 %v456
  %v3038 = vunpack.c.l.b16 %v457
  %v3039 = vunpack.c.h.b16 %v457
  %v3040 = vunpack.c.l.b16 %v458
  %v3041 = vunpack.c.h.b16 %v458
  %v3042 = vunpack.c.l.b16 %v459
  %v3043 = vunpack.c.h.b16 %v459
  %v3044 = vunpack.c.l.b16 %v460
  %v3045 = vunpack.c.h.b16 %v460
  %v3046 = vunpack.c.l.b16 %v461
  %v3047 = vunpack.c.h.b16 %v461
  %v3048 = vunpack.c.l.b16 %v462
  %v3049 = vunpack.c.h.b16 %v462
  %v3050 = vunpack.c.l.b16 %v463
  %v3051 = vunpack.c.h.b16 %v463
  %v3052 = vunpack.c.l.b16 %v464
  %v3053 = vunpack.c.h.b16 %v464
  %v3054 = vunpack.c.l.b16 %v465
  %v3055 = vunpack.c.h.b16 %v465
  %v3056 = vunpack.c.l.b16 %v466
  %v3057 = vunpack.c.h.b16 %v466
  %v3058 = vunpack.c.l.b16 %v467
  %v3059 = vunpack.c.h.b16 %v467
  %v3060 = vunpack.c.l.b16 %v468
  %v3061 = vunpack.c.h.b16 %v468
  %v3062 = vunpack.c.l.b16 %v469
  %v3063 = vunpack.c.h.b16 %v469
  %v3064 = vunpack.c.l.b16 %v470
  %v3065 = vunpack.c.h.b16 %v470
  %v3066 = vunpack.c.l.b16 %v471
  %v3067 = vunpack.c.h.b16 %v471
  %v3068 = vunpack.c.l.b16 %v472
  %v3069 = vunpack.c.h.b16 %v472
  %v3070 = vunpack.c.l.b16 %v473
  %v3071 = vunpack.c.h.b16 %v473
  %v3072 = vunpack.c.l.b16 %v474
  %v3073 = vunpack.c.h.b16 %v474
  %v3074 = vunpack.c.l.b16 %v475
  %v3075 = vunpack.c.h.b16 %v475
  %v3076 = vunpack.c.l.b16 %v476
  %v3077 = vunpack.c.h.b16 %v476
  %v3078 = vunpack.c.l.b16 %v477
  %v3079 = vunpack.c.h.b16 %v477
  %v3080 = vunpack.c.l.b16 %v478
  %v3081 = vunpack.c.h.b16 %v478
  %v3082 = vunpack.c.l.b16 %v479
  %v3083 = vunpack.c.h.b16 %v479
  %v3084 = vunpack.c.l.b16 %v480
  %v3085 = vunpack.c.h.b16 %v480
  %v3086 = vunpack.c.l.b16 %v481
  %v3087 = vunpack.c.h.b16 %v481
  %v3088 = vunpack.c.l.b16 %v482
  %v3089 = vunpack.c.h.b16 %v482
  %v3090 = vunpack.c.l.b16 %v483
  %v3091 = vunpack.c.h.b16 %v483
  %v3092 = vunpack.c.l.b16 %v484
  %v3093 = vunpack.c.h.b16 %v484
  %v3094 = vunpack.c.l.b16 %v485
  %v3095 = vunpack.c.h.b16 %v485
  %v3096 = vunpack.c.l.b16 %v486
  %v3097 = vunpack.c.h.b16 %v486
  %v3098 = vunpack.c.l.b16 %v487
  %v3099 = vunpack.c.h.b16 %v487
  %v3100 = vunpack.c.l.b16 %v488
  %v3101 = vunpack.c.h.b16 %v488
  %v3102 = vunpack.c.l.b16 %v489
  %v3103 = vunpack.c.h.b16 %v489
  %v3104 = vunpack.c.l.b16 %v490
  %v3105 = vunpack.c.h.b16 %v490
  %v3106 = vunpack.c.l.b16 %v491
  %v3107 = vunpack.c.h.b16 %v491
  %v3108 = vunpack.c.l.b16 %v492
  %v3109 = vunpack.c.h.b16 %v492
  %v3110 = vunpack.c.l.b16 %v493
  %v3111 = vunpack.c.h.b16 %v493
  %v3112 = vunpack.c.l.b16 %v494
  %v3113 = vunpack.c.h.b16 %v494
  %v3114 = vunpack.c.l.b16 %v495
  %v3115 = vunpack.c.h.b16 %v495
  %v3116 = vunpack.c.l.b16 %v496
  %v3117 = vunpack.c.h.b16 %v496
  %v3118 = vunpack.c.l.b16 %v497
  %v3119 = vunpack.c.h.b16 %v497
  %v3120 = vunpack.c.l.b16 %v498
  %v3121 = vunpack.c.h.b16 %v498
  %v3122 = vunpack.c.l.b16 %v499
  %v3123 = vunpack.c.h.b16 %v499
  %v3124 = vunpack.c.l.b16 %v500
  %v3125 = vunpack.c.h.b16 %v500
  %v3126 = vunpack.c.l.b16 %v501
  %v3127 = vunpack.c.h.b16 %v501
  %v3128 = vunpack.c.l.b16 %v502
  %v3129 = vunpack.c.h.b16 %v502
  %v3130 = vunpack.c.l.b16 %v503
  %v3131 = vunpack.c.h.b16 %v503
  %v3132 = vunpack.c.l.b16 %v504
  %v3133 = vunpack.c.h.b16 %v504
  %v3134 = vunpack.c.l.b16 %v505
  %v3135 = vunpack.c.h.b16 %v505
  %v3136 = vunpack.c.l.b16 %v506
  %v3137 = vunpack.c.h.b16 %v506
  %v3138 = vunpack.c.l.b16 %v507
  %v3139 = vunpack.c.h.b16 %v507
  %v3140 = vunpack.c.l.b16 %v508
  %v3141 = vunpack.c.h.b16 %v508
  %v3142 = vunpack.c.l.b16 %v509
  %v3143 = vunpack.c.h.b16 %v509
  %v3144 = vunpack.c.l.b16 %v510
  %v3145 = vunpack.c.h.b16 %v510
  %v3146 = vunpack.c.l.b16 %v511
  %v3147 = vunpack.c.h.b16 %v511
  %v3148 = vunpack.c.l.b16 %v512
  %v3149 = vunpack.c.h.b16 %v512
  %v3150 = vunpack.c.l.b16 %v513
  %v3151 = vunpack.c.h.b16 %v513
  %v3152 = vunpack.c.l.b16 %v514
  %v3153 = vunpack.c.h.b16 %v514
  %v3154 = vunpack.c.l.b16 %v515
  %v3155 = vunpack.c.h.b16 %v515
  %v3156 = vunpack.c.l.b16 %v516
  %v3157 = vunpack.c.h.b16 %v516
  %v3158 = vunpack.c.l.b16 %v517
  %v3159 = vunpack.c.h.b16 %v517
  %v3160 = vunpack.c.l.b16 %v518
  %v3161 = vunpack.c.h.b16 %v518
  %v3162 = vunpack.c.l.b16 %v519
  %v3163 = vunpack.c.h.b16 %v519
  %v3164 = vunpack.c.l.b16 %v520
  %v3165 = vunpack.c.h.b16 %v520
  %v3166 = vunpack.c.l.b16 %v521
  %v3167 = vunpack.c.h.b16 %v521
  %v3168 = vunpack.c.l.b16 %v522
  %v3169 = vunpack.c.h.b16 %v522
  %v3170 = vunpack.c.l.b16 %v523
  %v3171 = vunpack.c.h.b16 %v523
  %v3172 = vunpack.c.l.b16 %v524
  %v3173 = vunpack.c.h.b16 %v524
  %v3174 = vunpack.c.l.b16 %v525
  %v3175 = vunpack.c.h.b16 %v525
  %v3176 = vunpack.c.l.b16 %v526
  %v3177 = vunpack.c.h.b16 %v526
  %v3178 = vunpack.c.l.b16 %v527
  %v3179 = vunpack.c.h.b16 %v527
  %v3180 = vunpack.c.l.b16 %v528
  %v3181 = vunpack.c.h.b16 %v528
  %v3182 = vunpack.c.l.b16 %v529
  %v3183 = vunpack.c.h.b16 %v529
  %v3184 = vunpack.c.l.b16 %v530
  %v3185 = vunpack.c.h.b16 %v530
  %v3186 = vunpack.c.l.b16 %v531
  %v3187 = vunpack.c.h.b16 %v531
  %v3188 = vunpack.c.l.b16 %v532
  %v3189 = vunpack.c.h.b16 %v532
  %v3190 = vunpack.c.l.b16 %v533
  %v3191 = vunpack.c.h.b16 %v533
  %v3192 = vunpack.c.l.b16 %v534
  %v3193 = vunpack.c.h.b16 %v534
  %v3194 = vunpack.c.l.b16 %v535
  %v3195 = vunpack.c.h.b16 %v535
  %v3196 = vunpack.c.l.b16 %v536
  %v3197 = vunpack.c.h.b16 %v536
  %v3198 = vunpack.c.l.b16 %v537
  %v3199 = vunpack.c.h.b16 %v537
  %v3200 = vunpack.c.l.b16 %v538
  %v3201 = vunpack.c.h.b16 %v538
  %v3202 = vunpack.c.l.b16 %v539
  %v3203 = vunpack.c.h.b16 %v539
  %v3204 = vunpack.c.l.b16 %v540
  %v3205 = vunpack.c.h.b16 %v540
  %v3206 = vunpack.c.l.b16 %v541
  %v3207 = vunpack.c.h.b16 %v541
  %v3208 = vunpack.c.l.b16 %v542
  %v3209 = vunpack.c.h.b16 %v542
  %v3210 = vunpack.c.l.b16 %v543
  %v3211 = vunpack.c.h.b16 %v543
  %v3212 = vunpack.c.l.b16 %v544
  %v3213 = vunpack.c.h.b16 %v544
  %v3214 = vunpack.c.l.b16 %v545
  %v3215 = vunpack.c.h.b16 %v545
  %v3216 = vunpack.c.l.b16 %v546
  %v3217 = vunpack.c.h.b16 %v546
  %v3218 = vunpack.c.l.b16 %v547
  %v3219 = vunpack.c.h.b16 %v547
  %v3220 = vunpack.c.l.b16 %v548
  %v3221 = vunpack.c.h.b16 %v548
  %v3222 = vunpack.c.l.b16 %v549
  %v3223 = vunpack.c.h.b16 %v549
  %v3224 = vunpack.c.l.b16 %v550
  %v3225 = vunpack.c.h.b16 %v550
  %v3226 = vunpack.c.l.b16 %v551
  %v3227 = vunpack.c.h.b16 %v551
  %v3228 = vunpack.c.l.b16 %v552
  %v3229 = vunpack.c.h.b16 %v552
  %v3230 = vunpack.c.l.b16 %v553
  %v3231 = vunpack.c.h.b16 %v553
  %v3232 = vunpack.c.l.b16 %v554
  %v3233 = vunpack.c.h.b16 %v554
  %v3234 = vunpack.c.l.b16 %v555
  %v3235 = vunpack.c.h.b16 %v555
  %v3236 = vunpack.c.l.b16 %v556
  %v3237 = vunpack.c.h.b16 %v556
  %v3238 = vunpack.c.l.b16 %v557
  %v3239 = vunpack.c.h.b16 %v557
  %v3240 = vunpack.c.l.b16 %v558
  %v3241 = vunpack.c.h.b16 %v558
  %v3242 = vunpack.c.l.b16 %v559
  %v3243 = vunpack.c.h.b16 %v559
  %v3244 = vunpack.c.l.b16 %v560
  %v3245 = vunpack.c.h.b16 %v560
  %v3246 = vunpack.c.l.b16 %v561
  %v3247 = vunpack.c.h.b16 %v561
  %v3248 = vunpack.c.l.b16 %v562
  %v3249 = vunpack.c.h.b16 %v562
  %v3250 = vunpack.c.l.b16 %v563
  %v3251 = vunpack.c.h.b16 %v563
  %v3252 = vunpack.c.l.b16 %v564
  %v3253 = vunpack.c.h.b16 %v564
  %v3254 = vunpack.c.l.b16 %v565
  %v3255 = vunpack.c.h.b16 %v565
  %v3256 = vunpack.c.l.b16 %v566
  %v3257 = vunpack.c.h.b16 %v566
  %v3258 = vunpack.c.l.b16 %v567
  %v3259 = vunpack.c.h.b16 %v567
  %v3260 = vunpack.c.l.b16 %v568
  %v3261 = vunpack.c.h.b16 %v568
  %v3262 = vunpack.c.l.b16 %v569
  %v3263 = vunpack.c.h.b16 %v569
  %v3264 = vunpack.c.l.b16 %v570
  %v3265 = vunpack.c.h.b16 %v570
  %v3266 = vunpack.c.l.b16 %v571
  %v3267 = vunpack.c.h.b16 %v571
  %v3268 = vunpack.c.l.b16 %v572
  %v3269 = vunpack.c.h.b16 %v572
  %v3270 = vunpack.c.l.b16 %v573
  %v3271 = vunpack.c.h.b16 %v573
  %v3272 = vunpack.c.l.b16 %v574
  %v3273 = vunpack.c.h.b16 %v574
  %v3274 = vunpack.c.l.b16 %v575
  %v3275 = vunpack.c.h.b16 %v575
  %v3276 = vunpack.c.l.b16 %v576
  %v3277 = vunpack.c.h.b16 %v576
  %v3278 = vunpack.c.l.b16 %v577
  %v3279 = vunpack.c.h.b16 %v577
  %v3280 = vunpack.c.l.b16 %v578
  %v3281 = vunpack.c.h.b16 %v578
  %v3282 = vunpack.c.l.b16 %v579
  %v3283 = vunpack.c.h.b16 %v579
  %v3284 = vunpack.c.l.b16 %v580
  %v3285 = vunpack.c.h.b16 %v580
  %v3286 = vunpack.c.l.b16 %v581
  %v3287 = vunpack.c.h.b16 %v581
  %v3288 = vunpack.c.l.b16 %v582
  %v3289 = vunpack.c.h.b16 %v582
  %v3290 = vunpack.c.l.b16 %v583
  %v3291 = vunpack.c.h.b16 %v583
  %v3292 = vunpack.c.l.b16 %v584
  %v3293 = vunpack.c.h.b16 %v584
  %v3294 = vunpack.c.l.b16 %v585
  %v3295 = vunpack.c.h.b16 %v585
  %v3296 = vunpack.c.l.b16 %v586
  %v3297 = vunpack.c.h.b16 %v586
  %v3298 = vunpack.c.l.b16 %v587
  %v3299 = vunpack.c.h.b16 %v587
  %v3300 = vunpack.c.l.b16 %v588
  %v3301 = vunpack.c.h.b16 %v588
  %v3302 = vunpack.c.l.b16 %v589
  %v3303 = vunpack.c.h.b16 %v589
  %v3304 = vunpack.c.l.b16 %v590
  %v3305 = vunpack.c.h.b16 %v590
  %v3306 = vunpack.c.l.b16 %v591
  %v3307 = vunpack.c.h.b16 %v591
  %v3308 = vunpack.c.l.b16 %v592
  %v3309 = vunpack.c.h.b16 %v592
  %v3310 = vunpack.c.l.b16 %v593
  %v3311 = vunpack.c.h.b16 %v593
  %v3312 = vunpack.c.l.b16 %v594
  %v3313 = vunpack.c.h.b16 %v594
  %v3314 = vunpack.c.l.b16 %v595
  %v3315 = vunpack.c.h.b16 %v595
  %v3316 = vunpack.c.l.b16 %v596
  %v3317 = vunpack.c.h.b16 %v596
  %v3318 = vunpack.c.l.b16 %v597
  %v3319 = vunpack.c.h.b16 %v597
  %v3320 = vunpack.c.l.b16 %v598
  %v3321 = vunpack.c.h.b16 %v598
  %v3322 = vunpack.c.l.b16 %v599
  %v3323 = vunpack.c.h.b16 %v599
  %v3324 = vunpack.c.l.b16 %v600
  %v3325 = vunpack.c.h.b16 %v600
  %v3326 = vunpack.c.l.b16 %v601
  %v3327 = vunpack.c.h.b16 %v601
  %v3328 = vunpack.c.l.b16 %v602
  %v3329 = vunpack.c.h.b16 %v602
  %v3330 = vunpack.c.l.b16 %v603
  %v3331 = vunpack.c.h.b16 %v603
  %v3332 = vunpack.c.l.b16 %v604
  %v3333 = vunpack.c.h.b16 %v604
  %v3334 = vunpack.c.l.b16 %v605
  %v3335 = vunpack.c.h.b16 %v605
  %v3336 = vunpack.c.l.b16 %v606
  %v3337 = vunpack.c.h.b16 %v606
  %v3338 = vunpack.c.l.b16 %v607
  %v3339 = vunpack.c.h.b16 %v607
  %v3340 = vunpack.c.l.b16 %v608
  %v3341 = vunpack.c.h.b16 %v608
  %v3342 = vunpack.c.l.b16 %v609
  %v3343 = vunpack.c.h.b16 %v609
  %v3344 = vunpack.c.l.b16 %v610
  %v3345 = vunpack.c.h.b16 %v610
  %v3346 = vunpack.c.l.b16 %v611
  %v3347 = vunpack.c.h.b16 %v611
  %v3348 = vunpack.c.l.b16 %v612
  %v3349 = vunpack.c.h.b16 %v612
  %v3350 = vunpack.c.l.b16 %v613
  %v3351 = vunpack.c.h.b16 %v613
  %v3352 = vunpack.c.l.b16 %v614
  %v3353 = vunpack.c.h.b16 %v614
  %v3354 = vunpack.c.l.b16 %v615
  %v3355 = vunpack.c.h.b16 %v615
  %v3356 = vunpack.c.l.b16 %v616
  %v3357 = vunpack.c.h.b16 %v616
  %v3358 = vunpack.c.l.b16 %v617
  %v3359 = vunpack.c.h.b16 %v617
  %v3360 = vunpack.c.l.b16 %v618
  %v3361 = vunpack.c.h.b16 %v618
  %v3362 = vunpack.c.l.b16 %v619
  %v3363 = vunpack.c.h.b16 %v619
  %v3364 = vunpack.c.l.b16 %v620
  %v3365 = vunpack.c.h.b16 %v620
  %v3366 = vunpack.c.l.b16 %v621
  %v3367 = vunpack.c.h.b16 %v621
  %v3368 = vunpack.c.l.b16 %v622
  %v3369 = vunpack.c.h.b16 %v622
  %v3370 = vunpack.c.l.b16 %v623
  %v3371 = vunpack.c.h.b16 %v623
  %v3372 = vunpack.c.l.b16 %v624
  %v3373 = vunpack.c.h.b16 %v624
  %v3374 = vunpack.c.l.b16 %v625
  %v3375 = vunpack.c.h.b16 %v625
  %v3376 = vunpack.c.l.b16 %v626
  %v3377 = vunpack.c.h.b16 %v626
  %v3378 = vunpack.c.l.b16 %v627
  %v3379 = vunpack.c.h.b16 %v627
  %v3380 = vunpack.c.l.b16 %v628
  %v3381 = vunpack.c.h.b16 %v628
  %v3382 = vunpack.c.l.b16 %v629
  %v3383 = vunpack.c.h.b16 %v629
  %v3384 = vunpack.c.l.b16 %v630
  %v3385 = vunpack.c.h.b16 %v630
  %v3386 = vunpack.c.l.b16 %v631
  %v3387 = vunpack.c.h.b16 %v631
  %v3388 = vunpack.c.l.b16 %v632
  %v3389 = vunpack.c.h.b16 %v632
  %v3390 = vunpack.c.l.b16 %v633
  %v3391 = vunpack.c.h.b16 %v633
  %v3392 = vunpack.c.l.b16 %v634
  %v3393 = vunpack.c.h.b16 %v634
  %v3394 = vunpack.c.l.b16 %v635
  %v3395 = vunpack.c.h.b16 %v635
  %v3396 = vunpack.c.l.b16 %v636
  %v3397 = vunpack.c.h.b16 %v636
  %v3398 = vunpack.c.l.b16 %v637
  %v3399 = vunpack.c.h.b16 %v637
  %v3400 = vunpack.c.l.b16 %v638
  %v3401 = vunpack.c.h.b16 %v638
  %v3402 = vunpack.c.l.b16 %v639
  %v3403 = vunpack.c.h.b16 %v639
  %v3404 = vunpack.c.l.b16 %v640
  %v3405 = vunpack.c.h.b16 %v640
  %v3406 = vunpack.c.l.b16 %v641
  %v3407 = vunpack.c.h.b16 %v641
  %v3408 = vunpack.c.l.b16 %v642
  %v3409 = vunpack.c.h.b16 %v642
  %v3410 = vunpack.c.l.b16 %v643
  %v3411 = vunpack.c.h.b16 %v643
  %v3412 = vunpack.c.l.b16 %v644
  %v3413 = vunpack.c.h.b16 %v644
  %v3414 = vunpack.c.l.b16 %v645
  %v3415 = vunpack.c.h.b16 %v645
  %v3416 = vunpack.c.l.b16 %v646
  %v3417 = vunpack.c.h.b16 %v646
  %v3418 = vunpack.c.l.b16 %v647
  %v3419 = vunpack.c.h.b16 %v647
  %v3420 = vunpack.c.l.b16 %v648
  %v3421 = vunpack.c.h.b16 %v648
  %v3422 = vunpack.c.l.b16 %v649
  %v3423 = vunpack.c.h.b16 %v649
  %v3424 = vunpack.c.l.b16 %v650
  %v3425 = vunpack.c.h.b16 %v650
  %v3426 = vunpack.c.l.b16 %v651
  %v3427 = vunpack.c.h.b16 %v651
  %v3428 = vunpack.c.l.b16 %v652
  %v3429 = vunpack.c.h.b16 %v652
  %v3430 = vunpack.c.l.b16 %v653
  %v3431 = vunpack.c.h.b16 %v653
  %v3432 = vunpack.c.l.b16 %v654
  %v3433 = vunpack.c.h.b16 %v654
  %v3434 = vunpack.c.l.b16 %v655
  %v3435 = vunpack.c.h.b16 %v655
  %v3436 = vunpack.c.l.b16 %v656
  %v3437 = vunpack.c.h.b16 %v656
  %v3438 = vunpack.c.l.b16 %v657
  %v3439 = vunpack.c.h.b16 %v657
  %v3440 = vunpack.c.l.b16 %v658
  %v3441 = vunpack.c.h.b16 %v658
  %v3442 = vunpack.c.l.b16 %v659
  %v3443 = vunpack.c.h.b16 %v659
  %v3444 = vunpack.c.l.b16 %v660
  %v3445 = vunpack.c.h.b16 %v660
  %v3446 = vunpack.c.l.b16 %v661
  %v3447 = vunpack.c.h.b16 %v661
  %v3448 = vunpack.c.l.b16 %v662
  %v3449 = vunpack.c.h.b16 %v662
  %v3450 = vunpack.c.l.b16 %v663
  %v3451 = vunpack.c.h.b16 %v663
  %v3452 = vunpack.c.l.b16 %v664
  %v3453 = vunpack.c.h.b16 %v664
  %v3454 = vunpack.c.l.b16 %v665
  %v3455 = vunpack.c.h.b16 %v665
  %v3456 = vunpack.c.l.b16 %v666
  %v3457 = vunpack.c.h.b16 %v666
  %v3458 = vunpack.c.l.b16 %v667
  %v3459 = vunpack.c.h.b16 %v667
  %v3460 = vunpack.c.l.b16 %v668
  %v3461 = vunpack.c.h.b16 %v668
  %v3462 = vunpack.c.l.b16 %v669
  %v3463 = vunpack.c.h.b16 %v669
  %v3464 = vunpack.c.l.b16 %v670
  %v3465 = vunpack.c.h.b16 %v670
  %v3466 = vunpack.c.l.b16 %v671
  %v3467 = vunpack.c.h.b16 %v671
  %v3468 = vunpack.c.l.b16 %v672
  %v3469 = vunpack.c.h.b16 %v672
  %v3470 = vunpack.c.l.b16 %v673
  %v3471 = vunpack.c.h.b16 %v673
  %v3472 = vunpack.c.l.b16 %v674
  %v3473 = vunpack.c.h.b16 %v674
  %v3474 = vunpack.c.l.b16 %v675
  %v3475 = vunpack.c.h.b16 %v675
  %v3476 = vunpack.c.l.b16 %v676
  %v3477 = vunpack.c.h.b16 %v676
  %v3478 = vunpack.c.l.b16 %v677
  %v3479 = vunpack.c.h.b16 %v677
  %v3480 = vunpack.c.l.b16 %v678
  %v3481 = vunpack.c.h.b16 %v678
  %v3482 = vunpack.c.l.b16 %v679
  %v3483 = vunpack.c.h.b16 %v679
  %v3484 = vunpack.c.l.b16 %v680
  %v3485 = vunpack.c.h.b16 %v680
  %v3486 = vunpack.c.l.b16 %v681
  %v3487 = vunpack.c.h.b16 %v681
  %v3488 = vunpack.c.l.b16 %v682
  %v3489 = vunpack.c.h.b16 %v682
  %v3490 = vunpack.c.l.b16 %v683
  %v3491 = vunpack.c.h.b16 %v683
  %v3492 = vunpack.c.l.b16 %v684
  %v3493 = vunpack.c.h.b16 %v684
  %v3494 = vunpack.c.l.b16 %v685
  %v3495 = vunpack.c.h.b16 %v685
  %v3496 = vunpack.c.l.b16 %v686
  %v3497 = vunpack.c.h.b16 %v686
  %v3498 = vunpack.c.l.b16 %v687
  %v3499 = vunpack.c.h.b16 %v687
  %v3500 = vunpack.c.l.b16 %v688
  %v3501 = vunpack.c.h.b16 %v688
  %v3502 = vunpack.c.l.b16 %v689
  %v3503 = vunpack.c.h.b16 %v689
  %v3504 = vunpack.c.l.b16 %v690
  %v3505 = vunpack.c.h.b16 %v690
  %v3506 = vunpack.c.l.b16 %v691
  %v3507 = vunpack.c.h.b16 %v691
  %v3508 = vunpack.c.l.b16 %v692
  %v3509 = vunpack.c.h.b16 %v692
  %v3510 = vunpack.c.l.b16 %v693
  %v3511 = vunpack.c.h.b16 %v693
  %v3512 = vunpack.c.l.b16 %v694
  %v3513 = vunpack.c.h.b16 %v694
  %v3514 = vunpack.c.l.b16 %v695
  %v3515 = vunpack.c.h.b16 %v695
  %v3516 = vunpack.c.l.b16 %v696
  %v3517 = vunpack.c.h.b16 %v696
  %v3518 = vunpack.c.l.b16 %v697
  %v3519 = vunpack.c.h.b16 %v697
  %v3520 = vunpack.c.l.b16 %v698
  %v3521 = vunpack.c.h.b16 %v698
  %v3522 = vunpack.c.l.b16 %v699
  %v3523 = vunpack.c.h.b16 %v699
  %v3524 = vunpack.c.l.b16 %v700
  %v3525 = vunpack.c.h.b16 %v700
  %v3526 = vunpack.c.l.b16 %v701
  %v3527 = vunpack.c.h.b16 %v701
  %v3528 = vunpack.c.l.b16 %v702
  %v3529 = vunpack.c.h.b16 %v702
  %v3530 = vunpack.c.l.b16 %v703
  %v3531 = vunpack.c.h.b16 %v703
  %v3532 = vunpack.c.l.b16 %v704
  %v3533 = vunpack.c.h.b16 %v704
  %v3534 = vunpack.c.l.b16 %v705
  %v3535 = vunpack.c.h.b16 %v705
  %v3536 = vunpack.c.l.b16 %v706
  %v3537 = vunpack.c.h.b16 %v706
  %v3538 = vunpack.c.l.b16 %v707
  %v3539 = vunpack.c.h.b16 %v707
  %v3540 = vunpack.c.l.b16 %v708
  %v3541 = vunpack.c.h.b16 %v708
  %v3542 = vunpack.c.l.b16 %v709
  %v3543 = vunpack.c.h.b16 %v709
  %v3544 = vunpack.c.l.b16 %v710
  %v3545 = vunpack.c.h.b16 %v710
  %v3546 = vunpack.c.l.b16 %v711
  %v3547 = vunpack.c.h.b16 %v711
  %v3548 = vunpack.c.l.b16 %v712
  %v3549 = vunpack.c.h.b16 %v712
  %v3550 = vunpack.c.l.b16 %v713
  %v3551 = vunpack.c.h.b16 %v713
  %v3552 = vunpack.c.l.b16 %v714
  %v3553 = vunpack.c.h.b16 %v714
  %v3554 = vunpack.c.l.b16 %v715
  %v3555 = vunpack.c.h.b16 %v715
  %v3556 = vunpack.c.l.b16 %v716
  %v3557 = vunpack.c.h.b16 %v716
  %v3558 = vunpack.c.l.b16 %v717
  %v3559 = vunpack.c.h.b16 %v717
  %v3560 = vunpack.c.l.b16 %v718
  %v3561 = vunpack.c.h.b16 %v718
  %v3562 = vunpack.c.l.b16 %v719
  %v3563 = vunpack.c.h.b16 %v719
  %v3564 = vunpack.c.l.b16 %v720
  %v3565 = vunpack.c.h.b16 %v720
  %v3566 = vunpack.c.l.b16 %v721
  %v3567 = vunpack.c.h.b16 %v721
  %v3568 = vunpack.c.l.b16 %v722
  %v3569 = vunpack.c.h.b16 %v722
  %v3570 = vunpack.c.l.b16 %v723
  %v3571 = vunpack.c.h.b16 %v723
  %v3572 = vunpack.c.l.b16 %v724
  %v3573 = vunpack.c.h.b16 %v724
  %v3574 = vunpack.c.l.b16 %v725
  %v3575 = vunpack.c.h.b16 %v725
  %v3576 = vunpack.c.l.b16 %v726
  %v3577 = vunpack.c.h.b16 %v726
  %v3578 = vunpack.c.l.b16 %v727
  %v3579 = vunpack.c.h.b16 %v727
  %v3580 = vunpack.c.l.b16 %v728
  %v3581 = vunpack.c.h.b16 %v728
  %v3582 = vunpack.c.l.b16 %v729
  %v3583 = vunpack.c.h.b16 %v729
  %v3584 = vunpack.c.l.b16 %v730
  %v3585 = vunpack.c.h.b16 %v730
  %v3586 = vunpack.c.l.b16 %v731
  %v3587 = vunpack.c.h.b16 %v731
  %v3588 = vunpack.c.l.b16 %v732
  %v3589 = vunpack.c.h.b16 %v732
  %v3590 = vunpack.c.l.b16 %v733
  %v3591 = vunpack.c.h.b16 %v733
  %v3592 = vunpack.c.l.b16 %v734
  %v3593 = vunpack.c.h.b16 %v734
  %v3594 = vunpack.c.l.b16 %v735
  %v3595 = vunpack.c.h.b16 %v735
  %v3596 = vunpack.c.l.b16 %v736
  %v3597 = vunpack.c.h.b16 %v736
  %v3598 = vunpack.c.l.b16 %v737
  %v3599 = vunpack.c.h.b16 %v737
  %v3600 = vunpack.c.l.b16 %v738
  %v3601 = vunpack.c.h.b16 %v738
  %v3602 = vunpack.c.l.b16 %v739
  %v3603 = vunpack.c.h.b16 %v739
  %v3604 = vunpack.c.l.b16 %v740
  %v3605 = vunpack.c.h.b16 %v740
  %v3606 = vunpack.c.l.b16 %v741
  %v3607 = vunpack.c.h.b16 %v741
  %v3608 = vunpack.c.l.b16 %v742
  %v3609 = vunpack.c.h.b16 %v742
  %v3610 = vunpack.c.l.b16 %v743
  %v3611 = vunpack.c.h.b16 %v743
  %v3612 = vunpack.c.l.b16 %v744
  %v3613 = vunpack.c.h.b16 %v744
  %v3614 = vunpack.c.l.b16 %v745
  %v3615 = vunpack.c.h.b16 %v745
  %v3616 = vunpack.c.l.b16 %v746
  %v3617 = vunpack.c.h.b16 %v746
  %v3618 = vunpack.c.l.b16 %v747
  %v3619 = vunpack.c.h.b16 %v747
  %v3620 = vunpack.c.l.b16 %v748
  %v3621 = vunpack.c.h.b16 %v748
  %v3622 = vunpack.c.l.b16 %v749
  %v3623 = vunpack.c.h.b16 %v749
  %v3624 = vunpack.c.l.b16 %v750
  %v3625 = vunpack.c.h.b16 %v750
  %v3626 = vunpack.c.l.b16 %v751
  %v3627 = vunpack.c.h.b16 %v751
  %v3628 = vunpack.c.l.b16 %v752
  %v3629 = vunpack.c.h.b16 %v752
  %v3630 = vunpack.c.l.b16 %v753
  %v3631 = vunpack.c.h.b16 %v753
  %v3632 = vunpack.c.l.b16 %v754
  %v3633 = vunpack.c.h.b16 %v754
  %v3634 = vunpack.c.l.b16 %v755
  %v3635 = vunpack.c.h.b16 %v755
  %v3636 = vunpack.c.l.b16 %v756
  %v3637 = vunpack.c.h.b16 %v756
  %v3638 = vunpack.c.l.b16 %v757
  %v3639 = vunpack.c.h.b16 %v757
  %v3640 = vunpack.c.l.b16 %v758
  %v3641 = vunpack.c.h.b16 %v758
  %v3642 = vunpack.c.l.b16 %v759
  %v3643 = vunpack.c.h.b16 %v759
  %v3644 = vunpack.c.l.b16 %v760
  %v3645 = vunpack.c.h.b16 %v760
  %v3646 = vunpack.c.l.b16 %v761
  %v3647 = vunpack.c.h.b16 %v761
  %v3648 = vunpack.c.l.b16 %v762
  %v3649 = vunpack.c.h.b16 %v762
  %v3650 = vunpack.c.l.b16 %v763
  %v3651 = vunpack.c.h.b16 %v763
  %v3652 = vunpack.c.l.b16 %v764
  %v3653 = vunpack.c.h.b16 %v764
  %v3654 = vunpack.c.l.b16 %v765
  %v3655 = vunpack.c.h.b16 %v765
  %v3656 = vunpack.c.l.b16 %v766
  %v3657 = vunpack.c.h.b16 %v766
  %v3658 = vunpack.c.l.b16 %v767
  %v3659 = vunpack.c.h.b16 %v767
  %v3660 = vunpack.c.l.b16 %v768
  %v3661 = vunpack.c.h.b16 %v768
  %v3662 = vunpack.c.l.b16 %v769
  %v3663 = vunpack.c.h.b16 %v769
  %v3664 = vunpack.c.l.b16 %v770
  %v3665 = vunpack.c.h.b16 %v770
  %v3666 = vunpack.c.l.b16 %v771
  %v3667 = vunpack.c.h.b16 %v771
  %v3668 = vunpack.c.l.b16 %v772
  %v3669 = vunpack.c.h.b16 %v772
  %v3670 = vunpack.c.l.b16 %v773
  %v3671 = vunpack.c.h.b16 %v773
  %v3672 = vunpack.c.l.b16 %v774
  %v3673 = vunpack.c.h.b16 %v774
  %v3674 = vunpack.c.l.b16 %v775
  %v3675 = vunpack.c.h.b16 %v775
  %v3676 = vunpack.c.l.b16 %v776
  %v3677 = vunpack.c.h.b16 %v776
  %v3678 = vunpack.c.l.b16 %v777
  %v3679 = vunpack.c.h.b16 %v777
  %v3680 = vunpack.c.l.b16 %v778
  %v3681 = vunpack.c.h.b16 %v778
  %v3682 = vunpack.c.l.b16 %v779
  %v3683 = vunpack.c.h.b16 %v779
  %v3684 = vunpack.c.l.b16 %v780
  %v3685 = vunpack.c.h.b16 %v780
  %v3686 = vunpack.c.l.b16 %v781
  %v3687 = vunpack.c.h.b16 %v781
  %v3688 = vunpack.c.l.b16 %v782
  %v3689 = vunpack.c.h.b16 %v782
  %v3690 = vunpack.c.l.b16 %v783
  %v3691 = vunpack.c.h.b16 %v783
  %v3692 = vunpack.c.l.b16 %v784
  %v3693 = vunpack.c.h.b16 %v784
  %v3694 = vunpack.c.l.b16 %v785
  %v3695 = vunpack.c.h.b16 %v785
  %v3696 = vunpack.c.l.b16 %v786
  %v3697 = vunpack.c.h.b16 %v786
  %v3698 = vunpack.c.l.b16 %v787
  %v3699 = vunpack.c.h.b16 %v787
  %v3700 = vunpack.c.l.b16 %v788
  %v3701 = vunpack.c.h.b16 %v788
  %v3702 = vunpack.c.l.b16 %v789
  %v3703 = vunpack.c.h.b16 %v789
  %v3704 = vunpack.c.l.b16 %v790
  %v3705 = vunpack.c.h.b16 %v790
  %v3706 = vunpack.c.l.b16 %v791
  %v3707 = vunpack.c.h.b16 %v791
  %v3708 = vunpack.c.l.b16 %v792
  %v3709 = vunpack.c.h.b16 %v792
  %v3710 = vunpack.c.l.b16 %v793
  %v3711 = vunpack.c.h.b16 %v793
  %v3712 = vunpack.c.l.b16 %v794
  %v3713 = vunpack.c.h.b16 %v794
  %v3714 = vunpack.c.l.b16 %v795
  %v3715 = vunpack.c.h.b16 %v795
  %v3716 = vunpack.c.l.b16 %v796
  %v3717 = vunpack.c.h.b16 %v796
  %v3718 = vunpack.c.l.b16 %v797
  %v3719 = vunpack.c.h.b16 %v797
  %v3720 = vunpack.c.l.b16 %v798
  %v3721 = vunpack.c.h.b16 %v798
  %v3722 = vunpack.c.l.b16 %v799
  %v3723 = vunpack.c.h.b16 %v799
  %v3724 = vunpack.c.l.b16 %v800
  %v3725 = vunpack.c.h.b16 %v800
  %v3726 = vunpack.c.l.b16 %v801
  %v3727 = vunpack.c.h.b16 %v801
  %v3728 = vunpack.c.l.b16 %v802
  %v3729 = vunpack.c.h.b16 %v802
  %v3730 = vunpack.c.l.b16 %v803
  %v3731 = vunpack.c.h.b16 %v803
  %v3732 = vunpack.c.l.b16 %v804
  %v3733 = vunpack.c.h.b16 %v804
  %v3734 = vunpack.c.l.b16 %v805
  %v3735 = vunpack.c.h.b16 %v805
  %v3736 = vunpack.c.l.b16 %v806
  %v3737 = vunpack.c.h.b16 %v806
  %v3738 = vunpack.c.l.b16 %v807
  %v3739 = vunpack.c.h.b16 %v807
  %v3740 = vunpack.c.l.b16 %v808
  %v3741 = vunpack.c.h.b16 %v808
  %v3742 = vunpack.c.l.b16 %v809
  %v3743 = vunpack.c.h.b16 %v809
  %v3744 = vunpack.c.l.b16 %v810
  %v3745 = vunpack.c.h.b16 %v810
  %v3746 = vunpack.c.l.b16 %v811
  %v3747 = vunpack.c.h.b16 %v811
  %v3748 = vunpack.c.l.b16 %v812
  %v3749 = vunpack.c.h.b16 %v812
  %v3750 = vunpack.c.l.b16 %v813
  %v3751 = vunpack.c.h.b16 %v813
  %v3752 = vunpack.c.l.b16 %v814
  %v3753 = vunpack.c.h.b16 %v814
  %v3754 = vunpack.c.l.b16 %v815
  %v3755 = vunpack.c.h.b16 %v815
  %v3756 = vunpack.c.l.b16 %v816
  %v3757 = vunpack.c.h.b16 %v816
  %v3758 = vunpack.c.l.b16 %v817
  %v3759 = vunpack.c.h.b16 %v817
  %v3760 = vunpack.c.l.b16 %v818
  %v3761 = vunpack.c.h.b16 %v818
  %v3762 = vunpack.c.l.b16 %v819
  %v3763 = vunpack.c.h.b16 %v819
  %v3764 = vunpack.c.l.b16 %v820
  %v3765 = vunpack.c.h.b16 %v820
  %v3766 = vunpack.c.l.b16 %v821
  %v3767 = vunpack.c.h.b16 %v821
  %v3768 = vunpack.c.l.b16 %v822
  %v3769 = vunpack.c.h.b16 %v822
  %v3770 = vunpack.c.l.b16 %v823
  %v3771 = vunpack.c.h.b16 %v823
  %v3772 = vunpack.c.l.b16 %v824
  %v3773 = vunpack.c.h.b16 %v824
  %v3774 = vunpack.c.l.b16 %v825
  %v3775 = vunpack.c.h.b16 %v825
  %v3776 = vunpack.c.l.b16 %v826
  %v3777 = vunpack.c.h.b16 %v826
  %v3778 = vunpack.c.l.b16 %v827
  %v3779 = vunpack.c.h.b16 %v827
  %v3780 = vunpack.c.l.b16 %v828
  %v3781 = vunpack.c.h.b16 %v828
  %v3782 = vunpack.c.l.b16 %v829
  %v3783 = vunpack.c.h.b16 %v829
  %v3784 = vunpack.c.l.b16 %v830
  %v3785 = vunpack.c.h.b16 %v830
  %v3786 = vunpack.c.l.b16 %v831
  %v3787 = vunpack.c.h.b16 %v831
  %v3788 = vunpack.c.l.b16 %v832
  %v3789 = vunpack.c.h.b16 %v832
  %v3790 = vunpack.c.l.b16 %v833
  %v3791 = vunpack.c.h.b16 %v833
  %v3792 = vunpack.c.l.b16 %v834
  %v3793 = vunpack.c.h.b16 %v834
  %v3794 = vunpack.c.l.b16 %v835
  %v3795 = vunpack.c.h.b16 %v835
  %v3796 = vunpack.c.l.b16 %v836
  %v3797 = vunpack.c.h.b16 %v836
  %v3798 = vunpack.c.l.b16 %v837
  %v3799 = vunpack.c.h.b16 %v837
  %v3800 = vunpack.c.l.b16 %v838
  %v3801 = vunpack.c.h.b16 %v838
  %v3802 = vunpack.c.l.b16 %v839
  %v3803 = vunpack.c.h.b16 %v839
  %v3804 = vunpack.c.l.b16 %v840
  %v3805 = vunpack.c.h.b16 %v840
  %v3806 = vunpack.c.l.b16 %v841
  %v3807 = vunpack.c.h.b16 %v841
  %v3808 = vunpack.c.l.b16 %v842
  %v3809 = vunpack.c.h.b16 %v842
  %v3810 = vunpack.c.l.b16 %v843
  %v3811 = vunpack.c.h.b16 %v843
  %v3812 = vunpack.c.l.b16 %v844
  %v3813 = vunpack.c.h.b16 %v844
  %v3814 = vunpack.c.l.b16 %v845
  %v3815 = vunpack.c.h.b16 %v845
  %v3816 = vunpack.c.l.b16 %v846
  %v3817 = vunpack.c.h.b16 %v846
  %v3818 = vunpack.c.l.b16 %v847
  %v3819 = vunpack.c.h.b16 %v847
  %v3820 = vunpack.c.l.b16 %v848
  %v3821 = vunpack.c.h.b16 %v848
  %v3822 = vunpack.c.l.b16 %v849
  %v3823 = vunpack.c.h.b16 %v849
  %v3824 = vunpack.c.l.b16 %v850
  %v3825 = vunpack.c.h.b16 %v850
  %v3826 = vunpack.c.l.b16 %v851
  %v3827 = vunpack.c.h.b16 %v851
  %v3828 = vunpack.c.l.b16 %v852
  %v3829 = vunpack.c.h.b16 %v852
  %v3830 = vunpack.c.l.b16 %v853
  %v3831 = vunpack.c.h.b16 %v853
  %v3832 = vunpack.c.l.b16 %v854
  %v3833 = vunpack.c.h.b16 %v854
  %v3834 = vunpack.c.l.b16 %v855
  %v3835 = vunpack.c.h.b16 %v855
  %v3836 = vunpack.c.l.b16 %v856
  %v3837 = vunpack.c.h.b16 %v856
  %v3838 = vunpack.c.l.b16 %v857
  %v3839 = vunpack.c.h.b16 %v857
  %v3840 = vunpack.c.l.b16 %v858
  %v3841 = vunpack.c.h.b16 %v858
  %v3842 = vunpack.c.l.b16 %v859
  %v3843 = vunpack.c.h.b16 %v859
  %v3844 = vunpack.c.l.b16 %v860
  %v3845 = vunpack.c.h.b16 %v860
  %v3846 = vunpack.c.l.b16 %v861
  %v3847 = vunpack.c.h.b16 %v861
  %v3848 = vunpack.c.l.b16 %v862
  %v3849 = vunpack.c.h.b16 %v862
  %v3850 = vunpack.c.l.b16 %v863
  %v3851 = vunpack.c.h.b16 %v863
  %v3852 = vunpack.c.l.b16 %v864
  %v3853 = vunpack.c.h.b16 %v864
  %v3854 = vunpack.c.l.b16 %v865
  %v3855 = vunpack.c.h.b16 %v865
  %v3856 = vunpack.c.l.b16 %v866
  %v3857 = vunpack.c.h.b16 %v866
  %v3858 = vunpack.c.l.b16 %v867
  %v3859 = vunpack.c.h.b16 %v867
  %v3860 = vunpack.c.l.b16 %v868
  %v3861 = vunpack.c.h.b16 %v868
  %v3862 = vunpack.c.l.b16 %v869
  %v3863 = vunpack.c.h.b16 %v869
  %v3864 = vunpack.c.l.b16 %v870
  %v3865 = vunpack.c.h.b16 %v870
  %v3866 = vunpack.c.l.b16 %v871
  %v3867 = vunpack.c.h.b16 %v871
  %v3868 = vunpack.c.l.b16 %v872
  %v3869 = vunpack.c.h.b16 %v872
  %v3870 = vunpack.c.l.b16 %v873
  %v3871 = vunpack.c.h.b16 %v873
  %v3872 = vunpack.c.l.b16 %v874
  %v3873 = vunpack.c.h.b16 %v874
  %v3874 = vunpack.c.l.b16 %v875
  %v3875 = vunpack.c.h.b16 %v875
  %v3876 = vunpack.c.l.b16 %v876
  %v3877 = vunpack.c.h.b16 %v876
  %v3878 = vunpack.c.l.b16 %v877
  %v3879 = vunpack.c.h.b16 %v877
  %v3880 = vunpack.c.l.b16 %v878
  %v3881 = vunpack.c.h.b16 %v878
  %v3882 = vunpack.c.l.b16 %v879
  %v3883 = vunpack.c.h.b16 %v879
  %v3884 = vunpack.c.l.b16 %v880
  %v3885 = vunpack.c.h.b16 %v880
  %v3886 = vunpack.c.l.b16 %v881
  %v3887 = vunpack.c.h.b16 %v881
  %v3888 = vunpack.c.l.b16 %v882
  %v3889 = vunpack.c.h.b16 %v882
  %v3890 = vunpack.c.l.b16 %v883
  %v3891 = vunpack.c.h.b16 %v883
  %v3892 = vunpack.c.l.b16 %v884
  %v3893 = vunpack.c.h.b16 %v884
  %v3894 = vunpack.c.l.b16 %v885
  %v3895 = vunpack.c.h.b16 %v885
  %v3896 = vunpack.c.l.b16 %v886
  %v3897 = vunpack.c.h.b16 %v886
  %v3898 = vunpack.c.l.b16 %v887
  %v3899 = vunpack.c.h.b16 %v887
  %v3900 = vunpack.c.l.b16 %v888
  %v3901 = vunpack.c.h.b16 %v888
  %v3902 = vunpack.c.l.b16 %v889
  %v3903 = vunpack.c.h.b16 %v889
  %v3904 = vunpack.c.l.b16 %v890
  %v3905 = vunpack.c.h.b16 %v890
  %v3906 = vunpack.c.l.b16 %v891
  %v3907 = vunpack.c.h.b16 %v891
  %v3908 = vunpack.c.l.b16 %v892
  %v3909 = vunpack.c.h.b16 %v892
  %v3910 = vunpack.c.l.b16 %v893
  %v3911 = vunpack.c.h.b16 %v893
  %v3912 = vunpack.c.l.b16 %v894
  %v3913 = vunpack.c.h.b16 %v894
  %v3914 = vunpack.c.l.b16 %v895
  %v3915 = vunpack.c.h.b16 %v895
  %v3916 = vunpack.c.l.b16 %v896
  %v3917 = vunpack.c.h.b16 %v896
  %v3918 = vunpack.c.l.b16 %v897
  %v3919 = vunpack.c.h.b16 %v897
  %v3920 = vunpack.c.l.b16 %v898
  %v3921 = vunpack.c.h.b16 %v898
  %v3922 = vunpack.c.l.b16 %v899
  %v3923 = vunpack.c.h.b16 %v899
  %v3924 = vunpack.c.l.b16 %v900
  %v3925 = vunpack.c.h.b16 %v900
  %v3926 = vunpack.c.l.b16 %v901
  %v3927 = vunpack.c.h.b16 %v901
  %v3928 = vunpack.c.l.b16 %v902
  %v3929 = vunpack.c.h.b16 %v902
  %v3930 = vunpack.c.l.b16 %v903
  %v3931 = vunpack.c.h.b16 %v903
  %v3932 = vunpack.c.l.b16 %v904
  %v3933 = vunpack.c.h.b16 %v904
  %v3934 = vunpack.c.l.b16 %v905
  %v3935 = vunpack.c.h.b16 %v905
  %v3936 = vunpack.c.l.b16 %v906
  %v3937 = vunpack.c.h.b16 %v906
  %v3938 = vunpack.c.l.b16 %v907
  %v3939 = vunpack.c.h.b16 %v907
  %v3940 = vunpack.c.l.b16 %v908
  %v3941 = vunpack.c.h.b16 %v908
  %v3942 = vunpack.c.l.b16 %v909
  %v3943 = vunpack.c.h.b16 %v909
  %v3944 = vunpack.c.l.b16 %v910
  %v3945 = vunpack.c.h.b16 %v910
  %v3946 = vunpack.c.l.b16 %v911
  %v3947 = vunpack.c.h.b16 %v911
  %v3948 = vunpack.c.l.b16 %v912
  %v3949 = vunpack.c.h.b16 %v912
  %v3950 = vunpack.c.l.b16 %v913
  %v3951 = vunpack.c.h.b16 %v913
  %v3952 = vunpack.c.l.b16 %v914
  %v3953 = vunpack.c.h.b16 %v914
  %v3954 = vunpack.c.l.b16 %v915
  %v3955 = vunpack.c.h.b16 %v915
  %v3956 = vunpack.c.l.b16 %v916
  %v3957 = vunpack.c.h.b16 %v916
  %v3958 = vunpack.c.l.b16 %v917
  %v3959 = vunpack.c.h.b16 %v917
  %v3960 = vunpack.c.l.b16 %v918
  %v3961 = vunpack.c.h.b16 %v918
  %v3962 = vunpack.c.l.b16 %v919
  %v3963 = vunpack.c.h.b16 %v919
  %v3964 = vunpack.c.l.b16 %v920
  %v3965 = vunpack.c.h.b16 %v920
  %v3966 = vunpack.c.l.b16 %v921
  %v3967 = vunpack.c.h.b16 %v921
  %v3968 = vunpack.c.l.b16 %v922
  %v3969 = vunpack.c.h.b16 %v922
  %v3970 = vunpack.c.l.b16 %v923
  %v3971 = vunpack.c.h.b16 %v923
  %v3972 = vunpack.c.l.b16 %v924
  %v3973 = vunpack.c.h.b16 %v924
  %v3974 = vunpack.c.l.b16 %v925
  %v3975 = vunpack.c.h.b16 %v925
  %v3976 = vunpack.c.l.b16 %v926
  %v3977 = vunpack.c.h.b16 %v926
  %v3978 = vunpack.c.l.b16 %v927
  %v3979 = vunpack.c.h.b16 %v927
  %v3980 = vunpack.c.l.b16 %v928
  %v3981 = vunpack.c.h.b16 %v928
  %v3982 = vunpack.c.l.b16 %v929
  %v3983 = vunpack.c.h.b16 %v929
  %v3984 = vunpack.c.l.b16 %v930
  %v3985 = vunpack.c.h.b16 %v930
  %v3986 = vunpack.c.l.b16 %v931
  %v3987 = vunpack.c.h.b16 %v931
  %v3988 = vunpack.c.l.b16 %v932
  %v3989 = vunpack.c.h.b16 %v932
  %v3990 = vunpack.c.l.b16 %v933
  %v3991 = vunpack.c.h.b16 %v933
  %v3992 = vunpack.c.l.b16 %v934
  %v3993 = vunpack.c.h.b16 %v934
  %v3994 = vunpack.c.l.b16 %v935
  %v3995 = vunpack.c.h.b16 %v935
  %v3996 = vunpack.c.l.b16 %v936
  %v3997 = vunpack.c.h.b16 %v936
  %v3998 = vunpack.c.l.b16 %v937
  %v3999 = vunpack.c.h.b16 %v937
  %v4000 = vunpack.c.l.b16 %v938
  %v4001 = vunpack.c.h.b16 %v938
  %v4002 = vunpack.c.l.b16 %v939
  %v4003 = vunpack.c.h.b16 %v939
  %v4004 = vunpack.c.l.b16 %v940
  %v4005 = vunpack.c.h.b16 %v940
  %v4006 = vunpack.c.l.b16 %v941
  %v4007 = vunpack.c.h.b16 %v941
  %v4008 = vunpack.c.l.b16 %v942
  %v4009 = vunpack.c.h.b16 %v942
  %v4010 = vunpack.c.l.b16 %v943
  %v4011 = vunpack.c.h.b16 %v943
  %v4012 = vunpack.c.l.b16 %v944
  %v4013 = vunpack.c.h.b16 %v944
  %v4014 = vunpack.c.l.b16 %v945
  %v4015 = vunpack.c.h.b16 %v945
  %v4016 = vunpack.c.l.b16 %v946
  %v4017 = vunpack.c.h.b16 %v946
  %v4018 = vunpack.c.l.b16 %v947
  %v4019 = vunpack.c.h.b16 %v947
  %v4020 = vunpack.c.l.b16 %v948
  %v4021 = vunpack.c.h.b16 %v948
  %v4022 = vunpack.c.l.b16 %v949
  %v4023 = vunpack.c.h.b16 %v949
  %v4024 = vunpack.c.l.b16 %v950
  %v4025 = vunpack.c.h.b16 %v950
  %v4026 = vunpack.c.l.b16 %v951
  %v4027 = vunpack.c.h.b16 %v951
  %v4028 = vunpack.c.l.b16 %v952
  %v4029 = vunpack.c.h.b16 %v952
  %v4030 = vunpack.c.l.b16 %v953
  %v4031 = vunpack.c.h.b16 %v953
  %v4032 = vunpack.c.l.b16 %v954
  %v4033 = vunpack.c.h.b16 %v954
  %v4034 = vunpack.c.l.b16 %v955
  %v4035 = vunpack.c.h.b16 %v955
  %v4036 = vunpack.c.l.b16 %v956
  %v4037 = vunpack.c.h.b16 %v956
  %v4038 = vunpack.c.l.b16 %v957
  %v4039 = vunpack.c.h.b16 %v957
  %v4040 = vunpack.c.l.b16 %v958
  %v4041 = vunpack.c.h.b16 %v958
  %v4042 = vunpack.c.l.b16 %v959
  %v4043 = vunpack.c.h.b16 %v959
  %v4044 = vunpack.c.l.b16 %v960
  %v4045 = vunpack.c.h.b16 %v960
  %v4046 = vunpack.c.l.b16 %v961
  %v4047 = vunpack.c.h.b16 %v961
  %v4048 = vunpack.c.l.b16 %v962
  %v4049 = vunpack.c.h.b16 %v962
  %v4050 = vunpack.c.l.b16 %v963
  %v4051 = vunpack.c.h.b16 %v963
  %v4052 = vunpack.c.l.b16 %v964
  %v4053 = vunpack.c.h.b16 %v964
  %v4054 = vunpack.c.l.b16 %v965
  %v4055 = vunpack.c.h.b16 %v965
  %v4056 = vunpack.c.l.b16 %v966
  %v4057 = vunpack.c.h.b16 %v966
  %v4058 = vunpack.c.l.b16 %v967
  %v4059 = vunpack.c.h.b16 %v967
  %v4060 = vunpack.c.l.b16 %v968
  %v4061 = vunpack.c.h.b16 %v968
  %v4062 = vunpack.c.l.b16 %v969
  %v4063 = vunpack.c.h.b16 %v969
  %v4064 = vunpack.c.l.b16 %v970
  %v4065 = vunpack.c.h.b16 %v970
  %v4066 = vunpack.c.l.b16 %v971
  %v4067 = vunpack.c.h.b16 %v971
  %v4068 = vunpack.c.l.b16 %v972
  %v4069 = vunpack.c.h.b16 %v972
  %v4070 = vunpack.c.l.b16 %v973
  %v4071 = vunpack.c.h.b16 %v973
  %v4072 = vunpack.c.l.b16 %v974
  %v4073 = vunpack.c.h.b16 %v974
  %v4074 = vunpack.c.l.b16 %v975
  %v4075 = vunpack.c.h.b16 %v975
  %v4076 = vunpack.c.l.b16 %v976
  %v4077 = vunpack.c.h.b16 %v976
  %v4078 = vunpack.c.l.b16 %v977
  %v4079 = vunpack.c.h.b16 %v977
  %v4080 = vunpack.c.l.b16 %v978
  %v4081 = vunpack.c.h.b16 %v978
  %v4082 = vunpack.c.l.b16 %v979
  %v4083 = vunpack.c.h.b16 %v979
  %v4084 = vunpack.c.l.b16 %v980
  %v4085 = vunpack.c.h.b16 %v980
  %v4086 = vunpack.c.l.b16 %v981
  %v4087 = vunpack.c.h.b16 %v981
  %v4088 = vunpack.c.l.b16 %v982
  %v4089 = vunpack.c.h.b16 %v982
  %v4090 = vunpack.c.l.b16 %v983
  %v4091 = vunpack.c.h.b16 %v983
  %v4092 = vunpack.c.l.b16 %v984
  %v4093 = vunpack.c.h.b16 %v984
  %v4094 = vunpack.c.l.b16 %v985
  %v4095 = vunpack.c.h.b16 %v985
  %v4096 = vunpack.c.l.b16 %v986
  %v4097 = vunpack.c.h.b16 %v986
  %v4098 = vunpack.c.l.b16 %v987
  %v4099 = vunpack.c.h.b16 %v987
  %v4100 = vunpack.c.l.b16 %v988
  %v4101 = vunpack.c.h.b16 %v988
  %v4102 = vunpack.c.l.b16 %v989
  %v4103 = vunpack.c.h.b16 %v989
  %v4104 = vunpack.c.l.b16 %v990
  %v4105 = vunpack.c.h.b16 %v990
  %v4106 = vunpack.c.l.b16 %v991
  %v4107 = vunpack.c.h.b16 %v991
  %v4108 = vunpack.c.l.b16 %v992
  %v4109 = vunpack.c.h.b16 %v992
  %v4110 = vunpack.c.l.b16 %v993
  %v4111 = vunpack.c.h.b16 %v993
  %v4112 = vunpack.c.l.b16 %v994
  %v4113 = vunpack.c.h.b16 %v994
  %v4114 = vunpack.c.l.b16 %v995
  %v4115 = vunpack.c.h.b16 %v995
  %v4116 = vunpack.c.l.b16 %v996
  %v4117 = vunpack.c.h.b16 %v996
  %v4118 = vunpack.c.l.b16 %v997
  %v4119 = vunpack.c.h.b16 %v997
  %v4120 = vunpack.c.l.b16 %v998
  %v4121 = vunpack.c.h.b16 %v998
  %v4122 = vunpack.c.l.b16 %v999
  %v4123 = vunpack.c.h.b16 %v999
  %v4124 = vunpack.c.l.b16 %v1000
  %v4125 = vunpack.c.h.b16 %v1000
  %v4126 = vunpack.c.l.b16 %v1001
  %v4127 = vunpack.c.h.b16 %v1001
  %v4128 = vunpack.c.l.b16 %v1002
  %v4129 = vunpack.c.h.b16 %v1002
  %v4130 = vunpack.c.l.b16 %v1003
  %v4131 = vunpack.c.h.b16 %v1003
  %v4132 = vunpack.c.l.b16 %v1004
  %v4133 = vunpack.c.h.b16 %v1004
  %v4134 = vunpack.c.l.b16 %v1005
  %v4135 = vunpack.c.h.b16 %v1005
  %v4136 = vunpack.c.l.b16 %v1006
  %v4137 = vunpack.c.h.b16 %v1006
  %v4138 = vunpack.c.l.b16 %v1007
  %v4139 = vunpack.c.h.b16 %v1007
  %v4140 = vunpack.c.l.b16 %v1008
  %v4141 = vunpack.c.h.b16 %v1008
  %v4142 = vunpack.c.l.b16 %v1009
  %v4143 = vunpack.c.h.b16 %v1009
  %v4144 = vunpack.c.l.b16 %v1010
  %v4145 = vunpack.c.h.b16 %v1010
  %v4146 = vunpack.c.l.b16 %v1011
  %v4147 = vunpack.c.h.b16 %v1011
  %v4148 = vunpack.c.l.b16 %v1012
  %v4149 = vunpack.c.h.b16 %v1012
  %v4150 = vunpack.c.l.b16 %v1013
  %v4151 = vunpack.c.h.b16 %v1013
  %v4152 = vunpack.c.l.b16 %v1014
  %v4153 = vunpack.c.h.b16 %v1014
  %v4154 = vunpack.c.l.b16 %v1015
  %v4155 = vunpack.c.h.b16 %v1015
  %v4156 = vunpack.c.l.b16 %v1016
  %v4157 = vunpack.c.h.b16 %v1016
  %v4158 = vunpack.c.l.b16 %v1017
  %v4159 = vunpack.c.h.b16 %v1017
  %v4160 = vunpack.c.l.b16 %v1018
  %v4161 = vunpack.c.h.b16 %v1018
  %v4162 = vunpack.c.l.b16 %v1019
  %v4163 = vunpack.c.h.b16 %v1019
  %v4164 = vunpack.c.l.b16 %v1020
  %v4165 = vunpack.c.h.b16 %v1020
  %v4166 = vunpack.c.l.b16 %v1021
  %v4167 = vunpack.c.h.b16 %v1021
  %v4168 = vunpack.c.l.b16 %v1022
  %v4169 = vunpack.c.h.b16 %v1022
  %v4170 = vunpack.c.l.b16 %v1023
  %v4171 = vunpack.c.h.b16 %v1023
  %v4172 = vunpack.c.l.b16 %v1024
  %v4173 = vunpack.c.h.b16 %v1024
  %v4174 = vunpack.c.l.b16 %v1025
  %v4175 = vunpack.c.h.b16 %v1025
  %v4176 = vunpack.c.l.b16 %v1026
  %v4177 = vunpack.c.h.b16 %v1026
  %v4178 = vunpack.c.l.b16 %v1027
  %v4179 = vunpack.c.h.b16 %v1027
  %v4180 = vunpack.c.l.b16 %v1028
  %v4181 = vunpack.c.h.b16 %v1028
  %v4182 = vunpack.c.l.b16 %v1029
  %v4183 = vunpack.c.h.b16 %v1029
  %v4184 = vunpack.c.l.b16 %v1030
  %v4185 = vunpack.c.h.b16 %v1030
  %v4186 = vunpack.c.l.b16 %v1031
  %v4187 = vunpack.c.h.b16 %v1031
  %v4188 = vunpack.c.l.b16 %v1032
  %v4189 = vunpack.c.h.b16 %v1032
  %v4190 = vunpack.c.l.b16 %v1033
  %v4191 = vunpack.c.h.b16 %v1033
  %v4192 = vunpack.c.l.b16 %v1034
  %v4193 = vunpack.c.h.b16 %v1034
  %v4194 = vunpack.c.l.b16 %v1035
  %v4195 = vunpack.c.h.b16 %v1035
  %v4196 = vunpack.c.l.b16 %v1036
  %v4197 = vunpack.c.h.b16 %v1036
  %v4198 = vunpack.c.l.b16 %v1037
  %v4199 = vunpack.c.h.b16 %v1037
  %v4200 = vunpack.c.l.b16 %v1038
  %v4201 = vunpack.c.h.b16 %v1038
  %v4202 = vunpack.c.l.b16 %v1039
  %v4203 = vunpack.c.h.b16 %v1039
  %v4204 = vunpack.c.l.b16 %v1040
  %v4205 = vunpack.c.h.b16 %v1040
  %v4206 = vunpack.c.l.b16 %v1041
  %v4207 = vunpack.c.h.b16 %v1041
  %v4208 = vunpack.c.l.b16 %v1042
  %v4209 = vunpack.c.h.b16 %v1042
  %v4210 = vunpack.c.l.b16 %v1043
  %v4211 = vunpack.c.h.b16 %v1043
  %v4212 = vunpack.c.l.b16 %v1044
  %v4213 = vunpack.c.h.b16 %v1044
  %v4214 = vunpack.c.l.b16 %v1045
  %v4215 = vunpack.c.h.b16 %v1045
  %v4216 = vunpack.c.l.b16 %v1046
  %v4217 = vunpack.c.h.b16 %v1046
  %v4218 = vunpack.c.l.b16 %v1047
  %v4219 = vunpack.c.h.b16 %v1047
  %v4220 = vunpack.c.l.b16 %v1048
  %v4221 = vunpack.c.h.b16 %v1048
  %v4222 = vunpack.c.l.b16 %v1049
  %v4223 = vunpack.c.h.b16 %v1049
  %v4224 = vunpack.c.l.b16 %v1050
  %v4225 = vunpack.c.h.b16 %v1050
  %v4226 = vunpack.c.l.b16 %v1051
  %v4227 = vunpack.c.h.b16 %v1051
  %v4228 = vunpack.c.l.b16 %v1052
  %v4229 = vunpack.c.h.b16 %v1052
  %v4230 = vunpack.c.l.b16 %v1053
  %v4231 = vunpack.c.h.b16 %v1053
  %v4232 = vunpack.c.l.b16 %v1054
  %v4233 = vunpack.c.h.b16 %v1054
  %v4234 = vunpack.c.l.b16 %v1055
  %v4235 = vunpack.c.h.b16 %v1055
  %v4236 = vunpack.c.l.b16 %v1056
  %v4237 = vunpack.c.h.b16 %v1056
  %v4238 = vunpack.c.l.b16 %v1057
  %v4239 = vunpack.c.h.b16 %v1057
  %v4240 = vunpack.c.l.b16 %v1058
  %v4241 = vunpack.c.h.b16 %v1058
  %v4242 = vunpack.c.l.b16 %v1059
  %v4243 = vunpack.c.h.b16 %v1059
  %v4244 = vunpack.c.l.b16 %v1060
  %v4245 = vunpack.c.h.b16 %v1060
  %v4246 = vunpack.c.l.b16 %v1061
  %v4247 = vunpack.c.h.b16 %v1061
  %v4248 = vunpack.c.l.b16 %v1062
  %v4249 = vunpack.c.h.b16 %v1062
  %v4250 = vunpack.c.l.b16 %v1063
  %v4251 = vunpack.c.h.b16 %v1063
  %v4252 = vunpack.c.l.b16 %v1064
  %v4253 = vunpack.c.h.b16 %v1064
  %v4254 = vunpack.c.l.b16 %v1065
  %v4255 = vunpack.c.h.b16 %v1065
  %v4256 = vunpack.c.l.b16 %v1066
  %v4257 = vunpack.c.h.b16 %v1066
  %v4258 = vunpack.c.l.b16 %v1067
  %v4259 = vunpack.c.h.b16 %v1067
  %v4260 = vunpack.c.l.b16 %v1068
  %v4261 = vunpack.c.h.b16 %v1068
  %v4262 = vunpack.c.l.b16 %v1069
  %v4263 = vunpack.c.h.b16 %v1069
  %v4264 = vpack.c.b16 %v2220, %v2216
  %v4265 = vpack.c.b16 %v2221, %v2217
  %v4266 = vpack.c.b16 %v2222, %v2218
  %v4267 = vpack.c.b16 %v2223, %v2219
  %v4268 = vpack.c.b16 %v2228, %v2224
  %v4269 = vpack.c.b16 %v2229, %v2225
  %v4270 = vpack.c.b16 %v2230, %v2226
  %v4271 = vpack.c.b16 %v2231, %v2227
  %v4272 = vpack.c.b16 %v2236, %v2232
  %v4273 = vpack.c.b16 %v2237, %v2233
  %v4274 = vpack.c.b16 %v2238, %v2234
  %v4275 = vpack.c.b16 %v2239, %v2235
  %v4276 = vpack.c.b16 %v2244, %v2240
  %v4277 = vpack.c.b16 %v2245, %v2241
  %v4278 = vpack.c.b16 %v2246, %v2242
  %v4279 = vpack.c.b16 %v2247, %v2243
  %v4280 = vpack.c.b16 %v2252, %v2248
  %v4281 = vpack.c.b16 %v2253, %v2249
  %v4282 = vpack.c.b16 %v2254, %v2250
  %v4283 = vpack.c.b16 %v2255, %v2251
  %v4284 = vpack.c.b16 %v2260, %v2256
  %v4285 = vpack.c.b16 %v2261, %v2257
  %v4286 = vpack.c.b16 %v2262, %v2258
  %v4287 = vpack.c.b16 %v2263, %v2259
  %v4288 = vpack.c.b16 %v2268, %v2264
  %v4289 = vpack.c.b16 %v2269, %v2265
  %v4290 = vpack.c.b16 %v2270, %v2266
  %v4291 = vpack.c.b16 %v2271, %v2267
  %v4292 = vpack.c.b16 %v2276, %v2272
  %v4293 = vpack.c.b16 %v2277, %v2273
  %v4294 = vpack.c.b16 %v2278, %v2274
  %v4295 = vpack.c.b16 %v2279, %v2275
  %v4296 = vpack.c.b16 %v2284, %v2280
  %v4297 = vpack.c.b16 %v2285, %v2281
  %v4298 = vpack.c.b16 %v2286, %v2282
  %v4299 = vpack.c.b16 %v2287, %v2283
  %v4300 = vpack.c.b16 %v2292, %v2288
  %v4301 = vpack.c.b16 %v2293, %v2289
  %v4302 = vpack.c.b16 %v2294, %v2290
  %v4303 = vpack.c.b16 %v2295, %v2291
  %v4304 = vpack.c.b16 %v2300, %v2296
  %v4305 = vpack.c.b16 %v2301, %v2297
  %v4306 = vpack.c.b16 %v2302, %v2298
  %v4307 = vpack.c.b16 %v2303, %v2299
  %v4308 = vpack.c.b16 %v2308, %v2304
  %v4309 = vpack.c.b16 %v2309, %v2305
  %v4310 = vpack.c.b16 %v2310, %v2306
  %v4311 = vpack.c.b16 %v2311, %v2307
  %v4312 = vpack.c.b16 %v2316, %v2312
  %v4313 = vpack.c.b16 %v2317, %v2313
  %v4314 = vpack.c.b16 %v2318, %v2314
  %v4315 = vpack.c.b16 %v2319, %v2315
  %v4316 = vpack.c.b16 %v2324, %v2320
  %v4317 = vpack.c.b16 %v2325, %v2321
  %v4318 = vpack.c.b16 %v2326, %v2322
  %v4319 = vpack.c.b16 %v2327, %v2323
  %v4320 = vpack.c.b16 %v2332, %v2328
  %v4321 = vpack.c.b16 %v2333, %v2329
  %v4322 = vpack.c.b16 %v2334, %v2330
  %v4323 = vpack.c.b16 %v2335, %v2331
  %v4324 = vpack.c.b16 %v2340, %v2336
  %v4325 = vpack.c.b16 %v2341, %v2337
  %v4326 = vpack.c.b16 %v2342, %v2338
  %v4327 = vpack.c.b16 %v2343, %v2339
  %v4328 = vpack.c.b16 %v2348, %v2344
  %v4329 = vpack.c.b16 %v2349, %v2345
  %v4330 = vpack.c.b16 %v2350, %v2346
  %v4331 = vpack.c.b16 %v2351, %v2347
  %v4332 = vpack.c.b16 %v2356, %v2352
  %v4333 = vpack.c.b16 %v2357, %v2353
  %v4334 = vpack.c.b16 %v2358, %v2354
  %v4335 = vpack.c.b16 %v2359, %v2355
  %v4336 = vpack.c.b16 %v2364, %v2360
  %v4337 = vpack.c.b16 %v2365, %v2361
  %v4338 = vpack.c.b16 %v2366, %v2362
  %v4339 = vpack.c.b16 %v2367, %v2363
  %v4340 = vpack.c.b16 %v2372, %v2368
  %v4341 = vpack.c.b16 %v2373, %v2369
  %v4342 = vpack.c.b16 %v2374, %v2370
  %v4343 = vpack.c.b16 %v2375, %v2371
  %v4344 = vpack.c.b16 %v2380, %v2376
  %v4345 = vpack.c.b16 %v2381, %v2377
  %v4346 = vpack.c.b16 %v2382, %v2378
  %v4347 = vpack.c.b16 %v2383, %v2379
  %v4348 = vpack.c.b16 %v2388, %v2384
  %v4349 = vpack.c.b16 %v2389, %v2385
  %v4350 = vpack.c.b16 %v2390, %v2386
  %v4351 = vpack.c.b16 %v2391, %v2387
  %v4352 = vpack.c.b16 %v2396, %v2392
  %v4353 = vpack.c.b16 %v2397, %v2393
  %v4354 = vpack.c.b16 %v2398, %v2394
  %v4355 = vpack.c.b16 %v2399, %v2395
  %v4356 = vpack.c.b16 %v2404, %v2400
  %v4357 = vpack.c.b16 %v2405, %v2401
  %v4358 = vpack.c.b16 %v2406, %v2402
  %v4359 = vpack.c.b16 %v2407, %v2403
  %v4360 = vpack.c.b16 %v2412, %v2408
  %v4361 = vpack.c.b16 %v2413, %v2409
  %v4362 = vpack.c.b16 %v2414, %v2410
  %v4363 = vpack.c.b16 %v2415, %v2411
  %v4364 = vpack.c.b16 %v2420, %v2416
  %v4365 = vpack.c.b16 %v2421, %v2417
  %v4366 = vpack.c.b16 %v2422, %v2418
  %v4367 = vpack.c.b16 %v2423, %v2419
  %v4368 = vpack.c.b16 %v2428, %v2424
  %v4369 = vpack.c.b16 %v2429, %v2425
  %v4370 = vpack.c.b16 %v2430, %v2426
  %v4371 = vpack.c.b16 %v2431, %v2427
  %v4372 = vpack.c.b16 %v2436, %v2432
  %v4373 = vpack.c.b16 %v2437, %v2433
  %v4374 = vpack.c.b16 %v2438, %v2434
  %v4375 = vpack.c.b16 %v2439, %v2435
  %v4376 = vpack.c.b16 %v2444, %v2440
  %v4377 = vpack.c.b16 %v2445, %v2441
  %v4378 = vpack.c.b16 %v2446, %v2442
  %v4379 = vpack.c.b16 %v2447, %v2443
  %v4380 = vpack.c.b16 %v2452, %v2448
  %v4381 = vpack.c.b16 %v2453, %v2449
  %v4382 = vpack.c.b16 %v2454, %v2450
  %v4383 = vpack.c.b16 %v2455, %v2451
  %v4384 = vpack.c.b16 %v2460, %v2456
  %v4385 = vpack.c.b16 %v2461, %v2457
  %v4386 = vpack.c.b16 %v2462, %v2458
  %v4387 = vpack.c.b16 %v2463, %v2459
  %v4388 = vpack.c.b16 %v2468, %v2464
  %v4389 = vpack.c.b16 %v2469, %v2465
  %v4390 = vpack.c.b16 %v2470, %v2466
  %v4391 = vpack.c.b16 %v2471, %v2467
  %v4392 = vpack.c.b16 %v2476, %v2472
  %v4393 = vpack.c.b16 %v2477, %v2473
  %v4394 = vpack.c.b16 %v2478, %v2474
  %v4395 = vpack.c.b16 %v2479, %v2475
  %v4396 = vpack.c.b16 %v2484, %v2480
  %v4397 = vpack.c.b16 %v2485, %v2481
  %v4398 = vpack.c.b16 %v2486, %v2482
  %v4399 = vpack.c.b16 %v2487, %v2483
  %v4400 = vpack.c.b16 %v2492, %v2488
  %v4401 = vpack.c.b16 %v2493, %v2489
  %v4402 = vpack.c.b16 %v2494, %v2490
  %v4403 = vpack.c.b16 %v2495, %v2491
  %v4404 = vpack.c.b16 %v2500, %v2496
  %v4405 = vpack.c.b16 %v2501, %v2497
  %v4406 = vpack.c.b16 %v2502, %v2498
  %v4407 = vpack.c.b16 %v2503, %v2499
  %v4408 = vpack.c.b16 %v2508, %v2504
  %v4409 = vpack.c.b16 %v2509, %v2505
  %v4410 = vpack.c.b16 %v2510, %v2506
  %v4411 = vpack.c.b16 %v2511, %v2507
  %v4412 = vpack.c.b16 %v2516, %v2512
  %v4413 = vpack.c.b16 %v2517, %v2513
  %v4414 = vpack.c.b16 %v2518, %v2514
  %v4415 = vpack.c.b16 %v2519, %v2515
  %v4416 = vpack.c.b16 %v2524, %v2520
  %v4417 = vpack.c.b16 %v2525, %v2521
  %v4418 = vpack.c.b16 %v2526, %v2522
  %v4419 = vpack.c.b16 %v2527, %v2523
  %v4420 = vpack.c.b16 %v2532, %v2528
  %v4421 = vpack.c.b16 %v2533, %v2529
  %v4422 = vpack.c.b16 %v2534, %v2530
  %v4423 = vpack.c.b16 %v2535, %v2531
  %v4424 = vpack.c.b16 %v2540, %v2536
  %v4425 = vpack.c.b16 %v2541, %v2537
  %v4426 = vpack.c.b16 %v2542, %v2538
  %v4427 = vpack.c.b16 %v2543, %v2539
  %v4428 = vpack.c.b16 %v2548, %v2544
  %v4429 = vpack.c.b16 %v2549, %v2545
  %v4430 = vpack.c.b16 %v2550, %v2546
  %v4431 = vpack.c.b16 %v2551, %v2547
  %v4432 = vpack.c.b16 %v2556, %v2552
  %v4433 = vpack.c.b16 %v2557, %v2553
  %v4434 = vpack.c.b16 %v2558, %v2554
  %v4435 = vpack.c.b16 %v2559, %v2555
  %v4436 = vpack.c.b16 %v2564, %v2560
  %v4437 = vpack.c.b16 %v2565, %v2561
  %v4438 = vpack.c.b16 %v2566, %v2562
  %v4439 = vpack.c.b16 %v2567, %v2563
  %v4440 = vpack.c.b16 %v2572, %v2568
  %v4441 = vpack.c.b16 %v2573, %v2569
  %v4442 = vpack.c.b16 %v2574, %v2570
  %v4443 = vpack.c.b16 %v2575, %v2571
  %v4444 = vpack.c.b16 %v2580, %v2576
  %v4445 = vpack.c.b16 %v2581, %v2577
  %v4446 = vpack.c.b16 %v2582, %v2578
  %v4447 = vpack.c.b16 %v2583, %v2579
  %v4448 = vpack.c.b16 %v2588, %v2584
  %v4449 = vpack.c.b16 %v2589, %v2585
  %v4450 = vpack.c.b16 %v2590, %v2586
  %v4451 = vpack.c.b16 %v2591, %v2587
  %v4452 = vpack.c.b16 %v2596, %v2592
  %v4453 = vpack.c.b16 %v2597, %v2593
  %v4454 = vpack.c.b16 %v2598, %v2594
  %v4455 = vpack.c.b16 %v2599, %v2595
  %v4456 = vpack.c.b16 %v2604, %v2600
  %v4457 = vpack.c.b16 %v2605, %v2601
  %v4458 = vpack.c.b16 %v2606, %v2602
  %v4459 = vpack.c.b16 %v2607, %v2603
  %v4460 = vpack.c.b16 %v2612, %v2608
  %v4461 = vpack.c.b16 %v2613, %v2609
  %v4462 = vpack.c.b16 %v2614, %v2610
  %v4463 = vpack.c.b16 %v2615, %v2611
  %v4464 = vpack.c.b16 %v2620, %v2616
  %v4465 = vpack.c.b16 %v2621, %v2617
  %v4466 = vpack.c.b16 %v2622, %v2618
  %v4467 = vpack.c.b16 %v2623, %v2619
  %v4468 = vpack.c.b16 %v2628, %v2624
  %v4469 = vpack.c.b16 %v2629, %v2625
  %v4470 = vpack.c.b16 %v2630, %v2626
  %v4471 = vpack.c.b16 %v2631, %v2627
  %v4472 = vpack.c.b16 %v2636, %v2632
  %v4473 = vpack.c.b16 %v2637, %v2633
  %v4474 = vpack.c.b16 %v2638, %v2634
  %v4475 = vpack.c.b16 %v2639, %v2635
  %v4476 = vpack.c.b16 %v2644, %v2640
  %v4477 = vpack.c.b16 %v2645, %v2641
  %v4478 = vpack.c.b16 %v2646, %v2642
  %v4479 = vpack.c.b16 %v2647, %v2643
  %v4480 = vpack.c.b16 %v2652, %v2648
  %v4481 = vpack.c.b16 %v2653, %v2649
  %v4482 = vpack.c.b16 %v2654, %v2650
  %v4483 = vpack.c.b16 %v2655, %v2651
  %v4484 = vpack.c.b16 %v2660, %v2656
  %v4485 = vpack.c.b16 %v2661, %v2657
  %v4486 = vpack.c.b16 %v2662, %v2658
  %v4487 = vpack.c.b16 %v2663, %v2659
  %v4488 = vpack.c.b16 %v2668, %v2664
  %v4489 = vpack.c.b16 %v2669, %v2665
  %v4490 = vpack.c.b16 %v2670, %v2666
  %v4491 = vpack.c.b16 %v2671, %v2667
  %v4492 = vpack.c.b16 %v2676, %v2672
  %v4493 = vpack.c.b16 %v2677, %v2673
  %v4494 = vpack.c.b16 %v2678, %v2674
  %v4495 = vpack.c.b16 %v2679, %v2675
  %v4496 = vpack.c.b16 %v2684, %v2680
  %v4497 = vpack.c.b16 %v2685, %v2681
  %v4498 = vpack.c.b16 %v2686, %v2682
  %v4499 = vpack.c.b16 %v2687, %v2683
  %v4500 = vpack.c.b16 %v2692, %v2688
  %v4501 = vpack.c.b16 %v2693, %v2689
  %v4502 = vpack.c.b16 %v2694, %v2690
  %v4503 = vpack.c.b16 %v2695, %v2691
  %v4504 = vpack.c.b16 %v2700, %v2696
  %v4505 = vpack.c.b16 %v2701, %v2697
  %v4506 = vpack.c.b16 %v2702, %v2698
  %v4507 = vpack.c.b16 %v2703, %v2699
  %v4508 = vpack.c.b16 %v2708, %v2704
  %v4509 = vpack.c.b16 %v2709, %v2705
  %v4510 = vpack.c.b16 %v2710, %v2706
  %v4511 = vpack.c.b16 %v2711, %v2707
  %v4512 = vpack.c.b16 %v2716, %v2712
  %v4513 = vpack.c.b16 %v2717, %v2713
  %v4514 = vpack.c.b16 %v2718, %v2714
  %v4515 = vpack.c.b16 %v2719, %v2715
  %v4516 = vpack.c.b16 %v2724, %v2720
  %v4517 = vpack.c.b16 %v2725, %v2721
  %v4518 = vpack.c.b16 %v2726, %v2722
  %v4519 = vpack.c.b16 %v2727, %v2723
  %v4520 = vpack.c.b16 %v2732, %v2728
  %v4521 = vpack.c.b16 %v2733, %v2729
  %v4522 = vpack.c.b16 %v2734, %v2730
  %v4523 = vpack.c.b16 %v2735, %v2731
  %v4524 = vpack.c.b16 %v2740, %v2736
  %v4525 = vpack.c.b16 %v2741, %v2737
  %v4526 = vpack.c.b16 %v2742, %v2738
  %v4527 = vpack.c.b16 %v2743, %v2739
  %v4528 = vpack.c.b16 %v2748, %v2744
  %v4529 = vpack.c.b16 %v2749, %v2745
  %v4530 = vpack.c.b16 %v2750, %v2746
  %v4531 = vpack.c.b16 %v2751, %v2747
  %v4532 = vpack.c.b16 %v2756, %v2752
  %v4533 = vpack.c.b16 %v2757, %v2753
  %v4534 = vpack.c.b16 %v2758, %v2754
  %v4535 = vpack.c.b16 %v2759, %v2755
  %v4536 = vpack.c.b16 %v2764, %v2760
  %v4537 = vpack.c.b16 %v2765, %v2761
  %v4538 = vpack.c.b16 %v2766, %v2762
  %v4539 = vpack.c.b16 %v2767, %v2763
  %v4540 = vpack.c.b16 %v2772, %v2768
  %v4541 = vpack.c.b16 %v2773, %v2769
  %v4542 = vpack.c.b16 %v2774, %v2770
  %v4543 = vpack.c.b16 %v2775, %v2771
  %v4544 = vpack.c.b16 %v2780, %v2776
  %v4545 = vpack.c.b16 %v2781, %v2777
  %v4546 = vpack.c.b16 %v2782, %v2778
  %v4547 = vpack.c.b16 %v2783, %v2779
  %v4548 = vpack.c.b16 %v2788, %v2784
  %v4549 = vpack.c.b16 %v2789, %v2785
  %v4550 = vpack.c.b16 %v2790, %v2786
  %v4551 = vpack.c.b16 %v2791, %v2787
  %v4552 = vpack.c.b16 %v2796, %v2792
  %v4553 = vpack.c.b16 %v2797, %v2793
  %v4554 = vpack.c.b16 %v2798, %v2794
  %v4555 = vpack.c.b16 %v2799, %v2795
  %v4556 = vpack.c.b16 %v2804, %v2800
  %v4557 = vpack.c.b16 %v2805, %v2801
  %v4558 = vpack.c.b16 %v2806, %v2802
  %v4559 = vpack.c.b16 %v2807, %v2803
  %v4560 = vpack.c.b16 %v2812, %v2808
  %v4561 = vpack.c.b16 %v2813, %v2809
  %v4562 = vpack.c.b16 %v2814, %v2810
  %v4563 = vpack.c.b16 %v2815, %v2811
  %v4564 = vpack.c.b16 %v2820, %v2816
  %v4565 = vpack.c.b16 %v2821, %v2817
  %v4566 = vpack.c.b16 %v2822, %v2818
  %v4567 = vpack.c.b16 %v2823, %v2819
  %v4568 = vpack.c.b16 %v2828, %v2824
  %v4569 = vpack.c.b16 %v2829, %v2825
  %v4570 = vpack.c.b16 %v2830, %v2826
  %v4571 = vpack.c.b16 %v2831, %v2827
  %v4572 = vpack.c.b16 %v2836, %v2832
  %v4573 = vpack.c.b16 %v2837, %v2833
  %v4574 = vpack.c.b16 %v2838, %v2834
  %v4575 = vpack.c.b16 %v2839, %v2835
  %v4576 = vpack.c.b16 %v2844, %v2840
  %v4577 = vpack.c.b16 %v2845, %v2841
  %v4578 = vpack.c.b16 %v2846, %v2842
  %v4579 = vpack.c.b16 %v2847, %v2843
  %v4580 = vpack.c.b16 %v2852, %v2848
  %v4581 = vpack.c.b16 %v2853, %v2849
  %v4582 = vpack.c.b16 %v2854, %v2850
  %v4583 = vpack.c.b16 %v2855, %v2851
  %v4584 = vpack.c.b16 %v2860, %v2856
  %v4585 = vpack.c.b16 %v2861, %v2857
  %v4586 = vpack.c.b16 %v2862, %v2858
  %v4587 = vpack.c.b16 %v2863, %v2859
  %v4588 = vpack.c.b16 %v2868, %v2864
  %v4589 = vpack.c.b16 %v2869, %v2865
  %v4590 = vpack.c.b16 %v2870, %v2866
  %v4591 = vpack.c.b16 %v2871, %v2867
  %v4592 = vpack.c.b16 %v2876, %v2872
  %v4593 = vpack.c.b16 %v2877, %v2873
  %v4594 = vpack.c.b16 %v2878, %v2874
  %v4595 = vpack.c.b16 %v2879, %v2875
  %v4596 = vpack.c.b16 %v2884, %v2880
  %v4597 = vpack.c.b16 %v2885, %v2881
  %v4598 = vpack.c.b16 %v2886, %v2882
  %v4599 = vpack.c.b16 %v2887, %v2883
  %v4600 = vpack.c.b16 %v2892, %v2888
  %v4601 = vpack.c.b16 %v2893, %v2889
  %v4602 = vpack.c.b16 %v2894, %v2890
  %v4603 = vpack.c.b16 %v2895, %v2891
  %v4604 = vpack.c.b16 %v2900, %v2896
  %v4605 = vpack.c.b16 %v2901, %v2897
  %v4606 = vpack.c.b16 %v2902, %v2898
  %v4607 = vpack.c.b16 %v2903, %v2899
  %v4608 = vpack.c.b16 %v2908, %v2904
  %v4609 = vpack.c.b16 %v2909, %v2905
  %v4610 = vpack.c.b16 %v2910, %v2906
  %v4611 = vpack.c.b16 %v2911, %v2907
  %v4612 = vpack.c.b16 %v2916, %v2912
  %v4613 = vpack.c.b16 %v2917, %v2913
  %v4614 = vpack.c.b16 %v2918, %v2914
  %v4615 = vpack.c.b16 %v2919, %v2915
  %v4616 = vpack.c.b16 %v2924, %v2920
  %v4617 = vpack.c.b16 %v2925, %v2921
  %v4618 = vpack.c.b16 %v2926, %v2922
  %v4619 = vpack.c.b16 %v2927, %v2923
  %v4620 = vpack.c.b16 %v2932, %v2928
  %v4621 = vpack.c.b16 %v2933, %v2929
  %v4622 = vpack.c.b16 %v2934, %v2930
  %v4623 = vpack.c.b16 %v2935, %v2931
  %v4624 = vpack.c.b16 %v2940, %v2936
  %v4625 = vpack.c.b16 %v2941, %v2937
  %v4626 = vpack.c.b16 %v2942, %v2938
  %v4627 = vpack.c.b16 %v2943, %v2939
  %v4628 = vpack.c.b16 %v2948, %v2944
  %v4629 = vpack.c.b16 %v2949, %v2945
  %v4630 = vpack.c.b16 %v2950, %v2946
  %v4631 = vpack.c.b16 %v2951, %v2947
  %v4632 = vpack.c.b16 %v2956, %v2952
  %v4633 = vpack.c.b16 %v2957, %v2953
  %v4634 = vpack.c.b16 %v2958, %v2954
  %v4635 = vpack.c.b16 %v2959, %v2955
  %v4636 = vpack.c.b16 %v2964, %v2960
  %v4637 = vpack.c.b16 %v2965, %v2961
  %v4638 = vpack.c.b16 %v2966, %v2962
  %v4639 = vpack.c.b16 %v2967, %v2963
  %v4640 = vpack.c.b16 %v2972, %v2968
  %v4641 = vpack.c.b16 %v2973, %v2969
  %v4642 = vpack.c.b16 %v2974, %v2970
  %v4643 = vpack.c.b16 %v2975, %v2971
  %v4644 = vpack.c.b16 %v2980, %v2976
  %v4645 = vpack.c.b16 %v2981, %v2977
  %v4646 = vpack.c.b16 %v2982, %v2978
  %v4647 = vpack.c.b16 %v2983, %v2979
  %v4648 = vpack.c.b16 %v2988, %v2984
  %v4649 = vpack.c.b16 %v2989, %v2985
  %v4650 = vpack.c.b16 %v2990, %v2986
  %v4651 = vpack.c.b16 %v2991, %v2987
  %v4652 = vpack.c.b16 %v2996, %v2992
  %v4653 = vpack.c.b16 %v2997, %v2993
  %v4654 = vpack.c.b16 %v2998, %v2994
  %v4655 = vpack.c.b16 %v2999, %v2995
  %v4656 = vpack.c.b16 %v3004, %v3000
  %v4657 = vpack.c.b16 %v3005, %v3001
  %v4658 = vpack.c.b16 %v3006, %v3002
  %v4659 = vpack.c.b16 %v3007, %v3003
  %v4660 = vpack.c.b16 %v3012, %v3008
  %v4661 = vpack.c.b16 %v3013, %v3009
  %v4662 = vpack.c.b16 %v3014, %v3010
  %v4663 = vpack.c.b16 %v3015, %v3011
  %v4664 = vpack.c.b16 %v3020, %v3016
  %v4665 = vpack.c.b16 %v3021, %v3017
  %v4666 = vpack.c.b16 %v3022, %v3018
  %v4667 = vpack.c.b16 %v3023, %v3019
  %v4668 = vpack.c.b16 %v3028, %v3024
  %v4669 = vpack.c.b16 %v3029, %v3025
  %v4670 = vpack.c.b16 %v3030, %v3026
  %v4671 = vpack.c.b16 %v3031, %v3027
  %v4672 = vpack.c.b16 %v3036, %v3032
  %v4673 = vpack.c.b16 %v3037, %v3033
  %v4674 = vpack.c.b16 %v3038, %v3034
  %v4675 = vpack.c.b16 %v3039, %v3035
  %v4676 = vpack.c.b16 %v3044, %v3040
  %v4677 = vpack.c.b16 %v3045, %v3041
  %v4678 = vpack.c.b16 %v3046, %v3042
  %v4679 = vpack.c.b16 %v3047, %v3043
  %v4680 = vpack.c.b16 %v3052, %v3048
  %v4681 = vpack.c.b16 %v3053, %v3049
  %v4682 = vpack.c.b16 %v3054, %v3050
  %v4683 = vpack.c.b16 %v3055, %v3051
  %v4684 = vpack.c.b16 %v3060, %v3056
  %v4685 = vpack.c.b16 %v3061, %v3057
  %v4686 = vpack.c.b16 %v3062, %v3058
  %v4687 = vpack.c.b16 %v3063, %v3059
  %v4688 = vpack.c.b16 %v3068, %v3064
  %v4689 = vpack.c.b16 %v3069, %v3065
  %v4690 = vpack.c.b16 %v3070, %v3066
  %v4691 = vpack.c.b16 %v3071, %v3067
  %v4692 = vpack.c.b16 %v3076, %v3072
  %v4693 = vpack.c.b16 %v3077, %v3073
  %v4694 = vpack.c.b16 %v3078, %v3074
  %v4695 = vpack.c.b16 %v3079, %v3075
  %v4696 = vpack.c.b16 %v3084, %v3080
  %v4697 = vpack.c.b16 %v3085, %v3081
  %v4698 = vpack.c.b16 %v3086, %v3082
  %v4699 = vpack.c.b16 %v3087, %v3083
  %v4700 = vpack.c.b16 %v3092, %v3088
  %v4701 = vpack.c.b16 %v3093, %v3089
  %v4702 = vpack.c.b16 %v3094, %v3090
  %v4703 = vpack.c.b16 %v3095, %v3091
  %v4704 = vpack.c.b16 %v3100, %v3096
  %v4705 = vpack.c.b16 %v3101, %v3097
  %v4706 = vpack.c.b16 %v3102, %v3098
  %v4707 = vpack.c.b16 %v3103, %v3099
  %v4708 = vpack.c.b16 %v3108, %v3104
  %v4709 = vpack.c.b16 %v3109, %v3105
  %v4710 = vpack.c.b16 %v3110, %v3106
  %v4711 = vpack.c.b16 %v3111, %v3107
  %v4712 = vpack.c.b16 %v3116, %v3112
  %v4713 = vpack.c.b16 %v3117, %v3113
  %v4714 = vpack.c.b16 %v3118, %v3114
  %v4715 = vpack.c.b16 %v3119, %v3115
  %v4716 = vpack.c.b16 %v3124, %v3120
  %v4717 = vpack.c.b16 %v3125, %v3121
  %v4718 = vpack.c.b16 %v3126, %v3122
  %v4719 = vpack.c.b16 %v3127, %v3123
  %v4720 = vpack.c.b16 %v3132, %v3128
  %v4721 = vpack.c.b16 %v3133, %v3129
  %v4722 = vpack.c.b16 %v3134, %v3130
  %v4723 = vpack.c.b16 %v3135, %v3131
  %v4724 = vpack.c.b16 %v3140, %v3136
  %v4725 = vpack.c.b16 %v3141, %v3137
  %v4726 = vpack.c.b16 %v3142, %v3138
  %v4727 = vpack.c.b16 %v3143, %v3139
  %v4728 = vpack.c.b16 %v3148, %v3144
  %v4729 = vpack.c.b16 %v3149, %v3145
  %v4730 = vpack.c.b16 %v3150, %v3146
  %v4731 = vpack.c.b16 %v3151, %v3147
  %v4732 = vpack.c.b16 %v3156, %v3152
  %v4733 = vpack.c.b16 %v3157, %v3153
  %v4734 = vpack.c.b16 %v3158, %v3154
  %v4735 = vpack.c.b16 %v3159, %v3155
  %v4736 = vpack.c.b16 %v3164, %v3160
  %v4737 = vpack.c.b16 %v3165, %v3161
  %v4738 = vpack.c.b16 %v3166, %v3162
  %v4739 = vpack.c.b16 %v3167, %v3163
  %v4740 = vpack.c.b16 %v3172, %v3168
  %v4741 = vpack.c.b16 %v3173, %v3169
  %v4742 = vpack.c.b16 %v3174, %v3170
  %v4743 = vpack.c.b16 %v3175, %v3171
  %v4744 = vpack.c.b16 %v3180, %v3176
  %v4745 = vpack.c.b16 %v3181, %v3177
  %v4746 = vpack.c.b16 %v3182, %v3178
  %v4747 = vpack.c.b16 %v3183, %v3179
  %v4748 = vpack.c.b16 %v3188, %v3184
  %v4749 = vpack.c.b16 %v3189, %v3185
  %v4750 = vpack.c.b16 %v3190, %v3186
  %v4751 = vpack.c.b16 %v3191, %v3187
  %v4752 = vpack.c.b16 %v3196, %v3192
  %v4753 = vpack.c.b16 %v3197, %v3193
  %v4754 = vpack.c.b16 %v3198, %v3194
  %v4755 = vpack.c.b16 %v3199, %v3195
  %v4756 = vpack.c.b16 %v3204, %v3200
  %v4757 = vpack.c.b16 %v3205, %v3201
  %v4758 = vpack.c.b16 %v3206, %v3202
  %v4759 = vpack.c.b16 %v3207, %v3203
  %v4760 = vpack.c.b16 %v3212, %v3208
  %v4761 = vpack.c.b16 %v3213, %v3209
  %v4762 = vpack.c.b16 %v3214, %v3210
  %v4763 = vpack.c.b16 %v3215, %v3211
  %v4764 = vpack.c.b16 %v3220, %v3216
  %v4765 = vpack.c.b16 %v3221, %v3217
  %v4766 = vpack.c.b16 %v3222, %v3218
  %v4767 = vpack.c.b16 %v3223, %v3219
  %v4768 = vpack.c.b16 %v3228, %v3224
  %v4769 = vpack.c.b16 %v3229, %v3225
  %v4770 = vpack.c.b16 %v3230, %v3226
  %v4771 = vpack.c.b16 %v3231, %v3227
  %v4772 = vpack.c.b16 %v3236, %v3232
  %v4773 = vpack.c.b16 %v3237, %v3233
  %v4774 = vpack.c.b16 %v3238, %v3234
  %v4775 = vpack.c.b16 %v3239, %v3235
  %v4776 = vpack.c.b16 %v3244, %v3240
  %v4777 = vpack.c.b16 %v3245, %v3241
  %v4778 = vpack.c.b16 %v3246, %v3242
  %v4779 = vpack.c.b16 %v3247, %v3243
  %v4780 = vpack.c.b16 %v3252, %v3248
  %v4781 = vpack.c.b16 %v3253, %v3249
  %v4782 = vpack.c.b16 %v3254, %v3250
  %v4783 = vpack.c.b16 %v3255, %v3251
  %v4784 = vpack.c.b16 %v3260, %v3256
  %v4785 = vpack.c.b16 %v3261, %v3257
  %v4786 = vpack.c.b16 %v3262, %v3258
  %v4787 = vpack.c.b16 %v3263, %v3259
  %v4788 = vpack.c.b16 %v3268, %v3264
  %v4789 = vpack.c.b16 %v3269, %v3265
  %v4790 = vpack.c.b16 %v3270, %v3266
  %v4791 = vpack.c.b16 %v3271, %v3267
  %v4792 = vpack.c.b16 %v3276, %v3272
  %v4793 = vpack.c.b16 %v3277, %v3273
  %v4794 = vpack.c.b16 %v3278, %v3274
  %v4795 = vpack.c.b16 %v3279, %v3275
  %v4796 = vpack.c.b16 %v3284, %v3280
  %v4797 = vpack.c.b16 %v3285, %v3281
  %v4798 = vpack.c.b16 %v3286, %v3282
  %v4799 = vpack.c.b16 %v3287, %v3283
  %v4800 = vpack.c.b16 %v3292, %v3288
  %v4801 = vpack.c.b16 %v3293, %v3289
  %v4802 = vpack.c.b16 %v3294, %v3290
  %v4803 = vpack.c.b16 %v3295, %v3291
  %v4804 = vpack.c.b16 %v3300, %v3296
  %v4805 = vpack.c.b16 %v3301, %v3297
  %v4806 = vpack.c.b16 %v3302, %v3298
  %v4807 = vpack.c.b16 %v3303, %v3299
  %v4808 = vpack.c.b16 %v3308, %v3304
  %v4809 = vpack.c.b16 %v3309, %v3305
  %v4810 = vpack.c.b16 %v3310, %v3306
  %v4811 = vpack.c.b16 %v3311, %v3307
  %v4812 = vpack.c.b16 %v3316, %v3312
  %v4813 = vpack.c.b16 %v3317, %v3313
  %v4814 = vpack.c.b16 %v3318, %v3314
  %v4815 = vpack.c.b16 %v3319, %v3315
  %v4816 = vpack.c.b16 %v3324, %v3320
  %v4817 = vpack.c.b16 %v3325, %v3321
  %v4818 = vpack.c.b16 %v3326, %v3322
  %v4819 = vpack.c.b16 %v3327, %v3323
  %v4820 = vpack.c.b16 %v3332, %v3328
  %v4821 = vpack.c.b16 %v3333, %v3329
  %v4822 = vpack.c.b16 %v3334, %v3330
  %v4823 = vpack.c.b16 %v3335, %v3331
  %v4824 = vpack.c.b16 %v3340, %v3336
  %v4825 = vpack.c.b16 %v3341, %v3337
  %v4826 = vpack.c.b16 %v3342, %v3338
  %v4827 = vpack.c.b16 %v3343, %v3339
  %v4828 = vpack.c.b16 %v3348, %v3344
  %v4829 = vpack.c.b16 %v3349, %v3345
  %v4830 = vpack.c.b16 %v3350, %v3346
  %v4831 = vpack.c.b16 %v3351, %v3347
  %v4832 = vpack.c.b16 %v3356, %v3352
  %v4833 = vpack.c.b16 %v3357, %v3353
  %v4834 = vpack.c.b16 %v3358, %v3354
  %v4835 = vpack.c.b16 %v3359, %v3355
  %v4836 = vpack.c.b16 %v3364, %v3360
  %v4837 = vpack.c.b16 %v3365, %v3361
  %v4838 = vpack.c.b16 %v3366, %v3362
  %v4839 = vpack.c.b16 %v3367, %v3363
  %v4840 = vpack.c.b16 %v3372, %v3368
  %v4841 = vpack.c.b16 %v3373, %v3369
  %v4842 = vpack.c.b16 %v3374, %v3370
  %v4843 = vpack.c.b16 %v3375, %v3371
  %v4844 = vpack.c.b16 %v3380, %v3376
  %v4845 = vpack.c.b16 %v3381, %v3377
  %v4846 = vpack.c.b16 %v3382, %v3378
  %v4847 = vpack.c.b16 %v3383, %v3379
  %v4848 = vpack.c.b16 %v3388, %v3384
  %v4849 = vpack.c.b16 %v3389, %v3385
  %v4850 = vpack.c.b16 %v3390, %v3386
  %v4851 = vpack.c.b16 %v3391, %v3387
  %v4852 = vpack.c.b16 %v3396, %v3392
  %v4853 = vpack.c.b16 %v3397, %v3393
  %v4854 = vpack.c.b16 %v3398, %v3394
  %v4855 = vpack.c.b16 %v3399, %v3395
  %v4856 = vpack.c.b16 %v3404, %v3400
  %v4857 = vpack.c.b16 %v3405, %v3401
  %v4858 = vpack.c.b16 %v3406, %v3402
  %v4859 = vpack.c.b16 %v3407, %v3403
  %v4860 = vpack.c.b16 %v3412, %v3408
  %v4861 = vpack.c.b16 %v3413, %v3409
  %v4862 = vpack.c.b16 %v3414, %v3410
  %v4863 = vpack.c.b16 %v3415, %v3411
  %v4864 = vpack.c.b16 %v3420, %v3416
  %v4865 = vpack.c.b16 %v3421, %v3417
  %v4866 = vpack.c.b16 %v3422, %v3418
  %v4867 = vpack.c.b16 %v3423, %v3419
  %v4868 = vpack.c.b16 %v3428, %v3424
  %v4869 = vpack.c.b16 %v3429, %v3425
  %v4870 = vpack.c.b16 %v3430, %v3426
  %v4871 = vpack.c.b16 %v3431, %v3427
  %v4872 = vpack.c.b16 %v3436, %v3432
  %v4873 = vpack.c.b16 %v3437, %v3433
  %v4874 = vpack.c.b16 %v3438, %v3434
  %v4875 = vpack.c.b16 %v3439, %v3435
  %v4876 = vpack.c.b16 %v3444, %v3440
  %v4877 = vpack.c.b16 %v3445, %v3441
  %v4878 = vpack.c.b16 %v3446, %v3442
  %v4879 = vpack.c.b16 %v3447, %v3443
  %v4880 = vpack.c.b16 %v3452, %v3448
  %v4881 = vpack.c.b16 %v3453, %v3449
  %v4882 = vpack.c.b16 %v3454, %v3450
  %v4883 = vpack.c.b16 %v3455, %v3451
  %v4884 = vpack.c.b16 %v3460, %v3456
  %v4885 = vpack.c.b16 %v3461, %v3457
  %v4886 = vpack.c.b16 %v3462, %v3458
  %v4887 = vpack.c.b16 %v3463, %v3459
  %v4888 = vpack.c.b16 %v3468, %v3464
  %v4889 = vpack.c.b16 %v3469, %v3465
  %v4890 = vpack.c.b16 %v3470, %v3466
  %v4891 = vpack.c.b16 %v3471, %v3467
  %v4892 = vpack.c.b16 %v3476, %v3472
  %v4893 = vpack.c.b16 %v3477, %v3473
  %v4894 = vpack.c.b16 %v3478, %v3474
  %v4895 = vpack.c.b16 %v3479, %v3475
  %v4896 = vpack.c.b16 %v3484, %v3480
  %v4897 = vpack.c.b16 %v3485, %v3481
  %v4898 = vpack.c.b16 %v3486, %v3482
  %v4899 = vpack.c.b16 %v3487, %v3483
  %v4900 = vpack.c.b16 %v3492, %v3488
  %v4901 = vpack.c.b16 %v3493, %v3489
  %v4902 = vpack.c.b16 %v3494, %v3490
  %v4903 = vpack.c.b16 %v3495, %v3491
  %v4904 = vpack.c.b16 %v3500, %v3496
  %v4905 = vpack.c.b16 %v3501, %v3497
  %v4906 = vpack.c.b16 %v3502, %v3498
  %v4907 = vpack.c.b16 %v3503, %v3499
  %v4908 = vpack.c.b16 %v3508, %v3504
  %v4909 = vpack.c.b16 %v3509, %v3505
  %v4910 = vpack.c.b16 %v3510, %v3506
  %v4911 = vpack.c.b16 %v3511, %v3507
  %v4912 = vpack.c.b16 %v3516, %v3512
  %v4913 = vpack.c.b16 %v3517, %v3513
  %v4914 = vpack.c.b16 %v3518, %v3514
  %v4915 = vpack.c.b16 %v3519, %v3515
  %v4916 = vpack.c.b16 %v3524, %v3520
  %v4917 = vpack.c.b16 %v3525, %v3521
  %v4918 = vpack.c.b16 %v3526, %v3522
  %v4919 = vpack.c.b16 %v3527, %v3523
  %v4920 = vpack.c.b16 %v3532, %v3528
  %v4921 = vpack.c.b16 %v3533, %v3529
  %v4922 = vpack.c.b16 %v3534, %v3530
  %v4923 = vpack.c.b16 %v3535, %v3531
  %v4924 = vpack.c.b16 %v3540, %v3536
  %v4925 = vpack.c.b16 %v3541, %v3537
  %v4926 = vpack.c.b16 %v3542, %v3538
  %v4927 = vpack.c.b16 %v3543, %v3539
  %v4928 = vpack.c.b16 %v3548, %v3544
  %v4929 = vpack.c.b16 %v3549, %v3545
  %v4930 = vpack.c.b16 %v3550, %v3546
  %v4931 = vpack.c.b16 %v3551, %v3547
  %v4932 = vpack.c.b16 %v3556, %v3552
  %v4933 = vpack.c.b16 %v3557, %v3553
  %v4934 = vpack.c.b16 %v3558, %v3554
  %v4935 = vpack.c.b16 %v3559, %v3555
  %v4936 = vpack.c.b16 %v3564, %v3560
  %v4937 = vpack.c.b16 %v3565, %v3561
  %v4938 = vpack.c.b16 %v3566, %v3562
  %v4939 = vpack.c.b16 %v3567, %v3563
  %v4940 = vpack.c.b16 %v3572, %v3568
  %v4941 = vpack.c.b16 %v3573, %v3569
  %v4942 = vpack.c.b16 %v3574, %v3570
  %v4943 = vpack.c.b16 %v3575, %v3571
  %v4944 = vpack.c.b16 %v3580, %v3576
  %v4945 = vpack.c.b16 %v3581, %v3577
  %v4946 = vpack.c.b16 %v3582, %v3578
  %v4947 = vpack.c.b16 %v3583, %v3579
  %v4948 = vpack.c.b16 %v3588, %v3584
  %v4949 = vpack.c.b16 %v3589, %v3585
  %v4950 = vpack.c.b16 %v3590, %v3586
  %v4951 = vpack.c.b16 %v3591, %v3587
  %v4952 = vpack.c.b16 %v3596, %v3592
  %v4953 = vpack.c.b16 %v3597, %v3593
  %v4954 = vpack.c.b16 %v3598, %v3594
  %v4955 = vpack.c.b16 %v3599, %v3595
  %v4956 = vpack.c.b16 %v3604, %v3600
  %v4957 = vpack.c.b16 %v3605, %v3601
  %v4958 = vpack.c.b16 %v3606, %v3602
  %v4959 = vpack.c.b16 %v3607, %v3603
  %v4960 = vpack.c.b16 %v3612, %v3608
  %v4961 = vpack.c.b16 %v3613, %v3609
  %v4962 = vpack.c.b16 %v3614, %v3610
  %v4963 = vpack.c.b16 %v3615, %v3611
  %v4964 = vpack.c.b16 %v3620, %v3616
  %v4965 = vpack.c.b16 %v3621, %v3617
  %v4966 = vpack.c.b16 %v3622, %v3618
  %v4967 = vpack.c.b16 %v3623, %v3619
  %v4968 = vpack.c.b16 %v3628, %v3624
  %v4969 = vpack.c.b16 %v3629, %v3625
  %v4970 = vpack.c.b16 %v3630, %v3626
  %v4971 = vpack.c.b16 %v3631, %v3627
  %v4972 = vpack.c.b16 %v3636, %v3632
  %v4973 = vpack.c.b16 %v3637, %v3633
  %v4974 = vpack.c.b16 %v3638, %v3634
  %v4975 = vpack.c.b16 %v3639, %v3635
  %v4976 = vpack.c.b16 %v3644, %v3640
  %v4977 = vpack.c.b16 %v3645, %v3641
  %v4978 = vpack.c.b16 %v3646, %v3642
  %v4979 = vpack.c.b16 %v3647, %v3643
  %v4980 = vpack.c.b16 %v3652, %v3648
  %v4981 = vpack.c.b16 %v3653, %v3649
  %v4982 = vpack.c.b16 %v3654, %v3650
  %v4983 = vpack.c.b16 %v3655, %v3651
  %v4984 = vpack.c.b16 %v3660, %v3656
  %v4985 = vpack.c.b16 %v3661, %v3657
  %v4986 = vpack.c.b16 %v3662, %v3658
  %v4987 = vpack.c.b16 %v3663, %v3659
  %v4988 = vpack.c.b16 %v3668, %v3664
  %v4989 = vpack.c.b16 %v3669, %v3665
  %v4990 = vpack.c.b16 %v3670, %v3666
  %v4991 = vpack.c.b16 %v3671, %v3667
  %v4992 = vpack.c.b16 %v3676, %v3672
  %v4993 = vpack.c.b16 %v3677, %v3673
  %v4994 = vpack.c.b16 %v3678, %v3674
  %v4995 = vpack.c.b16 %v3679, %v3675
  %v4996 = vpack.c.b16 %v3684, %v3680
  %v4997 = vpack.c.b16 %v3685, %v3681
  %v4998 = vpack.c.b16 %v3686, %v3682
  %v4999 = vpack.c.b16 %v3687, %v3683
  %v5000 = vpack.c.b16 %v3692, %v3688
  %v5001 = vpack.c.b16 %v3693, %v3689
  %v5002 = vpack.c.b16 %v3694, %v3690
  %v5003 = vpack.c.b16 %v3695, %v3691
  %v5004 = vpack.c.b16 %v3700, %v3696
  %v5005 = vpack.c.b16 %v3701, %v3697
  %v5006 = vpack.c.b16 %v3702, %v3698
  %v5007 = vpack.c.b16 %v3703, %v3699
  %v5008 = vpack.c.b16 %v3708, %v3704
  %v5009 = vpack.c.b16 %v3709, %v3705
  %v5010 = vpack.c.b16 %v3710, %v3706
  %v5011 = vpack.c.b16 %v3711, %v3707
  %v5012 = vpack.c.b16 %v3716, %v3712
  %v5013 = vpack.c.b16 %v3717, %v3713
  %v5014 = vpack.c.b16 %v3718, %v3714
  %v5015 = vpack.c.b16 %v3719, %v3715
  %v5016 = vpack.c.b16 %v3724, %v3720
  %v5017 = vpack.c.b16 %v3725, %v3721
  %v5018 = vpack.c.b16 %v3726, %v3722
  %v5019 = vpack.c.b16 %v3727, %v3723
  %v5020 = vpack.c.b16 %v3732, %v3728
  %v5021 = vpack.c.b16 %v3733, %v3729
  %v5022 = vpack.c.b16 %v3734, %v3730
  %v5023 = vpack.c.b16 %v3735, %v3731
  %v5024 = vpack.c.b16 %v3740, %v3736
  %v5025 = vpack.c.b16 %v3741, %v3737
  %v5026 = vpack.c.b16 %v3742, %v3738
  %v5027 = vpack.c.b16 %v3743, %v3739
  %v5028 = vpack.c.b16 %v3748, %v3744
  %v5029 = vpack.c.b16 %v3749, %v3745
  %v5030 = vpack.c.b16 %v3750, %v3746
  %v5031 = vpack.c.b16 %v3751, %v3747
  %v5032 = vpack.c.b16 %v3756, %v3752
  %v5033 = vpack.c.b16 %v3757, %v3753
  %v5034 = vpack.c.b16 %v3758, %v3754
  %v5035 = vpack.c.b16 %v3759, %v3755
  %v5036 = vpack.c.b16 %v3764, %v3760
  %v5037 = vpack.c.b16 %v3765, %v3761
  %v5038 = vpack.c.b16 %v3766, %v3762
  %v5039 = vpack.c.b16 %v3767, %v3763
  %v5040 = vpack.c.b16 %v3772, %v3768
  %v5041 = vpack.c.b16 %v3773, %v3769
  %v5042 = vpack.c.b16 %v3774, %v3770
  %v5043 = vpack.c.b16 %v3775, %v3771
  %v5044 = vpack.c.b16 %v3780, %v3776
  %v5045 = vpack.c.b16 %v3781, %v3777
  %v5046 = vpack.c.b16 %v3782, %v3778
  %v5047 = vpack.c.b16 %v3783, %v3779
  %v5048 = vpack.c.b16 %v3788, %v3784
  %v5049 = vpack.c.b16 %v3789, %v3785
  %v5050 = vpack.c.b16 %v3790, %v3786
  %v5051 = vpack.c.b16 %v3791, %v3787
  %v5052 = vpack.c.b16 %v3796, %v3792
  %v5053 = vpack.c.b16 %v3797, %v3793
  %v5054 = vpack.c.b16 %v3798, %v3794
  %v5055 = vpack.c.b16 %v3799, %v3795
  %v5056 = vpack.c.b16 %v3804, %v3800
  %v5057 = vpack.c.b16 %v3805, %v3801
  %v5058 = vpack.c.b16 %v3806, %v3802
  %v5059 = vpack.c.b16 %v3807, %v3803
  %v5060 = vpack.c.b16 %v3812, %v3808
  %v5061 = vpack.c.b16 %v3813, %v3809
  %v5062 = vpack.c.b16 %v3814, %v3810
  %v5063 = vpack.c.b16 %v3815, %v3811
  %v5064 = vpack.c.b16 %v3820, %v3816
  %v5065 = vpack.c.b16 %v3821, %v3817
  %v5066 = vpack.c.b16 %v3822, %v3818
  %v5067 = vpack.c.b16 %v3823, %v3819
  %v5068 = vpack.c.b16 %v3828, %v3824
  %v5069 = vpack.c.b16 %v3829, %v3825
  %v5070 = vpack.c.b16 %v3830, %v3826
  %v5071 = vpack.c.b16 %v3831, %v3827
  %v5072 = vpack.c.b16 %v3836, %v3832
  %v5073 = vpack.c.b16 %v3837, %v3833
  %v5074 = vpack.c.b16 %v3838, %v3834
  %v5075 = vpack.c.b16 %v3839, %v3835
  %v5076 = vpack.c.b16 %v3844, %v3840
  %v5077 = vpack.c.b16 %v3845, %v3841
  %v5078 = vpack.c.b16 %v3846, %v3842
  %v5079 = vpack.c.b16 %v3847, %v3843
  %v5080 = vpack.c.b16 %v3852, %v3848
  %v5081 = vpack.c.b16 %v3853, %v3849
  %v5082 = vpack.c.b16 %v3854, %v3850
  %v5083 = vpack.c.b16 %v3855, %v3851
  %v5084 = vpack.c.b16 %v3860, %v3856
  %v5085 = vpack.c.b16 %v3861, %v3857
  %v5086 = vpack.c.b16 %v3862, %v3858
  %v5087 = vpack.c.b16 %v3863, %v3859
  %v5088 = vpack.c.b16 %v3868, %v3864
  %v5089 = vpack.c.b16 %v3869, %v3865
  %v5090 = vpack.c.b16 %v3870, %v3866
  %v5091 = vpack.c.b16 %v3871, %v3867
  %v5092 = vpack.c.b16 %v3876, %v3872
  %v5093 = vpack.c.b16 %v3877, %v3873
  %v5094 = vpack.c.b16 %v3878, %v3874
  %v5095 = vpack.c.b16 %v3879, %v3875
  %v5096 = vpack.c.b16 %v3884, %v3880
  %v5097 = vpack.c.b16 %v3885, %v3881
  %v5098 = vpack.c.b16 %v3886, %v3882
  %v5099 = vpack.c.b16 %v3887, %v3883
  %v5100 = vpack.c.b16 %v3892, %v3888
  %v5101 = vpack.c.b16 %v3893, %v3889
  %v5102 = vpack.c.b16 %v3894, %v3890
  %v5103 = vpack.c.b16 %v3895, %v3891
  %v5104 = vpack.c.b16 %v3900, %v3896
  %v5105 = vpack.c.b16 %v3901, %v3897
  %v5106 = vpack.c.b16 %v3902, %v3898
  %v5107 = vpack.c.b16 %v3903, %v3899
  %v5108 = vpack.c.b16 %v3908, %v3904
  %v5109 = vpack.c.b16 %v3909, %v3905
  %v5110 = vpack.c.b16 %v3910, %v3906
  %v5111 = vpack.c.b16 %v3911, %v3907
  %v5112 = vpack.c.b16 %v3916, %v3912
  %v5113 = vpack.c.b16 %v3917, %v3913
  %v5114 = vpack.c.b16 %v3918, %v3914
  %v5115 = vpack.c.b16 %v3919, %v3915
  %v5116 = vpack.c.b16 %v3924, %v3920
  %v5117 = vpack.c.b16 %v3925, %v3921
  %v5118 = vpack.c.b16 %v3926, %v3922
  %v5119 = vpack.c.b16 %v3927, %v3923
  %v5120 = vpack.c.b16 %v3932, %v3928
  %v5121 = vpack.c.b16 %v3933, %v3929
  %v5122 = vpack.c.b16 %v3934, %v3930
  %v5123 = vpack.c.b16 %v3935, %v3931
  %v5124 = vpack.c.b16 %v3940, %v3936
  %v5125 = vpack.c.b16 %v3941, %v3937
  %v5126 = vpack.c.b16 %v3942, %v3938
  %v5127 = vpack.c.b16 %v3943, %v3939
  %v5128 = vpack.c.b16 %v3948, %v3944
  %v5129 = vpack.c.b16 %v3949, %v3945
  %v5130 = vpack.c.b16 %v3950, %v3946
  %v5131 = vpack.c.b16 %v3951, %v3947
  %v5132 = vpack.c.b16 %v3956, %v3952
  %v5133 = vpack.c.b16 %v3957, %v3953
  %v5134 = vpack.c.b16 %v3958, %v3954
  %v5135 = vpack.c.b16 %v3959, %v3955
  %v5136 = vpack.c.b16 %v3964, %v3960
  %v5137 = vpack.c.b16 %v3965, %v3961
  %v5138 = vpack.c.b16 %v3966, %v3962
  %v5139 = vpack.c.b16 %v3967, %v3963
  %v5140 = vpack.c.b16 %v3972, %v3968
  %v5141 = vpack.c.b16 %v3973, %v3969
  %v5142 = vpack.c.b16 %v3974, %v3970
  %v5143 = vpack.c.b16 %v3975, %v3971
  %v5144 = vpack.c.b16 %v3980, %v3976
  %v5145 = vpack.c.b16 %v3981, %v3977
  %v5146 = vpack.c.b16 %v3982, %v3978
  %v5147 = vpack.c.b16 %v3983, %v3979
  %v5148 = vpack.c.b16 %v3988, %v3984
  %v5149 = vpack.c.b16 %v3989, %v3985
  %v5150 = vpack.c.b16 %v3990, %v3986
  %v5151 = vpack.c.b16 %v3991, %v3987
  %v5152 = vpack.c.b16 %v3996, %v3992
  %v5153 = vpack.c.b16 %v3997, %v3993
  %v5154 = vpack.c.b16 %v3998, %v3994
  %v5155 = vpack.c.b16 %v3999, %v3995
  %v5156 = vpack.c.b16 %v4004, %v4000
  %v5157 = vpack.c.b16 %v4005, %v4001
  %v5158 = vpack.c.b16 %v4006, %v4002
  %v5159 = vpack.c.b16 %v4007, %v4003
  %v5160 = vpack.c.b16 %v4012, %v4008
  %v5161 = vpack.c.b16 %v4013, %v4009
  %v5162 = vpack.c.b16 %v4014, %v4010
  %v5163 = vpack.c.b16 %v4015, %v4011
  %v5164 = vpack.c.b16 %v4020, %v4016
  %v5165 = vpack.c.b16 %v4021, %v4017
  %v5166 = vpack.c.b16 %v4022, %v4018
  %v5167 = vpack.c.b16 %v4023, %v4019
  %v5168 = vpack.c.b16 %v4028, %v4024
  %v5169 = vpack.c.b16 %v4029, %v4025
  %v5170 = vpack.c.b16 %v4030, %v4026
  %v5171 = vpack.c.b16 %v4031, %v4027
  %v5172 = vpack.c.b16 %v4036, %v4032
  %v5173 = vpack.c.b16 %v4037, %v4033
  %v5174 = vpack.c.b16 %v4038, %v4034
  %v5175 = vpack.c.b16 %v4039, %v4035
  %v5176 = vpack.c.b16 %v4044, %v4040
  %v5177 = vpack.c.b16 %v4045, %v4041
  %v5178 = vpack.c.b16 %v4046, %v4042
  %v5179 = vpack.c.b16 %v4047, %v4043
  %v5180 = vpack.c.b16 %v4052, %v4048
  %v5181 = vpack.c.b16 %v4053, %v4049
  %v5182 = vpack.c.b16 %v4054, %v4050
  %v5183 = vpack.c.b16 %v4055, %v4051
  %v5184 = vpack.c.b16 %v4060, %v4056
  %v5185 = vpack.c.b16 %v4061, %v4057
  %v5186 = vpack.c.b16 %v4062, %v4058
  %v5187 = vpack.c.b16 %v4063, %v4059
  %v5188 = vpack.c.b16 %v4068, %v4064
  %v5189 = vpack.c.b16 %v4069, %v4065
  %v5190 = vpack.c.b16 %v4070, %v4066
  %v5191 = vpack.c.b16 %v4071, %v4067
  %v5192 = vpack.c.b16 %v4076, %v4072
  %v5193 = vpack.c.b16 %v4077, %v4073
  %v5194 = vpack.c.b16 %v4078, %v4074
  %v5195 = vpack.c.b16 %v4079, %v4075
  %v5196 = vpack.c.b16 %v4084, %v4080
  %v5197 = vpack.c.b16 %v4085, %v4081
  %v5198 = vpack.c.b16 %v4086, %v4082
  %v5199 = vpack.c.b16 %v4087, %v4083
  %v5200 = vpack.c.b16 %v4092, %v4088
  %v5201 = vpack.c.b16 %v4093, %v4089
  %v5202 = vpack.c.b16 %v4094, %v4090
  %v5203 = vpack.c.b16 %v4095, %v4091
  %v5204 = vpack.c.b16 %v4100, %v4096
  %v5205 = vpack.c.b16 %v4101, %v4097
  %v5206 = vpack.c.b16 %v4102, %v4098
  %v5207 = vpack.c.b16 %v4103, %v4099
  %v5208 = vpack.c.b16 %v4108, %v4104
  %v5209 = vpack.c.b16 %v4109, %v4105
  %v5210 = vpack.c.b16 %v4110, %v4106
  %v5211 = vpack.c.b16 %v4111, %v4107
  %v5212 = vpack.c.b16 %v4116, %v4112
  %v5213 = vpack.c.b16 %v4117, %v4113
  %v5214 = vpack.c.b16 %v4118, %v4114
  %v5215 = vpack.c.b16 %v4119, %v4115
  %v5216 = vpack.c.b16 %v4124, %v4120
  %v5217 = vpack.c.b16 %v4125, %v4121
  %v5218 = vpack.c.b16 %v4126, %v4122
  %v5219 = vpack.c.b16 %v4127, %v4123
  %v5220 = vpack.c.b16 %v4132, %v4128
  %v5221 = vpack.c.b16 %v4133, %v4129
  %v5222 = vpack.c.b16 %v4134, %v4130
  %v5223 = vpack.c.b16 %v4135, %v4131
  %v5224 = vpack.c.b16 %v4140, %v4136
  %v5225 = vpack.c.b16 %v4141, %v4137
  %v5226 = vpack.c.b16 %v4142, %v4138
  %v5227 = vpack.c.b16 %v4143, %v4139
  %v5228 = vpack.c.b16 %v4148, %v4144
  %v5229 = vpack.c.b16 %v4149, %v4145
  %v5230 = vpack.c.b16 %v4150, %v4146
  %v5231 = vpack.c.b16 %v4151, %v4147
  %v5232 = vpack.c.b16 %v4156, %v4152
  %v5233 = vpack.c.b16 %v4157, %v4153
  %v5234 = vpack.c.b16 %v4158, %v4154
  %v5235 = vpack.c.b16 %v4159, %v4155
  %v5236 = vpack.c.b16 %v4164, %v4160
  %v5237 = vpack.c.b16 %v4165, %v4161
  %v5238 = vpack.c.b16 %v4166, %v4162
  %v5239 = vpack.c.b16 %v4167, %v4163
  %v5240 = vpack.c.b16 %v4172, %v4168
  %v5241 = vpack.c.b16 %v4173, %v4169
  %v5242 = vpack.c.b16 %v4174, %v4170
  %v5243 = vpack.c.b16 %v4175, %v4171
  %v5244 = vpack.c.b16 %v4180, %v4176
  %v5245 = vpack.c.b16 %v4181, %v4177
  %v5246 = vpack.c.b16 %v4182, %v4178
  %v5247 = vpack.c.b16 %v4183, %v4179
  %v5248 = vpack.c.b16 %v4188, %v4184
  %v5249 = vpack.c.b16 %v4189, %v4185
  %v5250 = vpack.c.b16 %v4190, %v4186
  %v5251 = vpack.c.b16 %v4191, %v4187
  %v5252 = vpack.c.b16 %v4196, %v4192
  %v5253 = vpack.c.b16 %v4197, %v4193
  %v5254 = vpack.c.b16 %v4198, %v4194
  %v5255 = vpack.c.b16 %v4199, %v4195
  %v5256 = vpack.c.b16 %v4204, %v4200
  %v5257 = vpack.c.b16 %v4205, %v4201
  %v5258 = vpack.c.b16 %v4206, %v4202
  %v5259 = vpack.c.b16 %v4207, %v4203
  %v5260 = vpack.c.b16 %v4212, %v4208
  %v5261 = vpack.c.b16 %v4213, %v4209
  %v5262 = vpack.c.b16 %v4214, %v4210
  %v5263 = vpack.c.b16 %v4215, %v4211
  %v5264 = vpack.c.b16 %v4220, %v4216
  %v5265 = vpack.c.b16 %v4221, %v4217
  %v5266 = vpack.c.b16 %v4222, %v4218
  %v5267 = vpack.c.b16 %v4223, %v4219
  %v5268 = vpack.c.b16 %v4228, %v4224
  %v5269 = vpack.c.b16 %v4229, %v4225
  %v5270 = vpack.c.b16 %v4230, %v4226
  %v5271 = vpack.c.b16 %v4231, %v4227
  %v5272 = vpack.c.b16 %v4236, %v4232
  %v5273 = vpack.c.b16 %v4237, %v4233
  %v5274 = vpack.c.b16 %v4238, %v4234
  %v5275 = vpack.c.b16 %v4239, %v4235
  %v5276 = vpack.c.b16 %v4244, %v4240
  %v5277 = vpack.c.b16 %v4245, %v4241
  %v5278 = vpack.c.b16 %v4246, %v4242
  %v5279 = vpack.c.b16 %v4247, %v4243
  %v5280 = vpack.c.b16 %v4252, %v4248
  %v5281 = vpack.c.b16 %v4253, %v4249
  %v5282 = vpack.c.b16 %v4254, %v4250
  %v5283 = vpack.c.b16 %v4255, %v4251
  %v5284 = vpack.c.b16 %v4260, %v4256
  %v5285 = vpack.c.b16 %v4261, %v4257
  %v5286 = vpack.c.b16 %v4262, %v4258
  %v5287 = vpack.c.b16 %v4263, %v4259
  %6312 = vmatpush.bf16.msra.mxu0 %v4292
  %6313 = vmatpush.bf16.msra.mxu0 %v4288
  %6314 = vmatpush.bf16.msra.mxu0 %v4284
  %6315 = vmatpush.bf16.msra.mxu0 %v4280
  %6316 = vmatpush.bf16.msra.mxu0 %v4276
  %6317 = vmatpush.bf16.msra.mxu0 %v4272
  %6318 = vmatpush.bf16.msra.mxu0 %v4268
  %6319 = vmatpush.bf16.msra.mxu0 %v4264
  %6320 = vmatmul.bf16.gmra.mxu0 %v1128
  %v6321 = vpop.f32.mrf.mxu0
  %v6322 = vadd.f32 %v1072, %v6321
  %v6323 = vpop.f32.mrf.mxu0
  %6324 = vdwg.mxu0
  %6325 = vmatpush.bf16.msra.mxu0 %v4324
  %6326 = vmatpush.bf16.msra.mxu0 %v4320
  %6327 = vmatpush.bf16.msra.mxu0 %v4316
  %6328 = vmatpush.bf16.msra.mxu0 %v4312
  %6329 = vmatpush.bf16.msra.mxu0 %v4308
  %6330 = vmatpush.bf16.msra.mxu0 %v4304
  %6331 = vmatpush.bf16.msra.mxu0 %v4300
  %6332 = vmatpush.bf16.msra.mxu0 %v4296
  %6333 = vmatmul.bf16.gmra.mxu0 %v1129
  %v6334 = vpop.f32.mrf.mxu0
  %v6335 = vadd.f32 %v6322, %v6334
  %v6336 = vpop.f32.mrf.mxu0
  %6337 = vdwg.mxu0
  %6338 = vmatpush.bf16.msra.mxu0 %v4356
  %6339 = vmatpush.bf16.msra.mxu0 %v4352
  %6340 = vmatpush.bf16.msra.mxu0 %v4348
  %6341 = vmatpush.bf16.msra.mxu0 %v4344
  %6342 = vmatpush.bf16.msra.mxu0 %v4340
  %6343 = vmatpush.bf16.msra.mxu0 %v4336
  %6344 = vmatpush.bf16.msra.mxu0 %v4332
  %6345 = vmatpush.bf16.msra.mxu0 %v4328
  %6346 = vmatmul.bf16.gmra.mxu0 %v1130
  %v6347 = vpop.f32.mrf.mxu0
  %v6348 = vadd.f32 %v6335, %v6347
  %v6349 = vpop.f32.mrf.mxu0
  %6350 = vdwg.mxu0
  %6351 = vmatpush.bf16.msra.mxu0 %v4388
  %6352 = vmatpush.bf16.msra.mxu0 %v4384
  %6353 = vmatpush.bf16.msra.mxu0 %v4380
  %6354 = vmatpush.bf16.msra.mxu0 %v4376
  %6355 = vmatpush.bf16.msra.mxu0 %v4372
  %6356 = vmatpush.bf16.msra.mxu0 %v4368
  %6357 = vmatpush.bf16.msra.mxu0 %v4364
  %6358 = vmatpush.bf16.msra.mxu0 %v4360
  %6359 = vmatmul.bf16.gmra.mxu0 %v1131
  %v6360 = vpop.f32.mrf.mxu0
  %v6361 = vadd.f32 %v6348, %v6360
  %v6362 = vpop.f32.mrf.mxu0
  %6363 = vdwg.mxu0
  %6364 = vmatpush.bf16.msra.mxu0 %v4420
  %6365 = vmatpush.bf16.msra.mxu0 %v4416
  %6366 = vmatpush.bf16.msra.mxu0 %v4412
  %6367 = vmatpush.bf16.msra.mxu0 %v4408
  %6368 = vmatpush.bf16.msra.mxu0 %v4404
  %6369 = vmatpush.bf16.msra.mxu0 %v4400
  %6370 = vmatpush.bf16.msra.mxu0 %v4396
  %6371 = vmatpush.bf16.msra.mxu0 %v4392
  %6372 = vmatmul.bf16.gmra.mxu0 %v1132
  %v6373 = vpop.f32.mrf.mxu0
  %v6374 = vadd.f32 %v6361, %v6373
  %v6375 = vpop.f32.mrf.mxu0
  %6376 = vdwg.mxu0
  %6377 = vmatpush.bf16.msra.mxu0 %v4452
  %6378 = vmatpush.bf16.msra.mxu0 %v4448
  %6379 = vmatpush.bf16.msra.mxu0 %v4444
  %6380 = vmatpush.bf16.msra.mxu0 %v4440
  %6381 = vmatpush.bf16.msra.mxu0 %v4436
  %6382 = vmatpush.bf16.msra.mxu0 %v4432
  %6383 = vmatpush.bf16.msra.mxu0 %v4428
  %6384 = vmatpush.bf16.msra.mxu0 %v4424
  %6385 = vmatmul.bf16.gmra.mxu0 %v1133
  %v6386 = vpop.f32.mrf.mxu0
  %v6387 = vadd.f32 %v6374, %v6386
  %v6388 = vpop.f32.mrf.mxu0
  %6389 = vdwg.mxu0
  %6390 = vmatpush.bf16.msra.mxu0 %v4484
  %6391 = vmatpush.bf16.msra.mxu0 %v4480
  %6392 = vmatpush.bf16.msra.mxu0 %v4476
  %6393 = vmatpush.bf16.msra.mxu0 %v4472
  %6394 = vmatpush.bf16.msra.mxu0 %v4468
  %6395 = vmatpush.bf16.msra.mxu0 %v4464
  %6396 = vmatpush.bf16.msra.mxu0 %v4460
  %6397 = vmatpush.bf16.msra.mxu0 %v4456
  %6398 = vmatmul.bf16.gmra.mxu0 %v1134
  %v6399 = vpop.f32.mrf.mxu0
  %v6400 = vadd.f32 %v6387, %v6399
  %v6401 = vpop.f32.mrf.mxu0
  %6402 = vdwg.mxu0
  %6403 = vmatpush.bf16.msra.mxu0 %v4516
  %6404 = vmatpush.bf16.msra.mxu0 %v4512
  %6405 = vmatpush.bf16.msra.mxu0 %v4508
  %6406 = vmatpush.bf16.msra.mxu0 %v4504
  %6407 = vmatpush.bf16.msra.mxu0 %v4500
  %6408 = vmatpush.bf16.msra.mxu0 %v4496
  %6409 = vmatpush.bf16.msra.mxu0 %v4492
  %6410 = vmatpush.bf16.msra.mxu0 %v4488
  %6411 = vmatmul.bf16.gmra.mxu0 %v1135
  %v6412 = vpop.f32.mrf.mxu0
  %v6413 = vadd.f32 %v6400, %v6412
  %v6414 = vpop.f32.mrf.mxu0
  %6415 = vdwg.mxu0
  %6416 = vmatpush.bf16.msra.mxu0 %v4548
  %6417 = vmatpush.bf16.msra.mxu0 %v4544
  %6418 = vmatpush.bf16.msra.mxu0 %v4540
  %6419 = vmatpush.bf16.msra.mxu0 %v4536
  %6420 = vmatpush.bf16.msra.mxu0 %v4532
  %6421 = vmatpush.bf16.msra.mxu0 %v4528
  %6422 = vmatpush.bf16.msra.mxu0 %v4524
  %6423 = vmatpush.bf16.msra.mxu0 %v4520
  %6424 = vmatmul.bf16.gmra.mxu0 %v1136
  %v6425 = vpop.f32.mrf.mxu0
  %v6426 = vadd.f32 %v6413, %v6425
  %v6427 = vpop.f32.mrf.mxu0
  %6428 = vdwg.mxu0
  %6429 = vmatpush.bf16.msra.mxu0 %v4580
  %6430 = vmatpush.bf16.msra.mxu0 %v4576
  %6431 = vmatpush.bf16.msra.mxu0 %v4572
  %6432 = vmatpush.bf16.msra.mxu0 %v4568
  %6433 = vmatpush.bf16.msra.mxu0 %v4564
  %6434 = vmatpush.bf16.msra.mxu0 %v4560
  %6435 = vmatpush.bf16.msra.mxu0 %v4556
  %6436 = vmatpush.bf16.msra.mxu0 %v4552
  %6437 = vmatmul.bf16.gmra.mxu0 %v1137
  %v6438 = vpop.f32.mrf.mxu0
  %v6439 = vadd.f32 %v6426, %v6438
  %v6440 = vpop.f32.mrf.mxu0
  %6441 = vdwg.mxu0
  %6442 = vmatpush.bf16.msra.mxu0 %v4612
  %6443 = vmatpush.bf16.msra.mxu0 %v4608
  %6444 = vmatpush.bf16.msra.mxu0 %v4604
  %6445 = vmatpush.bf16.msra.mxu0 %v4600
  %6446 = vmatpush.bf16.msra.mxu0 %v4596
  %6447 = vmatpush.bf16.msra.mxu0 %v4592
  %6448 = vmatpush.bf16.msra.mxu0 %v4588
  %6449 = vmatpush.bf16.msra.mxu0 %v4584
  %6450 = vmatmul.bf16.gmra.mxu0 %v1138
  %v6451 = vpop.f32.mrf.mxu0
  %v6452 = vadd.f32 %v6439, %v6451
  %v6453 = vpop.f32.mrf.mxu0
  %6454 = vdwg.mxu0
  %6455 = vmatpush.bf16.msra.mxu0 %v4644
  %6456 = vmatpush.bf16.msra.mxu0 %v4640
  %6457 = vmatpush.bf16.msra.mxu0 %v4636
  %6458 = vmatpush.bf16.msra.mxu0 %v4632
  %6459 = vmatpush.bf16.msra.mxu0 %v4628
  %6460 = vmatpush.bf16.msra.mxu0 %v4624
  %6461 = vmatpush.bf16.msra.mxu0 %v4620
  %6462 = vmatpush.bf16.msra.mxu0 %v4616
  %6463 = vmatmul.bf16.gmra.mxu0 %v1139
  %v6464 = vpop.f32.mrf.mxu0
  %v6465 = vadd.f32 %v6452, %v6464
  %v6466 = vpop.f32.mrf.mxu0
  %6467 = vdwg.mxu0
  %6468 = vmatpush.bf16.msra.mxu0 %v4676
  %6469 = vmatpush.bf16.msra.mxu0 %v4672
  %6470 = vmatpush.bf16.msra.mxu0 %v4668
  %6471 = vmatpush.bf16.msra.mxu0 %v4664
  %6472 = vmatpush.bf16.msra.mxu0 %v4660
  %6473 = vmatpush.bf16.msra.mxu0 %v4656
  %6474 = vmatpush.bf16.msra.mxu0 %v4652
  %6475 = vmatpush.bf16.msra.mxu0 %v4648
  %6476 = vmatmul.bf16.gmra.mxu0 %v1140
  %v6477 = vpop.f32.mrf.mxu0
  %v6478 = vadd.f32 %v6465, %v6477
  %v6479 = vpop.f32.mrf.mxu0
  %6480 = vdwg.mxu0
  %6481 = vmatpush.bf16.msra.mxu0 %v4708
  %6482 = vmatpush.bf16.msra.mxu0 %v4704
  %6483 = vmatpush.bf16.msra.mxu0 %v4700
  %6484 = vmatpush.bf16.msra.mxu0 %v4696
  %6485 = vmatpush.bf16.msra.mxu0 %v4692
  %6486 = vmatpush.bf16.msra.mxu0 %v4688
  %6487 = vmatpush.bf16.msra.mxu0 %v4684
  %6488 = vmatpush.bf16.msra.mxu0 %v4680
  %6489 = vmatmul.bf16.gmra.mxu0 %v1141
  %v6490 = vpop.f32.mrf.mxu0
  %v6491 = vadd.f32 %v6478, %v6490
  %v6492 = vpop.f32.mrf.mxu0
  %6493 = vdwg.mxu0
  %6494 = vmatpush.bf16.msra.mxu0 %v4740
  %6495 = vmatpush.bf16.msra.mxu0 %v4736
  %6496 = vmatpush.bf16.msra.mxu0 %v4732
  %6497 = vmatpush.bf16.msra.mxu0 %v4728
  %6498 = vmatpush.bf16.msra.mxu0 %v4724
  %6499 = vmatpush.bf16.msra.mxu0 %v4720
  %6500 = vmatpush.bf16.msra.mxu0 %v4716
  %6501 = vmatpush.bf16.msra.mxu0 %v4712
  %6502 = vmatmul.bf16.gmra.mxu0 %v1142
  %v6503 = vpop.f32.mrf.mxu0
  %v6504 = vadd.f32 %v6491, %v6503
  %v6505 = vpop.f32.mrf.mxu0
  %6506 = vdwg.mxu0
  %6507 = vmatpush.bf16.msra.mxu0 %v4772
  %6508 = vmatpush.bf16.msra.mxu0 %v4768
  %6509 = vmatpush.bf16.msra.mxu0 %v4764
  %6510 = vmatpush.bf16.msra.mxu0 %v4760
  %6511 = vmatpush.bf16.msra.mxu0 %v4756
  %6512 = vmatpush.bf16.msra.mxu0 %v4752
  %6513 = vmatpush.bf16.msra.mxu0 %v4748
  %6514 = vmatpush.bf16.msra.mxu0 %v4744
  %6515 = vmatmul.bf16.gmra.mxu0 %v1143
  %v6516 = vpop.f32.mrf.mxu0
  %v6517 = vadd.f32 %v6504, %v6516
  %v6518 = vpop.f32.mrf.mxu0
  %6519 = vdwg.mxu0
  %6520 = vmatpush.bf16.msra.mxu0 %v4804
  %6521 = vmatpush.bf16.msra.mxu0 %v4800
  %6522 = vmatpush.bf16.msra.mxu0 %v4796
  %6523 = vmatpush.bf16.msra.mxu0 %v4792
  %6524 = vmatpush.bf16.msra.mxu0 %v4788
  %6525 = vmatpush.bf16.msra.mxu0 %v4784
  %6526 = vmatpush.bf16.msra.mxu0 %v4780
  %6527 = vmatpush.bf16.msra.mxu0 %v4776
  %6528 = vmatmul.bf16.gmra.mxu0 %v1144
  %v6529 = vpop.f32.mrf.mxu0
  %v6530 = vadd.f32 %v6517, %v6529
  %v6531 = vpop.f32.mrf.mxu0
  %6532 = vdwg.mxu0
  %6533 = vmatpush.bf16.msra.mxu0 %v4836
  %6534 = vmatpush.bf16.msra.mxu0 %v4832
  %6535 = vmatpush.bf16.msra.mxu0 %v4828
  %6536 = vmatpush.bf16.msra.mxu0 %v4824
  %6537 = vmatpush.bf16.msra.mxu0 %v4820
  %6538 = vmatpush.bf16.msra.mxu0 %v4816
  %6539 = vmatpush.bf16.msra.mxu0 %v4812
  %6540 = vmatpush.bf16.msra.mxu0 %v4808
  %6541 = vmatmul.bf16.gmra.mxu0 %v1145
  %v6542 = vpop.f32.mrf.mxu0
  %v6543 = vadd.f32 %v6530, %v6542
  %v6544 = vpop.f32.mrf.mxu0
  %6545 = vdwg.mxu0
  %6546 = vmatpush.bf16.msra.mxu0 %v4868
  %6547 = vmatpush.bf16.msra.mxu0 %v4864
  %6548 = vmatpush.bf16.msra.mxu0 %v4860
  %6549 = vmatpush.bf16.msra.mxu0 %v4856
  %6550 = vmatpush.bf16.msra.mxu0 %v4852
  %6551 = vmatpush.bf16.msra.mxu0 %v4848
  %6552 = vmatpush.bf16.msra.mxu0 %v4844
  %6553 = vmatpush.bf16.msra.mxu0 %v4840
  %6554 = vmatmul.bf16.gmra.mxu0 %v1146
  %v6555 = vpop.f32.mrf.mxu0
  %v6556 = vadd.f32 %v6543, %v6555
  %v6557 = vpop.f32.mrf.mxu0
  %6558 = vdwg.mxu0
  %6559 = vmatpush.bf16.msra.mxu0 %v4900
  %6560 = vmatpush.bf16.msra.mxu0 %v4896
  %6561 = vmatpush.bf16.msra.mxu0 %v4892
  %6562 = vmatpush.bf16.msra.mxu0 %v4888
  %6563 = vmatpush.bf16.msra.mxu0 %v4884
  %6564 = vmatpush.bf16.msra.mxu0 %v4880
  %6565 = vmatpush.bf16.msra.mxu0 %v4876
  %6566 = vmatpush.bf16.msra.mxu0 %v4872
  %6567 = vmatmul.bf16.gmra.mxu0 %v1147
  %v6568 = vpop.f32.mrf.mxu0
  %v6569 = vadd.f32 %v6556, %v6568
  %v6570 = vpop.f32.mrf.mxu0
  %6571 = vdwg.mxu0
  %6572 = vmatpush.bf16.msra.mxu0 %v4932
  %6573 = vmatpush.bf16.msra.mxu0 %v4928
  %6574 = vmatpush.bf16.msra.mxu0 %v4924
  %6575 = vmatpush.bf16.msra.mxu0 %v4920
  %6576 = vmatpush.bf16.msra.mxu0 %v4916
  %6577 = vmatpush.bf16.msra.mxu0 %v4912
  %6578 = vmatpush.bf16.msra.mxu0 %v4908
  %6579 = vmatpush.bf16.msra.mxu0 %v4904
  %6580 = vmatmul.bf16.gmra.mxu0 %v1148
  %v6581 = vpop.f32.mrf.mxu0
  %v6582 = vadd.f32 %v6569, %v6581
  %v6583 = vpop.f32.mrf.mxu0
  %6584 = vdwg.mxu0
  %6585 = vmatpush.bf16.msra.mxu0 %v4964
  %6586 = vmatpush.bf16.msra.mxu0 %v4960
  %6587 = vmatpush.bf16.msra.mxu0 %v4956
  %6588 = vmatpush.bf16.msra.mxu0 %v4952
  %6589 = vmatpush.bf16.msra.mxu0 %v4948
  %6590 = vmatpush.bf16.msra.mxu0 %v4944
  %6591 = vmatpush.bf16.msra.mxu0 %v4940
  %6592 = vmatpush.bf16.msra.mxu0 %v4936
  %6593 = vmatmul.bf16.gmra.mxu0 %v1149
  %v6594 = vpop.f32.mrf.mxu0
  %v6595 = vadd.f32 %v6582, %v6594
  %v6596 = vpop.f32.mrf.mxu0
  %6597 = vdwg.mxu0
  %6598 = vmatpush.bf16.msra.mxu0 %v4996
  %6599 = vmatpush.bf16.msra.mxu0 %v4992
  %6600 = vmatpush.bf16.msra.mxu0 %v4988
  %6601 = vmatpush.bf16.msra.mxu0 %v4984
  %6602 = vmatpush.bf16.msra.mxu0 %v4980
  %6603 = vmatpush.bf16.msra.mxu0 %v4976
  %6604 = vmatpush.bf16.msra.mxu0 %v4972
  %6605 = vmatpush.bf16.msra.mxu0 %v4968
  %6606 = vmatmul.bf16.gmra.mxu0 %v1150
  %v6607 = vpop.f32.mrf.mxu0
  %v6608 = vadd.f32 %v6595, %v6607
  %v6609 = vpop.f32.mrf.mxu0
  %6610 = vdwg.mxu0
  %6611 = vmatpush.bf16.msra.mxu0 %v5028
  %6612 = vmatpush.bf16.msra.mxu0 %v5024
  %6613 = vmatpush.bf16.msra.mxu0 %v5020
  %6614 = vmatpush.bf16.msra.mxu0 %v5016
  %6615 = vmatpush.bf16.msra.mxu0 %v5012
  %6616 = vmatpush.bf16.msra.mxu0 %v5008
  %6617 = vmatpush.bf16.msra.mxu0 %v5004
  %6618 = vmatpush.bf16.msra.mxu0 %v5000
  %6619 = vmatmul.bf16.gmra.mxu0 %v1151
  %v6620 = vpop.f32.mrf.mxu0
  %v6621 = vadd.f32 %v6608, %v6620
  %v6622 = vpop.f32.mrf.mxu0
  %6623 = vdwg.mxu0
  %6624 = vmatpush.bf16.msra.mxu0 %v5060
  %6625 = vmatpush.bf16.msra.mxu0 %v5056
  %6626 = vmatpush.bf16.msra.mxu0 %v5052
  %6627 = vmatpush.bf16.msra.mxu0 %v5048
  %6628 = vmatpush.bf16.msra.mxu0 %v5044
  %6629 = vmatpush.bf16.msra.mxu0 %v5040
  %6630 = vmatpush.bf16.msra.mxu0 %v5036
  %6631 = vmatpush.bf16.msra.mxu0 %v5032
  %6632 = vmatmul.bf16.gmra.mxu0 %v1152
  %v6633 = vpop.f32.mrf.mxu0
  %v6634 = vadd.f32 %v6621, %v6633
  %v6635 = vpop.f32.mrf.mxu0
  %6636 = vdwg.mxu0
  %6637 = vmatpush.bf16.msra.mxu0 %v5092
  %6638 = vmatpush.bf16.msra.mxu0 %v5088
  %6639 = vmatpush.bf16.msra.mxu0 %v5084
  %6640 = vmatpush.bf16.msra.mxu0 %v5080
  %6641 = vmatpush.bf16.msra.mxu0 %v5076
  %6642 = vmatpush.bf16.msra.mxu0 %v5072
  %6643 = vmatpush.bf16.msra.mxu0 %v5068
  %6644 = vmatpush.bf16.msra.mxu0 %v5064
  %6645 = vmatmul.bf16.gmra.mxu0 %v1153
  %v6646 = vpop.f32.mrf.mxu0
  %v6647 = vadd.f32 %v6634, %v6646
  %v6648 = vpop.f32.mrf.mxu0
  %6649 = vdwg.mxu0
  %6650 = vmatpush.bf16.msra.mxu0 %v5124
  %6651 = vmatpush.bf16.msra.mxu0 %v5120
  %6652 = vmatpush.bf16.msra.mxu0 %v5116
  %6653 = vmatpush.bf16.msra.mxu0 %v5112
  %6654 = vmatpush.bf16.msra.mxu0 %v5108
  %6655 = vmatpush.bf16.msra.mxu0 %v5104
  %6656 = vmatpush.bf16.msra.mxu0 %v5100
  %6657 = vmatpush.bf16.msra.mxu0 %v5096
  %6658 = vmatmul.bf16.gmra.mxu0 %v1154
  %v6659 = vpop.f32.mrf.mxu0
  %v6660 = vadd.f32 %v6647, %v6659
  %v6661 = vpop.f32.mrf.mxu0
  %6662 = vdwg.mxu0
  %6663 = vmatpush.bf16.msra.mxu0 %v5156
  %6664 = vmatpush.bf16.msra.mxu0 %v5152
  %6665 = vmatpush.bf16.msra.mxu0 %v5148
  %6666 = vmatpush.bf16.msra.mxu0 %v5144
  %6667 = vmatpush.bf16.msra.mxu0 %v5140
  %6668 = vmatpush.bf16.msra.mxu0 %v5136
  %6669 = vmatpush.bf16.msra.mxu0 %v5132
  %6670 = vmatpush.bf16.msra.mxu0 %v5128
  %6671 = vmatmul.bf16.gmra.mxu0 %v1155
  %v6672 = vpop.f32.mrf.mxu0
  %v6673 = vadd.f32 %v6660, %v6672
  %v6674 = vpop.f32.mrf.mxu0
  %6675 = vdwg.mxu0
  %6676 = vmatpush.bf16.msra.mxu0 %v5188
  %6677 = vmatpush.bf16.msra.mxu0 %v5184
  %6678 = vmatpush.bf16.msra.mxu0 %v5180
  %6679 = vmatpush.bf16.msra.mxu0 %v5176
  %6680 = vmatpush.bf16.msra.mxu0 %v5172
  %6681 = vmatpush.bf16.msra.mxu0 %v5168
  %6682 = vmatpush.bf16.msra.mxu0 %v5164
  %6683 = vmatpush.bf16.msra.mxu0 %v5160
  %6684 = vmatmul.bf16.gmra.mxu0 %v1156
  %v6685 = vpop.f32.mrf.mxu0
  %v6686 = vadd.f32 %v6673, %v6685
  %v6687 = vpop.f32.mrf.mxu0
  %6688 = vdwg.mxu0
  %6689 = vmatpush.bf16.msra.mxu0 %v5220
  %6690 = vmatpush.bf16.msra.mxu0 %v5216
  %6691 = vmatpush.bf16.msra.mxu0 %v5212
  %6692 = vmatpush.bf16.msra.mxu0 %v5208
  %6693 = vmatpush.bf16.msra.mxu0 %v5204
  %6694 = vmatpush.bf16.msra.mxu0 %v5200
  %6695 = vmatpush.bf16.msra.mxu0 %v5196
  %6696 = vmatpush.bf16.msra.mxu0 %v5192
  %6697 = vmatmul.bf16.gmra.mxu0 %v1157
  %v6698 = vpop.f32.mrf.mxu0
  %v6699 = vadd.f32 %v6686, %v6698
  %v6700 = vpop.f32.mrf.mxu0
  %6701 = vdwg.mxu0
  %6702 = vmatpush.bf16.msra.mxu0 %v5252
  %6703 = vmatpush.bf16.msra.mxu0 %v5248
  %6704 = vmatpush.bf16.msra.mxu0 %v5244
  %6705 = vmatpush.bf16.msra.mxu0 %v5240
  %6706 = vmatpush.bf16.msra.mxu0 %v5236
  %6707 = vmatpush.bf16.msra.mxu0 %v5232
  %6708 = vmatpush.bf16.msra.mxu0 %v5228
  %6709 = vmatpush.bf16.msra.mxu0 %v5224
  %6710 = vmatmul.bf16.gmra.mxu0 %v1158
  %v6711 = vpop.f32.mrf.mxu0
  %v6712 = vadd.f32 %v6699, %v6711
  %v6713 = vpop.f32.mrf.mxu0
  %6714 = vdwg.mxu0
  %6715 = vmatpush.bf16.msra.mxu0 %v5284
  %6716 = vmatpush.bf16.msra.mxu0 %v5280
  %6717 = vmatpush.bf16.msra.mxu0 %v5276
  %6718 = vmatpush.bf16.msra.mxu0 %v5272
  %6719 = vmatpush.bf16.msra.mxu0 %v5268
  %6720 = vmatpush.bf16.msra.mxu0 %v5264
  %6721 = vmatpush.bf16.msra.mxu0 %v5260
  %6722 = vmatpush.bf16.msra.mxu0 %v5256
  %6723 = vmatmul.bf16.gmra.mxu0 %v1159
  %v6724 = vpop.f32.mrf.mxu0
  %v6725 = vadd.f32 %v6712, %v6724
  %v6726 = vpop.f32.mrf.mxu0
  %6727 = vdwg.mxu0
  %6728 = vmatpush.bf16.msra.mxu0 %v4293
  %6729 = vmatpush.bf16.msra.mxu0 %v4289
  %6730 = vmatpush.bf16.msra.mxu0 %v4285
  %6731 = vmatpush.bf16.msra.mxu0 %v4281
  %6732 = vmatpush.bf16.msra.mxu0 %v4277
  %6733 = vmatpush.bf16.msra.mxu0 %v4273
  %6734 = vmatpush.bf16.msra.mxu0 %v4269
  %6735 = vmatpush.bf16.msra.mxu0 %v4265
  %6736 = vmatmul.bf16.gmra.mxu0 %v1128
  %v6737 = vpop.f32.mrf.mxu0
  %v6738 = vadd.f32 %v1073, %v6737
  %v6739 = vpop.f32.mrf.mxu0
  %6740 = vdwg.mxu0
  %6741 = vmatpush.bf16.msra.mxu0 %v4325
  %6742 = vmatpush.bf16.msra.mxu0 %v4321
  %6743 = vmatpush.bf16.msra.mxu0 %v4317
  %6744 = vmatpush.bf16.msra.mxu0 %v4313
  %6745 = vmatpush.bf16.msra.mxu0 %v4309
  %6746 = vmatpush.bf16.msra.mxu0 %v4305
  %6747 = vmatpush.bf16.msra.mxu0 %v4301
  %6748 = vmatpush.bf16.msra.mxu0 %v4297
  %6749 = vmatmul.bf16.gmra.mxu0 %v1129
  %v6750 = vpop.f32.mrf.mxu0
  %v6751 = vadd.f32 %v6738, %v6750
  %v6752 = vpop.f32.mrf.mxu0
  %6753 = vdwg.mxu0
  %6754 = vmatpush.bf16.msra.mxu0 %v4357
  %6755 = vmatpush.bf16.msra.mxu0 %v4353
  %6756 = vmatpush.bf16.msra.mxu0 %v4349
  %6757 = vmatpush.bf16.msra.mxu0 %v4345
  %6758 = vmatpush.bf16.msra.mxu0 %v4341
  %6759 = vmatpush.bf16.msra.mxu0 %v4337
  %6760 = vmatpush.bf16.msra.mxu0 %v4333
  %6761 = vmatpush.bf16.msra.mxu0 %v4329
  %6762 = vmatmul.bf16.gmra.mxu0 %v1130
  %v6763 = vpop.f32.mrf.mxu0
  %v6764 = vadd.f32 %v6751, %v6763
  %v6765 = vpop.f32.mrf.mxu0
  %6766 = vdwg.mxu0
  %6767 = vmatpush.bf16.msra.mxu0 %v4389
  %6768 = vmatpush.bf16.msra.mxu0 %v4385
  %6769 = vmatpush.bf16.msra.mxu0 %v4381
  %6770 = vmatpush.bf16.msra.mxu0 %v4377
  %6771 = vmatpush.bf16.msra.mxu0 %v4373
  %6772 = vmatpush.bf16.msra.mxu0 %v4369
  %6773 = vmatpush.bf16.msra.mxu0 %v4365
  %6774 = vmatpush.bf16.msra.mxu0 %v4361
  %6775 = vmatmul.bf16.gmra.mxu0 %v1131
  %v6776 = vpop.f32.mrf.mxu0
  %v6777 = vadd.f32 %v6764, %v6776
  %v6778 = vpop.f32.mrf.mxu0
  %6779 = vdwg.mxu0
  %6780 = vmatpush.bf16.msra.mxu0 %v4421
  %6781 = vmatpush.bf16.msra.mxu0 %v4417
  %6782 = vmatpush.bf16.msra.mxu0 %v4413
  %6783 = vmatpush.bf16.msra.mxu0 %v4409
  %6784 = vmatpush.bf16.msra.mxu0 %v4405
  %6785 = vmatpush.bf16.msra.mxu0 %v4401
  %6786 = vmatpush.bf16.msra.mxu0 %v4397
  %6787 = vmatpush.bf16.msra.mxu0 %v4393
  %6788 = vmatmul.bf16.gmra.mxu0 %v1132
  %v6789 = vpop.f32.mrf.mxu0
  %v6790 = vadd.f32 %v6777, %v6789
  %v6791 = vpop.f32.mrf.mxu0
  %6792 = vdwg.mxu0
  %6793 = vmatpush.bf16.msra.mxu0 %v4453
  %6794 = vmatpush.bf16.msra.mxu0 %v4449
  %6795 = vmatpush.bf16.msra.mxu0 %v4445
  %6796 = vmatpush.bf16.msra.mxu0 %v4441
  %6797 = vmatpush.bf16.msra.mxu0 %v4437
  %6798 = vmatpush.bf16.msra.mxu0 %v4433
  %6799 = vmatpush.bf16.msra.mxu0 %v4429
  %6800 = vmatpush.bf16.msra.mxu0 %v4425
  %6801 = vmatmul.bf16.gmra.mxu0 %v1133
  %v6802 = vpop.f32.mrf.mxu0
  %v6803 = vadd.f32 %v6790, %v6802
  %v6804 = vpop.f32.mrf.mxu0
  %6805 = vdwg.mxu0
  %6806 = vmatpush.bf16.msra.mxu0 %v4485
  %6807 = vmatpush.bf16.msra.mxu0 %v4481
  %6808 = vmatpush.bf16.msra.mxu0 %v4477
  %6809 = vmatpush.bf16.msra.mxu0 %v4473
  %6810 = vmatpush.bf16.msra.mxu0 %v4469
  %6811 = vmatpush.bf16.msra.mxu0 %v4465
  %6812 = vmatpush.bf16.msra.mxu0 %v4461
  %6813 = vmatpush.bf16.msra.mxu0 %v4457
  %6814 = vmatmul.bf16.gmra.mxu0 %v1134
  %v6815 = vpop.f32.mrf.mxu0
  %v6816 = vadd.f32 %v6803, %v6815
  %v6817 = vpop.f32.mrf.mxu0
  %6818 = vdwg.mxu0
  %6819 = vmatpush.bf16.msra.mxu0 %v4517
  %6820 = vmatpush.bf16.msra.mxu0 %v4513
  %6821 = vmatpush.bf16.msra.mxu0 %v4509
  %6822 = vmatpush.bf16.msra.mxu0 %v4505
  %6823 = vmatpush.bf16.msra.mxu0 %v4501
  %6824 = vmatpush.bf16.msra.mxu0 %v4497
  %6825 = vmatpush.bf16.msra.mxu0 %v4493
  %6826 = vmatpush.bf16.msra.mxu0 %v4489
  %6827 = vmatmul.bf16.gmra.mxu0 %v1135
  %v6828 = vpop.f32.mrf.mxu0
  %v6829 = vadd.f32 %v6816, %v6828
  %v6830 = vpop.f32.mrf.mxu0
  %6831 = vdwg.mxu0
  %6832 = vmatpush.bf16.msra.mxu0 %v4549
  %6833 = vmatpush.bf16.msra.mxu0 %v4545
  %6834 = vmatpush.bf16.msra.mxu0 %v4541
  %6835 = vmatpush.bf16.msra.mxu0 %v4537
  %6836 = vmatpush.bf16.msra.mxu0 %v4533
  %6837 = vmatpush.bf16.msra.mxu0 %v4529
  %6838 = vmatpush.bf16.msra.mxu0 %v4525
  %6839 = vmatpush.bf16.msra.mxu0 %v4521
  %6840 = vmatmul.bf16.gmra.mxu0 %v1136
  %v6841 = vpop.f32.mrf.mxu0
  %v6842 = vadd.f32 %v6829, %v6841
  %v6843 = vpop.f32.mrf.mxu0
  %6844 = vdwg.mxu0
  %6845 = vmatpush.bf16.msra.mxu0 %v4581
  %6846 = vmatpush.bf16.msra.mxu0 %v4577
  %6847 = vmatpush.bf16.msra.mxu0 %v4573
  %6848 = vmatpush.bf16.msra.mxu0 %v4569
  %6849 = vmatpush.bf16.msra.mxu0 %v4565
  %6850 = vmatpush.bf16.msra.mxu0 %v4561
  %6851 = vmatpush.bf16.msra.mxu0 %v4557
  %6852 = vmatpush.bf16.msra.mxu0 %v4553
  %6853 = vmatmul.bf16.gmra.mxu0 %v1137
  %v6854 = vpop.f32.mrf.mxu0
  %v6855 = vadd.f32 %v6842, %v6854
  %v6856 = vpop.f32.mrf.mxu0
  %6857 = vdwg.mxu0
  %6858 = vmatpush.bf16.msra.mxu0 %v4613
  %6859 = vmatpush.bf16.msra.mxu0 %v4609
  %6860 = vmatpush.bf16.msra.mxu0 %v4605
  %6861 = vmatpush.bf16.msra.mxu0 %v4601
  %6862 = vmatpush.bf16.msra.mxu0 %v4597
  %6863 = vmatpush.bf16.msra.mxu0 %v4593
  %6864 = vmatpush.bf16.msra.mxu0 %v4589
  %6865 = vmatpush.bf16.msra.mxu0 %v4585
  %6866 = vmatmul.bf16.gmra.mxu0 %v1138
  %v6867 = vpop.f32.mrf.mxu0
  %v6868 = vadd.f32 %v6855, %v6867
  %v6869 = vpop.f32.mrf.mxu0
  %6870 = vdwg.mxu0
  %6871 = vmatpush.bf16.msra.mxu0 %v4645
  %6872 = vmatpush.bf16.msra.mxu0 %v4641
  %6873 = vmatpush.bf16.msra.mxu0 %v4637
  %6874 = vmatpush.bf16.msra.mxu0 %v4633
  %6875 = vmatpush.bf16.msra.mxu0 %v4629
  %6876 = vmatpush.bf16.msra.mxu0 %v4625
  %6877 = vmatpush.bf16.msra.mxu0 %v4621
  %6878 = vmatpush.bf16.msra.mxu0 %v4617
  %6879 = vmatmul.bf16.gmra.mxu0 %v1139
  %v6880 = vpop.f32.mrf.mxu0
  %v6881 = vadd.f32 %v6868, %v6880
  %v6882 = vpop.f32.mrf.mxu0
  %6883 = vdwg.mxu0
  %6884 = vmatpush.bf16.msra.mxu0 %v4677
  %6885 = vmatpush.bf16.msra.mxu0 %v4673
  %6886 = vmatpush.bf16.msra.mxu0 %v4669
  %6887 = vmatpush.bf16.msra.mxu0 %v4665
  %6888 = vmatpush.bf16.msra.mxu0 %v4661
  %6889 = vmatpush.bf16.msra.mxu0 %v4657
  %6890 = vmatpush.bf16.msra.mxu0 %v4653
  %6891 = vmatpush.bf16.msra.mxu0 %v4649
  %6892 = vmatmul.bf16.gmra.mxu0 %v1140
  %v6893 = vpop.f32.mrf.mxu0
  %v6894 = vadd.f32 %v6881, %v6893
  %v6895 = vpop.f32.mrf.mxu0
  %6896 = vdwg.mxu0
  %6897 = vmatpush.bf16.msra.mxu0 %v4709
  %6898 = vmatpush.bf16.msra.mxu0 %v4705
  %6899 = vmatpush.bf16.msra.mxu0 %v4701
  %6900 = vmatpush.bf16.msra.mxu0 %v4697
  %6901 = vmatpush.bf16.msra.mxu0 %v4693
  %6902 = vmatpush.bf16.msra.mxu0 %v4689
  %6903 = vmatpush.bf16.msra.mxu0 %v4685
  %6904 = vmatpush.bf16.msra.mxu0 %v4681
  %6905 = vmatmul.bf16.gmra.mxu0 %v1141
  %v6906 = vpop.f32.mrf.mxu0
  %v6907 = vadd.f32 %v6894, %v6906
  %v6908 = vpop.f32.mrf.mxu0
  %6909 = vdwg.mxu0
  %6910 = vmatpush.bf16.msra.mxu0 %v4741
  %6911 = vmatpush.bf16.msra.mxu0 %v4737
  %6912 = vmatpush.bf16.msra.mxu0 %v4733
  %6913 = vmatpush.bf16.msra.mxu0 %v4729
  %6914 = vmatpush.bf16.msra.mxu0 %v4725
  %6915 = vmatpush.bf16.msra.mxu0 %v4721
  %6916 = vmatpush.bf16.msra.mxu0 %v4717
  %6917 = vmatpush.bf16.msra.mxu0 %v4713
  %6918 = vmatmul.bf16.gmra.mxu0 %v1142
  %v6919 = vpop.f32.mrf.mxu0
  %v6920 = vadd.f32 %v6907, %v6919
  %v6921 = vpop.f32.mrf.mxu0
  %6922 = vdwg.mxu0
  %6923 = vmatpush.bf16.msra.mxu0 %v4773
  %6924 = vmatpush.bf16.msra.mxu0 %v4769
  %6925 = vmatpush.bf16.msra.mxu0 %v4765
  %6926 = vmatpush.bf16.msra.mxu0 %v4761
  %6927 = vmatpush.bf16.msra.mxu0 %v4757
  %6928 = vmatpush.bf16.msra.mxu0 %v4753
  %6929 = vmatpush.bf16.msra.mxu0 %v4749
  %6930 = vmatpush.bf16.msra.mxu0 %v4745
  %6931 = vmatmul.bf16.gmra.mxu0 %v1143
  %v6932 = vpop.f32.mrf.mxu0
  %v6933 = vadd.f32 %v6920, %v6932
  %v6934 = vpop.f32.mrf.mxu0
  %6935 = vdwg.mxu0
  %6936 = vmatpush.bf16.msra.mxu0 %v4805
  %6937 = vmatpush.bf16.msra.mxu0 %v4801
  %6938 = vmatpush.bf16.msra.mxu0 %v4797
  %6939 = vmatpush.bf16.msra.mxu0 %v4793
  %6940 = vmatpush.bf16.msra.mxu0 %v4789
  %6941 = vmatpush.bf16.msra.mxu0 %v4785
  %6942 = vmatpush.bf16.msra.mxu0 %v4781
  %6943 = vmatpush.bf16.msra.mxu0 %v4777
  %6944 = vmatmul.bf16.gmra.mxu0 %v1144
  %v6945 = vpop.f32.mrf.mxu0
  %v6946 = vadd.f32 %v6933, %v6945
  %v6947 = vpop.f32.mrf.mxu0
  %6948 = vdwg.mxu0
  %6949 = vmatpush.bf16.msra.mxu0 %v4837
  %6950 = vmatpush.bf16.msra.mxu0 %v4833
  %6951 = vmatpush.bf16.msra.mxu0 %v4829
  %6952 = vmatpush.bf16.msra.mxu0 %v4825
  %6953 = vmatpush.bf16.msra.mxu0 %v4821
  %6954 = vmatpush.bf16.msra.mxu0 %v4817
  %6955 = vmatpush.bf16.msra.mxu0 %v4813
  %6956 = vmatpush.bf16.msra.mxu0 %v4809
  %6957 = vmatmul.bf16.gmra.mxu0 %v1145
  %v6958 = vpop.f32.mrf.mxu0
  %v6959 = vadd.f32 %v6946, %v6958
  %v6960 = vpop.f32.mrf.mxu0
  %6961 = vdwg.mxu0
  %6962 = vmatpush.bf16.msra.mxu0 %v4869
  %6963 = vmatpush.bf16.msra.mxu0 %v4865
  %6964 = vmatpush.bf16.msra.mxu0 %v4861
  %6965 = vmatpush.bf16.msra.mxu0 %v4857
  %6966 = vmatpush.bf16.msra.mxu0 %v4853
  %6967 = vmatpush.bf16.msra.mxu0 %v4849
  %6968 = vmatpush.bf16.msra.mxu0 %v4845
  %6969 = vmatpush.bf16.msra.mxu0 %v4841
  %6970 = vmatmul.bf16.gmra.mxu0 %v1146
  %v6971 = vpop.f32.mrf.mxu0
  %v6972 = vadd.f32 %v6959, %v6971
  %v6973 = vpop.f32.mrf.mxu0
  %6974 = vdwg.mxu0
  %6975 = vmatpush.bf16.msra.mxu0 %v4901
  %6976 = vmatpush.bf16.msra.mxu0 %v4897
  %6977 = vmatpush.bf16.msra.mxu0 %v4893
  %6978 = vmatpush.bf16.msra.mxu0 %v4889
  %6979 = vmatpush.bf16.msra.mxu0 %v4885
  %6980 = vmatpush.bf16.msra.mxu0 %v4881
  %6981 = vmatpush.bf16.msra.mxu0 %v4877
  %6982 = vmatpush.bf16.msra.mxu0 %v4873
  %6983 = vmatmul.bf16.gmra.mxu0 %v1147
  %v6984 = vpop.f32.mrf.mxu0
  %v6985 = vadd.f32 %v6972, %v6984
  %v6986 = vpop.f32.mrf.mxu0
  %6987 = vdwg.mxu0
  %6988 = vmatpush.bf16.msra.mxu0 %v4933
  %6989 = vmatpush.bf16.msra.mxu0 %v4929
  %6990 = vmatpush.bf16.msra.mxu0 %v4925
  %6991 = vmatpush.bf16.msra.mxu0 %v4921
  %6992 = vmatpush.bf16.msra.mxu0 %v4917
  %6993 = vmatpush.bf16.msra.mxu0 %v4913
  %6994 = vmatpush.bf16.msra.mxu0 %v4909
  %6995 = vmatpush.bf16.msra.mxu0 %v4905
  %6996 = vmatmul.bf16.gmra.mxu0 %v1148
  %v6997 = vpop.f32.mrf.mxu0
  %v6998 = vadd.f32 %v6985, %v6997
  %v6999 = vpop.f32.mrf.mxu0
  %7000 = vdwg.mxu0
  %7001 = vmatpush.bf16.msra.mxu0 %v4965
  %7002 = vmatpush.bf16.msra.mxu0 %v4961
  %7003 = vmatpush.bf16.msra.mxu0 %v4957
  %7004 = vmatpush.bf16.msra.mxu0 %v4953
  %7005 = vmatpush.bf16.msra.mxu0 %v4949
  %7006 = vmatpush.bf16.msra.mxu0 %v4945
  %7007 = vmatpush.bf16.msra.mxu0 %v4941
  %7008 = vmatpush.bf16.msra.mxu0 %v4937
  %7009 = vmatmul.bf16.gmra.mxu0 %v1149
  %v7010 = vpop.f32.mrf.mxu0
  %v7011 = vadd.f32 %v6998, %v7010
  %v7012 = vpop.f32.mrf.mxu0
  %7013 = vdwg.mxu0
  %7014 = vmatpush.bf16.msra.mxu0 %v4997
  %7015 = vmatpush.bf16.msra.mxu0 %v4993
  %7016 = vmatpush.bf16.msra.mxu0 %v4989
  %7017 = vmatpush.bf16.msra.mxu0 %v4985
  %7018 = vmatpush.bf16.msra.mxu0 %v4981
  %7019 = vmatpush.bf16.msra.mxu0 %v4977
  %7020 = vmatpush.bf16.msra.mxu0 %v4973
  %7021 = vmatpush.bf16.msra.mxu0 %v4969
  %7022 = vmatmul.bf16.gmra.mxu0 %v1150
  %v7023 = vpop.f32.mrf.mxu0
  %v7024 = vadd.f32 %v7011, %v7023
  %v7025 = vpop.f32.mrf.mxu0
  %7026 = vdwg.mxu0
  %7027 = vmatpush.bf16.msra.mxu0 %v5029
  %7028 = vmatpush.bf16.msra.mxu0 %v5025
  %7029 = vmatpush.bf16.msra.mxu0 %v5021
  %7030 = vmatpush.bf16.msra.mxu0 %v5017
  %7031 = vmatpush.bf16.msra.mxu0 %v5013
  %7032 = vmatpush.bf16.msra.mxu0 %v5009
  %7033 = vmatpush.bf16.msra.mxu0 %v5005
  %7034 = vmatpush.bf16.msra.mxu0 %v5001
  %7035 = vmatmul.bf16.gmra.mxu0 %v1151
  %v7036 = vpop.f32.mrf.mxu0
  %v7037 = vadd.f32 %v7024, %v7036
  %v7038 = vpop.f32.mrf.mxu0
  %7039 = vdwg.mxu0
  %7040 = vmatpush.bf16.msra.mxu0 %v5061
  %7041 = vmatpush.bf16.msra.mxu0 %v5057
  %7042 = vmatpush.bf16.msra.mxu0 %v5053
  %7043 = vmatpush.bf16.msra.mxu0 %v5049
  %7044 = vmatpush.bf16.msra.mxu0 %v5045
  %7045 = vmatpush.bf16.msra.mxu0 %v5041
  %7046 = vmatpush.bf16.msra.mxu0 %v5037
  %7047 = vmatpush.bf16.msra.mxu0 %v5033
  %7048 = vmatmul.bf16.gmra.mxu0 %v1152
  %v7049 = vpop.f32.mrf.mxu0
  %v7050 = vadd.f32 %v7037, %v7049
  %v7051 = vpop.f32.mrf.mxu0
  %7052 = vdwg.mxu0
  %7053 = vmatpush.bf16.msra.mxu0 %v5093
  %7054 = vmatpush.bf16.msra.mxu0 %v5089
  %7055 = vmatpush.bf16.msra.mxu0 %v5085
  %7056 = vmatpush.bf16.msra.mxu0 %v5081
  %7057 = vmatpush.bf16.msra.mxu0 %v5077
  %7058 = vmatpush.bf16.msra.mxu0 %v5073
  %7059 = vmatpush.bf16.msra.mxu0 %v5069
  %7060 = vmatpush.bf16.msra.mxu0 %v5065
  %7061 = vmatmul.bf16.gmra.mxu0 %v1153
  %v7062 = vpop.f32.mrf.mxu0
  %v7063 = vadd.f32 %v7050, %v7062
  %v7064 = vpop.f32.mrf.mxu0
  %7065 = vdwg.mxu0
  %7066 = vmatpush.bf16.msra.mxu0 %v5125
  %7067 = vmatpush.bf16.msra.mxu0 %v5121
  %7068 = vmatpush.bf16.msra.mxu0 %v5117
  %7069 = vmatpush.bf16.msra.mxu0 %v5113
  %7070 = vmatpush.bf16.msra.mxu0 %v5109
  %7071 = vmatpush.bf16.msra.mxu0 %v5105
  %7072 = vmatpush.bf16.msra.mxu0 %v5101
  %7073 = vmatpush.bf16.msra.mxu0 %v5097
  %7074 = vmatmul.bf16.gmra.mxu0 %v1154
  %v7075 = vpop.f32.mrf.mxu0
  %v7076 = vadd.f32 %v7063, %v7075
  %v7077 = vpop.f32.mrf.mxu0
  %7078 = vdwg.mxu0
  %7079 = vmatpush.bf16.msra.mxu0 %v5157
  %7080 = vmatpush.bf16.msra.mxu0 %v5153
  %7081 = vmatpush.bf16.msra.mxu0 %v5149
  %7082 = vmatpush.bf16.msra.mxu0 %v5145
  %7083 = vmatpush.bf16.msra.mxu0 %v5141
  %7084 = vmatpush.bf16.msra.mxu0 %v5137
  %7085 = vmatpush.bf16.msra.mxu0 %v5133
  %7086 = vmatpush.bf16.msra.mxu0 %v5129
  %7087 = vmatmul.bf16.gmra.mxu0 %v1155
  %v7088 = vpop.f32.mrf.mxu0
  %v7089 = vadd.f32 %v7076, %v7088
  %v7090 = vpop.f32.mrf.mxu0
  %7091 = vdwg.mxu0
  %7092 = vmatpush.bf16.msra.mxu0 %v5189
  %7093 = vmatpush.bf16.msra.mxu0 %v5185
  %7094 = vmatpush.bf16.msra.mxu0 %v5181
  %7095 = vmatpush.bf16.msra.mxu0 %v5177
  %7096 = vmatpush.bf16.msra.mxu0 %v5173
  %7097 = vmatpush.bf16.msra.mxu0 %v5169
  %7098 = vmatpush.bf16.msra.mxu0 %v5165
  %7099 = vmatpush.bf16.msra.mxu0 %v5161
  %7100 = vmatmul.bf16.gmra.mxu0 %v1156
  %v7101 = vpop.f32.mrf.mxu0
  %v7102 = vadd.f32 %v7089, %v7101
  %v7103 = vpop.f32.mrf.mxu0
  %7104 = vdwg.mxu0
  %7105 = vmatpush.bf16.msra.mxu0 %v5221
  %7106 = vmatpush.bf16.msra.mxu0 %v5217
  %7107 = vmatpush.bf16.msra.mxu0 %v5213
  %7108 = vmatpush.bf16.msra.mxu0 %v5209
  %7109 = vmatpush.bf16.msra.mxu0 %v5205
  %7110 = vmatpush.bf16.msra.mxu0 %v5201
  %7111 = vmatpush.bf16.msra.mxu0 %v5197
  %7112 = vmatpush.bf16.msra.mxu0 %v5193
  %7113 = vmatmul.bf16.gmra.mxu0 %v1157
  %v7114 = vpop.f32.mrf.mxu0
  %v7115 = vadd.f32 %v7102, %v7114
  %v7116 = vpop.f32.mrf.mxu0
  %7117 = vdwg.mxu0
  %7118 = vmatpush.bf16.msra.mxu0 %v5253
  %7119 = vmatpush.bf16.msra.mxu0 %v5249
  %7120 = vmatpush.bf16.msra.mxu0 %v5245
  %7121 = vmatpush.bf16.msra.mxu0 %v5241
  %7122 = vmatpush.bf16.msra.mxu0 %v5237
  %7123 = vmatpush.bf16.msra.mxu0 %v5233
  %7124 = vmatpush.bf16.msra.mxu0 %v5229
  %7125 = vmatpush.bf16.msra.mxu0 %v5225
  %7126 = vmatmul.bf16.gmra.mxu0 %v1158
  %v7127 = vpop.f32.mrf.mxu0
  %v7128 = vadd.f32 %v7115, %v7127
  %v7129 = vpop.f32.mrf.mxu0
  %7130 = vdwg.mxu0
  %7131 = vmatpush.bf16.msra.mxu0 %v5285
  %7132 = vmatpush.bf16.msra.mxu0 %v5281
  %7133 = vmatpush.bf16.msra.mxu0 %v5277
  %7134 = vmatpush.bf16.msra.mxu0 %v5273
  %7135 = vmatpush.bf16.msra.mxu0 %v5269
  %7136 = vmatpush.bf16.msra.mxu0 %v5265
  %7137 = vmatpush.bf16.msra.mxu0 %v5261
  %7138 = vmatpush.bf16.msra.mxu0 %v5257
  %7139 = vmatmul.bf16.gmra.mxu0 %v1159
  %v7140 = vpop.f32.mrf.mxu0
  %v7141 = vadd.f32 %v7128, %v7140
  %v7142 = vpop.f32.mrf.mxu0
  %7143 = vdwg.mxu0
  %7144 = vmatpush.bf16.msra.mxu0 %v4294
  %7145 = vmatpush.bf16.msra.mxu0 %v4290
  %7146 = vmatpush.bf16.msra.mxu0 %v4286
  %7147 = vmatpush.bf16.msra.mxu0 %v4282
  %7148 = vmatpush.bf16.msra.mxu0 %v4278
  %7149 = vmatpush.bf16.msra.mxu0 %v4274
  %7150 = vmatpush.bf16.msra.mxu0 %v4270
  %7151 = vmatpush.bf16.msra.mxu0 %v4266
  %7152 = vmatmul.bf16.gmra.mxu0 %v1128
  %v7153 = vpop.f32.mrf.mxu0
  %v7154 = vadd.f32 %v1074, %v7153
  %v7155 = vpop.f32.mrf.mxu0
  %7156 = vdwg.mxu0
  %7157 = vmatpush.bf16.msra.mxu0 %v4326
  %7158 = vmatpush.bf16.msra.mxu0 %v4322
  %7159 = vmatpush.bf16.msra.mxu0 %v4318
  %7160 = vmatpush.bf16.msra.mxu0 %v4314
  %7161 = vmatpush.bf16.msra.mxu0 %v4310
  %7162 = vmatpush.bf16.msra.mxu0 %v4306
  %7163 = vmatpush.bf16.msra.mxu0 %v4302
  %7164 = vmatpush.bf16.msra.mxu0 %v4298
  %7165 = vmatmul.bf16.gmra.mxu0 %v1129
  %v7166 = vpop.f32.mrf.mxu0
  %v7167 = vadd.f32 %v7154, %v7166
  %v7168 = vpop.f32.mrf.mxu0
  %7169 = vdwg.mxu0
  %7170 = vmatpush.bf16.msra.mxu0 %v4358
  %7171 = vmatpush.bf16.msra.mxu0 %v4354
  %7172 = vmatpush.bf16.msra.mxu0 %v4350
  %7173 = vmatpush.bf16.msra.mxu0 %v4346
  %7174 = vmatpush.bf16.msra.mxu0 %v4342
  %7175 = vmatpush.bf16.msra.mxu0 %v4338
  %7176 = vmatpush.bf16.msra.mxu0 %v4334
  %7177 = vmatpush.bf16.msra.mxu0 %v4330
  %7178 = vmatmul.bf16.gmra.mxu0 %v1130
  %v7179 = vpop.f32.mrf.mxu0
  %v7180 = vadd.f32 %v7167, %v7179
  %v7181 = vpop.f32.mrf.mxu0
  %7182 = vdwg.mxu0
  %7183 = vmatpush.bf16.msra.mxu0 %v4390
  %7184 = vmatpush.bf16.msra.mxu0 %v4386
  %7185 = vmatpush.bf16.msra.mxu0 %v4382
  %7186 = vmatpush.bf16.msra.mxu0 %v4378
  %7187 = vmatpush.bf16.msra.mxu0 %v4374
  %7188 = vmatpush.bf16.msra.mxu0 %v4370
  %7189 = vmatpush.bf16.msra.mxu0 %v4366
  %7190 = vmatpush.bf16.msra.mxu0 %v4362
  %7191 = vmatmul.bf16.gmra.mxu0 %v1131
  %v7192 = vpop.f32.mrf.mxu0
  %v7193 = vadd.f32 %v7180, %v7192
  %v7194 = vpop.f32.mrf.mxu0
  %7195 = vdwg.mxu0
  %7196 = vmatpush.bf16.msra.mxu0 %v4422
  %7197 = vmatpush.bf16.msra.mxu0 %v4418
  %7198 = vmatpush.bf16.msra.mxu0 %v4414
  %7199 = vmatpush.bf16.msra.mxu0 %v4410
  %7200 = vmatpush.bf16.msra.mxu0 %v4406
  %7201 = vmatpush.bf16.msra.mxu0 %v4402
  %7202 = vmatpush.bf16.msra.mxu0 %v4398
  %7203 = vmatpush.bf16.msra.mxu0 %v4394
  %7204 = vmatmul.bf16.gmra.mxu0 %v1132
  %v7205 = vpop.f32.mrf.mxu0
  %v7206 = vadd.f32 %v7193, %v7205
  %v7207 = vpop.f32.mrf.mxu0
  %7208 = vdwg.mxu0
  %7209 = vmatpush.bf16.msra.mxu0 %v4454
  %7210 = vmatpush.bf16.msra.mxu0 %v4450
  %7211 = vmatpush.bf16.msra.mxu0 %v4446
  %7212 = vmatpush.bf16.msra.mxu0 %v4442
  %7213 = vmatpush.bf16.msra.mxu0 %v4438
  %7214 = vmatpush.bf16.msra.mxu0 %v4434
  %7215 = vmatpush.bf16.msra.mxu0 %v4430
  %7216 = vmatpush.bf16.msra.mxu0 %v4426
  %7217 = vmatmul.bf16.gmra.mxu0 %v1133
  %v7218 = vpop.f32.mrf.mxu0
  %v7219 = vadd.f32 %v7206, %v7218
  %v7220 = vpop.f32.mrf.mxu0
  %7221 = vdwg.mxu0
  %7222 = vmatpush.bf16.msra.mxu0 %v4486
  %7223 = vmatpush.bf16.msra.mxu0 %v4482
  %7224 = vmatpush.bf16.msra.mxu0 %v4478
  %7225 = vmatpush.bf16.msra.mxu0 %v4474
  %7226 = vmatpush.bf16.msra.mxu0 %v4470
  %7227 = vmatpush.bf16.msra.mxu0 %v4466
  %7228 = vmatpush.bf16.msra.mxu0 %v4462
  %7229 = vmatpush.bf16.msra.mxu0 %v4458
  %7230 = vmatmul.bf16.gmra.mxu0 %v1134
  %v7231 = vpop.f32.mrf.mxu0
  %v7232 = vadd.f32 %v7219, %v7231
  %v7233 = vpop.f32.mrf.mxu0
  %7234 = vdwg.mxu0
  %7235 = vmatpush.bf16.msra.mxu0 %v4518
  %7236 = vmatpush.bf16.msra.mxu0 %v4514
  %7237 = vmatpush.bf16.msra.mxu0 %v4510
  %7238 = vmatpush.bf16.msra.mxu0 %v4506
  %7239 = vmatpush.bf16.msra.mxu0 %v4502
  %7240 = vmatpush.bf16.msra.mxu0 %v4498
  %7241 = vmatpush.bf16.msra.mxu0 %v4494
  %7242 = vmatpush.bf16.msra.mxu0 %v4490
  %7243 = vmatmul.bf16.gmra.mxu0 %v1135
  %v7244 = vpop.f32.mrf.mxu0
  %v7245 = vadd.f32 %v7232, %v7244
  %v7246 = vpop.f32.mrf.mxu0
  %7247 = vdwg.mxu0
  %7248 = vmatpush.bf16.msra.mxu0 %v4550
  %7249 = vmatpush.bf16.msra.mxu0 %v4546
  %7250 = vmatpush.bf16.msra.mxu0 %v4542
  %7251 = vmatpush.bf16.msra.mxu0 %v4538
  %7252 = vmatpush.bf16.msra.mxu0 %v4534
  %7253 = vmatpush.bf16.msra.mxu0 %v4530
  %7254 = vmatpush.bf16.msra.mxu0 %v4526
  %7255 = vmatpush.bf16.msra.mxu0 %v4522
  %7256 = vmatmul.bf16.gmra.mxu0 %v1136
  %v7257 = vpop.f32.mrf.mxu0
  %v7258 = vadd.f32 %v7245, %v7257
  %v7259 = vpop.f32.mrf.mxu0
  %7260 = vdwg.mxu0
  %7261 = vmatpush.bf16.msra.mxu0 %v4582
  %7262 = vmatpush.bf16.msra.mxu0 %v4578
  %7263 = vmatpush.bf16.msra.mxu0 %v4574
  %7264 = vmatpush.bf16.msra.mxu0 %v4570
  %7265 = vmatpush.bf16.msra.mxu0 %v4566
  %7266 = vmatpush.bf16.msra.mxu0 %v4562
  %7267 = vmatpush.bf16.msra.mxu0 %v4558
  %7268 = vmatpush.bf16.msra.mxu0 %v4554
  %7269 = vmatmul.bf16.gmra.mxu0 %v1137
  %v7270 = vpop.f32.mrf.mxu0
  %v7271 = vadd.f32 %v7258, %v7270
  %v7272 = vpop.f32.mrf.mxu0
  %7273 = vdwg.mxu0
  %7274 = vmatpush.bf16.msra.mxu0 %v4614
  %7275 = vmatpush.bf16.msra.mxu0 %v4610
  %7276 = vmatpush.bf16.msra.mxu0 %v4606
  %7277 = vmatpush.bf16.msra.mxu0 %v4602
  %7278 = vmatpush.bf16.msra.mxu0 %v4598
  %7279 = vmatpush.bf16.msra.mxu0 %v4594
  %7280 = vmatpush.bf16.msra.mxu0 %v4590
  %7281 = vmatpush.bf16.msra.mxu0 %v4586
  %7282 = vmatmul.bf16.gmra.mxu0 %v1138
  %v7283 = vpop.f32.mrf.mxu0
  %v7284 = vadd.f32 %v7271, %v7283
  %v7285 = vpop.f32.mrf.mxu0
  %7286 = vdwg.mxu0
  %7287 = vmatpush.bf16.msra.mxu0 %v4646
  %7288 = vmatpush.bf16.msra.mxu0 %v4642
  %7289 = vmatpush.bf16.msra.mxu0 %v4638
  %7290 = vmatpush.bf16.msra.mxu0 %v4634
  %7291 = vmatpush.bf16.msra.mxu0 %v4630
  %7292 = vmatpush.bf16.msra.mxu0 %v4626
  %7293 = vmatpush.bf16.msra.mxu0 %v4622
  %7294 = vmatpush.bf16.msra.mxu0 %v4618
  %7295 = vmatmul.bf16.gmra.mxu0 %v1139
  %v7296 = vpop.f32.mrf.mxu0
  %v7297 = vadd.f32 %v7284, %v7296
  %v7298 = vpop.f32.mrf.mxu0
  %7299 = vdwg.mxu0
  %7300 = vmatpush.bf16.msra.mxu0 %v4678
  %7301 = vmatpush.bf16.msra.mxu0 %v4674
  %7302 = vmatpush.bf16.msra.mxu0 %v4670
  %7303 = vmatpush.bf16.msra.mxu0 %v4666
  %7304 = vmatpush.bf16.msra.mxu0 %v4662
  %7305 = vmatpush.bf16.msra.mxu0 %v4658
  %7306 = vmatpush.bf16.msra.mxu0 %v4654
  %7307 = vmatpush.bf16.msra.mxu0 %v4650
  %7308 = vmatmul.bf16.gmra.mxu0 %v1140
  %v7309 = vpop.f32.mrf.mxu0
  %v7310 = vadd.f32 %v7297, %v7309
  %v7311 = vpop.f32.mrf.mxu0
  %7312 = vdwg.mxu0
  %7313 = vmatpush.bf16.msra.mxu0 %v4710
  %7314 = vmatpush.bf16.msra.mxu0 %v4706
  %7315 = vmatpush.bf16.msra.mxu0 %v4702
  %7316 = vmatpush.bf16.msra.mxu0 %v4698
  %7317 = vmatpush.bf16.msra.mxu0 %v4694
  %7318 = vmatpush.bf16.msra.mxu0 %v4690
  %7319 = vmatpush.bf16.msra.mxu0 %v4686
  %7320 = vmatpush.bf16.msra.mxu0 %v4682
  %7321 = vmatmul.bf16.gmra.mxu0 %v1141
  %v7322 = vpop.f32.mrf.mxu0
  %v7323 = vadd.f32 %v7310, %v7322
  %v7324 = vpop.f32.mrf.mxu0
  %7325 = vdwg.mxu0
  %7326 = vmatpush.bf16.msra.mxu0 %v4742
  %7327 = vmatpush.bf16.msra.mxu0 %v4738
  %7328 = vmatpush.bf16.msra.mxu0 %v4734
  %7329 = vmatpush.bf16.msra.mxu0 %v4730
  %7330 = vmatpush.bf16.msra.mxu0 %v4726
  %7331 = vmatpush.bf16.msra.mxu0 %v4722
  %7332 = vmatpush.bf16.msra.mxu0 %v4718
  %7333 = vmatpush.bf16.msra.mxu0 %v4714
  %7334 = vmatmul.bf16.gmra.mxu0 %v1142
  %v7335 = vpop.f32.mrf.mxu0
  %v7336 = vadd.f32 %v7323, %v7335
  %v7337 = vpop.f32.mrf.mxu0
  %7338 = vdwg.mxu0
  %7339 = vmatpush.bf16.msra.mxu0 %v4774
  %7340 = vmatpush.bf16.msra.mxu0 %v4770
  %7341 = vmatpush.bf16.msra.mxu0 %v4766
  %7342 = vmatpush.bf16.msra.mxu0 %v4762
  %7343 = vmatpush.bf16.msra.mxu0 %v4758
  %7344 = vmatpush.bf16.msra.mxu0 %v4754
  %7345 = vmatpush.bf16.msra.mxu0 %v4750
  %7346 = vmatpush.bf16.msra.mxu0 %v4746
  %7347 = vmatmul.bf16.gmra.mxu0 %v1143
  %v7348 = vpop.f32.mrf.mxu0
  %v7349 = vadd.f32 %v7336, %v7348
  %v7350 = vpop.f32.mrf.mxu0
  %7351 = vdwg.mxu0
  %7352 = vmatpush.bf16.msra.mxu0 %v4806
  %7353 = vmatpush.bf16.msra.mxu0 %v4802
  %7354 = vmatpush.bf16.msra.mxu0 %v4798
  %7355 = vmatpush.bf16.msra.mxu0 %v4794
  %7356 = vmatpush.bf16.msra.mxu0 %v4790
  %7357 = vmatpush.bf16.msra.mxu0 %v4786
  %7358 = vmatpush.bf16.msra.mxu0 %v4782
  %7359 = vmatpush.bf16.msra.mxu0 %v4778
  %7360 = vmatmul.bf16.gmra.mxu0 %v1144
  %v7361 = vpop.f32.mrf.mxu0
  %v7362 = vadd.f32 %v7349, %v7361
  %v7363 = vpop.f32.mrf.mxu0
  %7364 = vdwg.mxu0
  %7365 = vmatpush.bf16.msra.mxu0 %v4838
  %7366 = vmatpush.bf16.msra.mxu0 %v4834
  %7367 = vmatpush.bf16.msra.mxu0 %v4830
  %7368 = vmatpush.bf16.msra.mxu0 %v4826
  %7369 = vmatpush.bf16.msra.mxu0 %v4822
  %7370 = vmatpush.bf16.msra.mxu0 %v4818
  %7371 = vmatpush.bf16.msra.mxu0 %v4814
  %7372 = vmatpush.bf16.msra.mxu0 %v4810
  %7373 = vmatmul.bf16.gmra.mxu0 %v1145
  %v7374 = vpop.f32.mrf.mxu0
  %v7375 = vadd.f32 %v7362, %v7374
  %v7376 = vpop.f32.mrf.mxu0
  %7377 = vdwg.mxu0
  %7378 = vmatpush.bf16.msra.mxu0 %v4870
  %7379 = vmatpush.bf16.msra.mxu0 %v4866
  %7380 = vmatpush.bf16.msra.mxu0 %v4862
  %7381 = vmatpush.bf16.msra.mxu0 %v4858
  %7382 = vmatpush.bf16.msra.mxu0 %v4854
  %7383 = vmatpush.bf16.msra.mxu0 %v4850
  %7384 = vmatpush.bf16.msra.mxu0 %v4846
  %7385 = vmatpush.bf16.msra.mxu0 %v4842
  %7386 = vmatmul.bf16.gmra.mxu0 %v1146
  %v7387 = vpop.f32.mrf.mxu0
  %v7388 = vadd.f32 %v7375, %v7387
  %v7389 = vpop.f32.mrf.mxu0
  %7390 = vdwg.mxu0
  %7391 = vmatpush.bf16.msra.mxu0 %v4902
  %7392 = vmatpush.bf16.msra.mxu0 %v4898
  %7393 = vmatpush.bf16.msra.mxu0 %v4894
  %7394 = vmatpush.bf16.msra.mxu0 %v4890
  %7395 = vmatpush.bf16.msra.mxu0 %v4886
  %7396 = vmatpush.bf16.msra.mxu0 %v4882
  %7397 = vmatpush.bf16.msra.mxu0 %v4878
  %7398 = vmatpush.bf16.msra.mxu0 %v4874
  %7399 = vmatmul.bf16.gmra.mxu0 %v1147
  %v7400 = vpop.f32.mrf.mxu0
  %v7401 = vadd.f32 %v7388, %v7400
  %v7402 = vpop.f32.mrf.mxu0
  %7403 = vdwg.mxu0
  %7404 = vmatpush.bf16.msra.mxu0 %v4934
  %7405 = vmatpush.bf16.msra.mxu0 %v4930
  %7406 = vmatpush.bf16.msra.mxu0 %v4926
  %7407 = vmatpush.bf16.msra.mxu0 %v4922
  %7408 = vmatpush.bf16.msra.mxu0 %v4918
  %7409 = vmatpush.bf16.msra.mxu0 %v4914
  %7410 = vmatpush.bf16.msra.mxu0 %v4910
  %7411 = vmatpush.bf16.msra.mxu0 %v4906
  %7412 = vmatmul.bf16.gmra.mxu0 %v1148
  %v7413 = vpop.f32.mrf.mxu0
  %v7414 = vadd.f32 %v7401, %v7413
  %v7415 = vpop.f32.mrf.mxu0
  %7416 = vdwg.mxu0
  %7417 = vmatpush.bf16.msra.mxu0 %v4966
  %7418 = vmatpush.bf16.msra.mxu0 %v4962
  %7419 = vmatpush.bf16.msra.mxu0 %v4958
  %7420 = vmatpush.bf16.msra.mxu0 %v4954
  %7421 = vmatpush.bf16.msra.mxu0 %v4950
  %7422 = vmatpush.bf16.msra.mxu0 %v4946
  %7423 = vmatpush.bf16.msra.mxu0 %v4942
  %7424 = vmatpush.bf16.msra.mxu0 %v4938
  %7425 = vmatmul.bf16.gmra.mxu0 %v1149
  %v7426 = vpop.f32.mrf.mxu0
  %v7427 = vadd.f32 %v7414, %v7426
  %v7428 = vpop.f32.mrf.mxu0
  %7429 = vdwg.mxu0
  %7430 = vmatpush.bf16.msra.mxu0 %v4998
  %7431 = vmatpush.bf16.msra.mxu0 %v4994
  %7432 = vmatpush.bf16.msra.mxu0 %v4990
  %7433 = vmatpush.bf16.msra.mxu0 %v4986
  %7434 = vmatpush.bf16.msra.mxu0 %v4982
  %7435 = vmatpush.bf16.msra.mxu0 %v4978
  %7436 = vmatpush.bf16.msra.mxu0 %v4974
  %7437 = vmatpush.bf16.msra.mxu0 %v4970
  %7438 = vmatmul.bf16.gmra.mxu0 %v1150
  %v7439 = vpop.f32.mrf.mxu0
  %v7440 = vadd.f32 %v7427, %v7439
  %v7441 = vpop.f32.mrf.mxu0
  %7442 = vdwg.mxu0
  %7443 = vmatpush.bf16.msra.mxu0 %v5030
  %7444 = vmatpush.bf16.msra.mxu0 %v5026
  %7445 = vmatpush.bf16.msra.mxu0 %v5022
  %7446 = vmatpush.bf16.msra.mxu0 %v5018
  %7447 = vmatpush.bf16.msra.mxu0 %v5014
  %7448 = vmatpush.bf16.msra.mxu0 %v5010
  %7449 = vmatpush.bf16.msra.mxu0 %v5006
  %7450 = vmatpush.bf16.msra.mxu0 %v5002
  %7451 = vmatmul.bf16.gmra.mxu0 %v1151
  %v7452 = vpop.f32.mrf.mxu0
  %v7453 = vadd.f32 %v7440, %v7452
  %v7454 = vpop.f32.mrf.mxu0
  %7455 = vdwg.mxu0
  %7456 = vmatpush.bf16.msra.mxu0 %v5062
  %7457 = vmatpush.bf16.msra.mxu0 %v5058
  %7458 = vmatpush.bf16.msra.mxu0 %v5054
  %7459 = vmatpush.bf16.msra.mxu0 %v5050
  %7460 = vmatpush.bf16.msra.mxu0 %v5046
  %7461 = vmatpush.bf16.msra.mxu0 %v5042
  %7462 = vmatpush.bf16.msra.mxu0 %v5038
  %7463 = vmatpush.bf16.msra.mxu0 %v5034
  %7464 = vmatmul.bf16.gmra.mxu0 %v1152
  %v7465 = vpop.f32.mrf.mxu0
  %v7466 = vadd.f32 %v7453, %v7465
  %v7467 = vpop.f32.mrf.mxu0
  %7468 = vdwg.mxu0
  %7469 = vmatpush.bf16.msra.mxu0 %v5094
  %7470 = vmatpush.bf16.msra.mxu0 %v5090
  %7471 = vmatpush.bf16.msra.mxu0 %v5086
  %7472 = vmatpush.bf16.msra.mxu0 %v5082
  %7473 = vmatpush.bf16.msra.mxu0 %v5078
  %7474 = vmatpush.bf16.msra.mxu0 %v5074
  %7475 = vmatpush.bf16.msra.mxu0 %v5070
  %7476 = vmatpush.bf16.msra.mxu0 %v5066
  %7477 = vmatmul.bf16.gmra.mxu0 %v1153
  %v7478 = vpop.f32.mrf.mxu0
  %v7479 = vadd.f32 %v7466, %v7478
  %v7480 = vpop.f32.mrf.mxu0
  %7481 = vdwg.mxu0
  %7482 = vmatpush.bf16.msra.mxu0 %v5126
  %7483 = vmatpush.bf16.msra.mxu0 %v5122
  %7484 = vmatpush.bf16.msra.mxu0 %v5118
  %7485 = vmatpush.bf16.msra.mxu0 %v5114
  %7486 = vmatpush.bf16.msra.mxu0 %v5110
  %7487 = vmatpush.bf16.msra.mxu0 %v5106
  %7488 = vmatpush.bf16.msra.mxu0 %v5102
  %7489 = vmatpush.bf16.msra.mxu0 %v5098
  %7490 = vmatmul.bf16.gmra.mxu0 %v1154
  %v7491 = vpop.f32.mrf.mxu0
  %v7492 = vadd.f32 %v7479, %v7491
  %v7493 = vpop.f32.mrf.mxu0
  %7494 = vdwg.mxu0
  %7495 = vmatpush.bf16.msra.mxu0 %v5158
  %7496 = vmatpush.bf16.msra.mxu0 %v5154
  %7497 = vmatpush.bf16.msra.mxu0 %v5150
  %7498 = vmatpush.bf16.msra.mxu0 %v5146
  %7499 = vmatpush.bf16.msra.mxu0 %v5142
  %7500 = vmatpush.bf16.msra.mxu0 %v5138
  %7501 = vmatpush.bf16.msra.mxu0 %v5134
  %7502 = vmatpush.bf16.msra.mxu0 %v5130
  %7503 = vmatmul.bf16.gmra.mxu0 %v1155
  %v7504 = vpop.f32.mrf.mxu0
  %v7505 = vadd.f32 %v7492, %v7504
  %v7506 = vpop.f32.mrf.mxu0
  %7507 = vdwg.mxu0
  %7508 = vmatpush.bf16.msra.mxu0 %v5190
  %7509 = vmatpush.bf16.msra.mxu0 %v5186
  %7510 = vmatpush.bf16.msra.mxu0 %v5182
  %7511 = vmatpush.bf16.msra.mxu0 %v5178
  %7512 = vmatpush.bf16.msra.mxu0 %v5174
  %7513 = vmatpush.bf16.msra.mxu0 %v5170
  %7514 = vmatpush.bf16.msra.mxu0 %v5166
  %7515 = vmatpush.bf16.msra.mxu0 %v5162
  %7516 = vmatmul.bf16.gmra.mxu0 %v1156
  %v7517 = vpop.f32.mrf.mxu0
  %v7518 = vadd.f32 %v7505, %v7517
  %v7519 = vpop.f32.mrf.mxu0
  %7520 = vdwg.mxu0
  %7521 = vmatpush.bf16.msra.mxu0 %v5222
  %7522 = vmatpush.bf16.msra.mxu0 %v5218
  %7523 = vmatpush.bf16.msra.mxu0 %v5214
  %7524 = vmatpush.bf16.msra.mxu0 %v5210
  %7525 = vmatpush.bf16.msra.mxu0 %v5206
  %7526 = vmatpush.bf16.msra.mxu0 %v5202
  %7527 = vmatpush.bf16.msra.mxu0 %v5198
  %7528 = vmatpush.bf16.msra.mxu0 %v5194
  %7529 = vmatmul.bf16.gmra.mxu0 %v1157
  %v7530 = vpop.f32.mrf.mxu0
  %v7531 = vadd.f32 %v7518, %v7530
  %v7532 = vpop.f32.mrf.mxu0
  %7533 = vdwg.mxu0
  %7534 = vmatpush.bf16.msra.mxu0 %v5254
  %7535 = vmatpush.bf16.msra.mxu0 %v5250
  %7536 = vmatpush.bf16.msra.mxu0 %v5246
  %7537 = vmatpush.bf16.msra.mxu0 %v5242
  %7538 = vmatpush.bf16.msra.mxu0 %v5238
  %7539 = vmatpush.bf16.msra.mxu0 %v5234
  %7540 = vmatpush.bf16.msra.mxu0 %v5230
  %7541 = vmatpush.bf16.msra.mxu0 %v5226
  %7542 = vmatmul.bf16.gmra.mxu0 %v1158
  %v7543 = vpop.f32.mrf.mxu0
  %v7544 = vadd.f32 %v7531, %v7543
  %v7545 = vpop.f32.mrf.mxu0
  %7546 = vdwg.mxu0
  %7547 = vmatpush.bf16.msra.mxu0 %v5286
  %7548 = vmatpush.bf16.msra.mxu0 %v5282
  %7549 = vmatpush.bf16.msra.mxu0 %v5278
  %7550 = vmatpush.bf16.msra.mxu0 %v5274
  %7551 = vmatpush.bf16.msra.mxu0 %v5270
  %7552 = vmatpush.bf16.msra.mxu0 %v5266
  %7553 = vmatpush.bf16.msra.mxu0 %v5262
  %7554 = vmatpush.bf16.msra.mxu0 %v5258
  %7555 = vmatmul.bf16.gmra.mxu0 %v1159
  %v7556 = vpop.f32.mrf.mxu0
  %v7557 = vadd.f32 %v7544, %v7556
  %v7558 = vpop.f32.mrf.mxu0
  %7559 = vdwg.mxu0
  %7560 = vmatpush.bf16.msra.mxu0 %v4295
  %7561 = vmatpush.bf16.msra.mxu0 %v4291
  %7562 = vmatpush.bf16.msra.mxu0 %v4287
  %7563 = vmatpush.bf16.msra.mxu0 %v4283
  %7564 = vmatpush.bf16.msra.mxu0 %v4279
  %7565 = vmatpush.bf16.msra.mxu0 %v4275
  %7566 = vmatpush.bf16.msra.mxu0 %v4271
  %7567 = vmatpush.bf16.msra.mxu0 %v4267
  %7568 = vmatmul.bf16.gmra.mxu0 %v1128
  %v7569 = vpop.f32.mrf.mxu0
  %v7570 = vadd.f32 %v1075, %v7569
  %v7571 = vpop.f32.mrf.mxu0
  %7572 = vdwg.mxu0
  %7573 = vmatpush.bf16.msra.mxu0 %v4327
  %7574 = vmatpush.bf16.msra.mxu0 %v4323
  %7575 = vmatpush.bf16.msra.mxu0 %v4319
  %7576 = vmatpush.bf16.msra.mxu0 %v4315
  %7577 = vmatpush.bf16.msra.mxu0 %v4311
  %7578 = vmatpush.bf16.msra.mxu0 %v4307
  %7579 = vmatpush.bf16.msra.mxu0 %v4303
  %7580 = vmatpush.bf16.msra.mxu0 %v4299
  %7581 = vmatmul.bf16.gmra.mxu0 %v1129
  %v7582 = vpop.f32.mrf.mxu0
  %v7583 = vadd.f32 %v7570, %v7582
  %v7584 = vpop.f32.mrf.mxu0
  %7585 = vdwg.mxu0
  %7586 = vmatpush.bf16.msra.mxu0 %v4359
  %7587 = vmatpush.bf16.msra.mxu0 %v4355
  %7588 = vmatpush.bf16.msra.mxu0 %v4351
  %7589 = vmatpush.bf16.msra.mxu0 %v4347
  %7590 = vmatpush.bf16.msra.mxu0 %v4343
  %7591 = vmatpush.bf16.msra.mxu0 %v4339
  %7592 = vmatpush.bf16.msra.mxu0 %v4335
  %7593 = vmatpush.bf16.msra.mxu0 %v4331
  %7594 = vmatmul.bf16.gmra.mxu0 %v1130
  %v7595 = vpop.f32.mrf.mxu0
  %v7596 = vadd.f32 %v7583, %v7595
  %v7597 = vpop.f32.mrf.mxu0
  %7598 = vdwg.mxu0
  %7599 = vmatpush.bf16.msra.mxu0 %v4391
  %7600 = vmatpush.bf16.msra.mxu0 %v4387
  %7601 = vmatpush.bf16.msra.mxu0 %v4383
  %7602 = vmatpush.bf16.msra.mxu0 %v4379
  %7603 = vmatpush.bf16.msra.mxu0 %v4375
  %7604 = vmatpush.bf16.msra.mxu0 %v4371
  %7605 = vmatpush.bf16.msra.mxu0 %v4367
  %7606 = vmatpush.bf16.msra.mxu0 %v4363
  %7607 = vmatmul.bf16.gmra.mxu0 %v1131
  %v7608 = vpop.f32.mrf.mxu0
  %v7609 = vadd.f32 %v7596, %v7608
  %v7610 = vpop.f32.mrf.mxu0
  %7611 = vdwg.mxu0
  %7612 = vmatpush.bf16.msra.mxu0 %v4423
  %7613 = vmatpush.bf16.msra.mxu0 %v4419
  %7614 = vmatpush.bf16.msra.mxu0 %v4415
  %7615 = vmatpush.bf16.msra.mxu0 %v4411
  %7616 = vmatpush.bf16.msra.mxu0 %v4407
  %7617 = vmatpush.bf16.msra.mxu0 %v4403
  %7618 = vmatpush.bf16.msra.mxu0 %v4399
  %7619 = vmatpush.bf16.msra.mxu0 %v4395
  %7620 = vmatmul.bf16.gmra.mxu0 %v1132
  %v7621 = vpop.f32.mrf.mxu0
  %v7622 = vadd.f32 %v7609, %v7621
  %v7623 = vpop.f32.mrf.mxu0
  %7624 = vdwg.mxu0
  %7625 = vmatpush.bf16.msra.mxu0 %v4455
  %7626 = vmatpush.bf16.msra.mxu0 %v4451
  %7627 = vmatpush.bf16.msra.mxu0 %v4447
  %7628 = vmatpush.bf16.msra.mxu0 %v4443
  %7629 = vmatpush.bf16.msra.mxu0 %v4439
  %7630 = vmatpush.bf16.msra.mxu0 %v4435
  %7631 = vmatpush.bf16.msra.mxu0 %v4431
  %7632 = vmatpush.bf16.msra.mxu0 %v4427
  %7633 = vmatmul.bf16.gmra.mxu0 %v1133
  %v7634 = vpop.f32.mrf.mxu0
  %v7635 = vadd.f32 %v7622, %v7634
  %v7636 = vpop.f32.mrf.mxu0
  %7637 = vdwg.mxu0
  %7638 = vmatpush.bf16.msra.mxu0 %v4487
  %7639 = vmatpush.bf16.msra.mxu0 %v4483
  %7640 = vmatpush.bf16.msra.mxu0 %v4479
  %7641 = vmatpush.bf16.msra.mxu0 %v4475
  %7642 = vmatpush.bf16.msra.mxu0 %v4471
  %7643 = vmatpush.bf16.msra.mxu0 %v4467
  %7644 = vmatpush.bf16.msra.mxu0 %v4463
  %7645 = vmatpush.bf16.msra.mxu0 %v4459
  %7646 = vmatmul.bf16.gmra.mxu0 %v1134
  %v7647 = vpop.f32.mrf.mxu0
  %v7648 = vadd.f32 %v7635, %v7647
  %v7649 = vpop.f32.mrf.mxu0
  %7650 = vdwg.mxu0
  %7651 = vmatpush.bf16.msra.mxu0 %v4519
  %7652 = vmatpush.bf16.msra.mxu0 %v4515
  %7653 = vmatpush.bf16.msra.mxu0 %v4511
  %7654 = vmatpush.bf16.msra.mxu0 %v4507
  %7655 = vmatpush.bf16.msra.mxu0 %v4503
  %7656 = vmatpush.bf16.msra.mxu0 %v4499
  %7657 = vmatpush.bf16.msra.mxu0 %v4495
  %7658 = vmatpush.bf16.msra.mxu0 %v4491
  %7659 = vmatmul.bf16.gmra.mxu0 %v1135
  %v7660 = vpop.f32.mrf.mxu0
  %v7661 = vadd.f32 %v7648, %v7660
  %v7662 = vpop.f32.mrf.mxu0
  %7663 = vdwg.mxu0
  %7664 = vmatpush.bf16.msra.mxu0 %v4551
  %7665 = vmatpush.bf16.msra.mxu0 %v4547
  %7666 = vmatpush.bf16.msra.mxu0 %v4543
  %7667 = vmatpush.bf16.msra.mxu0 %v4539
  %7668 = vmatpush.bf16.msra.mxu0 %v4535
  %7669 = vmatpush.bf16.msra.mxu0 %v4531
  %7670 = vmatpush.bf16.msra.mxu0 %v4527
  %7671 = vmatpush.bf16.msra.mxu0 %v4523
  %7672 = vmatmul.bf16.gmra.mxu0 %v1136
  %v7673 = vpop.f32.mrf.mxu0
  %v7674 = vadd.f32 %v7661, %v7673
  %v7675 = vpop.f32.mrf.mxu0
  %7676 = vdwg.mxu0
  %7677 = vmatpush.bf16.msra.mxu0 %v4583
  %7678 = vmatpush.bf16.msra.mxu0 %v4579
  %7679 = vmatpush.bf16.msra.mxu0 %v4575
  %7680 = vmatpush.bf16.msra.mxu0 %v4571
  %7681 = vmatpush.bf16.msra.mxu0 %v4567
  %7682 = vmatpush.bf16.msra.mxu0 %v4563
  %7683 = vmatpush.bf16.msra.mxu0 %v4559
  %7684 = vmatpush.bf16.msra.mxu0 %v4555
  %7685 = vmatmul.bf16.gmra.mxu0 %v1137
  %v7686 = vpop.f32.mrf.mxu0
  %v7687 = vadd.f32 %v7674, %v7686
  %v7688 = vpop.f32.mrf.mxu0
  %7689 = vdwg.mxu0
  %7690 = vmatpush.bf16.msra.mxu0 %v4615
  %7691 = vmatpush.bf16.msra.mxu0 %v4611
  %7692 = vmatpush.bf16.msra.mxu0 %v4607
  %7693 = vmatpush.bf16.msra.mxu0 %v4603
  %7694 = vmatpush.bf16.msra.mxu0 %v4599
  %7695 = vmatpush.bf16.msra.mxu0 %v4595
  %7696 = vmatpush.bf16.msra.mxu0 %v4591
  %7697 = vmatpush.bf16.msra.mxu0 %v4587
  %7698 = vmatmul.bf16.gmra.mxu0 %v1138
  %v7699 = vpop.f32.mrf.mxu0
  %v7700 = vadd.f32 %v7687, %v7699
  %v7701 = vpop.f32.mrf.mxu0
  %7702 = vdwg.mxu0
  %7703 = vmatpush.bf16.msra.mxu0 %v4647
  %7704 = vmatpush.bf16.msra.mxu0 %v4643
  %7705 = vmatpush.bf16.msra.mxu0 %v4639
  %7706 = vmatpush.bf16.msra.mxu0 %v4635
  %7707 = vmatpush.bf16.msra.mxu0 %v4631
  %7708 = vmatpush.bf16.msra.mxu0 %v4627
  %7709 = vmatpush.bf16.msra.mxu0 %v4623
  %7710 = vmatpush.bf16.msra.mxu0 %v4619
  %7711 = vmatmul.bf16.gmra.mxu0 %v1139
  %v7712 = vpop.f32.mrf.mxu0
  %v7713 = vadd.f32 %v7700, %v7712
  %v7714 = vpop.f32.mrf.mxu0
  %7715 = vdwg.mxu0
  %7716 = vmatpush.bf16.msra.mxu0 %v4679
  %7717 = vmatpush.bf16.msra.mxu0 %v4675
  %7718 = vmatpush.bf16.msra.mxu0 %v4671
  %7719 = vmatpush.bf16.msra.mxu0 %v4667
  %7720 = vmatpush.bf16.msra.mxu0 %v4663
  %7721 = vmatpush.bf16.msra.mxu0 %v4659
  %7722 = vmatpush.bf16.msra.mxu0 %v4655
  %7723 = vmatpush.bf16.msra.mxu0 %v4651
  %7724 = vmatmul.bf16.gmra.mxu0 %v1140
  %v7725 = vpop.f32.mrf.mxu0
  %v7726 = vadd.f32 %v7713, %v7725
  %v7727 = vpop.f32.mrf.mxu0
  %7728 = vdwg.mxu0
  %7729 = vmatpush.bf16.msra.mxu0 %v4711
  %7730 = vmatpush.bf16.msra.mxu0 %v4707
  %7731 = vmatpush.bf16.msra.mxu0 %v4703
  %7732 = vmatpush.bf16.msra.mxu0 %v4699
  %7733 = vmatpush.bf16.msra.mxu0 %v4695
  %7734 = vmatpush.bf16.msra.mxu0 %v4691
  %7735 = vmatpush.bf16.msra.mxu0 %v4687
  %7736 = vmatpush.bf16.msra.mxu0 %v4683
  %7737 = vmatmul.bf16.gmra.mxu0 %v1141
  %v7738 = vpop.f32.mrf.mxu0
  %v7739 = vadd.f32 %v7726, %v7738
  %v7740 = vpop.f32.mrf.mxu0
  %7741 = vdwg.mxu0
  %7742 = vmatpush.bf16.msra.mxu0 %v4743
  %7743 = vmatpush.bf16.msra.mxu0 %v4739
  %7744 = vmatpush.bf16.msra.mxu0 %v4735
  %7745 = vmatpush.bf16.msra.mxu0 %v4731
  %7746 = vmatpush.bf16.msra.mxu0 %v4727
  %7747 = vmatpush.bf16.msra.mxu0 %v4723
  %7748 = vmatpush.bf16.msra.mxu0 %v4719
  %7749 = vmatpush.bf16.msra.mxu0 %v4715
  %7750 = vmatmul.bf16.gmra.mxu0 %v1142
  %v7751 = vpop.f32.mrf.mxu0
  %v7752 = vadd.f32 %v7739, %v7751
  %v7753 = vpop.f32.mrf.mxu0
  %7754 = vdwg.mxu0
  %7755 = vmatpush.bf16.msra.mxu0 %v4775
  %7756 = vmatpush.bf16.msra.mxu0 %v4771
  %7757 = vmatpush.bf16.msra.mxu0 %v4767
  %7758 = vmatpush.bf16.msra.mxu0 %v4763
  %7759 = vmatpush.bf16.msra.mxu0 %v4759
  %7760 = vmatpush.bf16.msra.mxu0 %v4755
  %7761 = vmatpush.bf16.msra.mxu0 %v4751
  %7762 = vmatpush.bf16.msra.mxu0 %v4747
  %7763 = vmatmul.bf16.gmra.mxu0 %v1143
  %v7764 = vpop.f32.mrf.mxu0
  %v7765 = vadd.f32 %v7752, %v7764
  %v7766 = vpop.f32.mrf.mxu0
  %7767 = vdwg.mxu0
  %7768 = vmatpush.bf16.msra.mxu0 %v4807
  %7769 = vmatpush.bf16.msra.mxu0 %v4803
  %7770 = vmatpush.bf16.msra.mxu0 %v4799
  %7771 = vmatpush.bf16.msra.mxu0 %v4795
  %7772 = vmatpush.bf16.msra.mxu0 %v4791
  %7773 = vmatpush.bf16.msra.mxu0 %v4787
  %7774 = vmatpush.bf16.msra.mxu0 %v4783
  %7775 = vmatpush.bf16.msra.mxu0 %v4779
  %7776 = vmatmul.bf16.gmra.mxu0 %v1144
  %v7777 = vpop.f32.mrf.mxu0
  %v7778 = vadd.f32 %v7765, %v7777
  %v7779 = vpop.f32.mrf.mxu0
  %7780 = vdwg.mxu0
  %7781 = vmatpush.bf16.msra.mxu0 %v4839
  %7782 = vmatpush.bf16.msra.mxu0 %v4835
  %7783 = vmatpush.bf16.msra.mxu0 %v4831
  %7784 = vmatpush.bf16.msra.mxu0 %v4827
  %7785 = vmatpush.bf16.msra.mxu0 %v4823
  %7786 = vmatpush.bf16.msra.mxu0 %v4819
  %7787 = vmatpush.bf16.msra.mxu0 %v4815
  %7788 = vmatpush.bf16.msra.mxu0 %v4811
  %7789 = vmatmul.bf16.gmra.mxu0 %v1145
  %v7790 = vpop.f32.mrf.mxu0
  %v7791 = vadd.f32 %v7778, %v7790
  %v7792 = vpop.f32.mrf.mxu0
  %7793 = vdwg.mxu0
  %7794 = vmatpush.bf16.msra.mxu0 %v4871
  %7795 = vmatpush.bf16.msra.mxu0 %v4867
  %7796 = vmatpush.bf16.msra.mxu0 %v4863
  %7797 = vmatpush.bf16.msra.mxu0 %v4859
  %7798 = vmatpush.bf16.msra.mxu0 %v4855
  %7799 = vmatpush.bf16.msra.mxu0 %v4851
  %7800 = vmatpush.bf16.msra.mxu0 %v4847
  %7801 = vmatpush.bf16.msra.mxu0 %v4843
  %7802 = vmatmul.bf16.gmra.mxu0 %v1146
  %v7803 = vpop.f32.mrf.mxu0
  %v7804 = vadd.f32 %v7791, %v7803
  %v7805 = vpop.f32.mrf.mxu0
  %7806 = vdwg.mxu0
  %7807 = vmatpush.bf16.msra.mxu0 %v4903
  %7808 = vmatpush.bf16.msra.mxu0 %v4899
  %7809 = vmatpush.bf16.msra.mxu0 %v4895
  %7810 = vmatpush.bf16.msra.mxu0 %v4891
  %7811 = vmatpush.bf16.msra.mxu0 %v4887
  %7812 = vmatpush.bf16.msra.mxu0 %v4883
  %7813 = vmatpush.bf16.msra.mxu0 %v4879
  %7814 = vmatpush.bf16.msra.mxu0 %v4875
  %7815 = vmatmul.bf16.gmra.mxu0 %v1147
  %v7816 = vpop.f32.mrf.mxu0
  %v7817 = vadd.f32 %v7804, %v7816
  %v7818 = vpop.f32.mrf.mxu0
  %7819 = vdwg.mxu0
  %7820 = vmatpush.bf16.msra.mxu0 %v4935
  %7821 = vmatpush.bf16.msra.mxu0 %v4931
  %7822 = vmatpush.bf16.msra.mxu0 %v4927
  %7823 = vmatpush.bf16.msra.mxu0 %v4923
  %7824 = vmatpush.bf16.msra.mxu0 %v4919
  %7825 = vmatpush.bf16.msra.mxu0 %v4915
  %7826 = vmatpush.bf16.msra.mxu0 %v4911
  %7827 = vmatpush.bf16.msra.mxu0 %v4907
  %7828 = vmatmul.bf16.gmra.mxu0 %v1148
  %v7829 = vpop.f32.mrf.mxu0
  %v7830 = vadd.f32 %v7817, %v7829
  %v7831 = vpop.f32.mrf.mxu0
  %7832 = vdwg.mxu0
  %7833 = vmatpush.bf16.msra.mxu0 %v4967
  %7834 = vmatpush.bf16.msra.mxu0 %v4963
  %7835 = vmatpush.bf16.msra.mxu0 %v4959
  %7836 = vmatpush.bf16.msra.mxu0 %v4955
  %7837 = vmatpush.bf16.msra.mxu0 %v4951
  %7838 = vmatpush.bf16.msra.mxu0 %v4947
  %7839 = vmatpush.bf16.msra.mxu0 %v4943
  %7840 = vmatpush.bf16.msra.mxu0 %v4939
  %7841 = vmatmul.bf16.gmra.mxu0 %v1149
  %v7842 = vpop.f32.mrf.mxu0
  %v7843 = vadd.f32 %v7830, %v7842
  %v7844 = vpop.f32.mrf.mxu0
  %7845 = vdwg.mxu0
  %7846 = vmatpush.bf16.msra.mxu0 %v4999
  %7847 = vmatpush.bf16.msra.mxu0 %v4995
  %7848 = vmatpush.bf16.msra.mxu0 %v4991
  %7849 = vmatpush.bf16.msra.mxu0 %v4987
  %7850 = vmatpush.bf16.msra.mxu0 %v4983
  %7851 = vmatpush.bf16.msra.mxu0 %v4979
  %7852 = vmatpush.bf16.msra.mxu0 %v4975
  %7853 = vmatpush.bf16.msra.mxu0 %v4971
  %7854 = vmatmul.bf16.gmra.mxu0 %v1150
  %v7855 = vpop.f32.mrf.mxu0
  %v7856 = vadd.f32 %v7843, %v7855
  %v7857 = vpop.f32.mrf.mxu0
  %7858 = vdwg.mxu0
  %7859 = vmatpush.bf16.msra.mxu0 %v5031
  %7860 = vmatpush.bf16.msra.mxu0 %v5027
  %7861 = vmatpush.bf16.msra.mxu0 %v5023
  %7862 = vmatpush.bf16.msra.mxu0 %v5019
  %7863 = vmatpush.bf16.msra.mxu0 %v5015
  %7864 = vmatpush.bf16.msra.mxu0 %v5011
  %7865 = vmatpush.bf16.msra.mxu0 %v5007
  %7866 = vmatpush.bf16.msra.mxu0 %v5003
  %7867 = vmatmul.bf16.gmra.mxu0 %v1151
  %v7868 = vpop.f32.mrf.mxu0
  %v7869 = vadd.f32 %v7856, %v7868
  %v7870 = vpop.f32.mrf.mxu0
  %7871 = vdwg.mxu0
  %7872 = vmatpush.bf16.msra.mxu0 %v5063
  %7873 = vmatpush.bf16.msra.mxu0 %v5059
  %7874 = vmatpush.bf16.msra.mxu0 %v5055
  %7875 = vmatpush.bf16.msra.mxu0 %v5051
  %7876 = vmatpush.bf16.msra.mxu0 %v5047
  %7877 = vmatpush.bf16.msra.mxu0 %v5043
  %7878 = vmatpush.bf16.msra.mxu0 %v5039
  %7879 = vmatpush.bf16.msra.mxu0 %v5035
  %7880 = vmatmul.bf16.gmra.mxu0 %v1152
  %v7881 = vpop.f32.mrf.mxu0
  %v7882 = vadd.f32 %v7869, %v7881
  %v7883 = vpop.f32.mrf.mxu0
  %7884 = vdwg.mxu0
  %7885 = vmatpush.bf16.msra.mxu0 %v5095
  %7886 = vmatpush.bf16.msra.mxu0 %v5091
  %7887 = vmatpush.bf16.msra.mxu0 %v5087
  %7888 = vmatpush.bf16.msra.mxu0 %v5083
  %7889 = vmatpush.bf16.msra.mxu0 %v5079
  %7890 = vmatpush.bf16.msra.mxu0 %v5075
  %7891 = vmatpush.bf16.msra.mxu0 %v5071
  %7892 = vmatpush.bf16.msra.mxu0 %v5067
  %7893 = vmatmul.bf16.gmra.mxu0 %v1153
  %v7894 = vpop.f32.mrf.mxu0
  %v7895 = vadd.f32 %v7882, %v7894
  %v7896 = vpop.f32.mrf.mxu0
  %7897 = vdwg.mxu0
  %7898 = vmatpush.bf16.msra.mxu0 %v5127
  %7899 = vmatpush.bf16.msra.mxu0 %v5123
  %7900 = vmatpush.bf16.msra.mxu0 %v5119
  %7901 = vmatpush.bf16.msra.mxu0 %v5115
  %7902 = vmatpush.bf16.msra.mxu0 %v5111
  %7903 = vmatpush.bf16.msra.mxu0 %v5107
  %7904 = vmatpush.bf16.msra.mxu0 %v5103
  %7905 = vmatpush.bf16.msra.mxu0 %v5099
  %7906 = vmatmul.bf16.gmra.mxu0 %v1154
  %v7907 = vpop.f32.mrf.mxu0
  %v7908 = vadd.f32 %v7895, %v7907
  %v7909 = vpop.f32.mrf.mxu0
  %7910 = vdwg.mxu0
  %7911 = vmatpush.bf16.msra.mxu0 %v5159
  %7912 = vmatpush.bf16.msra.mxu0 %v5155
  %7913 = vmatpush.bf16.msra.mxu0 %v5151
  %7914 = vmatpush.bf16.msra.mxu0 %v5147
  %7915 = vmatpush.bf16.msra.mxu0 %v5143
  %7916 = vmatpush.bf16.msra.mxu0 %v5139
  %7917 = vmatpush.bf16.msra.mxu0 %v5135
  %7918 = vmatpush.bf16.msra.mxu0 %v5131
  %7919 = vmatmul.bf16.gmra.mxu0 %v1155
  %v7920 = vpop.f32.mrf.mxu0
  %v7921 = vadd.f32 %v7908, %v7920
  %v7922 = vpop.f32.mrf.mxu0
  %7923 = vdwg.mxu0
  %7924 = vmatpush.bf16.msra.mxu0 %v5191
  %7925 = vmatpush.bf16.msra.mxu0 %v5187
  %7926 = vmatpush.bf16.msra.mxu0 %v5183
  %7927 = vmatpush.bf16.msra.mxu0 %v5179
  %7928 = vmatpush.bf16.msra.mxu0 %v5175
  %7929 = vmatpush.bf16.msra.mxu0 %v5171
  %7930 = vmatpush.bf16.msra.mxu0 %v5167
  %7931 = vmatpush.bf16.msra.mxu0 %v5163
  %7932 = vmatmul.bf16.gmra.mxu0 %v1156
  %v7933 = vpop.f32.mrf.mxu0
  %v7934 = vadd.f32 %v7921, %v7933
  %v7935 = vpop.f32.mrf.mxu0
  %7936 = vdwg.mxu0
  %7937 = vmatpush.bf16.msra.mxu0 %v5223
  %7938 = vmatpush.bf16.msra.mxu0 %v5219
  %7939 = vmatpush.bf16.msra.mxu0 %v5215
  %7940 = vmatpush.bf16.msra.mxu0 %v5211
  %7941 = vmatpush.bf16.msra.mxu0 %v5207
  %7942 = vmatpush.bf16.msra.mxu0 %v5203
  %7943 = vmatpush.bf16.msra.mxu0 %v5199
  %7944 = vmatpush.bf16.msra.mxu0 %v5195
  %7945 = vmatmul.bf16.gmra.mxu0 %v1157
  %v7946 = vpop.f32.mrf.mxu0
  %v7947 = vadd.f32 %v7934, %v7946
  %v7948 = vpop.f32.mrf.mxu0
  %7949 = vdwg.mxu0
  %7950 = vmatpush.bf16.msra.mxu0 %v5255
  %7951 = vmatpush.bf16.msra.mxu0 %v5251
  %7952 = vmatpush.bf16.msra.mxu0 %v5247
  %7953 = vmatpush.bf16.msra.mxu0 %v5243
  %7954 = vmatpush.bf16.msra.mxu0 %v5239
  %7955 = vmatpush.bf16.msra.mxu0 %v5235
  %7956 = vmatpush.bf16.msra.mxu0 %v5231
  %7957 = vmatpush.bf16.msra.mxu0 %v5227
  %7958 = vmatmul.bf16.gmra.mxu0 %v1158
  %v7959 = vpop.f32.mrf.mxu0
  %v7960 = vadd.f32 %v7947, %v7959
  %v7961 = vpop.f32.mrf.mxu0
  %7962 = vdwg.mxu0
  %7963 = vmatpush.bf16.msra.mxu0 %v5287
  %7964 = vmatpush.bf16.msra.mxu0 %v5283
  %7965 = vmatpush.bf16.msra.mxu0 %v5279
  %7966 = vmatpush.bf16.msra.mxu0 %v5275
  %7967 = vmatpush.bf16.msra.mxu0 %v5271
  %7968 = vmatpush.bf16.msra.mxu0 %v5267
  %7969 = vmatpush.bf16.msra.mxu0 %v5263
  %7970 = vmatpush.bf16.msra.mxu0 %v5259
  %7971 = vmatmul.bf16.gmra.mxu0 %v1159
  %v7972 = vpop.f32.mrf.mxu0
  %v7973 = vadd.f32 %v7960, %v7972
  %v7974 = vpop.f32.mrf.mxu0
  %7975 = vdwg.mxu0
  %v7976 = vld [vmem:[#allocation2] sm:$0xf]
  %v7977 = vrot.slane %v6725, 4
  %v7978 = vadd.f32 %v6725, %v7977
  %v7979 = vrot.slane %v7978, 2
  %v7980 = vadd.f32 %v7978, %v7979
  %v7981 = vrot.slane %v7980, 1
  %v7982 = vadd.f32 %v7980, %v7981
  %v7983 = vrot.slane %v7141, 4
  %v7984 = vadd.f32 %v7141, %v7983
  %v7985 = vrot.slane %v7984, 2
  %v7986 = vadd.f32 %v7984, %v7985
  %v7987 = vrot.slane %v7986, 1
  %v7988 = vadd.f32 %v7986, %v7987
  %v7989 = vrot.slane %v7557, 4
  %v7990 = vadd.f32 %v7557, %v7989
  %v7991 = vrot.slane %v7990, 2
  %v7992 = vadd.f32 %v7990, %v7991
  %v7993 = vrot.slane %v7992, 1
  %v7994 = vadd.f32 %v7992, %v7993
  %v7995 = vrot.slane %v7973, 4
  %v7996 = vadd.f32 %v7973, %v7995
  %v7997 = vrot.slane %v7996, 2
  %v7998 = vadd.f32 %v7996, %v7997
  %v7999 = vrot.slane %v7998, 1
  %v8000 = vadd.f32 %v7998, %v7999
  %v8005 = vrot.slane %v7988, 7
  %v8006 = vrot.slane %v7994, 6
  %v8007 = vrot.slane %v8000, 5
  %vm8008 = vcmask 1040384
  %v8009 = vsel %vm8008, %v7982, %v8005
  %vm8010 = vcmask 1042434
  %v8011 = vsel %vm8010, %v8006, %v8007
  %vm8012 = vcmask 1041408
  %v8013 = vsel %vm8012, %v8009, %v8011
  %v8015 = vadd.f32 %v7976, %v8013
  %v8016 = vlaneseq
  %vm8017 = vcmp.ge.s32.totalorder %v8016, 0
  %vm8018 = vcmp.lt.s32.totalorder %v8016, 512
  %vm8019 = vmand %vm8017, %vm8018
  %8020 = vst.msk [vmem:[#allocation2] sm:$0xf] %vm8019, %v8015
  %v8021 = vld [vmem:[#allocation3] sm:$0xf]
  %v8022 = vmul.f32 %v6725, %v6725
  %v8023 = vmul.f32 %v7141, %v7141
  %v8024 = vmul.f32 %v7557, %v7557
  %v8025 = vmul.f32 %v7973, %v7973
  %v8026 = vrot.slane %v8022, 4
  %v8027 = vadd.f32 %v8022, %v8026
  %v8028 = vrot.slane %v8027, 2
  %v8029 = vadd.f32 %v8027, %v8028
  %v8030 = vrot.slane %v8029, 1
  %v8031 = vadd.f32 %v8029, %v8030
  %v8032 = vrot.slane %v8023, 4
  %v8033 = vadd.f32 %v8023, %v8032
  %v8034 = vrot.slane %v8033, 2
  %v8035 = vadd.f32 %v8033, %v8034
  %v8036 = vrot.slane %v8035, 1
  %v8037 = vadd.f32 %v8035, %v8036
  %v8038 = vrot.slane %v8024, 4
  %v8039 = vadd.f32 %v8024, %v8038
  %v8040 = vrot.slane %v8039, 2
  %v8041 = vadd.f32 %v8039, %v8040
  %v8042 = vrot.slane %v8041, 1
  %v8043 = vadd.f32 %v8041, %v8042
  %v8044 = vrot.slane %v8025, 4
  %v8045 = vadd.f32 %v8025, %v8044
  %v8046 = vrot.slane %v8045, 2
  %v8047 = vadd.f32 %v8045, %v8046
  %v8048 = vrot.slane %v8047, 1
  %v8049 = vadd.f32 %v8047, %v8048
  %v8054 = vrot.slane %v8037, 7
  %v8055 = vrot.slane %v8043, 6
  %v8056 = vrot.slane %v8049, 5
  %v8057 = vsel %vm8008, %v8031, %v8054
  %v8058 = vsel %vm8010, %v8055, %v8056
  %v8059 = vsel %vm8012, %v8057, %v8058
  %v8061 = vadd.f32 %v8021, %v8059
  %8062 = vst.msk [vmem:[#allocation3] sm:$0xf] %vm8019, %v8061
  %s8063 = smul.u32 0, 8
  %v8064 = vpack.c.bf16 %v7141, %v6725
  %v8065 = vpack.c.bf16 %v7973, %v7557
  %s8066 = sshra.s32 %s8063, 3
  %s8067 = sand.u32 %s8063, 7
  %s8068 = smul.u32 %s8066, 4
  %s8069 = smul.addr %s8068, 4
  %s8070 = scalar_lea.vmem %s5, %s8069
  %8071 = vst [vmem:[%s8070] sm:$0xff] %v8064
  %8072 = vst [vmem:[%s8070 + $0x8] sm:$0xff] %v8065
  // Predicated region
  $region26: #{discriminator_pallas.8} parent=0 // pred_check
    %p8073 = pneg %p20
  $region27: #{discriminator_pallas.8} parent=0 // pred_check_branch
    %8075 = sbr.rel (%p8073) target = $region29
  $region28: #{discriminator_pallas.8} parent=0 // pred_region
    %v8076 = vld [vmem:[#allocation2] sm:$0xf]
    %v8077 = vmul.f32 %v8076, 0.125
    %v8078 = vld [vmem:[#allocation3] sm:$0xf]
    %v8079 = vmul.f32 %v8078, 0.125
    %v8080 = vmul.f32 %v8077, %v8077
    %v8081 = vsub.f32 %v8079, %v8080
    %v8082 = vmax.f32 %v8081, 0.0
    %v8083 = vadd.f32 %v8082, 1e-05
    %v8084 = vrsqrt.pop %v8083
    %v8085 = vmul.f32 %v8084, %v8083
    %v8086 = vmul.f32 %v8085, %v8084
    %v8087 = vmul.f32 0.5, %v8086
    %v8088 = vsub.f32 1.5, %v8087
    %v8089 = vmul.f32 %v8084, %v8088
    %vm8090 = vweird.f32 %v8083
    %vm8091 = vweird.f32 %v8084
    %vm8092 = vmor %vm8090, %vm8091
    %v8093 = vsel %vm8092, %v8084, %v8089
    %v8094 = vld [vmem:[%s3] sm:$0xf]
    %v8095 = vmul.f32 %v8093, %v8094
    %v8096 = vld [vmem:[%s5] sm:$0xff]
    %v8097 = vld [vmem:[%s5 + $0x8] sm:$0xff]
    %v8098 = vunpack.c.l.bf16 %v8096
    %v8099 = vunpack.c.h.bf16 %v8096
    %v8100 = vunpack.c.l.bf16 %v8097
    %v8101 = vunpack.c.h.bf16 %v8097
    %v8103 = vperm.slane %v8077, 0
    %v8104 = vperm.slane %v8077, 1
    %v8105 = vperm.slane %v8077, 2
    %v8106 = vperm.slane %v8077, 3
    %v8111 = vsub.f32 %v8098, %v8103
    %v8112 = vsub.f32 %v8099, %v8104
    %v8113 = vsub.f32 %v8100, %v8105
    %v8114 = vsub.f32 %v8101, %v8106
    %v8116 = vperm.slane %v8095, 0
    %v8117 = vperm.slane %v8095, 1
    %v8118 = vperm.slane %v8095, 2
    %v8119 = vperm.slane %v8095, 3
    %v8124 = vmul.f32 %v8111, %v8116
    %v8125 = vmul.f32 %v8112, %v8117
    %v8126 = vmul.f32 %v8113, %v8118
    %v8127 = vmul.f32 %v8114, %v8119
    %v8128 = vld [vmem:[%s4] sm:$0xf]
    %v8130 = vperm.slane %v8128, 0
    %v8131 = vperm.slane %v8128, 1
    %v8132 = vperm.slane %v8128, 2
    %v8133 = vperm.slane %v8128, 3
    %v8138 = vadd.f32 %v8124, %v8130
    %v8139 = vadd.f32 %v8125, %v8131
    %v8140 = vadd.f32 %v8126, %v8132
    %v8141 = vadd.f32 %v8127, %v8133
    %vm8142 = vcmp.gt.f32.partialorder %v8138, 0.0
    %vm8143 = vcmp.gt.f32.partialorder %v8139, 0.0
    %vm8144 = vcmp.gt.f32.partialorder %v8140, 0.0
    %vm8145 = vcmp.gt.f32.partialorder %v8141, 0.0
    %v8146 = vmul.f32 %v8138, 0.2
    %v8147 = vmul.f32 %v8139, 0.2
    %v8148 = vmul.f32 %v8140, 0.2
    %v8149 = vmul.f32 %v8141, 0.2
    %v8150 = vsel %vm8142, %v8138, %v8146
    %v8151 = vsel %vm8143, %v8139, %v8147
    %v8152 = vsel %vm8144, %v8140, %v8148
    %v8153 = vsel %vm8145, %v8141, %v8149
    %v8154 = vpack.c.bf16 %v8151, %v8150
    %v8155 = vpack.c.bf16 %v8153, %v8152
    %8156 = vst [vmem:[%s5] sm:$0xff] %v8154
    %8157 = vst [vmem:[%s5 + $0x8] sm:$0xff] %v8155
  $region29: #{discriminator_pallas.8} parent=0 // pred_fallthru
    _
  // Predicated region
  $region30: #{discriminator_pallas.8} parent=0 // pred_check
    _
  $region31: #{discriminator_pallas.8} parent=0 // pred_check_branch
    %8159 = sbr.rel (0) target = $region33
  $region32: #{discriminator_pallas.8} parent=0 // pred_region
    _
  $region33: #{discriminator_pallas.8} parent=0 // pred_fallthru
    _
  // Predicated region
  $region34: #{discriminator_pallas.8} parent=0 // pred_check
    _
  $region35: #{discriminator_pallas.8} parent=0 // pred_check_branch
    %8161 = sbr.rel (0) target = $region37
  $region36: #{discriminator_pallas.8} parent=0 // pred_region
    _
  $region37: #{discriminator_pallas.8} parent=0 // pred_fallthru
    _

</llo_original>
